<compile_context>
chip_gen: v7x
topology: tpu7x:2x2x1
jax: 0.10.0
libtpu: 0.0.40
codegen_flags: <defaults>
</compile_context>

<pallas_src>
import functools

import numpy as np

import jax
import jax.numpy as jnp
from jax.experimental import pallas as pl
from jax.experimental.pallas import tpu as pltpu


# ---------------------------------------------------------------------------
# Kernel: one grid step == B_TILE images, everything stays on-chip.
# ---------------------------------------------------------------------------
def _make_kernel(bt):
    def kernel(x_ref, w0_ref, b0_ref, w1_ref, b1_ref, shf_ref, sel_ref,
               w2_ref, b2_ref, wd0_ref, bd0_ref, sc_ref, wd1_ref, bd1_ref,
               wd2_ref, bd2_ref, out_ref):
        f32 = jnp.float32
        mm = lambda a, b: jnp.dot(a, b, preferred_element_type=f32)
        relu = lambda v: jnp.maximum(v, 0.0)

        # Input: 5 height-phases of the padded image, each (bt*8, 28);
        # per-image block = 8 sublane rows (7 valid + 1 pad).
        x0 = x_ref[0, 0, :, :]
        x1 = x_ref[0, 1, :, :]
        x2 = x_ref[0, 2, :, :]
        x3 = x_ref[0, 3, :, :]
        x4 = x_ref[0, 4, :, :]

        # enc0: Conv2d(1->16, 3, s=2, p=1) + ReLU -> even/odd output-row slabs.
        b0 = b0_ref[...]
        e0 = relu(mm(x0, w0_ref[0]) + mm(x1, w0_ref[1]) + mm(x2, w0_ref[2]) + b0)
        o0 = relu(mm(x2, w0_ref[0]) + mm(x3, w0_ref[1]) + mm(x4, w0_ref[2]) + b0)

        # enc1: Conv2d(16->32, 3, s=2, p=1) + ReLU.
        # shf_ref[0] = within-block "row-1 with zero pad" operator (0/1 matrix).
        o0m = mm(shf_ref[0], o0)
        a1 = relu(mm(o0m, w1_ref[0]) + mm(e0, w1_ref[1]) + mm(o0, w1_ref[2])
                  + b1_ref[...])

        # enc2: Conv2d(32->64, 7) == dense over the 7x7 window.
        # sel_ref gathers row ky of every image into a (7*bt, 224) stack.
        astk = mm(sel_ref[...], a1)
        z = b2_ref[...]
        for ky in range(7):
            z = z + mm(astk[ky * bt:(ky + 1) * bt, :], w2_ref[ky])   # (bt, 64)

        # dec0: ConvTranspose2d(64->32, 7) on 1x1 latent == one dense matmul.
        d0 = relu(mm(z, wd0_ref[...]) + bd0_ref[...])                # (bt, 1792)
        # Scatter the 7 output rows of every image back into a row slab
        # (aligned 256-lane slices -> concat -> one scatter matmul each).
        d0stk = jnp.concatenate(
            [d0[:, 256 * r:256 * (r + 1)] for r in range(7)], axis=0)  # (7*bt,256)
        dslab = mm(sc_ref[0], d0stk)          # rows 8b+r = dec0 row r, 8b+7 = 0
        uslab = mm(sc_ref[1], d0stk)          # rows 8b+r = dec0 row r+1 (pad -> 0)

        # dec1: ConvTranspose2d(32->16, 3, s=2, p=1, op=1) + ReLU, even/odd rows.
        bd1 = bd1_ref[...]
        r0 = relu(mm(dslab, wd1_ref[1]) + bd1)                       # rows 2t
        r1 = relu(mm(dslab, wd1_ref[2]) + mm(uslab, wd1_ref[0]) + bd1)  # rows 2t+1
        ur0 = mm(shf_ref[1], r0)              # rows 2t+2 taps (zero past the edge)

        # dec2: ConvTranspose2d(16->1, 3, s=2, p=1, op=1) + Sigmoid.
        # The 4 output-row phases (rows 4t+p) are packed into lanes [32p:32p+28]
        # by the host-built fused weights -> one dense 128-lane output store.
        s = (mm(r0, wd2_ref[0]) + mm(r1, wd2_ref[1]) + mm(ur0, wd2_ref[2])
             + bd2_ref[...])
        out_ref[...] = 1.0 / (1.0 + jnp.exp(-s))

    return kernel


# ---------------------------------------------------------------------------
# Host wrapper.
# ---------------------------------------------------------------------------
def _const_spec(shape):
    nd = len(shape)
    return pl.BlockSpec(shape, lambda i: (0,) * nd)   # resident across the grid


def _structural_mats(bt):
    """0/1 matrices implementing within-image row shifts / gathers / scatters."""
    dn0 = np.zeros((bt * 8, bt * 8), np.float32)   # enc1 tap-0: row t-1, pad row 0
    upr = np.zeros((bt * 8, bt * 8), np.float32)   # dec2 tap:   row t+1, pad row 14
    sel = np.zeros((7 * bt, bt * 8), np.float32)   # enc2 row gather
    sc = np.zeros((2, bt * 8, 7 * bt), np.float32)  # dec0 row scatter (+1-shifted)
    for b in range(bt):
        for t in range(1, 7):
            dn0[8 * b + t, 8 * b + t - 1] = 1.0
        for t in range(6):
            upr[8 * b + t, 8 * b + t + 1] = 1.0
        for r in range(7):
            sel[r * bt + b, 8 * b + r] = 1.0
            sc[0, 8 * b + r, r * bt + b] = 1.0
        for r in range(6):
            sc[1, 8 * b + r, (r + 1) * bt + b] = 1.0
    return np.stack([dn0, upr]), sel, sc


@functools.partial(jax.jit, static_argnames=("b_tile",))
def autoencoder_forward(params, x, b_tile=16):
    """x: (B, 1, 28, 28) float32 NCHW. Returns the same shape."""
    B, C, H, W = x.shape
    assert (C, H, W) == (1, 28, 28), "architecture requires 1x28x28 inputs"
    bt = b_tile
    nt = -(-B // bt)          # number of grid steps
    Bp = nt * bt              # padded batch

    # Host-side layout prep: pad height (conv pad + alignment), split the rows
    # into 5 phases (rows mod 4, plus the +4-shifted phase for odd output rows)
    # and stack B_TILE image blocks along the sublane axis.
    img = x[:, 0, :, :].astype(jnp.float32)
    img = jnp.pad(img, ((0, Bp - B), (1, 7), (0, 0)))            # (Bp, 36, 28)
    phases = [img[:, p:p + 32:4, :] for p in range(4)]           # each (Bp, 8, 28)
    phases.append(img[:, 4:36:4, :])                             # phase "4"
    xph = jnp.stack(phases, axis=1)                              # (Bp, 5, 8, 28)
    xph = (xph.reshape(nt, bt, 5, 8, 28)
              .transpose(0, 2, 1, 3, 4)
              .reshape(nt, 5, bt * 8, 28))

    shf, sel, sc = _structural_mats(bt)
    shf, sel, sc = jnp.asarray(shf), jnp.asarray(sel), jnp.asarray(sc)

    wlist = [params["w0"], params["b0"], params["w1"], params["b1"],
             shf, sel,
             params["w2"], params["b2"], params["wd0"], params["bd0"],
             sc,
             params["wd1"], params["bd1"], params["wd2f"], params["bd2f"]]

    in_specs = [pl.BlockSpec((1, 5, bt * 8, 28), lambda i: (i, 0, 0, 0))]
    in_specs += [_const_spec(w.shape) for w in wlist]

    out = pl.pallas_call(
        _make_kernel(bt),
        out_shape=jax.ShapeDtypeStruct((nt * bt * 8, 128), jnp.float32),
        grid_spec=pltpu.PrefetchScalarGridSpec(
            num_scalar_prefetch=0,
            grid=(nt,),
            in_specs=in_specs,
            out_specs=pl.BlockSpec((bt * 8, 128), lambda i: (i, 0)),
        ),
        compiler_params=pltpu.CompilerParams(
            dimension_semantics=("parallel",)),
    )(xph, *wlist)

    # Host unpack: (step, image, block-row t, phase p, x) -> row 4t+p.
    out = out.reshape(nt * bt, 8, 4, 32)[:, :7, :, :28]          # (Bp, 7, 4, 28)
    out = out.reshape(Bp, 28, 28)[:B]
    return out[:, None, :, :]


# ---------------------------------------------------------------------------
# Parameter init (PyTorch layout / init) and host-side repacking.
# ---------------------------------------------------------------------------
def init_params(key):
    def layer(k, w_shape, fan_in, n_out):
        kw, kb = jax.random.split(k)
        bound = 1.0 / float(np.sqrt(fan_in))
        w = jax.random.uniform(kw, w_shape, jnp.float32, -bound, bound)
        b = jax.random.uniform(kb, (n_out,), jnp.float32, -bound, bound)
        return w, b

    ks = jax.random.split(key, 6)
    p = {}
    p["enc0_w"], p["enc0_b"] = layer(ks[0], (16, 1, 3, 3), 1 * 9, 16)
    p["enc1_w"], p["enc1_b"] = layer(ks[1], (32, 16, 3, 3), 16 * 9, 32)
    p["enc2_w"], p["enc2_b"] = layer(ks[2], (64, 32, 7, 7), 32 * 49, 64)
    p["dec0_w"], p["dec0_b"] = layer(ks[3], (64, 32, 7, 7), 32 * 49, 32)
    p["dec1_w"], p["dec1_b"] = layer(ks[4], (32, 16, 3, 3), 16 * 9, 16)
    p["dec2_w"], p["dec2_b"] = layer(ks[5], (16, 1, 3, 3), 1 * 9, 1)
    return p


def _conv_band(w, x_in, x_out, stride, pad):
    # Conv2d (Cout,Cin,kh,kw) -> per-tap-row banded mats:
    # M[ky, xi*Cin+ci, xo*Cout+co] = w[co,ci,ky,kx],  xi = xo*stride - pad + kx.
    cout, cin, kh, kw = w.shape
    m = np.zeros((kh, x_in * cin, x_out * cout), np.float32)
    for ky in range(kh):
        for xo in range(x_out):
            for kx in range(kw):
                xi = xo * stride - pad + kx
                if 0 <= xi < x_in:
                    m[ky, xi * cin:(xi + 1) * cin,
                      xo * cout:(xo + 1) * cout] = w[:, :, ky, kx].T
    return m


def _convT_band(w, x_in, x_out, stride, pad):
    # ConvTranspose2d (Cin,Cout,kh,kw) -> per-tap-row banded mats:
    # M[ky, xi*Cin+ci, xo*Cout+co] = w[ci,co,ky,kx],  xo = xi*stride - pad + kx.
    cin, cout, kh, kw = w.shape
    m = np.zeros((kh, x_in * cin, x_out * cout), np.float32)
    for ky in range(kh):
        for xi in range(x_in):
            for kx in range(kw):
                xo = xi * stride - pad + kx
                if 0 <= xo < x_out:
                    m[ky, xi * cin:(xi + 1) * cin,
                      xo * cout:(xo + 1) * cout] = w[:, :, ky, kx]
    return m


def prepare_params(raw):
    """One-time host repack of PyTorch-layout weights into kernel layouts."""
    n = lambda a: np.asarray(a, np.float32)
    w0, b0 = n(raw["enc0_w"]), n(raw["enc0_b"])
    w1, b1 = n(raw["enc1_w"]), n(raw["enc1_b"])
    w2, b2 = n(raw["enc2_w"]), n(raw["enc2_b"])
    wd0, bd0 = n(raw["dec0_w"]), n(raw["dec0_b"])
    wd1, bd1 = n(raw["dec1_w"]), n(raw["dec1_b"])
    wd2, bd2 = n(raw["dec2_w"]), n(raw["dec2_b"])

    p = {}
    p["w0"] = _conv_band(w0, 28, 14, 2, 1)                       # (3, 28, 224)
    p["b0"] = np.tile(b0, 14).reshape(1, 224)
    p["w1"] = _conv_band(w1, 14, 7, 2, 1)                        # (3, 224, 224)
    p["b1"] = np.tile(b1, 7).reshape(1, 224)
    p["w2"] = np.transpose(w2, (2, 3, 1, 0)).reshape(7, 7 * 32, 64)  # (7,224,64)
    p["b2"] = b2.reshape(1, 64)
    # dec0: dense 64 -> 7x7x32, lanes = (oy, ox padded 7->8, c) -> aligned 256
    # lanes per output row.
    t = np.transpose(wd0, (0, 2, 3, 1))                          # (64, 7, 7, 32)
    p["wd0"] = np.pad(t, ((0, 0), (0, 0), (0, 1), (0, 0))).reshape(64, 7 * 8 * 32)
    bt0 = np.zeros((7, 8, 32), np.float32)
    bt0[:, :7, :] = bd0[None, None, :]
    p["bd0"] = bt0.reshape(1, 7 * 8 * 32)
    p["wd1"] = np.pad(_convT_band(wd1, 7, 14, 2, 1),
                      ((0, 0), (0, 32), (0, 0)))                 # (3, 256, 224)
    p["bd1"] = np.tile(bd1, 14).reshape(1, 224)

    # dec2: fold the 4 output-row phases (rows 4t+p) into lanes [32p : 32p+28]
    # of three fused weights (operands r0, r1, up(r0)).
    w2t = _convT_band(wd2, 14, 28, 2, 1)                         # (3, 224, 28)
    wf = np.zeros((3, 224, 128), np.float32)
    wf[0, :, 0:28] = w2t[1]        # r0     -> phase 0 (rows 4t)
    wf[0, :, 32:60] = w2t[2]       # r0     -> phase 1 (rows 4t+1)
    wf[1, :, 32:60] = w2t[0]       # r1     -> phase 1
    wf[1, :, 64:92] = w2t[1]       # r1     -> phase 2 (rows 4t+2)
    wf[1, :, 96:124] = w2t[2]      # r1     -> phase 3 (rows 4t+3)
    wf[2, :, 96:124] = w2t[0]      # up(r0) -> phase 3
    p["wd2f"] = wf
    bf = np.zeros((1, 128), np.float32)
    for q in range(4):
        bf[0, 32 * q:32 * q + 28] = bd2[0]
    p["bd2f"] = bf
    return {k: jnp.asarray(v) for k, v in p.items()}


# ---------------------------------------------------------------------------
# Pure-XLA reference of the PyTorch module (for the self-check).
# ---------------------------------------------------------------------------
def _ref_conv(x, w, b, stride, pad):
    out = jax.lax.conv_general_dilated(
        x, w, window_strides=(stride, stride),
        padding=[(pad, pad), (pad, pad)],
        dimension_numbers=("NCHW", "OIHW", "NCHW"),
        precision=jax.lax.Precision.HIGHEST)
    return out + b.reshape(1, -1, 1, 1)


def _ref_convT(x, w, b, stride, pad, out_pad):
    kh, kw = w.shape[2], w.shape[3]
    w_eq = jnp.flip(w, (2, 3)).transpose(1, 0, 2, 3)
    out = jax.lax.conv_general_dilated(
        x, w_eq, window_strides=(1, 1),
        padding=[(kh - 1 - pad, kh - 1 - pad + out_pad),
                 (kw - 1 - pad, kw - 1 - pad + out_pad)],
        lhs_dilation=(stride, stride),
        dimension_numbers=("NCHW", "OIHW", "NCHW"),
        precision=jax.lax.Precision.HIGHEST)
    return out + b.reshape(1, -1, 1, 1)


def reference_forward(raw, x):
    h = jax.nn.relu(_ref_conv(x, raw["enc0_w"], raw["enc0_b"], 2, 1))
    h = jax.nn.relu(_ref_conv(h, raw["enc1_w"], raw["enc1_b"], 2, 1))
    h = _ref_conv(h, raw["enc2_w"], raw["enc2_b"], 1, 0)
    h = jax.nn.relu(_ref_convT(h, raw["dec0_w"], raw["dec0_b"], 1, 0, 0))
    h = jax.nn.relu(_ref_convT(h, raw["dec1_w"], raw["dec1_b"], 2, 1, 1))
    h = jax.nn.sigmoid(_ref_convT(h, raw["dec2_w"], raw["dec2_b"], 2, 1, 1))
    return h


if __name__ == "__main__":
    key = jax.random.PRNGKey(0)
    kx, kp = jax.random.split(key)
    raw = init_params(kp)
    params = prepare_params(raw)
    x = jax.random.uniform(kx, (2, 1, 28, 28), jnp.float32)

    y = jax.block_until_ready(autoencoder_forward(params, x))
    assert y.shape == x.shape and y.dtype == jnp.float32, (y.shape, y.dtype)

    # Numerical self-check against the pure-XLA reference of the PyTorch module.
    y_ref = jax.block_until_ready(jax.jit(reference_forward)(raw, x))
    max_err = float(jnp.max(jnp.abs(y - y_ref)))
    assert max_err < 2e-2, f"kernel/reference mismatch: max abs err {max_err}"
    print("KERNEL_OK")
</pallas_src>

<mosaic_0001>
module attributes {stable_mosaic.version = 11 : i64} {
  func.func @kernel(%arg0: i32, %arg1: memref<1x5x128x28xf32, #tpu.memory_space<vmem>>, %arg2: memref<3x28x224xf32, #tpu.memory_space<vmem>>, %arg3: memref<1x224xf32, #tpu.memory_space<vmem>>, %arg4: memref<3x224x224xf32, #tpu.memory_space<vmem>>, %arg5: memref<1x224xf32, #tpu.memory_space<vmem>>, %arg6: memref<2x128x128xf32, #tpu.memory_space<vmem>>, %arg7: memref<112x128xf32, #tpu.memory_space<vmem>>, %arg8: memref<7x224x64xf32, #tpu.memory_space<vmem>>, %arg9: memref<1x64xf32, #tpu.memory_space<vmem>>, %arg10: memref<64x1792xf32, #tpu.memory_space<vmem>>, %arg11: memref<1x1792xf32, #tpu.memory_space<vmem>>, %arg12: memref<2x128x112xf32, #tpu.memory_space<vmem>>, %arg13: memref<3x256x224xf32, #tpu.memory_space<vmem>>, %arg14: memref<1x224xf32, #tpu.memory_space<vmem>>, %arg15: memref<3x224x128xf32, #tpu.memory_space<vmem>>, %arg16: memref<1x128xf32, #tpu.memory_space<vmem>>, %arg17: memref<128x128xf32, #tpu.memory_space<vmem>>) attributes {dimension_semantics = [#tpu.dimension_semantics<parallel>], iteration_bounds = array<i64: 1>, scalar_prefetch = 0 : i64, scratch_operands = 0 : i64, tpu.core_type = #tpu.core_type<tc>, window_params = [{transform_indices = @transform_0, window_bounds = array<i64: 1, 5, 128, 28>}, {pipeline_mode = #tpu.pipeline_mode<synchronous>, transform_indices = @transform_1, window_bounds = array<i64: 3, 28, 224>}, {pipeline_mode = #tpu.pipeline_mode<synchronous>, transform_indices = @transform_2, window_bounds = array<i64: 1, 224>}, {pipeline_mode = #tpu.pipeline_mode<synchronous>, transform_indices = @transform_3, window_bounds = array<i64: 3, 224, 224>}, {pipeline_mode = #tpu.pipeline_mode<synchronous>, transform_indices = @transform_4, window_bounds = array<i64: 1, 224>}, {pipeline_mode = #tpu.pipeline_mode<synchronous>, transform_indices = @transform_5, window_bounds = array<i64: 2, 128, 128>}, {pipeline_mode = #tpu.pipeline_mode<synchronous>, transform_indices = @transform_6, window_bounds = array<i64: 112, 128>}, {pipeline_mode = #tpu.pipeline_mode<synchronous>, transform_indices = @transform_7, window_bounds = array<i64: 7, 224, 64>}, {pipeline_mode = #tpu.pipeline_mode<synchronous>, transform_indices = @transform_8, window_bounds = array<i64: 1, 64>}, {pipeline_mode = #tpu.pipeline_mode<synchronous>, transform_indices = @transform_9, window_bounds = array<i64: 64, 1792>}, {pipeline_mode = #tpu.pipeline_mode<synchronous>, transform_indices = @transform_10, window_bounds = array<i64: 1, 1792>}, {pipeline_mode = #tpu.pipeline_mode<synchronous>, transform_indices = @transform_11, window_bounds = array<i64: 2, 128, 112>}, {pipeline_mode = #tpu.pipeline_mode<synchronous>, transform_indices = @transform_12, window_bounds = array<i64: 3, 256, 224>}, {pipeline_mode = #tpu.pipeline_mode<synchronous>, transform_indices = @transform_13, window_bounds = array<i64: 1, 224>}, {pipeline_mode = #tpu.pipeline_mode<synchronous>, transform_indices = @transform_14, window_bounds = array<i64: 3, 224, 128>}, {pipeline_mode = #tpu.pipeline_mode<synchronous>, transform_indices = @transform_15, window_bounds = array<i64: 1, 128>}, {transform_indices = @transform_16, window_bounds = array<i64: 128, 128>}]} {
    %c0 = arith.constant 0 : index
    %c0_0 = arith.constant 0 : index
    %c0_1 = arith.constant 0 : index
    %c0_2 = arith.constant 0 : index
    %0 = vector.load %arg1[%c0, %c0_0, %c0_1, %c0_2] : memref<1x5x128x28xf32, #tpu.memory_space<vmem>>, vector<1x1x128x28xf32>
    %1 = vector.shape_cast %0 : vector<1x1x128x28xf32> to vector<128x28xf32>
    %c0_3 = arith.constant 0 : index
    %c1 = arith.constant 1 : index
    %c0_4 = arith.constant 0 : index
    %c0_5 = arith.constant 0 : index
    %2 = vector.load %arg1[%c0_3, %c1, %c0_4, %c0_5] : memref<1x5x128x28xf32, #tpu.memory_space<vmem>>, vector<1x1x128x28xf32>
    %3 = vector.shape_cast %2 : vector<1x1x128x28xf32> to vector<128x28xf32>
    %c0_6 = arith.constant 0 : index
    %c2 = arith.constant 2 : index
    %c0_7 = arith.constant 0 : index
    %c0_8 = arith.constant 0 : index
    %4 = vector.load %arg1[%c0_6, %c2, %c0_7, %c0_8] : memref<1x5x128x28xf32, #tpu.memory_space<vmem>>, vector<1x1x128x28xf32>
    %5 = vector.shape_cast %4 : vector<1x1x128x28xf32> to vector<128x28xf32>
    %c0_9 = arith.constant 0 : index
    %c3 = arith.constant 3 : index
    %c0_10 = arith.constant 0 : index
    %c0_11 = arith.constant 0 : index
    %6 = vector.load %arg1[%c0_9, %c3, %c0_10, %c0_11] : memref<1x5x128x28xf32, #tpu.memory_space<vmem>>, vector<1x1x128x28xf32>
    %7 = vector.shape_cast %6 : vector<1x1x128x28xf32> to vector<128x28xf32>
    %c0_12 = arith.constant 0 : index
    %c4 = arith.constant 4 : index
    %c0_13 = arith.constant 0 : index
    %c0_14 = arith.constant 0 : index
    %8 = vector.load %arg1[%c0_12, %c4, %c0_13, %c0_14] : memref<1x5x128x28xf32, #tpu.memory_space<vmem>>, vector<1x1x128x28xf32>
    %9 = vector.shape_cast %8 : vector<1x1x128x28xf32> to vector<128x28xf32>
    %c0_15 = arith.constant 0 : index
    %c0_16 = arith.constant 0 : index
    %10 = vector.load %arg3[%c0_15, %c0_16] : memref<1x224xf32, #tpu.memory_space<vmem>>, vector<1x224xf32>
    %c0_17 = arith.constant 0 : index
    %c0_18 = arith.constant 0 : index
    %c0_19 = arith.constant 0 : index
    %11 = vector.load %arg2[%c0_17, %c0_18, %c0_19] : memref<3x28x224xf32, #tpu.memory_space<vmem>>, vector<1x28x224xf32>
    %12 = vector.shape_cast %11 : vector<1x28x224xf32> to vector<28x224xf32>
    %cst = arith.constant dense<0.000000e+00> : vector<128x224xf32>
    %13 = tpu.matmul %1, %12, %cst {dimension_numbers = #tpu.dot_dimension_numbers<[1], [0], [0], [1], [0, 0, 1, 1], [], []>} : vector<128x28xf32>, vector<28x224xf32>, vector<128x224xf32> -> vector<128x224xf32>
    %c1_20 = arith.constant 1 : index
    %c0_21 = arith.constant 0 : index
    %c0_22 = arith.constant 0 : index
    %14 = vector.load %arg2[%c1_20, %c0_21, %c0_22] : memref<3x28x224xf32, #tpu.memory_space<vmem>>, vector<1x28x224xf32>
    %15 = vector.shape_cast %14 : vector<1x28x224xf32> to vector<28x224xf32>
    %cst_23 = arith.constant dense<0.000000e+00> : vector<128x224xf32>
    %16 = tpu.matmul %3, %15, %cst_23 {dimension_numbers = #tpu.dot_dimension_numbers<[1], [0], [0], [1], [0, 0, 1, 1], [], []>} : vector<128x28xf32>, vector<28x224xf32>, vector<128x224xf32> -> vector<128x224xf32>
    %17 = arith.addf %13, %16 : vector<128x224xf32>
    %c2_24 = arith.constant 2 : index
    %c0_25 = arith.constant 0 : index
    %c0_26 = arith.constant 0 : index
    %18 = vector.load %arg2[%c2_24, %c0_25, %c0_26] : memref<3x28x224xf32, #tpu.memory_space<vmem>>, vector<1x28x224xf32>
    %19 = vector.shape_cast %18 : vector<1x28x224xf32> to vector<28x224xf32>
    %cst_27 = arith.constant dense<0.000000e+00> : vector<128x224xf32>
    %20 = tpu.matmul %5, %19, %cst_27 {dimension_numbers = #tpu.dot_dimension_numbers<[1], [0], [0], [1], [0, 0, 1, 1], [], []>} : vector<128x28xf32>, vector<28x224xf32>, vector<128x224xf32> -> vector<128x224xf32>
    %21 = arith.addf %17, %20 : vector<128x224xf32>
    %22 = vector.broadcast %10 : vector<1x224xf32> to vector<128x224xf32>
    %23 = arith.addf %21, %22 : vector<128x224xf32>
    %cst_28 = arith.constant 0.000000e+00 : f32
    %24 = vector.broadcast %cst_28 : f32 to vector<128x224xf32>
    %25 = arith.maximumf %23, %24 : vector<128x224xf32>
    %c0_29 = arith.constant 0 : index
    %c0_30 = arith.constant 0 : index
    %c0_31 = arith.constant 0 : index
    %26 = vector.load %arg2[%c0_29, %c0_30, %c0_31] : memref<3x28x224xf32, #tpu.memory_space<vmem>>, vector<1x28x224xf32>
    %27 = vector.shape_cast %26 : vector<1x28x224xf32> to vector<28x224xf32>
    %cst_32 = arith.constant dense<0.000000e+00> : vector<128x224xf32>
    %28 = tpu.matmul %5, %27, %cst_32 {dimension_numbers = #tpu.dot_dimension_numbers<[1], [0], [0], [1], [0, 0, 1, 1], [], []>} : vector<128x28xf32>, vector<28x224xf32>, vector<128x224xf32> -> vector<128x224xf32>
    %c1_33 = arith.constant 1 : index
    %c0_34 = arith.constant 0 : index
    %c0_35 = arith.constant 0 : index
    %29 = vector.load %arg2[%c1_33, %c0_34, %c0_35] : memref<3x28x224xf32, #tpu.memory_space<vmem>>, vector<1x28x224xf32>
    %30 = vector.shape_cast %29 : vector<1x28x224xf32> to vector<28x224xf32>
    %cst_36 = arith.constant dense<0.000000e+00> : vector<128x224xf32>
    %31 = tpu.matmul %7, %30, %cst_36 {dimension_numbers = #tpu.dot_dimension_numbers<[1], [0], [0], [1], [0, 0, 1, 1], [], []>} : vector<128x28xf32>, vector<28x224xf32>, vector<128x224xf32> -> vector<128x224xf32>
    %32 = arith.addf %28, %31 : vector<128x224xf32>
    %c2_37 = arith.constant 2 : index
    %c0_38 = arith.constant 0 : index
    %c0_39 = arith.constant 0 : index
    %33 = vector.load %arg2[%c2_37, %c0_38, %c0_39] : memref<3x28x224xf32, #tpu.memory_space<vmem>>, vector<1x28x224xf32>
    %34 = vector.shape_cast %33 : vector<1x28x224xf32> to vector<28x224xf32>
    %cst_40 = arith.constant dense<0.000000e+00> : vector<128x224xf32>
    %35 = tpu.matmul %9, %34, %cst_40 {dimension_numbers = #tpu.dot_dimension_numbers<[1], [0], [0], [1], [0, 0, 1, 1], [], []>} : vector<128x28xf32>, vector<28x224xf32>, vector<128x224xf32> -> vector<128x224xf32>
    %36 = arith.addf %32, %35 : vector<128x224xf32>
    %37 = vector.broadcast %10 : vector<1x224xf32> to vector<128x224xf32>
    %38 = arith.addf %36, %37 : vector<128x224xf32>
    %cst_41 = arith.constant 0.000000e+00 : f32
    %39 = vector.broadcast %cst_41 : f32 to vector<128x224xf32>
    %40 = arith.maximumf %38, %39 : vector<128x224xf32>
    %c0_42 = arith.constant 0 : index
    %c0_43 = arith.constant 0 : index
    %c0_44 = arith.constant 0 : index
    %41 = vector.load %arg6[%c0_42, %c0_43, %c0_44] : memref<2x128x128xf32, #tpu.memory_space<vmem>>, vector<1x128x128xf32>
    %42 = vector.shape_cast %41 : vector<1x128x128xf32> to vector<128x128xf32>
    %cst_45 = arith.constant dense<0.000000e+00> : vector<128x224xf32>
    %43 = tpu.matmul %42, %40, %cst_45 {dimension_numbers = #tpu.dot_dimension_numbers<[1], [0], [0], [1], [0, 0, 1, 1], [], []>} : vector<128x128xf32>, vector<128x224xf32>, vector<128x224xf32> -> vector<128x224xf32>
    %c0_46 = arith.constant 0 : index
    %c0_47 = arith.constant 0 : index
    %c0_48 = arith.constant 0 : index
    %44 = vector.load %arg4[%c0_46, %c0_47, %c0_48] : memref<3x224x224xf32, #tpu.memory_space<vmem>>, vector<1x224x224xf32>
    %45 = vector.shape_cast %44 : vector<1x224x224xf32> to vector<224x224xf32>
    %cst_49 = arith.constant dense<0.000000e+00> : vector<128x224xf32>
    %46 = tpu.matmul %43, %45, %cst_49 {dimension_numbers = #tpu.dot_dimension_numbers<[1], [0], [0], [1], [0, 0, 1, 1], [], []>} : vector<128x224xf32>, vector<224x224xf32>, vector<128x224xf32> -> vector<128x224xf32>
    %c1_50 = arith.constant 1 : index
    %c0_51 = arith.constant 0 : index
    %c0_52 = arith.constant 0 : index
    %47 = vector.load %arg4[%c1_50, %c0_51, %c0_52] : memref<3x224x224xf32, #tpu.memory_space<vmem>>, vector<1x224x224xf32>
    %48 = vector.shape_cast %47 : vector<1x224x224xf32> to vector<224x224xf32>
    %cst_53 = arith.constant dense<0.000000e+00> : vector<128x224xf32>
    %49 = tpu.matmul %25, %48, %cst_53 {dimension_numbers = #tpu.dot_dimension_numbers<[1], [0], [0], [1], [0, 0, 1, 1], [], []>} : vector<128x224xf32>, vector<224x224xf32>, vector<128x224xf32> -> vector<128x224xf32>
    %50 = arith.addf %46, %49 : vector<128x224xf32>
    %c2_54 = arith.constant 2 : index
    %c0_55 = arith.constant 0 : index
    %c0_56 = arith.constant 0 : index
    %51 = vector.load %arg4[%c2_54, %c0_55, %c0_56] : memref<3x224x224xf32, #tpu.memory_space<vmem>>, vector<1x224x224xf32>
    %52 = vector.shape_cast %51 : vector<1x224x224xf32> to vector<224x224xf32>
    %cst_57 = arith.constant dense<0.000000e+00> : vector<128x224xf32>
    %53 = tpu.matmul %40, %52, %cst_57 {dimension_numbers = #tpu.dot_dimension_numbers<[1], [0], [0], [1], [0, 0, 1, 1], [], []>} : vector<128x224xf32>, vector<224x224xf32>, vector<128x224xf32> -> vector<128x224xf32>
    %54 = arith.addf %50, %53 : vector<128x224xf32>
    %c0_58 = arith.constant 0 : index
    %c0_59 = arith.constant 0 : index
    %55 = vector.load %arg5[%c0_58, %c0_59] : memref<1x224xf32, #tpu.memory_space<vmem>>, vector<1x224xf32>
    %56 = vector.broadcast %55 : vector<1x224xf32> to vector<128x224xf32>
    %57 = arith.addf %54, %56 : vector<128x224xf32>
    %cst_60 = arith.constant 0.000000e+00 : f32
    %58 = vector.broadcast %cst_60 : f32 to vector<128x224xf32>
    %59 = arith.maximumf %57, %58 : vector<128x224xf32>
    %c0_61 = arith.constant 0 : index
    %c0_62 = arith.constant 0 : index
    %60 = vector.load %arg7[%c0_61, %c0_62] : memref<112x128xf32, #tpu.memory_space<vmem>>, vector<112x128xf32>
    %cst_63 = arith.constant dense<0.000000e+00> : vector<112x224xf32>
    %61 = tpu.matmul %60, %59, %cst_63 {dimension_numbers = #tpu.dot_dimension_numbers<[1], [0], [0], [1], [0, 0, 1, 1], [], []>} : vector<112x128xf32>, vector<128x224xf32>, vector<112x224xf32> -> vector<112x224xf32>
    %c0_64 = arith.constant 0 : index
    %c0_65 = arith.constant 0 : index
    %62 = vector.load %arg9[%c0_64, %c0_65] : memref<1x64xf32, #tpu.memory_space<vmem>>, vector<1x64xf32>
    %63 = vector.extract_strided_slice %61 {offsets = [0, 0], sizes = [16, 224], strides = [1, 1]} : vector<112x224xf32> to vector<16x224xf32>
    %c0_66 = arith.constant 0 : index
    %c0_67 = arith.constant 0 : index
    %c0_68 = arith.constant 0 : index
    %64 = vector.load %arg8[%c0_66, %c0_67, %c0_68] : memref<7x224x64xf32, #tpu.memory_space<vmem>>, vector<1x224x64xf32>
    %65 = vector.shape_cast %64 : vector<1x224x64xf32> to vector<224x64xf32>
    %cst_69 = arith.constant dense<0.000000e+00> : vector<16x64xf32>
    %66 = tpu.matmul %63, %65, %cst_69 {dimension_numbers = #tpu.dot_dimension_numbers<[1], [0], [0], [1], [0, 0, 1, 1], [], []>} : vector<16x224xf32>, vector<224x64xf32>, vector<16x64xf32> -> vector<16x64xf32>
    %67 = vector.broadcast %62 : vector<1x64xf32> to vector<16x64xf32>
    %68 = arith.addf %67, %66 : vector<16x64xf32>
    %69 = vector.extract_strided_slice %61 {offsets = [16, 0], sizes = [16, 224], strides = [1, 1]} : vector<112x224xf32> to vector<16x224xf32>
    %c1_70 = arith.constant 1 : index
    %c0_71 = arith.constant 0 : index
    %c0_72 = arith.constant 0 : index
    %70 = vector.load %arg8[%c1_70, %c0_71, %c0_72] : memref<7x224x64xf32, #tpu.memory_space<vmem>>, vector<1x224x64xf32>
    %71 = vector.shape_cast %70 : vector<1x224x64xf32> to vector<224x64xf32>
    %cst_73 = arith.constant dense<0.000000e+00> : vector<16x64xf32>
    %72 = tpu.matmul %69, %71, %cst_73 {dimension_numbers = #tpu.dot_dimension_numbers<[1], [0], [0], [1], [0, 0, 1, 1], [], []>} : vector<16x224xf32>, vector<224x64xf32>, vector<16x64xf32> -> vector<16x64xf32>
    %73 = arith.addf %68, %72 : vector<16x64xf32>
    %74 = vector.extract_strided_slice %61 {offsets = [32, 0], sizes = [16, 224], strides = [1, 1]} : vector<112x224xf32> to vector<16x224xf32>
    %c2_74 = arith.constant 2 : index
    %c0_75 = arith.constant 0 : index
    %c0_76 = arith.constant 0 : index
    %75 = vector.load %arg8[%c2_74, %c0_75, %c0_76] : memref<7x224x64xf32, #tpu.memory_space<vmem>>, vector<1x224x64xf32>
    %76 = vector.shape_cast %75 : vector<1x224x64xf32> to vector<224x64xf32>
    %cst_77 = arith.constant dense<0.000000e+00> : vector<16x64xf32>
    %77 = tpu.matmul %74, %76, %cst_77 {dimension_numbers = #tpu.dot_dimension_numbers<[1], [0], [0], [1], [0, 0, 1, 1], [], []>} : vector<16x224xf32>, vector<224x64xf32>, vector<16x64xf32> -> vector<16x64xf32>
    %78 = arith.addf %73, %77 : vector<16x64xf32>
    %79 = vector.extract_strided_slice %61 {offsets = [48, 0], sizes = [16, 224], strides = [1, 1]} : vector<112x224xf32> to vector<16x224xf32>
    %c3_78 = arith.constant 3 : index
    %c0_79 = arith.constant 0 : index
    %c0_80 = arith.constant 0 : index
    %80 = vector.load %arg8[%c3_78, %c0_79, %c0_80] : memref<7x224x64xf32, #tpu.memory_space<vmem>>, vector<1x224x64xf32>
    %81 = vector.shape_cast %80 : vector<1x224x64xf32> to vector<224x64xf32>
    %cst_81 = arith.constant dense<0.000000e+00> : vector<16x64xf32>
    %82 = tpu.matmul %79, %81, %cst_81 {dimension_numbers = #tpu.dot_dimension_numbers<[1], [0], [0], [1], [0, 0, 1, 1], [], []>} : vector<16x224xf32>, vector<224x64xf32>, vector<16x64xf32> -> vector<16x64xf32>
    %83 = arith.addf %78, %82 : vector<16x64xf32>
    %84 = vector.extract_strided_slice %61 {offsets = [64, 0], sizes = [16, 224], strides = [1, 1]} : vector<112x224xf32> to vector<16x224xf32>
    %c4_82 = arith.constant 4 : index
    %c0_83 = arith.constant 0 : index
    %c0_84 = arith.constant 0 : index
    %85 = vector.load %arg8[%c4_82, %c0_83, %c0_84] : memref<7x224x64xf32, #tpu.memory_space<vmem>>, vector<1x224x64xf32>
    %86 = vector.shape_cast %85 : vector<1x224x64xf32> to vector<224x64xf32>
    %cst_85 = arith.constant dense<0.000000e+00> : vector<16x64xf32>
    %87 = tpu.matmul %84, %86, %cst_85 {dimension_numbers = #tpu.dot_dimension_numbers<[1], [0], [0], [1], [0, 0, 1, 1], [], []>} : vector<16x224xf32>, vector<224x64xf32>, vector<16x64xf32> -> vector<16x64xf32>
    %88 = arith.addf %83, %87 : vector<16x64xf32>
    %89 = vector.extract_strided_slice %61 {offsets = [80, 0], sizes = [16, 224], strides = [1, 1]} : vector<112x224xf32> to vector<16x224xf32>
    %c5 = arith.constant 5 : index
    %c0_86 = arith.constant 0 : index
    %c0_87 = arith.constant 0 : index
    %90 = vector.load %arg8[%c5, %c0_86, %c0_87] : memref<7x224x64xf32, #tpu.memory_space<vmem>>, vector<1x224x64xf32>
    %91 = vector.shape_cast %90 : vector<1x224x64xf32> to vector<224x64xf32>
    %cst_88 = arith.constant dense<0.000000e+00> : vector<16x64xf32>
    %92 = tpu.matmul %89, %91, %cst_88 {dimension_numbers = #tpu.dot_dimension_numbers<[1], [0], [0], [1], [0, 0, 1, 1], [], []>} : vector<16x224xf32>, vector<224x64xf32>, vector<16x64xf32> -> vector<16x64xf32>
    %93 = arith.addf %88, %92 : vector<16x64xf32>
    %94 = vector.extract_strided_slice %61 {offsets = [96, 0], sizes = [16, 224], strides = [1, 1]} : vector<112x224xf32> to vector<16x224xf32>
    %c6 = arith.constant 6 : index
    %c0_89 = arith.constant 0 : index
    %c0_90 = arith.constant 0 : index
    %95 = vector.load %arg8[%c6, %c0_89, %c0_90] : memref<7x224x64xf32, #tpu.memory_space<vmem>>, vector<1x224x64xf32>
    %96 = vector.shape_cast %95 : vector<1x224x64xf32> to vector<224x64xf32>
    %cst_91 = arith.constant dense<0.000000e+00> : vector<16x64xf32>
    %97 = tpu.matmul %94, %96, %cst_91 {dimension_numbers = #tpu.dot_dimension_numbers<[1], [0], [0], [1], [0, 0, 1, 1], [], []>} : vector<16x224xf32>, vector<224x64xf32>, vector<16x64xf32> -> vector<16x64xf32>
    %98 = arith.addf %93, %97 : vector<16x64xf32>
    %c0_92 = arith.constant 0 : index
    %c0_93 = arith.constant 0 : index
    %99 = vector.load %arg10[%c0_92, %c0_93] : memref<64x1792xf32, #tpu.memory_space<vmem>>, vector<64x1792xf32>
    %cst_94 = arith.constant dense<0.000000e+00> : vector<16x1792xf32>
    %100 = tpu.matmul %98, %99, %cst_94 {dimension_numbers = #tpu.dot_dimension_numbers<[1], [0], [0], [1], [0, 0, 1, 1], [], []>} : vector<16x64xf32>, vector<64x1792xf32>, vector<16x1792xf32> -> vector<16x1792xf32>
    %c0_95 = arith.constant 0 : index
    %c0_96 = arith.constant 0 : index
    %101 = vector.load %arg11[%c0_95, %c0_96] : memref<1x1792xf32, #tpu.memory_space<vmem>>, vector<1x1792xf32>
    %102 = vector.broadcast %101 : vector<1x1792xf32> to vector<16x1792xf32>
    %103 = arith.addf %100, %102 : vector<16x1792xf32>
    %cst_97 = arith.constant 0.000000e+00 : f32
    %104 = vector.broadcast %cst_97 : f32 to vector<16x1792xf32>
    %105 = arith.maximumf %103, %104 : vector<16x1792xf32>
    %106 = vector.extract_strided_slice %105 {offsets = [0, 0], sizes = [16, 256], strides = [1, 1]} : vector<16x1792xf32> to vector<16x256xf32>
    %107 = vector.extract_strided_slice %105 {offsets = [0, 256], sizes = [16, 256], strides = [1, 1]} : vector<16x1792xf32> to vector<16x256xf32>
    %108 = vector.extract_strided_slice %105 {offsets = [0, 512], sizes = [16, 256], strides = [1, 1]} : vector<16x1792xf32> to vector<16x256xf32>
    %109 = vector.extract_strided_slice %105 {offsets = [0, 768], sizes = [16, 256], strides = [1, 1]} : vector<16x1792xf32> to vector<16x256xf32>
    %110 = vector.extract_strided_slice %105 {offsets = [0, 1024], sizes = [16, 256], strides = [1, 1]} : vector<16x1792xf32> to vector<16x256xf32>
    %111 = vector.extract_strided_slice %105 {offsets = [0, 1280], sizes = [16, 256], strides = [1, 1]} : vector<16x1792xf32> to vector<16x256xf32>
    %112 = vector.extract_strided_slice %105 {offsets = [0, 1536], sizes = [16, 256], strides = [1, 1]} : vector<16x1792xf32> to vector<16x256xf32>
    %113 = tpu.concatenate %106, %107, %108, %109, %110, %111, %112 in 0 : vector<16x256xf32>, vector<16x256xf32>, vector<16x256xf32>, vector<16x256xf32>, vector<16x256xf32>, vector<16x256xf32>, vector<16x256xf32> -> vector<112x256xf32>
    %c0_98 = arith.constant 0 : index
    %c0_99 = arith.constant 0 : index
    %c0_100 = arith.constant 0 : index
    %114 = vector.load %arg12[%c0_98, %c0_99, %c0_100] : memref<2x128x112xf32, #tpu.memory_space<vmem>>, vector<1x128x112xf32>
    %115 = vector.shape_cast %114 : vector<1x128x112xf32> to vector<128x112xf32>
    %cst_101 = arith.constant dense<0.000000e+00> : vector<128x256xf32>
    %116 = tpu.matmul %115, %113, %cst_101 {dimension_numbers = #tpu.dot_dimension_numbers<[1], [0], [0], [1], [0, 0, 1, 1], [], []>} : vector<128x112xf32>, vector<112x256xf32>, vector<128x256xf32> -> vector<128x256xf32>
    %c1_102 = arith.constant 1 : index
    %c0_103 = arith.constant 0 : index
    %c0_104 = arith.constant 0 : index
    %117 = vector.load %arg12[%c1_102, %c0_103, %c0_104] : memref<2x128x112xf32, #tpu.memory_space<vmem>>, vector<1x128x112xf32>
    %118 = vector.shape_cast %117 : vector<1x128x112xf32> to vector<128x112xf32>
    %cst_105 = arith.constant dense<0.000000e+00> : vector<128x256xf32>
    %119 = tpu.matmul %118, %113, %cst_105 {dimension_numbers = #tpu.dot_dimension_numbers<[1], [0], [0], [1], [0, 0, 1, 1], [], []>} : vector<128x112xf32>, vector<112x256xf32>, vector<128x256xf32> -> vector<128x256xf32>
    %c0_106 = arith.constant 0 : index
    %c0_107 = arith.constant 0 : index
    %120 = vector.load %arg14[%c0_106, %c0_107] : memref<1x224xf32, #tpu.memory_space<vmem>>, vector<1x224xf32>
    %c1_108 = arith.constant 1 : index
    %c0_109 = arith.constant 0 : index
    %c0_110 = arith.constant 0 : index
    %121 = vector.load %arg13[%c1_108, %c0_109, %c0_110] : memref<3x256x224xf32, #tpu.memory_space<vmem>>, vector<1x256x224xf32>
    %122 = vector.shape_cast %121 : vector<1x256x224xf32> to vector<256x224xf32>
    %cst_111 = arith.constant dense<0.000000e+00> : vector<128x224xf32>
    %123 = tpu.matmul %116, %122, %cst_111 {dimension_numbers = #tpu.dot_dimension_numbers<[1], [0], [0], [1], [0, 0, 1, 1], [], []>} : vector<128x256xf32>, vector<256x224xf32>, vector<128x224xf32> -> vector<128x224xf32>
    %124 = vector.broadcast %120 : vector<1x224xf32> to vector<128x224xf32>
    %125 = arith.addf %123, %124 : vector<128x224xf32>
    %cst_112 = arith.constant 0.000000e+00 : f32
    %126 = vector.broadcast %cst_112 : f32 to vector<128x224xf32>
    %127 = arith.maximumf %125, %126 : vector<128x224xf32>
    %c2_113 = arith.constant 2 : index
    %c0_114 = arith.constant 0 : index
    %c0_115 = arith.constant 0 : index
    %128 = vector.load %arg13[%c2_113, %c0_114, %c0_115] : memref<3x256x224xf32, #tpu.memory_space<vmem>>, vector<1x256x224xf32>
    %129 = vector.shape_cast %128 : vector<1x256x224xf32> to vector<256x224xf32>
    %cst_116 = arith.constant dense<0.000000e+00> : vector<128x224xf32>
    %130 = tpu.matmul %116, %129, %cst_116 {dimension_numbers = #tpu.dot_dimension_numbers<[1], [0], [0], [1], [0, 0, 1, 1], [], []>} : vector<128x256xf32>, vector<256x224xf32>, vector<128x224xf32> -> vector<128x224xf32>
    %c0_117 = arith.constant 0 : index
    %c0_118 = arith.constant 0 : index
    %c0_119 = arith.constant 0 : index
    %131 = vector.load %arg13[%c0_117, %c0_118, %c0_119] : memref<3x256x224xf32, #tpu.memory_space<vmem>>, vector<1x256x224xf32>
    %132 = vector.shape_cast %131 : vector<1x256x224xf32> to vector<256x224xf32>
    %cst_120 = arith.constant dense<0.000000e+00> : vector<128x224xf32>
    %133 = tpu.matmul %119, %132, %cst_120 {dimension_numbers = #tpu.dot_dimension_numbers<[1], [0], [0], [1], [0, 0, 1, 1], [], []>} : vector<128x256xf32>, vector<256x224xf32>, vector<128x224xf32> -> vector<128x224xf32>
    %134 = arith.addf %130, %133 : vector<128x224xf32>
    %135 = vector.broadcast %120 : vector<1x224xf32> to vector<128x224xf32>
    %136 = arith.addf %134, %135 : vector<128x224xf32>
    %cst_121 = arith.constant 0.000000e+00 : f32
    %137 = vector.broadcast %cst_121 : f32 to vector<128x224xf32>
    %138 = arith.maximumf %136, %137 : vector<128x224xf32>
    %c1_122 = arith.constant 1 : index
    %c0_123 = arith.constant 0 : index
    %c0_124 = arith.constant 0 : index
    %139 = vector.load %arg6[%c1_122, %c0_123, %c0_124] : memref<2x128x128xf32, #tpu.memory_space<vmem>>, vector<1x128x128xf32>
    %140 = vector.shape_cast %139 : vector<1x128x128xf32> to vector<128x128xf32>
    %cst_125 = arith.constant dense<0.000000e+00> : vector<128x224xf32>
    %141 = tpu.matmul %140, %127, %cst_125 {dimension_numbers = #tpu.dot_dimension_numbers<[1], [0], [0], [1], [0, 0, 1, 1], [], []>} : vector<128x128xf32>, vector<128x224xf32>, vector<128x224xf32> -> vector<128x224xf32>
    %c0_126 = arith.constant 0 : index
    %c0_127 = arith.constant 0 : index
    %c0_128 = arith.constant 0 : index
    %142 = vector.load %arg15[%c0_126, %c0_127, %c0_128] : memref<3x224x128xf32, #tpu.memory_space<vmem>>, vector<1x224x128xf32>
    %143 = vector.shape_cast %142 : vector<1x224x128xf32> to vector<224x128xf32>
    %cst_129 = arith.constant dense<0.000000e+00> : vector<128x128xf32>
    %144 = tpu.matmul %127, %143, %cst_129 {dimension_numbers = #tpu.dot_dimension_numbers<[1], [0], [0], [1], [0, 0, 1, 1], [], []>} : vector<128x224xf32>, vector<224x128xf32>, vector<128x128xf32> -> vector<128x128xf32>
    %c1_130 = arith.constant 1 : index
    %c0_131 = arith.constant 0 : index
    %c0_132 = arith.constant 0 : index
    %145 = vector.load %arg15[%c1_130, %c0_131, %c0_132] : memref<3x224x128xf32, #tpu.memory_space<vmem>>, vector<1x224x128xf32>
    %146 = vector.shape_cast %145 : vector<1x224x128xf32> to vector<224x128xf32>
    %cst_133 = arith.constant dense<0.000000e+00> : vector<128x128xf32>
    %147 = tpu.matmul %138, %146, %cst_133 {dimension_numbers = #tpu.dot_dimension_numbers<[1], [0], [0], [1], [0, 0, 1, 1], [], []>} : vector<128x224xf32>, vector<224x128xf32>, vector<128x128xf32> -> vector<128x128xf32>
    %148 = arith.addf %144, %147 : vector<128x128xf32>
    %c2_134 = arith.constant 2 : index
    %c0_135 = arith.constant 0 : index
    %c0_136 = arith.constant 0 : index
    %149 = vector.load %arg15[%c2_134, %c0_135, %c0_136] : memref<3x224x128xf32, #tpu.memory_space<vmem>>, vector<1x224x128xf32>
    %150 = vector.shape_cast %149 : vector<1x224x128xf32> to vector<224x128xf32>
    %cst_137 = arith.constant dense<0.000000e+00> : vector<128x128xf32>
    %151 = tpu.matmul %141, %150, %cst_137 {dimension_numbers = #tpu.dot_dimension_numbers<[1], [0], [0], [1], [0, 0, 1, 1], [], []>} : vector<128x224xf32>, vector<224x128xf32>, vector<128x128xf32> -> vector<128x128xf32>
    %152 = arith.addf %148, %151 : vector<128x128xf32>
    %c0_138 = arith.constant 0 : index
    %c0_139 = arith.constant 0 : index
    %153 = vector.load %arg16[%c0_138, %c0_139] : memref<1x128xf32, #tpu.memory_space<vmem>>, vector<1x128xf32>
    %154 = vector.broadcast %153 : vector<1x128xf32> to vector<128x128xf32>
    %155 = arith.addf %152, %154 : vector<128x128xf32>
    %cst_140 = arith.constant 0.000000e+00 : f32
    %156 = vector.broadcast %cst_140 : f32 to vector<128x128xf32>
    %157 = arith.subf %156, %155 : vector<128x128xf32>
    %158 = math.exp %157 : vector<128x128xf32>
    %cst_141 = arith.constant 1.000000e+00 : f32
    %159 = vector.broadcast %cst_141 : f32 to vector<128x128xf32>
    %160 = arith.addf %159, %158 : vector<128x128xf32>
    %cst_142 = arith.constant 1.000000e+00 : f32
    %161 = vector.broadcast %cst_142 : f32 to vector<128x128xf32>
    %162 = arith.divf %161, %160 : vector<128x128xf32>
    %c0_143 = arith.constant 0 : index
    %c0_144 = arith.constant 0 : index
    %163 = vector.load %arg17[%c0_143, %c0_144] : memref<128x128xf32, #tpu.memory_space<vmem>>, vector<128x128xf32>
    tpu.vector_store %arg17[%c0_143, %c0_144], %162 {strides = array<i32>} : memref<128x128xf32, #tpu.memory_space<vmem>>, vector<128x128xf32>,
    return
  }
  func.func @transform_0(%arg0: i32) -> (i32, i32, i32, i32) {
    %c0_i32 = arith.constant 0 : i32
    %c0_i32_0 = arith.constant 0 : i32
    %c0_i32_1 = arith.constant 0 : i32
    %c0_i32_2 = arith.constant 0 : i32
    return %arg0, %c0_i32, %c0_i32_0, %c0_i32_1 : i32, i32, i32, i32
  }
  func.func @transform_1(%arg0: i32) -> (i32, i32, i32) {
    %c0_i32 = arith.constant 0 : i32
    %c0_i32_0 = arith.constant 0 : i32
    %c0_i32_1 = arith.constant 0 : i32
    %c0_i32_2 = arith.constant 0 : i32
    return %c0_i32, %c0_i32_0, %c0_i32_1 : i32, i32, i32
  }
  func.func @transform_2(%arg0: i32) -> (i32, i32) {
    %c0_i32 = arith.constant 0 : i32
    %c0_i32_0 = arith.constant 0 : i32
    %c0_i32_1 = arith.constant 0 : i32
    return %c0_i32, %c0_i32_0 : i32, i32
  }
  func.func @transform_3(%arg0: i32) -> (i32, i32, i32) {
    %c0_i32 = arith.constant 0 : i32
    %c0_i32_0 = arith.constant 0 : i32
    %c0_i32_1 = arith.constant 0 : i32
    %c0_i32_2 = arith.constant 0 : i32
    return %c0_i32, %c0_i32_0, %c0_i32_1 : i32, i32, i32
  }
  func.func @transform_4(%arg0: i32) -> (i32, i32) {
    %c0_i32 = arith.constant 0 : i32
    %c0_i32_0 = arith.constant 0 : i32
    %c0_i32_1 = arith.constant 0 : i32
    return %c0_i32, %c0_i32_0 : i32, i32
  }
  func.func @transform_5(%arg0: i32) -> (i32, i32, i32) {
    %c0_i32 = arith.constant 0 : i32
    %c0_i32_0 = arith.constant 0 : i32
    %c0_i32_1 = arith.constant 0 : i32
    %c0_i32_2 = arith.constant 0 : i32
    return %c0_i32, %c0_i32_0, %c0_i32_1 : i32, i32, i32
  }
  func.func @transform_6(%arg0: i32) -> (i32, i32) {
    %c0_i32 = arith.constant 0 : i32
    %c0_i32_0 = arith.constant 0 : i32
    %c0_i32_1 = arith.constant 0 : i32
    return %c0_i32, %c0_i32_0 : i32, i32
  }
  func.func @transform_7(%arg0: i32) -> (i32, i32, i32) {
    %c0_i32 = arith.constant 0 : i32
    %c0_i32_0 = arith.constant 0 : i32
    %c0_i32_1 = arith.constant 0 : i32
    %c0_i32_2 = arith.constant 0 : i32
    return %c0_i32, %c0_i32_0, %c0_i32_1 : i32, i32, i32
  }
  func.func @transform_8(%arg0: i32) -> (i32, i32) {
    %c0_i32 = arith.constant 0 : i32
    %c0_i32_0 = arith.constant 0 : i32
    %c0_i32_1 = arith.constant 0 : i32
    return %c0_i32, %c0_i32_0 : i32, i32
  }
  func.func @transform_9(%arg0: i32) -> (i32, i32) {
    %c0_i32 = arith.constant 0 : i32
    %c0_i32_0 = arith.constant 0 : i32
    %c0_i32_1 = arith.constant 0 : i32
    return %c0_i32, %c0_i32_0 : i32, i32
  }
  func.func @transform_10(%arg0: i32) -> (i32, i32) {
    %c0_i32 = arith.constant 0 : i32
    %c0_i32_0 = arith.constant 0 : i32
    %c0_i32_1 = arith.constant 0 : i32
    return %c0_i32, %c0_i32_0 : i32, i32
  }
  func.func @transform_11(%arg0: i32) -> (i32, i32, i32) {
    %c0_i32 = arith.constant 0 : i32
    %c0_i32_0 = arith.constant 0 : i32
    %c0_i32_1 = arith.constant 0 : i32
    %c0_i32_2 = arith.constant 0 : i32
    return %c0_i32, %c0_i32_0, %c0_i32_1 : i32, i32, i32
  }
  func.func @transform_12(%arg0: i32) -> (i32, i32, i32) {
    %c0_i32 = arith.constant 0 : i32
    %c0_i32_0 = arith.constant 0 : i32
    %c0_i32_1 = arith.constant 0 : i32
    %c0_i32_2 = arith.constant 0 : i32
    return %c0_i32, %c0_i32_0, %c0_i32_1 : i32, i32, i32
  }
  func.func @transform_13(%arg0: i32) -> (i32, i32) {
    %c0_i32 = arith.constant 0 : i32
    %c0_i32_0 = arith.constant 0 : i32
    %c0_i32_1 = arith.constant 0 : i32
    return %c0_i32, %c0_i32_0 : i32, i32
  }
  func.func @transform_14(%arg0: i32) -> (i32, i32, i32) {
    %c0_i32 = arith.constant 0 : i32
    %c0_i32_0 = arith.constant 0 : i32
    %c0_i32_1 = arith.constant 0 : i32
    %c0_i32_2 = arith.constant 0 : i32
    return %c0_i32, %c0_i32_0, %c0_i32_1 : i32, i32, i32
  }
  func.func @transform_15(%arg0: i32) -> (i32, i32) {
    %c0_i32 = arith.constant 0 : i32
    %c0_i32_0 = arith.constant 0 : i32
    %c0_i32_1 = arith.constant 0 : i32
    return %c0_i32, %c0_i32_0 : i32, i32
  }
  func.func @transform_16(%arg0: i32) -> (i32, i32) {
    %c0_i32 = arith.constant 0 : i32
    %c0_i32_0 = arith.constant 0 : i32
    return %arg0, %c0_i32 : i32, i32
  }
}

</mosaic_0001>

<llo_original>
// kernel: autoencoder_forward.1
$region0: #{autoencoder_forward.1}
  #allocation0 [shape = 'u32[]', space=smem, size = 0x4, offset = 0x4, fixed_abs, tag = 'smem constant byte address 0x4 - core index']
  #allocation1 [shape = 'u32[144,128]{1,0:T(1,128)}', space=vmem, size = 0x12000, scoped, tag = 'internal scratch']
  %s0 = inlined_call_operand.vmem [shape: f32[1,5,128,28], index: 0, kind: input, shape index: {}]
  %s1 = inlined_call_operand.vmem [shape: f32[3,28,224], index: 1, kind: input, shape index: {}]
  %s2 = inlined_call_operand.vmem [shape: f32[1,224], index: 2, kind: input, shape index: {}]
  %s3 = inlined_call_operand.vmem [shape: f32[3,224,224], index: 3, kind: input, shape index: {}]
  %s4 = inlined_call_operand.vmem [shape: f32[1,224], index: 4, kind: input, shape index: {}]
  %s5 = inlined_call_operand.vmem [shape: f32[2,128,128], index: 5, kind: input, shape index: {}]
  %s6 = inlined_call_operand.vmem [shape: f32[112,128], index: 6, kind: input, shape index: {}]
  %s7 = inlined_call_operand.vmem [shape: f32[7,224,64], index: 7, kind: input, shape index: {}]
  %s8 = inlined_call_operand.vmem [shape: f32[1,64], index: 8, kind: input, shape index: {}]
  %s9 = inlined_call_operand.vmem [shape: f32[64,1792], index: 9, kind: input, shape index: {}]
  %s10 = inlined_call_operand.vmem [shape: f32[1,1792], index: 10, kind: input, shape index: {}]
  %s11 = inlined_call_operand.vmem [shape: f32[2,128,112], index: 11, kind: input, shape index: {}]
  %s12 = inlined_call_operand.vmem [shape: f32[3,256,224], index: 12, kind: input, shape index: {}]
  %s13 = inlined_call_operand.vmem [shape: f32[1,224], index: 13, kind: input, shape index: {}]
  %s14 = inlined_call_operand.vmem [shape: f32[3,224,128], index: 14, kind: input, shape index: {}]
  %s15 = inlined_call_operand.vmem [shape: f32[1,128], index: 15, kind: input, shape index: {}]
  %s16 = inlined_call_operand.vmem [shape: f32[128,128], index: 16, kind: output, shape index: {}]
  %s17 = sld [smem:[#allocation0]]
  $region74: #{autoencoder_forward.1} parent=0
    _
  %s19 = ssub.s32 1, %s17
  %s20 = scalar_select 0, %s19, %s17
  // Predicated region
  $region2: #{autoencoder_forward.1} parent=0 // pred_check
    _
  $region3: #{autoencoder_forward.1} parent=0 // pred_check_branch
    %22 = sbr.rel (0) target = $region5
  $region4: #{autoencoder_forward.1} parent=0 // pred_region
    _
  $region5: #{autoencoder_forward.1} parent=0 // pred_fallthru
    _
  // Predicated region
  $region6: #{autoencoder_forward.1} parent=0 // pred_check
    _
  $region7: #{autoencoder_forward.1} parent=0 // pred_check_branch
    %24 = sbr.rel (0) target = $region9
  $region8: #{autoencoder_forward.1} parent=0 // pred_region
    _
  $region9: #{autoencoder_forward.1} parent=0 // pred_fallthru
    _
  // Predicated region
  $region10: #{autoencoder_forward.1} parent=0 // pred_check
    _
  $region11: #{autoencoder_forward.1} parent=0 // pred_check_branch
    %26 = sbr.rel (0) target = $region13
  $region12: #{autoencoder_forward.1} parent=0 // pred_region
    _
  $region13: #{autoencoder_forward.1} parent=0 // pred_fallthru
    _
  // Predicated region
  $region14: #{autoencoder_forward.1} parent=0 // pred_check
    _
  $region15: #{autoencoder_forward.1} parent=0 // pred_check_branch
    %28 = sbr.rel (0) target = $region17
  $region16: #{autoencoder_forward.1} parent=0 // pred_region
    _
  $region17: #{autoencoder_forward.1} parent=0 // pred_fallthru
    _
  // Predicated region
  $region18: #{autoencoder_forward.1} parent=0 // pred_check
    _
  $region19: #{autoencoder_forward.1} parent=0 // pred_check_branch
    %30 = sbr.rel (0) target = $region21
  $region20: #{autoencoder_forward.1} parent=0 // pred_region
    _
  $region21: #{autoencoder_forward.1} parent=0 // pred_fallthru
    _
  // Predicated region
  $region22: #{autoencoder_forward.1} parent=0 // pred_check
    _
  $region23: #{autoencoder_forward.1} parent=0 // pred_check_branch
    %32 = sbr.rel (0) target = $region25
  $region24: #{autoencoder_forward.1} parent=0 // pred_region
    _
  $region25: #{autoencoder_forward.1} parent=0 // pred_fallthru
    _
  // Predicated region
  $region26: #{autoencoder_forward.1} parent=0 // pred_check
    _
  $region27: #{autoencoder_forward.1} parent=0 // pred_check_branch
    %34 = sbr.rel (0) target = $region29
  $region28: #{autoencoder_forward.1} parent=0 // pred_region
    _
  $region29: #{autoencoder_forward.1} parent=0 // pred_fallthru
    _
  // Predicated region
  $region30: #{autoencoder_forward.1} parent=0 // pred_check
    _
  $region31: #{autoencoder_forward.1} parent=0 // pred_check_branch
    %36 = sbr.rel (0) target = $region33
  $region32: #{autoencoder_forward.1} parent=0 // pred_region
    _
  $region33: #{autoencoder_forward.1} parent=0 // pred_fallthru
    _
  // Predicated region
  $region34: #{autoencoder_forward.1} parent=0 // pred_check
    _
  $region35: #{autoencoder_forward.1} parent=0 // pred_check_branch
    %38 = sbr.rel (0) target = $region37
  $region36: #{autoencoder_forward.1} parent=0 // pred_region
    _
  $region37: #{autoencoder_forward.1} parent=0 // pred_fallthru
    _
  // Predicated region
  $region38: #{autoencoder_forward.1} parent=0 // pred_check
    _
  $region39: #{autoencoder_forward.1} parent=0 // pred_check_branch
    %40 = sbr.rel (0) target = $region41
  $region40: #{autoencoder_forward.1} parent=0 // pred_region
    _
  $region41: #{autoencoder_forward.1} parent=0 // pred_fallthru
    _
  // Predicated region
  $region42: #{autoencoder_forward.1} parent=0 // pred_check
    _
  $region43: #{autoencoder_forward.1} parent=0 // pred_check_branch
    %42 = sbr.rel (0) target = $region45
  $region44: #{autoencoder_forward.1} parent=0 // pred_region
    _
  $region45: #{autoencoder_forward.1} parent=0 // pred_fallthru
    _
  // Predicated region
  $region46: #{autoencoder_forward.1} parent=0 // pred_check
    _
  $region47: #{autoencoder_forward.1} parent=0 // pred_check_branch
    %44 = sbr.rel (0) target = $region49
  $region48: #{autoencoder_forward.1} parent=0 // pred_region
    _
  $region49: #{autoencoder_forward.1} parent=0 // pred_fallthru
    _
  // Predicated region
  $region50: #{autoencoder_forward.1} parent=0 // pred_check
    _
  $region51: #{autoencoder_forward.1} parent=0 // pred_check_branch
    %46 = sbr.rel (0) target = $region53
  $region52: #{autoencoder_forward.1} parent=0 // pred_region
    _
  $region53: #{autoencoder_forward.1} parent=0 // pred_fallthru
    _
  // Predicated region
  $region54: #{autoencoder_forward.1} parent=0 // pred_check
    _
  $region55: #{autoencoder_forward.1} parent=0 // pred_check_branch
    %48 = sbr.rel (0) target = $region57
  $region56: #{autoencoder_forward.1} parent=0 // pred_region
    _
  $region57: #{autoencoder_forward.1} parent=0 // pred_fallthru
    _
  // Predicated region
  $region58: #{autoencoder_forward.1} parent=0 // pred_check
    _
  $region59: #{autoencoder_forward.1} parent=0 // pred_check_branch
    %50 = sbr.rel (0) target = $region61
  $region60: #{autoencoder_forward.1} parent=0 // pred_region
    _
  $region61: #{autoencoder_forward.1} parent=0 // pred_fallthru
    _
  // Predicated region
  $region62: #{autoencoder_forward.1} parent=0 // pred_check
    _
  $region63: #{autoencoder_forward.1} parent=0 // pred_check_branch
    %52 = sbr.rel (0) target = $region65
  $region64: #{autoencoder_forward.1} parent=0 // pred_region
    _
  $region65: #{autoencoder_forward.1} parent=0 // pred_fallthru
    _
  %v53 = vld [vmem:[%s0] sm:$0xff]
  %v54 = vld [vmem:[%s0 + $0x8] sm:$0xff]
  %v55 = vld [vmem:[%s0 + $0x10] sm:$0xff]
  %v56 = vld [vmem:[%s0 + $0x18] sm:$0xff]
  %v57 = vld [vmem:[%s0 + $0x20] sm:$0xff]
  %v58 = vld [vmem:[%s0 + $0x28] sm:$0xff]
  %v59 = vld [vmem:[%s0 + $0x30] sm:$0xff]
  %v60 = vld [vmem:[%s0 + $0x38] sm:$0xff]
  %v61 = vld [vmem:[%s0 + $0x40] sm:$0xff]
  %v62 = vld [vmem:[%s0 + $0x48] sm:$0xff]
  %v63 = vld [vmem:[%s0 + $0x50] sm:$0xff]
  %v64 = vld [vmem:[%s0 + $0x58] sm:$0xff]
  %v65 = vld [vmem:[%s0 + $0x60] sm:$0xff]
  %v66 = vld [vmem:[%s0 + $0x68] sm:$0xff]
  %v67 = vld [vmem:[%s0 + $0x70] sm:$0xff]
  %v68 = vld [vmem:[%s0 + $0x78] sm:$0xff]
  %s69 = scalar_lea.vmem %s0, 128
  %v70 = vld [vmem:[%s69] sm:$0xff]
  %v71 = vld [vmem:[%s69 + $0x8] sm:$0xff]
  %v72 = vld [vmem:[%s69 + $0x10] sm:$0xff]
  %v73 = vld [vmem:[%s69 + $0x18] sm:$0xff]
  %v74 = vld [vmem:[%s69 + $0x20] sm:$0xff]
  %v75 = vld [vmem:[%s69 + $0x28] sm:$0xff]
  %v76 = vld [vmem:[%s69 + $0x30] sm:$0xff]
  %v77 = vld [vmem:[%s69 + $0x38] sm:$0xff]
  %v78 = vld [vmem:[%s69 + $0x40] sm:$0xff]
  %v79 = vld [vmem:[%s69 + $0x48] sm:$0xff]
  %v80 = vld [vmem:[%s69 + $0x50] sm:$0xff]
  %v81 = vld [vmem:[%s69 + $0x58] sm:$0xff]
  %v82 = vld [vmem:[%s69 + $0x60] sm:$0xff]
  %v83 = vld [vmem:[%s69 + $0x68] sm:$0xff]
  %v84 = vld [vmem:[%s69 + $0x70] sm:$0xff]
  %v85 = vld [vmem:[%s69 + $0x78] sm:$0xff]
  %s86 = scalar_lea.vmem %s0, 256
  %v87 = vld [vmem:[%s86] sm:$0xff]
  %v88 = vld [vmem:[%s86 + $0x8] sm:$0xff]
  %v89 = vld [vmem:[%s86 + $0x10] sm:$0xff]
  %v90 = vld [vmem:[%s86 + $0x18] sm:$0xff]
  %v91 = vld [vmem:[%s86 + $0x20] sm:$0xff]
  %v92 = vld [vmem:[%s86 + $0x28] sm:$0xff]
  %v93 = vld [vmem:[%s86 + $0x30] sm:$0xff]
  %v94 = vld [vmem:[%s86 + $0x38] sm:$0xff]
  %v95 = vld [vmem:[%s86 + $0x40] sm:$0xff]
  %v96 = vld [vmem:[%s86 + $0x48] sm:$0xff]
  %v97 = vld [vmem:[%s86 + $0x50] sm:$0xff]
  %v98 = vld [vmem:[%s86 + $0x58] sm:$0xff]
  %v99 = vld [vmem:[%s86 + $0x60] sm:$0xff]
  %v100 = vld [vmem:[%s86 + $0x68] sm:$0xff]
  %v101 = vld [vmem:[%s86 + $0x70] sm:$0xff]
  %v102 = vld [vmem:[%s86 + $0x78] sm:$0xff]
  %s103 = scalar_lea.vmem %s0, 384
  %v104 = vld [vmem:[%s103] sm:$0xff]
  %v105 = vld [vmem:[%s103 + $0x8] sm:$0xff]
  %v106 = vld [vmem:[%s103 + $0x10] sm:$0xff]
  %v107 = vld [vmem:[%s103 + $0x18] sm:$0xff]
  %v108 = vld [vmem:[%s103 + $0x20] sm:$0xff]
  %v109 = vld [vmem:[%s103 + $0x28] sm:$0xff]
  %v110 = vld [vmem:[%s103 + $0x30] sm:$0xff]
  %v111 = vld [vmem:[%s103 + $0x38] sm:$0xff]
  %v112 = vld [vmem:[%s103 + $0x40] sm:$0xff]
  %v113 = vld [vmem:[%s103 + $0x48] sm:$0xff]
  %v114 = vld [vmem:[%s103 + $0x50] sm:$0xff]
  %v115 = vld [vmem:[%s103 + $0x58] sm:$0xff]
  %v116 = vld [vmem:[%s103 + $0x60] sm:$0xff]
  %v117 = vld [vmem:[%s103 + $0x68] sm:$0xff]
  %v118 = vld [vmem:[%s103 + $0x70] sm:$0xff]
  %v119 = vld [vmem:[%s103 + $0x78] sm:$0xff]
  %s120 = scalar_lea.vmem %s0, 512
  %v121 = vld [vmem:[%s120] sm:$0xff]
  %v122 = vld [vmem:[%s120 + $0x8] sm:$0xff]
  %v123 = vld [vmem:[%s120 + $0x10] sm:$0xff]
  %v124 = vld [vmem:[%s120 + $0x18] sm:$0xff]
  %v125 = vld [vmem:[%s120 + $0x20] sm:$0xff]
  %v126 = vld [vmem:[%s120 + $0x28] sm:$0xff]
  %v127 = vld [vmem:[%s120 + $0x30] sm:$0xff]
  %v128 = vld [vmem:[%s120 + $0x38] sm:$0xff]
  %v129 = vld [vmem:[%s120 + $0x40] sm:$0xff]
  %v130 = vld [vmem:[%s120 + $0x48] sm:$0xff]
  %v131 = vld [vmem:[%s120 + $0x50] sm:$0xff]
  %v132 = vld [vmem:[%s120 + $0x58] sm:$0xff]
  %v133 = vld [vmem:[%s120 + $0x60] sm:$0xff]
  %v134 = vld [vmem:[%s120 + $0x68] sm:$0xff]
  %v135 = vld [vmem:[%s120 + $0x70] sm:$0xff]
  %v136 = vld [vmem:[%s120 + $0x78] sm:$0xff]
  %v137 = vld [vmem:[%s2] sm:$0x3]
  %v138 = vld [vmem:[%s1] sm:$0xff]
  %v139 = vld [vmem:[%s1 + $0x8] sm:$0xff]
  %v140 = vld [vmem:[%s1 + $0x10] sm:$0xff]
  %v141 = vld [vmem:[%s1 + $0x18] sm:$0xff]
  %v142 = vld [vmem:[%s1 + $0x20] sm:$0xff]
  %v143 = vld [vmem:[%s1 + $0x28] sm:$0xff]
  %v144 = vld [vmem:[%s1 + $0x30] sm:$0xf]
  %v145 = vld [vmem:[%s1 + $0x38] sm:$0xf]
  %s146 = scalar_lea.vmem %s1, 64
  %v147 = vld [vmem:[%s146] sm:$0xff]
  %v148 = vld [vmem:[%s146 + $0x8] sm:$0xff]
  %v149 = vld [vmem:[%s146 + $0x10] sm:$0xff]
  %v150 = vld [vmem:[%s146 + $0x18] sm:$0xff]
  %v151 = vld [vmem:[%s146 + $0x20] sm:$0xff]
  %v152 = vld [vmem:[%s146 + $0x28] sm:$0xff]
  %v153 = vld [vmem:[%s146 + $0x30] sm:$0xf]
  %v154 = vld [vmem:[%s146 + $0x38] sm:$0xf]
  %vm155 = vcmask 228352
  %v157 = vsel %vm155, %v70, 0
  %v160 = vsel %vm155, %v71, 0
  %v163 = vsel %vm155, %v72, 0
  %v166 = vsel %vm155, %v73, 0
  %v169 = vsel %vm155, %v74, 0
  %v172 = vsel %vm155, %v75, 0
  %v175 = vsel %vm155, %v76, 0
  %v178 = vsel %vm155, %v77, 0
  %v181 = vsel %vm155, %v78, 0
  %v184 = vsel %vm155, %v79, 0
  %v187 = vsel %vm155, %v80, 0
  %v190 = vsel %vm155, %v81, 0
  %v193 = vsel %vm155, %v82, 0
  %v196 = vsel %vm155, %v83, 0
  %v199 = vsel %vm155, %v84, 0
  %v202 = vsel %vm155, %v85, 0
  %vm204 = vcmask 1043456
  %v206 = vsel %vm204, %v153, 0
  %v209 = vsel %vm204, %v154, 0
  %211 = vmatprep.subr.mxu0 %v148
  %212 = vmatpush1.msra.mxu0 %v147
  %213 = vmatprep.subr.mxu0 %v150
  %214 = vmatpush1.msra.mxu0 %v149
  %215 = vmatprep.subr.mxu0 %v152
  %216 = vmatpush1.msra.mxu0 %v151
  %217 = vmatprep.subr.mxu0 %v209
  %218 = vmatpush1.msra.mxu0 %v206
  %219 = vmatprep.subr.mxu0 0.0
  %220 = vmatpush1.msra.mxu0 0.0
  %221 = vmatprep.subr.mxu0 0.0
  %222 = vmatpush1.msra.mxu0 0.0
  %223 = vmatprep.subr.mxu0 0.0
  %224 = vmatpush1.msra.mxu0 0.0
  %225 = vmatprep.subr.mxu0 0.0
  %226 = vmatpush1.msra.mxu0 0.0
  %227 = vmatprep.subr.mxu0 0.0
  %228 = vmatpush1.msra.mxu0 0.0
  %229 = vmatprep.subr.mxu0 0.0
  %230 = vmatpush1.msra.mxu0 0.0
  %231 = vmatprep.subr.mxu0 0.0
  %232 = vmatpush1.msra.mxu0 0.0
  %233 = vmatprep.subr.mxu0 0.0
  %234 = vmatpush1.msra.mxu0 0.0
  %235 = vmatprep.subr.mxu0 0.0
  %236 = vmatpush1.msra.mxu0 0.0
  %237 = vmatprep.subr.mxu0 0.0
  %238 = vmatpush1.msra.mxu0 0.0
  %239 = vmatprep.subr.mxu0 0.0
  %240 = vmatpush1.msra.mxu0 0.0
  %241 = vmatprep.subr.mxu0 0.0
  %242 = vmatpush1.msra.mxu0 0.0
  %243 = vmatprep.subr.mxu0 0.0
  %244 = vmatpush1.msra.mxu0 0.0
  %245 = vmatprep.subr.mxu0 0.0
  %246 = vmatpush1.msra.mxu0 0.0
  %247 = vmatprep.subr.mxu0 0.0
  %248 = vmatpush1.msra.mxu0 0.0
  %249 = vmatprep.subr.mxu0 0.0
  %250 = vmatpush1.msra.mxu0 0.0
  %251 = vmatprep.subr.mxu0 0.0
  %252 = vmatpush1.msra.mxu0 0.0
  %253 = vmatprep.subr.mxu0 0.0
  %254 = vmatpush1.msra.mxu0 0.0
  %255 = vmatprep.subr.mxu0 0.0
  %256 = vmatpush1.msra.mxu0 0.0
  %257 = vmatprep.subr.mxu0 0.0
  %258 = vmatpush1.msra.mxu0 0.0
  %259 = vmatprep.subr.mxu0 0.0
  %260 = vmatpush1.msra.mxu0 0.0
  %261 = vmatprep.subr.mxu0 0.0
  %262 = vmatpush1.msra.mxu0 0.0
  %263 = vmatprep.subr.mxu0 0.0
  %264 = vmatpush1.msra.mxu0 0.0
  %265 = vmatprep.subr.mxu0 0.0
  %266 = vmatpush1.msra.mxu0 0.0
  %267 = vmatprep.subr.mxu0 0.0
  %268 = vmatpush1.msra.mxu0 0.0
  %269 = vmatprep.subr.mxu0 0.0
  %270 = vmatpush1.msra.mxu0 0.0
  %271 = vmatprep.subr.mxu0 0.0
  %272 = vmatpush1.msra.mxu0 0.0
  %273 = vmatprep.subr.mxu0 0.0
  %274 = vmatpush1.msra.mxu0 0.0
  %275 = vmatprep.mubr.f32.mxu0 0.0
  %276 = vmatmul.mubr.f32.gmra.mrb[0].mxu0 %v157
  %v277 = vpop.f32.mrb[0].mxu0
  %v278 = vadd.f32 0.0, %v277
  %v279 = vpop.f32.mrb[0].mxu0
  %v280 = vadd.f32 0.0, %v279
  %281 = vmatprep.mubr.f32.mxu0 0.0
  %282 = vmatmul.mubr.f32.gmra.mrb[0].mxu0 %v160
  %v283 = vpop.f32.mrb[0].mxu0
  %v284 = vadd.f32 0.0, %v283
  %v285 = vpop.f32.mrb[0].mxu0
  %v286 = vadd.f32 0.0, %v285
  %287 = vmatprep.mubr.f32.mxu0 0.0
  %288 = vmatmul.mubr.f32.gmra.mrb[0].mxu0 %v163
  %v289 = vpop.f32.mrb[0].mxu0
  %v290 = vadd.f32 0.0, %v289
  %v291 = vpop.f32.mrb[0].mxu0
  %v292 = vadd.f32 0.0, %v291
  %293 = vmatprep.mubr.f32.mxu0 0.0
  %294 = vmatmul.mubr.f32.gmra.mrb[0].mxu0 %v166
  %v295 = vpop.f32.mrb[0].mxu0
  %v296 = vadd.f32 0.0, %v295
  %v297 = vpop.f32.mrb[0].mxu0
  %v298 = vadd.f32 0.0, %v297
  %299 = vmatprep.mubr.f32.mxu0 0.0
  %300 = vmatmul.mubr.f32.gmra.mrb[0].mxu0 %v169
  %v301 = vpop.f32.mrb[0].mxu0
  %v302 = vadd.f32 0.0, %v301
  %v303 = vpop.f32.mrb[0].mxu0
  %v304 = vadd.f32 0.0, %v303
  %305 = vmatprep.mubr.f32.mxu0 0.0
  %306 = vmatmul.mubr.f32.gmra.mrb[0].mxu0 %v172
  %v307 = vpop.f32.mrb[0].mxu0
  %v308 = vadd.f32 0.0, %v307
  %v309 = vpop.f32.mrb[0].mxu0
  %v310 = vadd.f32 0.0, %v309
  %311 = vmatprep.mubr.f32.mxu0 0.0
  %312 = vmatmul.mubr.f32.gmra.mrb[0].mxu0 %v175
  %v313 = vpop.f32.mrb[0].mxu0
  %v314 = vadd.f32 0.0, %v313
  %v315 = vpop.f32.mrb[0].mxu0
  %v316 = vadd.f32 0.0, %v315
  %317 = vmatprep.mubr.f32.mxu0 0.0
  %318 = vmatmul.mubr.f32.gmra.mrb[0].mxu0 %v178
  %v319 = vpop.f32.mrb[0].mxu0
  %v320 = vadd.f32 0.0, %v319
  %v321 = vpop.f32.mrb[0].mxu0
  %v322 = vadd.f32 0.0, %v321
  %323 = vmatprep.mubr.f32.mxu0 0.0
  %324 = vmatmul.mubr.f32.gmra.mrb[0].mxu0 %v181
  %v325 = vpop.f32.mrb[0].mxu0
  %v326 = vadd.f32 0.0, %v325
  %v327 = vpop.f32.mrb[0].mxu0
  %v328 = vadd.f32 0.0, %v327
  %329 = vmatprep.mubr.f32.mxu0 0.0
  %330 = vmatmul.mubr.f32.gmra.mrb[0].mxu0 %v184
  %v331 = vpop.f32.mrb[0].mxu0
  %v332 = vadd.f32 0.0, %v331
  %v333 = vpop.f32.mrb[0].mxu0
  %v334 = vadd.f32 0.0, %v333
  %335 = vmatprep.mubr.f32.mxu0 0.0
  %336 = vmatmul.mubr.f32.gmra.mrb[0].mxu0 %v187
  %v337 = vpop.f32.mrb[0].mxu0
  %v338 = vadd.f32 0.0, %v337
  %v339 = vpop.f32.mrb[0].mxu0
  %v340 = vadd.f32 0.0, %v339
  %341 = vmatprep.mubr.f32.mxu0 0.0
  %342 = vmatmul.mubr.f32.gmra.mrb[0].mxu0 %v190
  %v343 = vpop.f32.mrb[0].mxu0
  %v344 = vadd.f32 0.0, %v343
  %v345 = vpop.f32.mrb[0].mxu0
  %v346 = vadd.f32 0.0, %v345
  %347 = vmatprep.mubr.f32.mxu0 0.0
  %348 = vmatmul.mubr.f32.gmra.mrb[0].mxu0 %v193
  %v349 = vpop.f32.mrb[0].mxu0
  %v350 = vadd.f32 0.0, %v349
  %v351 = vpop.f32.mrb[0].mxu0
  %v352 = vadd.f32 0.0, %v351
  %353 = vmatprep.mubr.f32.mxu0 0.0
  %354 = vmatmul.mubr.f32.gmra.mrb[0].mxu0 %v196
  %v355 = vpop.f32.mrb[0].mxu0
  %v356 = vadd.f32 0.0, %v355
  %v357 = vpop.f32.mrb[0].mxu0
  %v358 = vadd.f32 0.0, %v357
  %359 = vmatprep.mubr.f32.mxu0 0.0
  %360 = vmatmul.mubr.f32.gmra.mrb[0].mxu0 %v199
  %v361 = vpop.f32.mrb[0].mxu0
  %v362 = vadd.f32 0.0, %v361
  %v363 = vpop.f32.mrb[0].mxu0
  %v364 = vadd.f32 0.0, %v363
  %365 = vmatprep.mubr.f32.mxu0 0.0
  %366 = vmatmul.mubr.f32.gmra.mrb[0].mxu0 %v202
  %v367 = vpop.f32.mrb[0].mxu0
  %v368 = vadd.f32 0.0, %v367
  %v369 = vpop.f32.mrb[0].mxu0
  %v370 = vadd.f32 0.0, %v369
  %371 = vdwg.mxu0
  %v373 = vsel %vm155, %v53, 0
  %v376 = vsel %vm155, %v54, 0
  %v379 = vsel %vm155, %v55, 0
  %v382 = vsel %vm155, %v56, 0
  %v385 = vsel %vm155, %v57, 0
  %v388 = vsel %vm155, %v58, 0
  %v391 = vsel %vm155, %v59, 0
  %v394 = vsel %vm155, %v60, 0
  %v397 = vsel %vm155, %v61, 0
  %v400 = vsel %vm155, %v62, 0
  %v403 = vsel %vm155, %v63, 0
  %v406 = vsel %vm155, %v64, 0
  %v409 = vsel %vm155, %v65, 0
  %v412 = vsel %vm155, %v66, 0
  %v415 = vsel %vm155, %v67, 0
  %v418 = vsel %vm155, %v68, 0
  %v421 = vsel %vm204, %v144, 0
  %v424 = vsel %vm204, %v145, 0
  %426 = vmatprep.subr.mxu0 %v139
  %427 = vmatpush1.msra.mxu0 %v138
  %428 = vmatprep.subr.mxu0 %v141
  %429 = vmatpush1.msra.mxu0 %v140
  %430 = vmatprep.subr.mxu0 %v143
  %431 = vmatpush1.msra.mxu0 %v142
  %432 = vmatprep.subr.mxu0 %v424
  %433 = vmatpush1.msra.mxu0 %v421
  %434 = vmatprep.subr.mxu0 0.0
  %435 = vmatpush1.msra.mxu0 0.0
  %436 = vmatprep.subr.mxu0 0.0
  %437 = vmatpush1.msra.mxu0 0.0
  %438 = vmatprep.subr.mxu0 0.0
  %439 = vmatpush1.msra.mxu0 0.0
  %440 = vmatprep.subr.mxu0 0.0
  %441 = vmatpush1.msra.mxu0 0.0
  %442 = vmatprep.subr.mxu0 0.0
  %443 = vmatpush1.msra.mxu0 0.0
  %444 = vmatprep.subr.mxu0 0.0
  %445 = vmatpush1.msra.mxu0 0.0
  %446 = vmatprep.subr.mxu0 0.0
  %447 = vmatpush1.msra.mxu0 0.0
  %448 = vmatprep.subr.mxu0 0.0
  %449 = vmatpush1.msra.mxu0 0.0
  %450 = vmatprep.subr.mxu0 0.0
  %451 = vmatpush1.msra.mxu0 0.0
  %452 = vmatprep.subr.mxu0 0.0
  %453 = vmatpush1.msra.mxu0 0.0
  %454 = vmatprep.subr.mxu0 0.0
  %455 = vmatpush1.msra.mxu0 0.0
  %456 = vmatprep.subr.mxu0 0.0
  %457 = vmatpush1.msra.mxu0 0.0
  %458 = vmatprep.subr.mxu0 0.0
  %459 = vmatpush1.msra.mxu0 0.0
  %460 = vmatprep.subr.mxu0 0.0
  %461 = vmatpush1.msra.mxu0 0.0
  %462 = vmatprep.subr.mxu0 0.0
  %463 = vmatpush1.msra.mxu0 0.0
  %464 = vmatprep.subr.mxu0 0.0
  %465 = vmatpush1.msra.mxu0 0.0
  %466 = vmatprep.subr.mxu0 0.0
  %467 = vmatpush1.msra.mxu0 0.0
  %468 = vmatprep.subr.mxu0 0.0
  %469 = vmatpush1.msra.mxu0 0.0
  %470 = vmatprep.subr.mxu0 0.0
  %471 = vmatpush1.msra.mxu0 0.0
  %472 = vmatprep.subr.mxu0 0.0
  %473 = vmatpush1.msra.mxu0 0.0
  %474 = vmatprep.subr.mxu0 0.0
  %475 = vmatpush1.msra.mxu0 0.0
  %476 = vmatprep.subr.mxu0 0.0
  %477 = vmatpush1.msra.mxu0 0.0
  %478 = vmatprep.subr.mxu0 0.0
  %479 = vmatpush1.msra.mxu0 0.0
  %480 = vmatprep.subr.mxu0 0.0
  %481 = vmatpush1.msra.mxu0 0.0
  %482 = vmatprep.subr.mxu0 0.0
  %483 = vmatpush1.msra.mxu0 0.0
  %484 = vmatprep.subr.mxu0 0.0
  %485 = vmatpush1.msra.mxu0 0.0
  %486 = vmatprep.subr.mxu0 0.0
  %487 = vmatpush1.msra.mxu0 0.0
  %488 = vmatprep.subr.mxu0 0.0
  %489 = vmatpush1.msra.mxu0 0.0
  %490 = vmatprep.mubr.f32.mxu0 0.0
  %491 = vmatmul.mubr.f32.gmra.mrb[0].mxu0 %v373
  %v492 = vpop.f32.mrb[0].mxu0
  %v493 = vadd.f32 %v278, %v492
  %v494 = vpop.f32.mrb[0].mxu0
  %v495 = vadd.f32 %v280, %v494
  %496 = vmatprep.mubr.f32.mxu0 0.0
  %497 = vmatmul.mubr.f32.gmra.mrb[0].mxu0 %v376
  %v498 = vpop.f32.mrb[0].mxu0
  %v499 = vadd.f32 %v284, %v498
  %v500 = vpop.f32.mrb[0].mxu0
  %v501 = vadd.f32 %v286, %v500
  %502 = vmatprep.mubr.f32.mxu0 0.0
  %503 = vmatmul.mubr.f32.gmra.mrb[0].mxu0 %v379
  %v504 = vpop.f32.mrb[0].mxu0
  %v505 = vadd.f32 %v290, %v504
  %v506 = vpop.f32.mrb[0].mxu0
  %v507 = vadd.f32 %v292, %v506
  %508 = vmatprep.mubr.f32.mxu0 0.0
  %509 = vmatmul.mubr.f32.gmra.mrb[0].mxu0 %v382
  %v510 = vpop.f32.mrb[0].mxu0
  %v511 = vadd.f32 %v296, %v510
  %v512 = vpop.f32.mrb[0].mxu0
  %v513 = vadd.f32 %v298, %v512
  %514 = vmatprep.mubr.f32.mxu0 0.0
  %515 = vmatmul.mubr.f32.gmra.mrb[0].mxu0 %v385
  %v516 = vpop.f32.mrb[0].mxu0
  %v517 = vadd.f32 %v302, %v516
  %v518 = vpop.f32.mrb[0].mxu0
  %v519 = vadd.f32 %v304, %v518
  %520 = vmatprep.mubr.f32.mxu0 0.0
  %521 = vmatmul.mubr.f32.gmra.mrb[0].mxu0 %v388
  %v522 = vpop.f32.mrb[0].mxu0
  %v523 = vadd.f32 %v308, %v522
  %v524 = vpop.f32.mrb[0].mxu0
  %v525 = vadd.f32 %v310, %v524
  %526 = vmatprep.mubr.f32.mxu0 0.0
  %527 = vmatmul.mubr.f32.gmra.mrb[0].mxu0 %v391
  %v528 = vpop.f32.mrb[0].mxu0
  %v529 = vadd.f32 %v314, %v528
  %v530 = vpop.f32.mrb[0].mxu0
  %v531 = vadd.f32 %v316, %v530
  %532 = vmatprep.mubr.f32.mxu0 0.0
  %533 = vmatmul.mubr.f32.gmra.mrb[0].mxu0 %v394
  %v534 = vpop.f32.mrb[0].mxu0
  %v535 = vadd.f32 %v320, %v534
  %v536 = vpop.f32.mrb[0].mxu0
  %v537 = vadd.f32 %v322, %v536
  %538 = vmatprep.mubr.f32.mxu0 0.0
  %539 = vmatmul.mubr.f32.gmra.mrb[0].mxu0 %v397
  %v540 = vpop.f32.mrb[0].mxu0
  %v541 = vadd.f32 %v326, %v540
  %v542 = vpop.f32.mrb[0].mxu0
  %v543 = vadd.f32 %v328, %v542
  %544 = vmatprep.mubr.f32.mxu0 0.0
  %545 = vmatmul.mubr.f32.gmra.mrb[0].mxu0 %v400
  %v546 = vpop.f32.mrb[0].mxu0
  %v547 = vadd.f32 %v332, %v546
  %v548 = vpop.f32.mrb[0].mxu0
  %v549 = vadd.f32 %v334, %v548
  %550 = vmatprep.mubr.f32.mxu0 0.0
  %551 = vmatmul.mubr.f32.gmra.mrb[0].mxu0 %v403
  %v552 = vpop.f32.mrb[0].mxu0
  %v553 = vadd.f32 %v338, %v552
  %v554 = vpop.f32.mrb[0].mxu0
  %v555 = vadd.f32 %v340, %v554
  %556 = vmatprep.mubr.f32.mxu0 0.0
  %557 = vmatmul.mubr.f32.gmra.mrb[0].mxu0 %v406
  %v558 = vpop.f32.mrb[0].mxu0
  %v559 = vadd.f32 %v344, %v558
  %v560 = vpop.f32.mrb[0].mxu0
  %v561 = vadd.f32 %v346, %v560
  %562 = vmatprep.mubr.f32.mxu0 0.0
  %563 = vmatmul.mubr.f32.gmra.mrb[0].mxu0 %v409
  %v564 = vpop.f32.mrb[0].mxu0
  %v565 = vadd.f32 %v350, %v564
  %v566 = vpop.f32.mrb[0].mxu0
  %v567 = vadd.f32 %v352, %v566
  %568 = vmatprep.mubr.f32.mxu0 0.0
  %569 = vmatmul.mubr.f32.gmra.mrb[0].mxu0 %v412
  %v570 = vpop.f32.mrb[0].mxu0
  %v571 = vadd.f32 %v356, %v570
  %v572 = vpop.f32.mrb[0].mxu0
  %v573 = vadd.f32 %v358, %v572
  %574 = vmatprep.mubr.f32.mxu0 0.0
  %575 = vmatmul.mubr.f32.gmra.mrb[0].mxu0 %v415
  %v576 = vpop.f32.mrb[0].mxu0
  %v577 = vadd.f32 %v362, %v576
  %v578 = vpop.f32.mrb[0].mxu0
  %v579 = vadd.f32 %v364, %v578
  %580 = vmatprep.mubr.f32.mxu0 0.0
  %581 = vmatmul.mubr.f32.gmra.mrb[0].mxu0 %v418
  %v582 = vpop.f32.mrb[0].mxu0
  %v583 = vadd.f32 %v368, %v582
  %v584 = vpop.f32.mrb[0].mxu0
  %v585 = vadd.f32 %v370, %v584
  %586 = vdwg.mxu0
  %s587 = scalar_lea.vmem %s1, 128
  %v588 = vld [vmem:[%s587] sm:$0xff]
  %v589 = vld [vmem:[%s587 + $0x8] sm:$0xff]
  %v590 = vld [vmem:[%s587 + $0x10] sm:$0xff]
  %v591 = vld [vmem:[%s587 + $0x18] sm:$0xff]
  %v592 = vld [vmem:[%s587 + $0x20] sm:$0xff]
  %v593 = vld [vmem:[%s587 + $0x28] sm:$0xff]
  %v594 = vld [vmem:[%s587 + $0x30] sm:$0xf]
  %v595 = vld [vmem:[%s587 + $0x38] sm:$0xf]
  %v597 = vsel %vm155, %v87, 0
  %v600 = vsel %vm155, %v88, 0
  %v603 = vsel %vm155, %v89, 0
  %v606 = vsel %vm155, %v90, 0
  %v609 = vsel %vm155, %v91, 0
  %v612 = vsel %vm155, %v92, 0
  %v615 = vsel %vm155, %v93, 0
  %v618 = vsel %vm155, %v94, 0
  %v621 = vsel %vm155, %v95, 0
  %v624 = vsel %vm155, %v96, 0
  %v627 = vsel %vm155, %v97, 0
  %v630 = vsel %vm155, %v98, 0
  %v633 = vsel %vm155, %v99, 0
  %v636 = vsel %vm155, %v100, 0
  %v639 = vsel %vm155, %v101, 0
  %v642 = vsel %vm155, %v102, 0
  %v645 = vsel %vm204, %v594, 0
  %v648 = vsel %vm204, %v595, 0
  %650 = vmatprep.subr.mxu0 %v589
  %651 = vmatpush1.msra.mxu0 %v588
  %652 = vmatprep.subr.mxu0 %v591
  %653 = vmatpush1.msra.mxu0 %v590
  %654 = vmatprep.subr.mxu0 %v593
  %655 = vmatpush1.msra.mxu0 %v592
  %656 = vmatprep.subr.mxu0 %v648
  %657 = vmatpush1.msra.mxu0 %v645
  %658 = vmatprep.subr.mxu0 0.0
  %659 = vmatpush1.msra.mxu0 0.0
  %660 = vmatprep.subr.mxu0 0.0
  %661 = vmatpush1.msra.mxu0 0.0
  %662 = vmatprep.subr.mxu0 0.0
  %663 = vmatpush1.msra.mxu0 0.0
  %664 = vmatprep.subr.mxu0 0.0
  %665 = vmatpush1.msra.mxu0 0.0
  %666 = vmatprep.subr.mxu0 0.0
  %667 = vmatpush1.msra.mxu0 0.0
  %668 = vmatprep.subr.mxu0 0.0
  %669 = vmatpush1.msra.mxu0 0.0
  %670 = vmatprep.subr.mxu0 0.0
  %671 = vmatpush1.msra.mxu0 0.0
  %672 = vmatprep.subr.mxu0 0.0
  %673 = vmatpush1.msra.mxu0 0.0
  %674 = vmatprep.subr.mxu0 0.0
  %675 = vmatpush1.msra.mxu0 0.0
  %676 = vmatprep.subr.mxu0 0.0
  %677 = vmatpush1.msra.mxu0 0.0
  %678 = vmatprep.subr.mxu0 0.0
  %679 = vmatpush1.msra.mxu0 0.0
  %680 = vmatprep.subr.mxu0 0.0
  %681 = vmatpush1.msra.mxu0 0.0
  %682 = vmatprep.subr.mxu0 0.0
  %683 = vmatpush1.msra.mxu0 0.0
  %684 = vmatprep.subr.mxu0 0.0
  %685 = vmatpush1.msra.mxu0 0.0
  %686 = vmatprep.subr.mxu0 0.0
  %687 = vmatpush1.msra.mxu0 0.0
  %688 = vmatprep.subr.mxu0 0.0
  %689 = vmatpush1.msra.mxu0 0.0
  %690 = vmatprep.subr.mxu0 0.0
  %691 = vmatpush1.msra.mxu0 0.0
  %692 = vmatprep.subr.mxu0 0.0
  %693 = vmatpush1.msra.mxu0 0.0
  %694 = vmatprep.subr.mxu0 0.0
  %695 = vmatpush1.msra.mxu0 0.0
  %696 = vmatprep.subr.mxu0 0.0
  %697 = vmatpush1.msra.mxu0 0.0
  %698 = vmatprep.subr.mxu0 0.0
  %699 = vmatpush1.msra.mxu0 0.0
  %700 = vmatprep.subr.mxu0 0.0
  %701 = vmatpush1.msra.mxu0 0.0
  %702 = vmatprep.subr.mxu0 0.0
  %703 = vmatpush1.msra.mxu0 0.0
  %704 = vmatprep.subr.mxu0 0.0
  %705 = vmatpush1.msra.mxu0 0.0
  %706 = vmatprep.subr.mxu0 0.0
  %707 = vmatpush1.msra.mxu0 0.0
  %708 = vmatprep.subr.mxu0 0.0
  %709 = vmatpush1.msra.mxu0 0.0
  %710 = vmatprep.subr.mxu0 0.0
  %711 = vmatpush1.msra.mxu0 0.0
  %712 = vmatprep.subr.mxu0 0.0
  %713 = vmatpush1.msra.mxu0 0.0
  %714 = vmatprep.mubr.f32.mxu0 0.0
  %715 = vmatmul.mubr.f32.gmra.mrb[0].mxu0 %v597
  %v716 = vpop.f32.mrb[0].mxu0
  %v717 = vadd.f32 0.0, %v716
  %v718 = vpop.f32.mrb[0].mxu0
  %v719 = vadd.f32 0.0, %v718
  %720 = vmatprep.mubr.f32.mxu0 0.0
  %721 = vmatmul.mubr.f32.gmra.mrb[0].mxu0 %v600
  %v722 = vpop.f32.mrb[0].mxu0
  %v723 = vadd.f32 0.0, %v722
  %v724 = vpop.f32.mrb[0].mxu0
  %v725 = vadd.f32 0.0, %v724
  %726 = vmatprep.mubr.f32.mxu0 0.0
  %727 = vmatmul.mubr.f32.gmra.mrb[0].mxu0 %v603
  %v728 = vpop.f32.mrb[0].mxu0
  %v729 = vadd.f32 0.0, %v728
  %v730 = vpop.f32.mrb[0].mxu0
  %v731 = vadd.f32 0.0, %v730
  %732 = vmatprep.mubr.f32.mxu0 0.0
  %733 = vmatmul.mubr.f32.gmra.mrb[0].mxu0 %v606
  %v734 = vpop.f32.mrb[0].mxu0
  %v735 = vadd.f32 0.0, %v734
  %v736 = vpop.f32.mrb[0].mxu0
  %v737 = vadd.f32 0.0, %v736
  %738 = vmatprep.mubr.f32.mxu0 0.0
  %739 = vmatmul.mubr.f32.gmra.mrb[0].mxu0 %v609
  %v740 = vpop.f32.mrb[0].mxu0
  %v741 = vadd.f32 0.0, %v740
  %v742 = vpop.f32.mrb[0].mxu0
  %v743 = vadd.f32 0.0, %v742
  %744 = vmatprep.mubr.f32.mxu0 0.0
  %745 = vmatmul.mubr.f32.gmra.mrb[0].mxu0 %v612
  %v746 = vpop.f32.mrb[0].mxu0
  %v747 = vadd.f32 0.0, %v746
  %v748 = vpop.f32.mrb[0].mxu0
  %v749 = vadd.f32 0.0, %v748
  %750 = vmatprep.mubr.f32.mxu0 0.0
  %751 = vmatmul.mubr.f32.gmra.mrb[0].mxu0 %v615
  %v752 = vpop.f32.mrb[0].mxu0
  %v753 = vadd.f32 0.0, %v752
  %v754 = vpop.f32.mrb[0].mxu0
  %v755 = vadd.f32 0.0, %v754
  %756 = vmatprep.mubr.f32.mxu0 0.0
  %757 = vmatmul.mubr.f32.gmra.mrb[0].mxu0 %v618
  %v758 = vpop.f32.mrb[0].mxu0
  %v759 = vadd.f32 0.0, %v758
  %v760 = vpop.f32.mrb[0].mxu0
  %v761 = vadd.f32 0.0, %v760
  %762 = vmatprep.mubr.f32.mxu0 0.0
  %763 = vmatmul.mubr.f32.gmra.mrb[0].mxu0 %v621
  %v764 = vpop.f32.mrb[0].mxu0
  %v765 = vadd.f32 0.0, %v764
  %v766 = vpop.f32.mrb[0].mxu0
  %v767 = vadd.f32 0.0, %v766
  %768 = vmatprep.mubr.f32.mxu0 0.0
  %769 = vmatmul.mubr.f32.gmra.mrb[0].mxu0 %v624
  %v770 = vpop.f32.mrb[0].mxu0
  %v771 = vadd.f32 0.0, %v770
  %v772 = vpop.f32.mrb[0].mxu0
  %v773 = vadd.f32 0.0, %v772
  %774 = vmatprep.mubr.f32.mxu0 0.0
  %775 = vmatmul.mubr.f32.gmra.mrb[0].mxu0 %v627
  %v776 = vpop.f32.mrb[0].mxu0
  %v777 = vadd.f32 0.0, %v776
  %v778 = vpop.f32.mrb[0].mxu0
  %v779 = vadd.f32 0.0, %v778
  %780 = vmatprep.mubr.f32.mxu0 0.0
  %781 = vmatmul.mubr.f32.gmra.mrb[0].mxu0 %v630
  %v782 = vpop.f32.mrb[0].mxu0
  %v783 = vadd.f32 0.0, %v782
  %v784 = vpop.f32.mrb[0].mxu0
  %v785 = vadd.f32 0.0, %v784
  %786 = vmatprep.mubr.f32.mxu0 0.0
  %787 = vmatmul.mubr.f32.gmra.mrb[0].mxu0 %v633
  %v788 = vpop.f32.mrb[0].mxu0
  %v789 = vadd.f32 0.0, %v788
  %v790 = vpop.f32.mrb[0].mxu0
  %v791 = vadd.f32 0.0, %v790
  %792 = vmatprep.mubr.f32.mxu0 0.0
  %793 = vmatmul.mubr.f32.gmra.mrb[0].mxu0 %v636
  %v794 = vpop.f32.mrb[0].mxu0
  %v795 = vadd.f32 0.0, %v794
  %v796 = vpop.f32.mrb[0].mxu0
  %v797 = vadd.f32 0.0, %v796
  %798 = vmatprep.mubr.f32.mxu0 0.0
  %799 = vmatmul.mubr.f32.gmra.mrb[0].mxu0 %v639
  %v800 = vpop.f32.mrb[0].mxu0
  %v801 = vadd.f32 0.0, %v800
  %v802 = vpop.f32.mrb[0].mxu0
  %v803 = vadd.f32 0.0, %v802
  %804 = vmatprep.mubr.f32.mxu0 0.0
  %805 = vmatmul.mubr.f32.gmra.mrb[0].mxu0 %v642
  %v806 = vpop.f32.mrb[0].mxu0
  %v807 = vadd.f32 0.0, %v806
  %v808 = vpop.f32.mrb[0].mxu0
  %v809 = vadd.f32 0.0, %v808
  %810 = vdwg.mxu0
  %v811 = vadd.f32 %v493, %v717
  %v812 = vadd.f32 %v495, %v719
  %v813 = vadd.f32 %v499, %v723
  %v814 = vadd.f32 %v501, %v725
  %v815 = vadd.f32 %v505, %v729
  %v816 = vadd.f32 %v507, %v731
  %v817 = vadd.f32 %v511, %v735
  %v818 = vadd.f32 %v513, %v737
  %v819 = vadd.f32 %v517, %v741
  %v820 = vadd.f32 %v519, %v743
  %v821 = vadd.f32 %v523, %v747
  %v822 = vadd.f32 %v525, %v749
  %v823 = vadd.f32 %v529, %v753
  %v824 = vadd.f32 %v531, %v755
  %v825 = vadd.f32 %v535, %v759
  %v826 = vadd.f32 %v537, %v761
  %v827 = vadd.f32 %v541, %v765
  %v828 = vadd.f32 %v543, %v767
  %v829 = vadd.f32 %v547, %v771
  %v830 = vadd.f32 %v549, %v773
  %v831 = vadd.f32 %v553, %v777
  %v832 = vadd.f32 %v555, %v779
  %v833 = vadd.f32 %v559, %v783
  %v834 = vadd.f32 %v561, %v785
  %v835 = vadd.f32 %v565, %v789
  %v836 = vadd.f32 %v567, %v791
  %v837 = vadd.f32 %v571, %v795
  %v838 = vadd.f32 %v573, %v797
  %v839 = vadd.f32 %v577, %v801
  %v840 = vadd.f32 %v579, %v803
  %v841 = vadd.f32 %v583, %v807
  %v842 = vadd.f32 %v585, %v809
  %v844 = vlaneseq
  %v845 = vshrl.u32 %v844, 7
  %v846 = vsub.s32 0, %v845
  %v847 = vrot.slane %v137, %v846
  %v848 = vlaneseq
  %v849 = vshrl.u32 %v848, 7
  %v850 = vsub.s32 1, %v849
  %v851 = vrot.slane %v137, %v850
  %v854 = vadd.f32 %v811, %v847
  %v855 = vadd.f32 %v812, %v851
  %v856 = vadd.f32 %v813, %v847
  %v857 = vadd.f32 %v814, %v851
  %v858 = vadd.f32 %v815, %v847
  %v859 = vadd.f32 %v816, %v851
  %v860 = vadd.f32 %v817, %v847
  %v861 = vadd.f32 %v818, %v851
  %v862 = vadd.f32 %v819, %v847
  %v863 = vadd.f32 %v820, %v851
  %v864 = vadd.f32 %v821, %v847
  %v865 = vadd.f32 %v822, %v851
  %v866 = vadd.f32 %v823, %v847
  %v867 = vadd.f32 %v824, %v851
  %v868 = vadd.f32 %v825, %v847
  %v869 = vadd.f32 %v826, %v851
  %v870 = vadd.f32 %v827, %v847
  %v871 = vadd.f32 %v828, %v851
  %v872 = vadd.f32 %v829, %v847
  %v873 = vadd.f32 %v830, %v851
  %v874 = vadd.f32 %v831, %v847
  %v875 = vadd.f32 %v832, %v851
  %v876 = vadd.f32 %v833, %v847
  %v877 = vadd.f32 %v834, %v851
  %v878 = vadd.f32 %v835, %v847
  %v879 = vadd.f32 %v836, %v851
  %v880 = vadd.f32 %v837, %v847
  %v881 = vadd.f32 %v838, %v851
  %v882 = vadd.f32 %v839, %v847
  %v883 = vadd.f32 %v840, %v851
  %v884 = vadd.f32 %v841, %v847
  %v885 = vadd.f32 %v842, %v851
  %v886 = vmax.f32 %v854, 0.0
  %v887 = vmax.f32 %v855, 0.0
  %v888 = vmax.f32 %v856, 0.0
  %v889 = vmax.f32 %v857, 0.0
  %v890 = vmax.f32 %v858, 0.0
  %v891 = vmax.f32 %v859, 0.0
  %v892 = vmax.f32 %v860, 0.0
  %v893 = vmax.f32 %v861, 0.0
  %v894 = vmax.f32 %v862, 0.0
  %v895 = vmax.f32 %v863, 0.0
  %v896 = vmax.f32 %v864, 0.0
  %v897 = vmax.f32 %v865, 0.0
  %v898 = vmax.f32 %v866, 0.0
  %v899 = vmax.f32 %v867, 0.0
  %v900 = vmax.f32 %v868, 0.0
  %v901 = vmax.f32 %v869, 0.0
  %v902 = vmax.f32 %v870, 0.0
  %v903 = vmax.f32 %v871, 0.0
  %v904 = vmax.f32 %v872, 0.0
  %v905 = vmax.f32 %v873, 0.0
  %v906 = vmax.f32 %v874, 0.0
  %v907 = vmax.f32 %v875, 0.0
  %v908 = vmax.f32 %v876, 0.0
  %v909 = vmax.f32 %v877, 0.0
  %v910 = vmax.f32 %v878, 0.0
  %v911 = vmax.f32 %v879, 0.0
  %v912 = vmax.f32 %v880, 0.0
  %v913 = vmax.f32 %v881, 0.0
  %v914 = vmax.f32 %v882, 0.0
  %v915 = vmax.f32 %v883, 0.0
  %v916 = vmax.f32 %v884, 0.0
  %v917 = vmax.f32 %v885, 0.0
  %v919 = vsel %vm155, %v104, 0
  %v922 = vsel %vm155, %v105, 0
  %v925 = vsel %vm155, %v106, 0
  %v928 = vsel %vm155, %v107, 0
  %v931 = vsel %vm155, %v108, 0
  %v934 = vsel %vm155, %v109, 0
  %v937 = vsel %vm155, %v110, 0
  %v940 = vsel %vm155, %v111, 0
  %v943 = vsel %vm155, %v112, 0
  %v946 = vsel %vm155, %v113, 0
  %v949 = vsel %vm155, %v114, 0
  %v952 = vsel %vm155, %v115, 0
  %v955 = vsel %vm155, %v116, 0
  %v958 = vsel %vm155, %v117, 0
  %v961 = vsel %vm155, %v118, 0
  %v964 = vsel %vm155, %v119, 0
  %966 = vmatprep.subr.mxu0 %v148
  %967 = vmatpush1.msra.mxu0 %v147
  %968 = vmatprep.subr.mxu0 %v150
  %969 = vmatpush1.msra.mxu0 %v149
  %970 = vmatprep.subr.mxu0 %v152
  %971 = vmatpush1.msra.mxu0 %v151
  %972 = vmatprep.subr.mxu0 %v209
  %973 = vmatpush1.msra.mxu0 %v206
  %974 = vmatprep.subr.mxu0 0.0
  %975 = vmatpush1.msra.mxu0 0.0
  %976 = vmatprep.subr.mxu0 0.0
  %977 = vmatpush1.msra.mxu0 0.0
  %978 = vmatprep.subr.mxu0 0.0
  %979 = vmatpush1.msra.mxu0 0.0
  %980 = vmatprep.subr.mxu0 0.0
  %981 = vmatpush1.msra.mxu0 0.0
  %982 = vmatprep.subr.mxu0 0.0
  %983 = vmatpush1.msra.mxu0 0.0
  %984 = vmatprep.subr.mxu0 0.0
  %985 = vmatpush1.msra.mxu0 0.0
  %986 = vmatprep.subr.mxu0 0.0
  %987 = vmatpush1.msra.mxu0 0.0
  %988 = vmatprep.subr.mxu0 0.0
  %989 = vmatpush1.msra.mxu0 0.0
  %990 = vmatprep.subr.mxu0 0.0
  %991 = vmatpush1.msra.mxu0 0.0
  %992 = vmatprep.subr.mxu0 0.0
  %993 = vmatpush1.msra.mxu0 0.0
  %994 = vmatprep.subr.mxu0 0.0
  %995 = vmatpush1.msra.mxu0 0.0
  %996 = vmatprep.subr.mxu0 0.0
  %997 = vmatpush1.msra.mxu0 0.0
  %998 = vmatprep.subr.mxu0 0.0
  %999 = vmatpush1.msra.mxu0 0.0
  %1000 = vmatprep.subr.mxu0 0.0
  %1001 = vmatpush1.msra.mxu0 0.0
  %1002 = vmatprep.subr.mxu0 0.0
  %1003 = vmatpush1.msra.mxu0 0.0
  %1004 = vmatprep.subr.mxu0 0.0
  %1005 = vmatpush1.msra.mxu0 0.0
  %1006 = vmatprep.subr.mxu0 0.0
  %1007 = vmatpush1.msra.mxu0 0.0
  %1008 = vmatprep.subr.mxu0 0.0
  %1009 = vmatpush1.msra.mxu0 0.0
  %1010 = vmatprep.subr.mxu0 0.0
  %1011 = vmatpush1.msra.mxu0 0.0
  %1012 = vmatprep.subr.mxu0 0.0
  %1013 = vmatpush1.msra.mxu0 0.0
  %1014 = vmatprep.subr.mxu0 0.0
  %1015 = vmatpush1.msra.mxu0 0.0
  %1016 = vmatprep.subr.mxu0 0.0
  %1017 = vmatpush1.msra.mxu0 0.0
  %1018 = vmatprep.subr.mxu0 0.0
  %1019 = vmatpush1.msra.mxu0 0.0
  %1020 = vmatprep.subr.mxu0 0.0
  %1021 = vmatpush1.msra.mxu0 0.0
  %1022 = vmatprep.subr.mxu0 0.0
  %1023 = vmatpush1.msra.mxu0 0.0
  %1024 = vmatprep.subr.mxu0 0.0
  %1025 = vmatpush1.msra.mxu0 0.0
  %1026 = vmatprep.subr.mxu0 0.0
  %1027 = vmatpush1.msra.mxu0 0.0
  %1028 = vmatprep.subr.mxu0 0.0
  %1029 = vmatpush1.msra.mxu0 0.0
  %1030 = vmatprep.mubr.f32.mxu0 0.0
  %1031 = vmatmul.mubr.f32.gmra.mrb[0].mxu0 %v919
  %v1032 = vpop.f32.mrb[0].mxu0
  %v1033 = vadd.f32 0.0, %v1032
  %v1034 = vpop.f32.mrb[0].mxu0
  %v1035 = vadd.f32 0.0, %v1034
  %1036 = vmatprep.mubr.f32.mxu0 0.0
  %1037 = vmatmul.mubr.f32.gmra.mrb[0].mxu0 %v922
  %v1038 = vpop.f32.mrb[0].mxu0
  %v1039 = vadd.f32 0.0, %v1038
  %v1040 = vpop.f32.mrb[0].mxu0
  %v1041 = vadd.f32 0.0, %v1040
  %1042 = vmatprep.mubr.f32.mxu0 0.0
  %1043 = vmatmul.mubr.f32.gmra.mrb[0].mxu0 %v925
  %v1044 = vpop.f32.mrb[0].mxu0
  %v1045 = vadd.f32 0.0, %v1044
  %v1046 = vpop.f32.mrb[0].mxu0
  %v1047 = vadd.f32 0.0, %v1046
  %1048 = vmatprep.mubr.f32.mxu0 0.0
  %1049 = vmatmul.mubr.f32.gmra.mrb[0].mxu0 %v928
  %v1050 = vpop.f32.mrb[0].mxu0
  %v1051 = vadd.f32 0.0, %v1050
  %v1052 = vpop.f32.mrb[0].mxu0
  %v1053 = vadd.f32 0.0, %v1052
  %1054 = vmatprep.mubr.f32.mxu0 0.0
  %1055 = vmatmul.mubr.f32.gmra.mrb[0].mxu0 %v931
  %v1056 = vpop.f32.mrb[0].mxu0
  %v1057 = vadd.f32 0.0, %v1056
  %v1058 = vpop.f32.mrb[0].mxu0
  %v1059 = vadd.f32 0.0, %v1058
  %1060 = vmatprep.mubr.f32.mxu0 0.0
  %1061 = vmatmul.mubr.f32.gmra.mrb[0].mxu0 %v934
  %v1062 = vpop.f32.mrb[0].mxu0
  %v1063 = vadd.f32 0.0, %v1062
  %v1064 = vpop.f32.mrb[0].mxu0
  %v1065 = vadd.f32 0.0, %v1064
  %1066 = vmatprep.mubr.f32.mxu0 0.0
  %1067 = vmatmul.mubr.f32.gmra.mrb[0].mxu0 %v937
  %v1068 = vpop.f32.mrb[0].mxu0
  %v1069 = vadd.f32 0.0, %v1068
  %v1070 = vpop.f32.mrb[0].mxu0
  %v1071 = vadd.f32 0.0, %v1070
  %1072 = vmatprep.mubr.f32.mxu0 0.0
  %1073 = vmatmul.mubr.f32.gmra.mrb[0].mxu0 %v940
  %v1074 = vpop.f32.mrb[0].mxu0
  %v1075 = vadd.f32 0.0, %v1074
  %v1076 = vpop.f32.mrb[0].mxu0
  %v1077 = vadd.f32 0.0, %v1076
  %1078 = vmatprep.mubr.f32.mxu0 0.0
  %1079 = vmatmul.mubr.f32.gmra.mrb[0].mxu0 %v943
  %v1080 = vpop.f32.mrb[0].mxu0
  %v1081 = vadd.f32 0.0, %v1080
  %v1082 = vpop.f32.mrb[0].mxu0
  %v1083 = vadd.f32 0.0, %v1082
  %1084 = vmatprep.mubr.f32.mxu0 0.0
  %1085 = vmatmul.mubr.f32.gmra.mrb[0].mxu0 %v946
  %v1086 = vpop.f32.mrb[0].mxu0
  %v1087 = vadd.f32 0.0, %v1086
  %v1088 = vpop.f32.mrb[0].mxu0
  %v1089 = vadd.f32 0.0, %v1088
  %1090 = vmatprep.mubr.f32.mxu0 0.0
  %1091 = vmatmul.mubr.f32.gmra.mrb[0].mxu0 %v949
  %v1092 = vpop.f32.mrb[0].mxu0
  %v1093 = vadd.f32 0.0, %v1092
  %v1094 = vpop.f32.mrb[0].mxu0
  %v1095 = vadd.f32 0.0, %v1094
  %1096 = vmatprep.mubr.f32.mxu0 0.0
  %1097 = vmatmul.mubr.f32.gmra.mrb[0].mxu0 %v952
  %v1098 = vpop.f32.mrb[0].mxu0
  %v1099 = vadd.f32 0.0, %v1098
  %v1100 = vpop.f32.mrb[0].mxu0
  %v1101 = vadd.f32 0.0, %v1100
  %1102 = vmatprep.mubr.f32.mxu0 0.0
  %1103 = vmatmul.mubr.f32.gmra.mrb[0].mxu0 %v955
  %v1104 = vpop.f32.mrb[0].mxu0
  %v1105 = vadd.f32 0.0, %v1104
  %v1106 = vpop.f32.mrb[0].mxu0
  %v1107 = vadd.f32 0.0, %v1106
  %1108 = vmatprep.mubr.f32.mxu0 0.0
  %1109 = vmatmul.mubr.f32.gmra.mrb[0].mxu0 %v958
  %v1110 = vpop.f32.mrb[0].mxu0
  %v1111 = vadd.f32 0.0, %v1110
  %v1112 = vpop.f32.mrb[0].mxu0
  %v1113 = vadd.f32 0.0, %v1112
  %1114 = vmatprep.mubr.f32.mxu0 0.0
  %1115 = vmatmul.mubr.f32.gmra.mrb[0].mxu0 %v961
  %v1116 = vpop.f32.mrb[0].mxu0
  %v1117 = vadd.f32 0.0, %v1116
  %v1118 = vpop.f32.mrb[0].mxu0
  %v1119 = vadd.f32 0.0, %v1118
  %1120 = vmatprep.mubr.f32.mxu0 0.0
  %1121 = vmatmul.mubr.f32.gmra.mrb[0].mxu0 %v964
  %v1122 = vpop.f32.mrb[0].mxu0
  %v1123 = vadd.f32 0.0, %v1122
  %v1124 = vpop.f32.mrb[0].mxu0
  %v1125 = vadd.f32 0.0, %v1124
  %1126 = vdwg.mxu0
  %1127 = vmatprep.subr.mxu0 %v139
  %1128 = vmatpush1.msra.mxu0 %v138
  %1129 = vmatprep.subr.mxu0 %v141
  %1130 = vmatpush1.msra.mxu0 %v140
  %1131 = vmatprep.subr.mxu0 %v143
  %1132 = vmatpush1.msra.mxu0 %v142
  %1133 = vmatprep.subr.mxu0 %v424
  %1134 = vmatpush1.msra.mxu0 %v421
  %1135 = vmatprep.subr.mxu0 0.0
  %1136 = vmatpush1.msra.mxu0 0.0
  %1137 = vmatprep.subr.mxu0 0.0
  %1138 = vmatpush1.msra.mxu0 0.0
  %1139 = vmatprep.subr.mxu0 0.0
  %1140 = vmatpush1.msra.mxu0 0.0
  %1141 = vmatprep.subr.mxu0 0.0
  %1142 = vmatpush1.msra.mxu0 0.0
  %1143 = vmatprep.subr.mxu0 0.0
  %1144 = vmatpush1.msra.mxu0 0.0
  %1145 = vmatprep.subr.mxu0 0.0
  %1146 = vmatpush1.msra.mxu0 0.0
  %1147 = vmatprep.subr.mxu0 0.0
  %1148 = vmatpush1.msra.mxu0 0.0
  %1149 = vmatprep.subr.mxu0 0.0
  %1150 = vmatpush1.msra.mxu0 0.0
  %1151 = vmatprep.subr.mxu0 0.0
  %1152 = vmatpush1.msra.mxu0 0.0
  %1153 = vmatprep.subr.mxu0 0.0
  %1154 = vmatpush1.msra.mxu0 0.0
  %1155 = vmatprep.subr.mxu0 0.0
  %1156 = vmatpush1.msra.mxu0 0.0
  %1157 = vmatprep.subr.mxu0 0.0
  %1158 = vmatpush1.msra.mxu0 0.0
  %1159 = vmatprep.subr.mxu0 0.0
  %1160 = vmatpush1.msra.mxu0 0.0
  %1161 = vmatprep.subr.mxu0 0.0
  %1162 = vmatpush1.msra.mxu0 0.0
  %1163 = vmatprep.subr.mxu0 0.0
  %1164 = vmatpush1.msra.mxu0 0.0
  %1165 = vmatprep.subr.mxu0 0.0
  %1166 = vmatpush1.msra.mxu0 0.0
  %1167 = vmatprep.subr.mxu0 0.0
  %1168 = vmatpush1.msra.mxu0 0.0
  %1169 = vmatprep.subr.mxu0 0.0
  %1170 = vmatpush1.msra.mxu0 0.0
  %1171 = vmatprep.subr.mxu0 0.0
  %1172 = vmatpush1.msra.mxu0 0.0
  %1173 = vmatprep.subr.mxu0 0.0
  %1174 = vmatpush1.msra.mxu0 0.0
  %1175 = vmatprep.subr.mxu0 0.0
  %1176 = vmatpush1.msra.mxu0 0.0
  %1177 = vmatprep.subr.mxu0 0.0
  %1178 = vmatpush1.msra.mxu0 0.0
  %1179 = vmatprep.subr.mxu0 0.0
  %1180 = vmatpush1.msra.mxu0 0.0
  %1181 = vmatprep.subr.mxu0 0.0
  %1182 = vmatpush1.msra.mxu0 0.0
  %1183 = vmatprep.subr.mxu0 0.0
  %1184 = vmatpush1.msra.mxu0 0.0
  %1185 = vmatprep.subr.mxu0 0.0
  %1186 = vmatpush1.msra.mxu0 0.0
  %1187 = vmatprep.subr.mxu0 0.0
  %1188 = vmatpush1.msra.mxu0 0.0
  %1189 = vmatprep.subr.mxu0 0.0
  %1190 = vmatpush1.msra.mxu0 0.0
  %1191 = vmatprep.mubr.f32.mxu0 0.0
  %1192 = vmatmul.mubr.f32.gmra.mrb[0].mxu0 %v597
  %v1193 = vpop.f32.mrb[0].mxu0
  %v1194 = vadd.f32 %v1033, %v1193
  %v1195 = vpop.f32.mrb[0].mxu0
  %v1196 = vadd.f32 %v1035, %v1195
  %1197 = vmatprep.mubr.f32.mxu0 0.0
  %1198 = vmatmul.mubr.f32.gmra.mrb[0].mxu0 %v600
  %v1199 = vpop.f32.mrb[0].mxu0
  %v1200 = vadd.f32 %v1039, %v1199
  %v1201 = vpop.f32.mrb[0].mxu0
  %v1202 = vadd.f32 %v1041, %v1201
  %1203 = vmatprep.mubr.f32.mxu0 0.0
  %1204 = vmatmul.mubr.f32.gmra.mrb[0].mxu0 %v603
  %v1205 = vpop.f32.mrb[0].mxu0
  %v1206 = vadd.f32 %v1045, %v1205
  %v1207 = vpop.f32.mrb[0].mxu0
  %v1208 = vadd.f32 %v1047, %v1207
  %1209 = vmatprep.mubr.f32.mxu0 0.0
  %1210 = vmatmul.mubr.f32.gmra.mrb[0].mxu0 %v606
  %v1211 = vpop.f32.mrb[0].mxu0
  %v1212 = vadd.f32 %v1051, %v1211
  %v1213 = vpop.f32.mrb[0].mxu0
  %v1214 = vadd.f32 %v1053, %v1213
  %1215 = vmatprep.mubr.f32.mxu0 0.0
  %1216 = vmatmul.mubr.f32.gmra.mrb[0].mxu0 %v609
  %v1217 = vpop.f32.mrb[0].mxu0
  %v1218 = vadd.f32 %v1057, %v1217
  %v1219 = vpop.f32.mrb[0].mxu0
  %v1220 = vadd.f32 %v1059, %v1219
  %1221 = vmatprep.mubr.f32.mxu0 0.0
  %1222 = vmatmul.mubr.f32.gmra.mrb[0].mxu0 %v612
  %v1223 = vpop.f32.mrb[0].mxu0
  %v1224 = vadd.f32 %v1063, %v1223
  %v1225 = vpop.f32.mrb[0].mxu0
  %v1226 = vadd.f32 %v1065, %v1225
  %1227 = vmatprep.mubr.f32.mxu0 0.0
  %1228 = vmatmul.mubr.f32.gmra.mrb[0].mxu0 %v615
  %v1229 = vpop.f32.mrb[0].mxu0
  %v1230 = vadd.f32 %v1069, %v1229
  %v1231 = vpop.f32.mrb[0].mxu0
  %v1232 = vadd.f32 %v1071, %v1231
  %1233 = vmatprep.mubr.f32.mxu0 0.0
  %1234 = vmatmul.mubr.f32.gmra.mrb[0].mxu0 %v618
  %v1235 = vpop.f32.mrb[0].mxu0
  %v1236 = vadd.f32 %v1075, %v1235
  %v1237 = vpop.f32.mrb[0].mxu0
  %v1238 = vadd.f32 %v1077, %v1237
  %1239 = vmatprep.mubr.f32.mxu0 0.0
  %1240 = vmatmul.mubr.f32.gmra.mrb[0].mxu0 %v621
  %v1241 = vpop.f32.mrb[0].mxu0
  %v1242 = vadd.f32 %v1081, %v1241
  %v1243 = vpop.f32.mrb[0].mxu0
  %v1244 = vadd.f32 %v1083, %v1243
  %1245 = vmatprep.mubr.f32.mxu0 0.0
  %1246 = vmatmul.mubr.f32.gmra.mrb[0].mxu0 %v624
  %v1247 = vpop.f32.mrb[0].mxu0
  %v1248 = vadd.f32 %v1087, %v1247
  %v1249 = vpop.f32.mrb[0].mxu0
  %v1250 = vadd.f32 %v1089, %v1249
  %1251 = vmatprep.mubr.f32.mxu0 0.0
  %1252 = vmatmul.mubr.f32.gmra.mrb[0].mxu0 %v627
  %v1253 = vpop.f32.mrb[0].mxu0
  %v1254 = vadd.f32 %v1093, %v1253
  %v1255 = vpop.f32.mrb[0].mxu0
  %v1256 = vadd.f32 %v1095, %v1255
  %1257 = vmatprep.mubr.f32.mxu0 0.0
  %1258 = vmatmul.mubr.f32.gmra.mrb[0].mxu0 %v630
  %v1259 = vpop.f32.mrb[0].mxu0
  %v1260 = vadd.f32 %v1099, %v1259
  %v1261 = vpop.f32.mrb[0].mxu0
  %v1262 = vadd.f32 %v1101, %v1261
  %1263 = vmatprep.mubr.f32.mxu0 0.0
  %1264 = vmatmul.mubr.f32.gmra.mrb[0].mxu0 %v633
  %v1265 = vpop.f32.mrb[0].mxu0
  %v1266 = vadd.f32 %v1105, %v1265
  %v1267 = vpop.f32.mrb[0].mxu0
  %v1268 = vadd.f32 %v1107, %v1267
  %1269 = vmatprep.mubr.f32.mxu0 0.0
  %1270 = vmatmul.mubr.f32.gmra.mrb[0].mxu0 %v636
  %v1271 = vpop.f32.mrb[0].mxu0
  %v1272 = vadd.f32 %v1111, %v1271
  %v1273 = vpop.f32.mrb[0].mxu0
  %v1274 = vadd.f32 %v1113, %v1273
  %1275 = vmatprep.mubr.f32.mxu0 0.0
  %1276 = vmatmul.mubr.f32.gmra.mrb[0].mxu0 %v639
  %v1277 = vpop.f32.mrb[0].mxu0
  %v1278 = vadd.f32 %v1117, %v1277
  %v1279 = vpop.f32.mrb[0].mxu0
  %v1280 = vadd.f32 %v1119, %v1279
  %1281 = vmatprep.mubr.f32.mxu0 0.0
  %1282 = vmatmul.mubr.f32.gmra.mrb[0].mxu0 %v642
  %v1283 = vpop.f32.mrb[0].mxu0
  %v1284 = vadd.f32 %v1123, %v1283
  %v1285 = vpop.f32.mrb[0].mxu0
  %v1286 = vadd.f32 %v1125, %v1285
  %1287 = vdwg.mxu0
  %v1289 = vsel %vm155, %v121, 0
  %v1292 = vsel %vm155, %v122, 0
  %v1295 = vsel %vm155, %v123, 0
  %v1298 = vsel %vm155, %v124, 0
  %v1301 = vsel %vm155, %v125, 0
  %v1304 = vsel %vm155, %v126, 0
  %v1307 = vsel %vm155, %v127, 0
  %v1310 = vsel %vm155, %v128, 0
  %v1313 = vsel %vm155, %v129, 0
  %v1316 = vsel %vm155, %v130, 0
  %v1319 = vsel %vm155, %v131, 0
  %v1322 = vsel %vm155, %v132, 0
  %v1325 = vsel %vm155, %v133, 0
  %v1328 = vsel %vm155, %v134, 0
  %v1331 = vsel %vm155, %v135, 0
  %v1334 = vsel %vm155, %v136, 0
  %1336 = vmatprep.subr.mxu0 %v589
  %1337 = vmatpush1.msra.mxu0 %v588
  %1338 = vmatprep.subr.mxu0 %v591
  %1339 = vmatpush1.msra.mxu0 %v590
  %1340 = vmatprep.subr.mxu0 %v593
  %1341 = vmatpush1.msra.mxu0 %v592
  %1342 = vmatprep.subr.mxu0 %v648
  %1343 = vmatpush1.msra.mxu0 %v645
  %1344 = vmatprep.subr.mxu0 0.0
  %1345 = vmatpush1.msra.mxu0 0.0
  %1346 = vmatprep.subr.mxu0 0.0
  %1347 = vmatpush1.msra.mxu0 0.0
  %1348 = vmatprep.subr.mxu0 0.0
  %1349 = vmatpush1.msra.mxu0 0.0
  %1350 = vmatprep.subr.mxu0 0.0
  %1351 = vmatpush1.msra.mxu0 0.0
  %1352 = vmatprep.subr.mxu0 0.0
  %1353 = vmatpush1.msra.mxu0 0.0
  %1354 = vmatprep.subr.mxu0 0.0
  %1355 = vmatpush1.msra.mxu0 0.0
  %1356 = vmatprep.subr.mxu0 0.0
  %1357 = vmatpush1.msra.mxu0 0.0
  %1358 = vmatprep.subr.mxu0 0.0
  %1359 = vmatpush1.msra.mxu0 0.0
  %1360 = vmatprep.subr.mxu0 0.0
  %1361 = vmatpush1.msra.mxu0 0.0
  %1362 = vmatprep.subr.mxu0 0.0
  %1363 = vmatpush1.msra.mxu0 0.0
  %1364 = vmatprep.subr.mxu0 0.0
  %1365 = vmatpush1.msra.mxu0 0.0
  %1366 = vmatprep.subr.mxu0 0.0
  %1367 = vmatpush1.msra.mxu0 0.0
  %1368 = vmatprep.subr.mxu0 0.0
  %1369 = vmatpush1.msra.mxu0 0.0
  %1370 = vmatprep.subr.mxu0 0.0
  %1371 = vmatpush1.msra.mxu0 0.0
  %1372 = vmatprep.subr.mxu0 0.0
  %1373 = vmatpush1.msra.mxu0 0.0
  %1374 = vmatprep.subr.mxu0 0.0
  %1375 = vmatpush1.msra.mxu0 0.0
  %1376 = vmatprep.subr.mxu0 0.0
  %1377 = vmatpush1.msra.mxu0 0.0
  %1378 = vmatprep.subr.mxu0 0.0
  %1379 = vmatpush1.msra.mxu0 0.0
  %1380 = vmatprep.subr.mxu0 0.0
  %1381 = vmatpush1.msra.mxu0 0.0
  %1382 = vmatprep.subr.mxu0 0.0
  %1383 = vmatpush1.msra.mxu0 0.0
  %1384 = vmatprep.subr.mxu0 0.0
  %1385 = vmatpush1.msra.mxu0 0.0
  %1386 = vmatprep.subr.mxu0 0.0
  %1387 = vmatpush1.msra.mxu0 0.0
  %1388 = vmatprep.subr.mxu0 0.0
  %1389 = vmatpush1.msra.mxu0 0.0
  %1390 = vmatprep.subr.mxu0 0.0
  %1391 = vmatpush1.msra.mxu0 0.0
  %1392 = vmatprep.subr.mxu0 0.0
  %1393 = vmatpush1.msra.mxu0 0.0
  %1394 = vmatprep.subr.mxu0 0.0
  %1395 = vmatpush1.msra.mxu0 0.0
  %1396 = vmatprep.subr.mxu0 0.0
  %1397 = vmatpush1.msra.mxu0 0.0
  %1398 = vmatprep.subr.mxu0 0.0
  %1399 = vmatpush1.msra.mxu0 0.0
  %1400 = vmatprep.mubr.f32.mxu0 0.0
  %1401 = vmatmul.mubr.f32.gmra.mrb[0].mxu0 %v1289
  %v1402 = vpop.f32.mrb[0].mxu0
  %v1403 = vadd.f32 0.0, %v1402
  %v1404 = vpop.f32.mrb[0].mxu0
  %v1405 = vadd.f32 0.0, %v1404
  %1406 = vmatprep.mubr.f32.mxu0 0.0
  %1407 = vmatmul.mubr.f32.gmra.mrb[0].mxu0 %v1292
  %v1408 = vpop.f32.mrb[0].mxu0
  %v1409 = vadd.f32 0.0, %v1408
  %v1410 = vpop.f32.mrb[0].mxu0
  %v1411 = vadd.f32 0.0, %v1410
  %1412 = vmatprep.mubr.f32.mxu0 0.0
  %1413 = vmatmul.mubr.f32.gmra.mrb[0].mxu0 %v1295
  %v1414 = vpop.f32.mrb[0].mxu0
  %v1415 = vadd.f32 0.0, %v1414
  %v1416 = vpop.f32.mrb[0].mxu0
  %v1417 = vadd.f32 0.0, %v1416
  %1418 = vmatprep.mubr.f32.mxu0 0.0
  %1419 = vmatmul.mubr.f32.gmra.mrb[0].mxu0 %v1298
  %v1420 = vpop.f32.mrb[0].mxu0
  %v1421 = vadd.f32 0.0, %v1420
  %v1422 = vpop.f32.mrb[0].mxu0
  %v1423 = vadd.f32 0.0, %v1422
  %1424 = vmatprep.mubr.f32.mxu0 0.0
  %1425 = vmatmul.mubr.f32.gmra.mrb[0].mxu0 %v1301
  %v1426 = vpop.f32.mrb[0].mxu0
  %v1427 = vadd.f32 0.0, %v1426
  %v1428 = vpop.f32.mrb[0].mxu0
  %v1429 = vadd.f32 0.0, %v1428
  %1430 = vmatprep.mubr.f32.mxu0 0.0
  %1431 = vmatmul.mubr.f32.gmra.mrb[0].mxu0 %v1304
  %v1432 = vpop.f32.mrb[0].mxu0
  %v1433 = vadd.f32 0.0, %v1432
  %v1434 = vpop.f32.mrb[0].mxu0
  %v1435 = vadd.f32 0.0, %v1434
  %1436 = vmatprep.mubr.f32.mxu0 0.0
  %1437 = vmatmul.mubr.f32.gmra.mrb[0].mxu0 %v1307
  %v1438 = vpop.f32.mrb[0].mxu0
  %v1439 = vadd.f32 0.0, %v1438
  %v1440 = vpop.f32.mrb[0].mxu0
  %v1441 = vadd.f32 0.0, %v1440
  %1442 = vmatprep.mubr.f32.mxu0 0.0
  %1443 = vmatmul.mubr.f32.gmra.mrb[0].mxu0 %v1310
  %v1444 = vpop.f32.mrb[0].mxu0
  %v1445 = vadd.f32 0.0, %v1444
  %v1446 = vpop.f32.mrb[0].mxu0
  %v1447 = vadd.f32 0.0, %v1446
  %1448 = vmatprep.mubr.f32.mxu0 0.0
  %1449 = vmatmul.mubr.f32.gmra.mrb[0].mxu0 %v1313
  %v1450 = vpop.f32.mrb[0].mxu0
  %v1451 = vadd.f32 0.0, %v1450
  %v1452 = vpop.f32.mrb[0].mxu0
  %v1453 = vadd.f32 0.0, %v1452
  %1454 = vmatprep.mubr.f32.mxu0 0.0
  %1455 = vmatmul.mubr.f32.gmra.mrb[0].mxu0 %v1316
  %v1456 = vpop.f32.mrb[0].mxu0
  %v1457 = vadd.f32 0.0, %v1456
  %v1458 = vpop.f32.mrb[0].mxu0
  %v1459 = vadd.f32 0.0, %v1458
  %1460 = vmatprep.mubr.f32.mxu0 0.0
  %1461 = vmatmul.mubr.f32.gmra.mrb[0].mxu0 %v1319
  %v1462 = vpop.f32.mrb[0].mxu0
  %v1463 = vadd.f32 0.0, %v1462
  %v1464 = vpop.f32.mrb[0].mxu0
  %v1465 = vadd.f32 0.0, %v1464
  %1466 = vmatprep.mubr.f32.mxu0 0.0
  %1467 = vmatmul.mubr.f32.gmra.mrb[0].mxu0 %v1322
  %v1468 = vpop.f32.mrb[0].mxu0
  %v1469 = vadd.f32 0.0, %v1468
  %v1470 = vpop.f32.mrb[0].mxu0
  %v1471 = vadd.f32 0.0, %v1470
  %1472 = vmatprep.mubr.f32.mxu0 0.0
  %1473 = vmatmul.mubr.f32.gmra.mrb[0].mxu0 %v1325
  %v1474 = vpop.f32.mrb[0].mxu0
  %v1475 = vadd.f32 0.0, %v1474
  %v1476 = vpop.f32.mrb[0].mxu0
  %v1477 = vadd.f32 0.0, %v1476
  %1478 = vmatprep.mubr.f32.mxu0 0.0
  %1479 = vmatmul.mubr.f32.gmra.mrb[0].mxu0 %v1328
  %v1480 = vpop.f32.mrb[0].mxu0
  %v1481 = vadd.f32 0.0, %v1480
  %v1482 = vpop.f32.mrb[0].mxu0
  %v1483 = vadd.f32 0.0, %v1482
  %1484 = vmatprep.mubr.f32.mxu0 0.0
  %1485 = vmatmul.mubr.f32.gmra.mrb[0].mxu0 %v1331
  %v1486 = vpop.f32.mrb[0].mxu0
  %v1487 = vadd.f32 0.0, %v1486
  %v1488 = vpop.f32.mrb[0].mxu0
  %v1489 = vadd.f32 0.0, %v1488
  %1490 = vmatprep.mubr.f32.mxu0 0.0
  %1491 = vmatmul.mubr.f32.gmra.mrb[0].mxu0 %v1334
  %v1492 = vpop.f32.mrb[0].mxu0
  %v1493 = vadd.f32 0.0, %v1492
  %v1494 = vpop.f32.mrb[0].mxu0
  %v1495 = vadd.f32 0.0, %v1494
  %1496 = vdwg.mxu0
  %v1497 = vadd.f32 %v1194, %v1403
  %v1498 = vadd.f32 %v1196, %v1405
  %v1499 = vadd.f32 %v1200, %v1409
  %v1500 = vadd.f32 %v1202, %v1411
  %v1501 = vadd.f32 %v1206, %v1415
  %v1502 = vadd.f32 %v1208, %v1417
  %v1503 = vadd.f32 %v1212, %v1421
  %v1504 = vadd.f32 %v1214, %v1423
  %v1505 = vadd.f32 %v1218, %v1427
  %v1506 = vadd.f32 %v1220, %v1429
  %v1507 = vadd.f32 %v1224, %v1433
  %v1508 = vadd.f32 %v1226, %v1435
  %v1509 = vadd.f32 %v1230, %v1439
  %v1510 = vadd.f32 %v1232, %v1441
  %v1511 = vadd.f32 %v1236, %v1445
  %v1512 = vadd.f32 %v1238, %v1447
  %v1513 = vadd.f32 %v1242, %v1451
  %v1514 = vadd.f32 %v1244, %v1453
  %v1515 = vadd.f32 %v1248, %v1457
  %v1516 = vadd.f32 %v1250, %v1459
  %v1517 = vadd.f32 %v1254, %v1463
  %v1518 = vadd.f32 %v1256, %v1465
  %v1519 = vadd.f32 %v1260, %v1469
  %v1520 = vadd.f32 %v1262, %v1471
  %v1521 = vadd.f32 %v1266, %v1475
  %v1522 = vadd.f32 %v1268, %v1477
  %v1523 = vadd.f32 %v1272, %v1481
  %v1524 = vadd.f32 %v1274, %v1483
  %v1525 = vadd.f32 %v1278, %v1487
  %v1526 = vadd.f32 %v1280, %v1489
  %v1527 = vadd.f32 %v1284, %v1493
  %v1528 = vadd.f32 %v1286, %v1495
  %v1529 = vadd.f32 %v1497, %v847
  %v1530 = vadd.f32 %v1498, %v851
  %v1531 = vadd.f32 %v1499, %v847
  %v1532 = vadd.f32 %v1500, %v851
  %v1533 = vadd.f32 %v1501, %v847
  %v1534 = vadd.f32 %v1502, %v851
  %v1535 = vadd.f32 %v1503, %v847
  %v1536 = vadd.f32 %v1504, %v851
  %v1537 = vadd.f32 %v1505, %v847
  %v1538 = vadd.f32 %v1506, %v851
  %v1539 = vadd.f32 %v1507, %v847
  %v1540 = vadd.f32 %v1508, %v851
  %v1541 = vadd.f32 %v1509, %v847
  %v1542 = vadd.f32 %v1510, %v851
  %v1543 = vadd.f32 %v1511, %v847
  %v1544 = vadd.f32 %v1512, %v851
  %v1545 = vadd.f32 %v1513, %v847
  %v1546 = vadd.f32 %v1514, %v851
  %v1547 = vadd.f32 %v1515, %v847
  %v1548 = vadd.f32 %v1516, %v851
  %v1549 = vadd.f32 %v1517, %v847
  %v1550 = vadd.f32 %v1518, %v851
  %v1551 = vadd.f32 %v1519, %v847
  %v1552 = vadd.f32 %v1520, %v851
  %v1553 = vadd.f32 %v1521, %v847
  %v1554 = vadd.f32 %v1522, %v851
  %v1555 = vadd.f32 %v1523, %v847
  %v1556 = vadd.f32 %v1524, %v851
  %v1557 = vadd.f32 %v1525, %v847
  %v1558 = vadd.f32 %v1526, %v851
  %v1559 = vadd.f32 %v1527, %v847
  %v1560 = vadd.f32 %v1528, %v851
  %v1561 = vmax.f32 %v1529, 0.0
  %v1562 = vmax.f32 %v1530, 0.0
  %v1563 = vmax.f32 %v1531, 0.0
  %v1564 = vmax.f32 %v1532, 0.0
  %v1565 = vmax.f32 %v1533, 0.0
  %v1566 = vmax.f32 %v1534, 0.0
  %v1567 = vmax.f32 %v1535, 0.0
  %v1568 = vmax.f32 %v1536, 0.0
  %v1569 = vmax.f32 %v1537, 0.0
  %v1570 = vmax.f32 %v1538, 0.0
  %v1571 = vmax.f32 %v1539, 0.0
  %v1572 = vmax.f32 %v1540, 0.0
  %v1573 = vmax.f32 %v1541, 0.0
  %v1574 = vmax.f32 %v1542, 0.0
  %v1575 = vmax.f32 %v1543, 0.0
  %v1576 = vmax.f32 %v1544, 0.0
  %v1577 = vmax.f32 %v1545, 0.0
  %v1578 = vmax.f32 %v1546, 0.0
  %v1579 = vmax.f32 %v1547, 0.0
  %v1580 = vmax.f32 %v1548, 0.0
  %v1581 = vmax.f32 %v1549, 0.0
  %v1582 = vmax.f32 %v1550, 0.0
  %v1583 = vmax.f32 %v1551, 0.0
  %v1584 = vmax.f32 %v1552, 0.0
  %v1585 = vmax.f32 %v1553, 0.0
  %v1586 = vmax.f32 %v1554, 0.0
  %v1587 = vmax.f32 %v1555, 0.0
  %v1588 = vmax.f32 %v1556, 0.0
  %v1589 = vmax.f32 %v1557, 0.0
  %v1590 = vmax.f32 %v1558, 0.0
  %v1591 = vmax.f32 %v1559, 0.0
  %v1592 = vmax.f32 %v1560, 0.0
  %v1593 = vld [vmem:[%s5] sm:$0xff]
  %v1594 = vld [vmem:[%s5 + $0x8] sm:$0xff]
  %v1595 = vld [vmem:[%s5 + $0x10] sm:$0xff]
  %v1596 = vld [vmem:[%s5 + $0x18] sm:$0xff]
  %v1597 = vld [vmem:[%s5 + $0x20] sm:$0xff]
  %v1598 = vld [vmem:[%s5 + $0x28] sm:$0xff]
  %v1599 = vld [vmem:[%s5 + $0x30] sm:$0xff]
  %v1600 = vld [vmem:[%s5 + $0x38] sm:$0xff]
  %v1601 = vld [vmem:[%s5 + $0x40] sm:$0xff]
  %v1602 = vld [vmem:[%s5 + $0x48] sm:$0xff]
  %v1603 = vld [vmem:[%s5 + $0x50] sm:$0xff]
  %v1604 = vld [vmem:[%s5 + $0x58] sm:$0xff]
  %v1605 = vld [vmem:[%s5 + $0x60] sm:$0xff]
  %v1606 = vld [vmem:[%s5 + $0x68] sm:$0xff]
  %v1607 = vld [vmem:[%s5 + $0x70] sm:$0xff]
  %v1608 = vld [vmem:[%s5 + $0x78] sm:$0xff]
  %1609 = vmatprep.subr.mxu0 %v1562
  %1610 = vmatpush1.msra.mxu0 %v1561
  %1611 = vmatprep.subr.mxu0 %v1564
  %1612 = vmatpush1.msra.mxu0 %v1563
  %1613 = vmatprep.subr.mxu0 %v1566
  %1614 = vmatpush1.msra.mxu0 %v1565
  %1615 = vmatprep.subr.mxu0 %v1568
  %1616 = vmatpush1.msra.mxu0 %v1567
  %1617 = vmatprep.subr.mxu0 %v1570
  %1618 = vmatpush1.msra.mxu0 %v1569
  %1619 = vmatprep.subr.mxu0 %v1572
  %1620 = vmatpush1.msra.mxu0 %v1571
  %1621 = vmatprep.subr.mxu0 %v1574
  %1622 = vmatpush1.msra.mxu0 %v1573
  %1623 = vmatprep.subr.mxu0 %v1576
  %1624 = vmatpush1.msra.mxu0 %v1575
  %1625 = vmatprep.subr.mxu0 %v1578
  %1626 = vmatpush1.msra.mxu0 %v1577
  %1627 = vmatprep.subr.mxu0 %v1580
  %1628 = vmatpush1.msra.mxu0 %v1579
  %1629 = vmatprep.subr.mxu0 %v1582
  %1630 = vmatpush1.msra.mxu0 %v1581
  %1631 = vmatprep.subr.mxu0 %v1584
  %1632 = vmatpush1.msra.mxu0 %v1583
  %1633 = vmatprep.subr.mxu0 %v1586
  %1634 = vmatpush1.msra.mxu0 %v1585
  %1635 = vmatprep.subr.mxu0 %v1588
  %1636 = vmatpush1.msra.mxu0 %v1587
  %1637 = vmatprep.subr.mxu0 %v1590
  %1638 = vmatpush1.msra.mxu0 %v1589
  %1639 = vmatprep.subr.mxu0 %v1592
  %1640 = vmatpush1.msra.mxu0 %v1591
  %1641 = vmatprep.subr.mxu0 0.0
  %1642 = vmatpush1.msra.mxu0 0.0
  %1643 = vmatprep.subr.mxu0 0.0
  %1644 = vmatpush1.msra.mxu0 0.0
  %1645 = vmatprep.subr.mxu0 0.0
  %1646 = vmatpush1.msra.mxu0 0.0
  %1647 = vmatprep.subr.mxu0 0.0
  %1648 = vmatpush1.msra.mxu0 0.0
  %1649 = vmatprep.subr.mxu0 0.0
  %1650 = vmatpush1.msra.mxu0 0.0
  %1651 = vmatprep.subr.mxu0 0.0
  %1652 = vmatpush1.msra.mxu0 0.0
  %1653 = vmatprep.subr.mxu0 0.0
  %1654 = vmatpush1.msra.mxu0 0.0
  %1655 = vmatprep.subr.mxu0 0.0
  %1656 = vmatpush1.msra.mxu0 0.0
  %1657 = vmatprep.subr.mxu0 0.0
  %1658 = vmatpush1.msra.mxu0 0.0
  %1659 = vmatprep.subr.mxu0 0.0
  %1660 = vmatpush1.msra.mxu0 0.0
  %1661 = vmatprep.subr.mxu0 0.0
  %1662 = vmatpush1.msra.mxu0 0.0
  %1663 = vmatprep.subr.mxu0 0.0
  %1664 = vmatpush1.msra.mxu0 0.0
  %1665 = vmatprep.subr.mxu0 0.0
  %1666 = vmatpush1.msra.mxu0 0.0
  %1667 = vmatprep.subr.mxu0 0.0
  %1668 = vmatpush1.msra.mxu0 0.0
  %1669 = vmatprep.subr.mxu0 0.0
  %1670 = vmatpush1.msra.mxu0 0.0
  %1671 = vmatprep.subr.mxu0 0.0
  %1672 = vmatpush1.msra.mxu0 0.0
  %1673 = vmatprep.mubr.f32.mxu0 0.0
  %1674 = vmatmul.mubr.f32.gmra.mrb[0].mxu0 %v1593
  %v1675 = vpop.f32.mrb[0].mxu0
  %v1676 = vadd.f32 0.0, %v1675
  %v1677 = vpop.f32.mrb[0].mxu0
  %v1678 = vadd.f32 0.0, %v1677
  %1679 = vmatprep.mubr.f32.mxu0 0.0
  %1680 = vmatmul.mubr.f32.gmra.mrb[0].mxu0 %v1594
  %v1681 = vpop.f32.mrb[0].mxu0
  %v1682 = vadd.f32 0.0, %v1681
  %v1683 = vpop.f32.mrb[0].mxu0
  %v1684 = vadd.f32 0.0, %v1683
  %1685 = vmatprep.mubr.f32.mxu0 0.0
  %1686 = vmatmul.mubr.f32.gmra.mrb[0].mxu0 %v1595
  %v1687 = vpop.f32.mrb[0].mxu0
  %v1688 = vadd.f32 0.0, %v1687
  %v1689 = vpop.f32.mrb[0].mxu0
  %v1690 = vadd.f32 0.0, %v1689
  %1691 = vmatprep.mubr.f32.mxu0 0.0
  %1692 = vmatmul.mubr.f32.gmra.mrb[0].mxu0 %v1596
  %v1693 = vpop.f32.mrb[0].mxu0
  %v1694 = vadd.f32 0.0, %v1693
  %v1695 = vpop.f32.mrb[0].mxu0
  %v1696 = vadd.f32 0.0, %v1695
  %1697 = vmatprep.mubr.f32.mxu0 0.0
  %1698 = vmatmul.mubr.f32.gmra.mrb[0].mxu0 %v1597
  %v1699 = vpop.f32.mrb[0].mxu0
  %v1700 = vadd.f32 0.0, %v1699
  %v1701 = vpop.f32.mrb[0].mxu0
  %v1702 = vadd.f32 0.0, %v1701
  %1703 = vmatprep.mubr.f32.mxu0 0.0
  %1704 = vmatmul.mubr.f32.gmra.mrb[0].mxu0 %v1598
  %v1705 = vpop.f32.mrb[0].mxu0
  %v1706 = vadd.f32 0.0, %v1705
  %v1707 = vpop.f32.mrb[0].mxu0
  %v1708 = vadd.f32 0.0, %v1707
  %1709 = vmatprep.mubr.f32.mxu0 0.0
  %1710 = vmatmul.mubr.f32.gmra.mrb[0].mxu0 %v1599
  %v1711 = vpop.f32.mrb[0].mxu0
  %v1712 = vadd.f32 0.0, %v1711
  %v1713 = vpop.f32.mrb[0].mxu0
  %v1714 = vadd.f32 0.0, %v1713
  %1715 = vmatprep.mubr.f32.mxu0 0.0
  %1716 = vmatmul.mubr.f32.gmra.mrb[0].mxu0 %v1600
  %v1717 = vpop.f32.mrb[0].mxu0
  %v1718 = vadd.f32 0.0, %v1717
  %v1719 = vpop.f32.mrb[0].mxu0
  %v1720 = vadd.f32 0.0, %v1719
  %1721 = vmatprep.mubr.f32.mxu0 0.0
  %1722 = vmatmul.mubr.f32.gmra.mrb[0].mxu0 %v1601
  %v1723 = vpop.f32.mrb[0].mxu0
  %v1724 = vadd.f32 0.0, %v1723
  %v1725 = vpop.f32.mrb[0].mxu0
  %v1726 = vadd.f32 0.0, %v1725
  %1727 = vmatprep.mubr.f32.mxu0 0.0
  %1728 = vmatmul.mubr.f32.gmra.mrb[0].mxu0 %v1602
  %v1729 = vpop.f32.mrb[0].mxu0
  %v1730 = vadd.f32 0.0, %v1729
  %v1731 = vpop.f32.mrb[0].mxu0
  %v1732 = vadd.f32 0.0, %v1731
  %1733 = vmatprep.mubr.f32.mxu0 0.0
  %1734 = vmatmul.mubr.f32.gmra.mrb[0].mxu0 %v1603
  %v1735 = vpop.f32.mrb[0].mxu0
  %v1736 = vadd.f32 0.0, %v1735
  %v1737 = vpop.f32.mrb[0].mxu0
  %v1738 = vadd.f32 0.0, %v1737
  %1739 = vmatprep.mubr.f32.mxu0 0.0
  %1740 = vmatmul.mubr.f32.gmra.mrb[0].mxu0 %v1604
  %v1741 = vpop.f32.mrb[0].mxu0
  %v1742 = vadd.f32 0.0, %v1741
  %v1743 = vpop.f32.mrb[0].mxu0
  %v1744 = vadd.f32 0.0, %v1743
  %1745 = vmatprep.mubr.f32.mxu0 0.0
  %1746 = vmatmul.mubr.f32.gmra.mrb[0].mxu0 %v1605
  %v1747 = vpop.f32.mrb[0].mxu0
  %v1748 = vadd.f32 0.0, %v1747
  %v1749 = vpop.f32.mrb[0].mxu0
  %v1750 = vadd.f32 0.0, %v1749
  %1751 = vmatprep.mubr.f32.mxu0 0.0
  %1752 = vmatmul.mubr.f32.gmra.mrb[0].mxu0 %v1606
  %v1753 = vpop.f32.mrb[0].mxu0
  %v1754 = vadd.f32 0.0, %v1753
  %v1755 = vpop.f32.mrb[0].mxu0
  %v1756 = vadd.f32 0.0, %v1755
  %1757 = vmatprep.mubr.f32.mxu0 0.0
  %1758 = vmatmul.mubr.f32.gmra.mrb[0].mxu0 %v1607
  %v1759 = vpop.f32.mrb[0].mxu0
  %v1760 = vadd.f32 0.0, %v1759
  %v1761 = vpop.f32.mrb[0].mxu0
  %v1762 = vadd.f32 0.0, %v1761
  %1763 = vmatprep.mubr.f32.mxu0 0.0
  %1764 = vmatmul.mubr.f32.gmra.mrb[0].mxu0 %v1608
  %v1765 = vpop.f32.mrb[0].mxu0
  %v1766 = vadd.f32 0.0, %v1765
  %v1767 = vpop.f32.mrb[0].mxu0
  %v1768 = vadd.f32 0.0, %v1767
  %1769 = vdwg.mxu0
  %v1770 = vld [vmem:[%s3] sm:$0xff]
  %v1771 = vld [vmem:[%s3 + $0x8] sm:$0xff]
  %v1772 = vld [vmem:[%s3 + $0x10] sm:$0xff]
  %v1773 = vld [vmem:[%s3 + $0x18] sm:$0xff]
  %v1774 = vld [vmem:[%s3 + $0x20] sm:$0xff]
  %v1775 = vld [vmem:[%s3 + $0x28] sm:$0xff]
  %v1776 = vld [vmem:[%s3 + $0x30] sm:$0xff]
  %v1777 = vld [vmem:[%s3 + $0x38] sm:$0xff]
  %v1778 = vld [vmem:[%s3 + $0x40] sm:$0xff]
  %v1779 = vld [vmem:[%s3 + $0x48] sm:$0xff]
  %v1780 = vld [vmem:[%s3 + $0x50] sm:$0xff]
  %v1781 = vld [vmem:[%s3 + $0x58] sm:$0xff]
  %v1782 = vld [vmem:[%s3 + $0x60] sm:$0xff]
  %v1783 = vld [vmem:[%s3 + $0x68] sm:$0xff]
  %v1784 = vld [vmem:[%s3 + $0x70] sm:$0xff]
  %v1785 = vld [vmem:[%s3 + $0x78] sm:$0xff]
  %v1786 = vld [vmem:[%s3 + $0x80] sm:$0xff]
  %v1787 = vld [vmem:[%s3 + $0x88] sm:$0xff]
  %v1788 = vld [vmem:[%s3 + $0x90] sm:$0xff]
  %v1789 = vld [vmem:[%s3 + $0x98] sm:$0xff]
  %v1790 = vld [vmem:[%s3 + $0xa0] sm:$0xff]
  %v1791 = vld [vmem:[%s3 + $0xa8] sm:$0xff]
  %v1792 = vld [vmem:[%s3 + $0xb0] sm:$0xff]
  %v1793 = vld [vmem:[%s3 + $0xb8] sm:$0xff]
  %v1794 = vld [vmem:[%s3 + $0xc0] sm:$0xff]
  %v1795 = vld [vmem:[%s3 + $0xc8] sm:$0xff]
  %v1796 = vld [vmem:[%s3 + $0xd0] sm:$0xff]
  %v1797 = vld [vmem:[%s3 + $0xd8] sm:$0xff]
  %v1798 = vld [vmem:[%s3 + $0xe0] sm:$0xff]
  %v1799 = vld [vmem:[%s3 + $0xe8] sm:$0xff]
  %v1800 = vld [vmem:[%s3 + $0xf0] sm:$0xff]
  %v1801 = vld [vmem:[%s3 + $0xf8] sm:$0xff]
  %v1802 = vld [vmem:[%s3 + $0x100] sm:$0xff]
  %v1803 = vld [vmem:[%s3 + $0x108] sm:$0xff]
  %v1804 = vld [vmem:[%s3 + $0x110] sm:$0xff]
  %v1805 = vld [vmem:[%s3 + $0x118] sm:$0xff]
  %v1806 = vld [vmem:[%s3 + $0x120] sm:$0xff]
  %v1807 = vld [vmem:[%s3 + $0x128] sm:$0xff]
  %v1808 = vld [vmem:[%s3 + $0x130] sm:$0xff]
  %v1809 = vld [vmem:[%s3 + $0x138] sm:$0xff]
  %v1810 = vld [vmem:[%s3 + $0x140] sm:$0xff]
  %v1811 = vld [vmem:[%s3 + $0x148] sm:$0xff]
  %v1812 = vld [vmem:[%s3 + $0x150] sm:$0xff]
  %v1813 = vld [vmem:[%s3 + $0x158] sm:$0xff]
  %v1814 = vld [vmem:[%s3 + $0x160] sm:$0xff]
  %v1815 = vld [vmem:[%s3 + $0x168] sm:$0xff]
  %v1816 = vld [vmem:[%s3 + $0x170] sm:$0xff]
  %v1817 = vld [vmem:[%s3 + $0x178] sm:$0xff]
  %v1818 = vld [vmem:[%s3 + $0x180] sm:$0xff]
  %v1819 = vld [vmem:[%s3 + $0x188] sm:$0xff]
  %v1820 = vld [vmem:[%s3 + $0x190] sm:$0xff]
  %v1821 = vld [vmem:[%s3 + $0x198] sm:$0xff]
  %v1822 = vld [vmem:[%s3 + $0x1a0] sm:$0xff]
  %v1823 = vld [vmem:[%s3 + $0x1a8] sm:$0xff]
  %v1824 = vld [vmem:[%s3 + $0x1b0] sm:$0xff]
  %v1825 = vld [vmem:[%s3 + $0x1b8] sm:$0xff]
  %s1826 = scalar_lea.vmem %s3, 448
  %v1827 = vld [vmem:[%s1826] sm:$0xff]
  %v1828 = vld [vmem:[%s1826 + $0x8] sm:$0xff]
  %v1829 = vld [vmem:[%s1826 + $0x10] sm:$0xff]
  %v1830 = vld [vmem:[%s1826 + $0x18] sm:$0xff]
  %v1831 = vld [vmem:[%s1826 + $0x20] sm:$0xff]
  %v1832 = vld [vmem:[%s1826 + $0x28] sm:$0xff]
  %v1833 = vld [vmem:[%s1826 + $0x30] sm:$0xff]
  %v1834 = vld [vmem:[%s1826 + $0x38] sm:$0xff]
  %v1835 = vld [vmem:[%s1826 + $0x40] sm:$0xff]
  %v1836 = vld [vmem:[%s1826 + $0x48] sm:$0xff]
  %v1837 = vld [vmem:[%s1826 + $0x50] sm:$0xff]
  %v1838 = vld [vmem:[%s1826 + $0x58] sm:$0xff]
  %v1839 = vld [vmem:[%s1826 + $0x60] sm:$0xff]
  %v1840 = vld [vmem:[%s1826 + $0x68] sm:$0xff]
  %v1841 = vld [vmem:[%s1826 + $0x70] sm:$0xff]
  %v1842 = vld [vmem:[%s1826 + $0x78] sm:$0xff]
  %v1843 = vld [vmem:[%s1826 + $0x80] sm:$0xff]
  %v1844 = vld [vmem:[%s1826 + $0x88] sm:$0xff]
  %v1845 = vld [vmem:[%s1826 + $0x90] sm:$0xff]
  %v1846 = vld [vmem:[%s1826 + $0x98] sm:$0xff]
  %v1847 = vld [vmem:[%s1826 + $0xa0] sm:$0xff]
  %v1848 = vld [vmem:[%s1826 + $0xa8] sm:$0xff]
  %v1849 = vld [vmem:[%s1826 + $0xb0] sm:$0xff]
  %v1850 = vld [vmem:[%s1826 + $0xb8] sm:$0xff]
  %v1851 = vld [vmem:[%s1826 + $0xc0] sm:$0xff]
  %v1852 = vld [vmem:[%s1826 + $0xc8] sm:$0xff]
  %v1853 = vld [vmem:[%s1826 + $0xd0] sm:$0xff]
  %v1854 = vld [vmem:[%s1826 + $0xd8] sm:$0xff]
  %v1855 = vld [vmem:[%s1826 + $0xe0] sm:$0xff]
  %v1856 = vld [vmem:[%s1826 + $0xe8] sm:$0xff]
  %v1857 = vld [vmem:[%s1826 + $0xf0] sm:$0xff]
  %v1858 = vld [vmem:[%s1826 + $0xf8] sm:$0xff]
  %v1859 = vld [vmem:[%s1826 + $0x100] sm:$0xff]
  %v1860 = vld [vmem:[%s1826 + $0x108] sm:$0xff]
  %v1861 = vld [vmem:[%s1826 + $0x110] sm:$0xff]
  %v1862 = vld [vmem:[%s1826 + $0x118] sm:$0xff]
  %v1863 = vld [vmem:[%s1826 + $0x120] sm:$0xff]
  %v1864 = vld [vmem:[%s1826 + $0x128] sm:$0xff]
  %v1865 = vld [vmem:[%s1826 + $0x130] sm:$0xff]
  %v1866 = vld [vmem:[%s1826 + $0x138] sm:$0xff]
  %v1867 = vld [vmem:[%s1826 + $0x140] sm:$0xff]
  %v1868 = vld [vmem:[%s1826 + $0x148] sm:$0xff]
  %v1869 = vld [vmem:[%s1826 + $0x150] sm:$0xff]
  %v1870 = vld [vmem:[%s1826 + $0x158] sm:$0xff]
  %v1871 = vld [vmem:[%s1826 + $0x160] sm:$0xff]
  %v1872 = vld [vmem:[%s1826 + $0x168] sm:$0xff]
  %v1873 = vld [vmem:[%s1826 + $0x170] sm:$0xff]
  %v1874 = vld [vmem:[%s1826 + $0x178] sm:$0xff]
  %v1875 = vld [vmem:[%s1826 + $0x180] sm:$0xff]
  %v1876 = vld [vmem:[%s1826 + $0x188] sm:$0xff]
  %v1877 = vld [vmem:[%s1826 + $0x190] sm:$0xff]
  %v1878 = vld [vmem:[%s1826 + $0x198] sm:$0xff]
  %v1879 = vld [vmem:[%s1826 + $0x1a0] sm:$0xff]
  %v1880 = vld [vmem:[%s1826 + $0x1a8] sm:$0xff]
  %v1881 = vld [vmem:[%s1826 + $0x1b0] sm:$0xff]
  %v1882 = vld [vmem:[%s1826 + $0x1b8] sm:$0xff]
  %vm1883 = vcmask 785408
  %v1885 = vsel %vm1883, %v887, 0
  %v1888 = vsel %vm1883, %v889, 0
  %v1891 = vsel %vm1883, %v891, 0
  %v1894 = vsel %vm1883, %v893, 0
  %v1897 = vsel %vm1883, %v895, 0
  %v1900 = vsel %vm1883, %v897, 0
  %v1903 = vsel %vm1883, %v899, 0
  %v1906 = vsel %vm1883, %v901, 0
  %v1909 = vsel %vm1883, %v903, 0
  %v1912 = vsel %vm1883, %v905, 0
  %v1915 = vsel %vm1883, %v907, 0
  %v1918 = vsel %vm1883, %v909, 0
  %v1921 = vsel %vm1883, %v911, 0
  %v1924 = vsel %vm1883, %v913, 0
  %v1927 = vsel %vm1883, %v915, 0
  %v1930 = vsel %vm1883, %v917, 0
  %1932 = vmatprep.subr.mxu0 %v1828
  %1933 = vmatpush1.msra.mxu0 %v1827
  %1934 = vmatprep.subr.mxu0 %v1830
  %1935 = vmatpush1.msra.mxu0 %v1829
  %1936 = vmatprep.subr.mxu0 %v1832
  %1937 = vmatpush1.msra.mxu0 %v1831
  %1938 = vmatprep.subr.mxu0 %v1834
  %1939 = vmatpush1.msra.mxu0 %v1833
  %1940 = vmatprep.subr.mxu0 %v1836
  %1941 = vmatpush1.msra.mxu0 %v1835
  %1942 = vmatprep.subr.mxu0 %v1838
  %1943 = vmatpush1.msra.mxu0 %v1837
  %1944 = vmatprep.subr.mxu0 %v1840
  %1945 = vmatpush1.msra.mxu0 %v1839
  %1946 = vmatprep.subr.mxu0 %v1842
  %1947 = vmatpush1.msra.mxu0 %v1841
  %1948 = vmatprep.subr.mxu0 %v1844
  %1949 = vmatpush1.msra.mxu0 %v1843
  %1950 = vmatprep.subr.mxu0 %v1846
  %1951 = vmatpush1.msra.mxu0 %v1845
  %1952 = vmatprep.subr.mxu0 %v1848
  %1953 = vmatpush1.msra.mxu0 %v1847
  %1954 = vmatprep.subr.mxu0 %v1850
  %1955 = vmatpush1.msra.mxu0 %v1849
  %1956 = vmatprep.subr.mxu0 %v1852
  %1957 = vmatpush1.msra.mxu0 %v1851
  %1958 = vmatprep.subr.mxu0 %v1854
  %1959 = vmatpush1.msra.mxu0 %v1853
  %1960 = vmatprep.subr.mxu0 %v1856
  %1961 = vmatpush1.msra.mxu0 %v1855
  %1962 = vmatprep.subr.mxu0 %v1858
  %1963 = vmatpush1.msra.mxu0 %v1857
  %1964 = vmatprep.subr.mxu0 %v1860
  %1965 = vmatpush1.msra.mxu0 %v1859
  %1966 = vmatprep.subr.mxu0 %v1862
  %1967 = vmatpush1.msra.mxu0 %v1861
  %1968 = vmatprep.subr.mxu0 %v1864
  %1969 = vmatpush1.msra.mxu0 %v1863
  %1970 = vmatprep.subr.mxu0 %v1866
  %1971 = vmatpush1.msra.mxu0 %v1865
  %1972 = vmatprep.subr.mxu0 %v1868
  %1973 = vmatpush1.msra.mxu0 %v1867
  %1974 = vmatprep.subr.mxu0 %v1870
  %1975 = vmatpush1.msra.mxu0 %v1869
  %1976 = vmatprep.subr.mxu0 %v1872
  %1977 = vmatpush1.msra.mxu0 %v1871
  %1978 = vmatprep.subr.mxu0 %v1874
  %1979 = vmatpush1.msra.mxu0 %v1873
  %1980 = vmatprep.subr.mxu0 %v1876
  %1981 = vmatpush1.msra.mxu0 %v1875
  %1982 = vmatprep.subr.mxu0 %v1878
  %1983 = vmatpush1.msra.mxu0 %v1877
  %1984 = vmatprep.subr.mxu0 %v1880
  %1985 = vmatpush1.msra.mxu0 %v1879
  %1986 = vmatprep.subr.mxu0 %v1882
  %1987 = vmatpush1.msra.mxu0 %v1881
  %1988 = vmatprep.subr.mxu0 0.0
  %1989 = vmatpush1.msra.mxu0 0.0
  %1990 = vmatprep.subr.mxu0 0.0
  %1991 = vmatpush1.msra.mxu0 0.0
  %1992 = vmatprep.subr.mxu0 0.0
  %1993 = vmatpush1.msra.mxu0 0.0
  %1994 = vmatprep.subr.mxu0 0.0
  %1995 = vmatpush1.msra.mxu0 0.0
  %1996 = vmatprep.mubr.f32.mxu0 %v1885
  %1997 = vmatmul.mubr.f32.gmra.mrb[0].mxu0 %v886
  %v1998 = vpop.f32.mrb[0].mxu0
  %v1999 = vadd.f32 0.0, %v1998
  %v2000 = vpop.f32.mrb[0].mxu0
  %v2001 = vadd.f32 0.0, %v2000
  %2002 = vmatprep.mubr.f32.mxu0 %v1888
  %2003 = vmatmul.mubr.f32.gmra.mrb[0].mxu0 %v888
  %v2004 = vpop.f32.mrb[0].mxu0
  %v2005 = vadd.f32 0.0, %v2004
  %v2006 = vpop.f32.mrb[0].mxu0
  %v2007 = vadd.f32 0.0, %v2006
  %2008 = vmatprep.mubr.f32.mxu0 %v1891
  %2009 = vmatmul.mubr.f32.gmra.mrb[0].mxu0 %v890
  %v2010 = vpop.f32.mrb[0].mxu0
  %v2011 = vadd.f32 0.0, %v2010
  %v2012 = vpop.f32.mrb[0].mxu0
  %v2013 = vadd.f32 0.0, %v2012
  %2014 = vmatprep.mubr.f32.mxu0 %v1894
  %2015 = vmatmul.mubr.f32.gmra.mrb[0].mxu0 %v892
  %v2016 = vpop.f32.mrb[0].mxu0
  %v2017 = vadd.f32 0.0, %v2016
  %v2018 = vpop.f32.mrb[0].mxu0
  %v2019 = vadd.f32 0.0, %v2018
  %2020 = vmatprep.mubr.f32.mxu0 %v1897
  %2021 = vmatmul.mubr.f32.gmra.mrb[0].mxu0 %v894
  %v2022 = vpop.f32.mrb[0].mxu0
  %v2023 = vadd.f32 0.0, %v2022
  %v2024 = vpop.f32.mrb[0].mxu0
  %v2025 = vadd.f32 0.0, %v2024
  %2026 = vmatprep.mubr.f32.mxu0 %v1900
  %2027 = vmatmul.mubr.f32.gmra.mrb[0].mxu0 %v896
  %v2028 = vpop.f32.mrb[0].mxu0
  %v2029 = vadd.f32 0.0, %v2028
  %v2030 = vpop.f32.mrb[0].mxu0
  %v2031 = vadd.f32 0.0, %v2030
  %2032 = vmatprep.mubr.f32.mxu0 %v1903
  %2033 = vmatmul.mubr.f32.gmra.mrb[0].mxu0 %v898
  %v2034 = vpop.f32.mrb[0].mxu0
  %v2035 = vadd.f32 0.0, %v2034
  %v2036 = vpop.f32.mrb[0].mxu0
  %v2037 = vadd.f32 0.0, %v2036
  %2038 = vmatprep.mubr.f32.mxu0 %v1906
  %2039 = vmatmul.mubr.f32.gmra.mrb[0].mxu0 %v900
  %v2040 = vpop.f32.mrb[0].mxu0
  %v2041 = vadd.f32 0.0, %v2040
  %v2042 = vpop.f32.mrb[0].mxu0
  %v2043 = vadd.f32 0.0, %v2042
  %2044 = vmatprep.mubr.f32.mxu0 %v1909
  %2045 = vmatmul.mubr.f32.gmra.mrb[0].mxu0 %v902
  %v2046 = vpop.f32.mrb[0].mxu0
  %v2047 = vadd.f32 0.0, %v2046
  %v2048 = vpop.f32.mrb[0].mxu0
  %v2049 = vadd.f32 0.0, %v2048
  %2050 = vmatprep.mubr.f32.mxu0 %v1912
  %2051 = vmatmul.mubr.f32.gmra.mrb[0].mxu0 %v904
  %v2052 = vpop.f32.mrb[0].mxu0
  %v2053 = vadd.f32 0.0, %v2052
  %v2054 = vpop.f32.mrb[0].mxu0
  %v2055 = vadd.f32 0.0, %v2054
  %2056 = vmatprep.mubr.f32.mxu0 %v1915
  %2057 = vmatmul.mubr.f32.gmra.mrb[0].mxu0 %v906
  %v2058 = vpop.f32.mrb[0].mxu0
  %v2059 = vadd.f32 0.0, %v2058
  %v2060 = vpop.f32.mrb[0].mxu0
  %v2061 = vadd.f32 0.0, %v2060
  %2062 = vmatprep.mubr.f32.mxu0 %v1918
  %2063 = vmatmul.mubr.f32.gmra.mrb[0].mxu0 %v908
  %v2064 = vpop.f32.mrb[0].mxu0
  %v2065 = vadd.f32 0.0, %v2064
  %v2066 = vpop.f32.mrb[0].mxu0
  %v2067 = vadd.f32 0.0, %v2066
  %2068 = vmatprep.mubr.f32.mxu0 %v1921
  %2069 = vmatmul.mubr.f32.gmra.mrb[0].mxu0 %v910
  %v2070 = vpop.f32.mrb[0].mxu0
  %v2071 = vadd.f32 0.0, %v2070
  %v2072 = vpop.f32.mrb[0].mxu0
  %v2073 = vadd.f32 0.0, %v2072
  %2074 = vmatprep.mubr.f32.mxu0 %v1924
  %2075 = vmatmul.mubr.f32.gmra.mrb[0].mxu0 %v912
  %v2076 = vpop.f32.mrb[0].mxu0
  %v2077 = vadd.f32 0.0, %v2076
  %v2078 = vpop.f32.mrb[0].mxu0
  %v2079 = vadd.f32 0.0, %v2078
  %2080 = vmatprep.mubr.f32.mxu0 %v1927
  %2081 = vmatmul.mubr.f32.gmra.mrb[0].mxu0 %v914
  %v2082 = vpop.f32.mrb[0].mxu0
  %v2083 = vadd.f32 0.0, %v2082
  %v2084 = vpop.f32.mrb[0].mxu0
  %v2085 = vadd.f32 0.0, %v2084
  %2086 = vmatprep.mubr.f32.mxu0 %v1930
  %2087 = vmatmul.mubr.f32.gmra.mrb[0].mxu0 %v916
  %v2088 = vpop.f32.mrb[0].mxu0
  %v2089 = vadd.f32 0.0, %v2088
  %v2090 = vpop.f32.mrb[0].mxu0
  %v2091 = vadd.f32 0.0, %v2090
  %2092 = vdwg.mxu0
  %v2094 = vsel %vm1883, %v1678, 0
  %v2097 = vsel %vm1883, %v1684, 0
  %v2100 = vsel %vm1883, %v1690, 0
  %v2103 = vsel %vm1883, %v1696, 0
  %v2106 = vsel %vm1883, %v1702, 0
  %v2109 = vsel %vm1883, %v1708, 0
  %v2112 = vsel %vm1883, %v1714, 0
  %v2115 = vsel %vm1883, %v1720, 0
  %v2118 = vsel %vm1883, %v1726, 0
  %v2121 = vsel %vm1883, %v1732, 0
  %v2124 = vsel %vm1883, %v1738, 0
  %v2127 = vsel %vm1883, %v1744, 0
  %v2130 = vsel %vm1883, %v1750, 0
  %v2133 = vsel %vm1883, %v1756, 0
  %v2136 = vsel %vm1883, %v1762, 0
  %v2139 = vsel %vm1883, %v1768, 0
  %2141 = vmatprep.subr.mxu0 %v1771
  %2142 = vmatpush1.msra.mxu0 %v1770
  %2143 = vmatprep.subr.mxu0 %v1773
  %2144 = vmatpush1.msra.mxu0 %v1772
  %2145 = vmatprep.subr.mxu0 %v1775
  %2146 = vmatpush1.msra.mxu0 %v1774
  %2147 = vmatprep.subr.mxu0 %v1777
  %2148 = vmatpush1.msra.mxu0 %v1776
  %2149 = vmatprep.subr.mxu0 %v1779
  %2150 = vmatpush1.msra.mxu0 %v1778
  %2151 = vmatprep.subr.mxu0 %v1781
  %2152 = vmatpush1.msra.mxu0 %v1780
  %2153 = vmatprep.subr.mxu0 %v1783
  %2154 = vmatpush1.msra.mxu0 %v1782
  %2155 = vmatprep.subr.mxu0 %v1785
  %2156 = vmatpush1.msra.mxu0 %v1784
  %2157 = vmatprep.subr.mxu0 %v1787
  %2158 = vmatpush1.msra.mxu0 %v1786
  %2159 = vmatprep.subr.mxu0 %v1789
  %2160 = vmatpush1.msra.mxu0 %v1788
  %2161 = vmatprep.subr.mxu0 %v1791
  %2162 = vmatpush1.msra.mxu0 %v1790
  %2163 = vmatprep.subr.mxu0 %v1793
  %2164 = vmatpush1.msra.mxu0 %v1792
  %2165 = vmatprep.subr.mxu0 %v1795
  %2166 = vmatpush1.msra.mxu0 %v1794
  %2167 = vmatprep.subr.mxu0 %v1797
  %2168 = vmatpush1.msra.mxu0 %v1796
  %2169 = vmatprep.subr.mxu0 %v1799
  %2170 = vmatpush1.msra.mxu0 %v1798
  %2171 = vmatprep.subr.mxu0 %v1801
  %2172 = vmatpush1.msra.mxu0 %v1800
  %2173 = vmatprep.subr.mxu0 %v1803
  %2174 = vmatpush1.msra.mxu0 %v1802
  %2175 = vmatprep.subr.mxu0 %v1805
  %2176 = vmatpush1.msra.mxu0 %v1804
  %2177 = vmatprep.subr.mxu0 %v1807
  %2178 = vmatpush1.msra.mxu0 %v1806
  %2179 = vmatprep.subr.mxu0 %v1809
  %2180 = vmatpush1.msra.mxu0 %v1808
  %2181 = vmatprep.subr.mxu0 %v1811
  %2182 = vmatpush1.msra.mxu0 %v1810
  %2183 = vmatprep.subr.mxu0 %v1813
  %2184 = vmatpush1.msra.mxu0 %v1812
  %2185 = vmatprep.subr.mxu0 %v1815
  %2186 = vmatpush1.msra.mxu0 %v1814
  %2187 = vmatprep.subr.mxu0 %v1817
  %2188 = vmatpush1.msra.mxu0 %v1816
  %2189 = vmatprep.subr.mxu0 %v1819
  %2190 = vmatpush1.msra.mxu0 %v1818
  %2191 = vmatprep.subr.mxu0 %v1821
  %2192 = vmatpush1.msra.mxu0 %v1820
  %2193 = vmatprep.subr.mxu0 %v1823
  %2194 = vmatpush1.msra.mxu0 %v1822
  %2195 = vmatprep.subr.mxu0 %v1825
  %2196 = vmatpush1.msra.mxu0 %v1824
  %2197 = vmatprep.subr.mxu0 0.0
  %2198 = vmatpush1.msra.mxu0 0.0
  %2199 = vmatprep.subr.mxu0 0.0
  %2200 = vmatpush1.msra.mxu0 0.0
  %2201 = vmatprep.subr.mxu0 0.0
  %2202 = vmatpush1.msra.mxu0 0.0
  %2203 = vmatprep.subr.mxu0 0.0
  %2204 = vmatpush1.msra.mxu0 0.0
  %2205 = vmatprep.mubr.f32.mxu0 %v2094
  %2206 = vmatmul.mubr.f32.gmra.mrb[0].mxu0 %v1676
  %v2207 = vpop.f32.mrb[0].mxu0
  %v2208 = vadd.f32 %v1999, %v2207
  %v2209 = vpop.f32.mrb[0].mxu0
  %v2210 = vadd.f32 %v2001, %v2209
  %2211 = vmatprep.mubr.f32.mxu0 %v2097
  %2212 = vmatmul.mubr.f32.gmra.mrb[0].mxu0 %v1682
  %v2213 = vpop.f32.mrb[0].mxu0
  %v2214 = vadd.f32 %v2005, %v2213
  %v2215 = vpop.f32.mrb[0].mxu0
  %v2216 = vadd.f32 %v2007, %v2215
  %2217 = vmatprep.mubr.f32.mxu0 %v2100
  %2218 = vmatmul.mubr.f32.gmra.mrb[0].mxu0 %v1688
  %v2219 = vpop.f32.mrb[0].mxu0
  %v2220 = vadd.f32 %v2011, %v2219
  %v2221 = vpop.f32.mrb[0].mxu0
  %v2222 = vadd.f32 %v2013, %v2221
  %2223 = vmatprep.mubr.f32.mxu0 %v2103
  %2224 = vmatmul.mubr.f32.gmra.mrb[0].mxu0 %v1694
  %v2225 = vpop.f32.mrb[0].mxu0
  %v2226 = vadd.f32 %v2017, %v2225
  %v2227 = vpop.f32.mrb[0].mxu0
  %v2228 = vadd.f32 %v2019, %v2227
  %2229 = vmatprep.mubr.f32.mxu0 %v2106
  %2230 = vmatmul.mubr.f32.gmra.mrb[0].mxu0 %v1700
  %v2231 = vpop.f32.mrb[0].mxu0
  %v2232 = vadd.f32 %v2023, %v2231
  %v2233 = vpop.f32.mrb[0].mxu0
  %v2234 = vadd.f32 %v2025, %v2233
  %2235 = vmatprep.mubr.f32.mxu0 %v2109
  %2236 = vmatmul.mubr.f32.gmra.mrb[0].mxu0 %v1706
  %v2237 = vpop.f32.mrb[0].mxu0
  %v2238 = vadd.f32 %v2029, %v2237
  %v2239 = vpop.f32.mrb[0].mxu0
  %v2240 = vadd.f32 %v2031, %v2239
  %2241 = vmatprep.mubr.f32.mxu0 %v2112
  %2242 = vmatmul.mubr.f32.gmra.mrb[0].mxu0 %v1712
  %v2243 = vpop.f32.mrb[0].mxu0
  %v2244 = vadd.f32 %v2035, %v2243
  %v2245 = vpop.f32.mrb[0].mxu0
  %v2246 = vadd.f32 %v2037, %v2245
  %2247 = vmatprep.mubr.f32.mxu0 %v2115
  %2248 = vmatmul.mubr.f32.gmra.mrb[0].mxu0 %v1718
  %v2249 = vpop.f32.mrb[0].mxu0
  %v2250 = vadd.f32 %v2041, %v2249
  %v2251 = vpop.f32.mrb[0].mxu0
  %v2252 = vadd.f32 %v2043, %v2251
  %2253 = vmatprep.mubr.f32.mxu0 %v2118
  %2254 = vmatmul.mubr.f32.gmra.mrb[0].mxu0 %v1724
  %v2255 = vpop.f32.mrb[0].mxu0
  %v2256 = vadd.f32 %v2047, %v2255
  %v2257 = vpop.f32.mrb[0].mxu0
  %v2258 = vadd.f32 %v2049, %v2257
  %2259 = vmatprep.mubr.f32.mxu0 %v2121
  %2260 = vmatmul.mubr.f32.gmra.mrb[0].mxu0 %v1730
  %v2261 = vpop.f32.mrb[0].mxu0
  %v2262 = vadd.f32 %v2053, %v2261
  %v2263 = vpop.f32.mrb[0].mxu0
  %v2264 = vadd.f32 %v2055, %v2263
  %2265 = vmatprep.mubr.f32.mxu0 %v2124
  %2266 = vmatmul.mubr.f32.gmra.mrb[0].mxu0 %v1736
  %v2267 = vpop.f32.mrb[0].mxu0
  %v2268 = vadd.f32 %v2059, %v2267
  %v2269 = vpop.f32.mrb[0].mxu0
  %v2270 = vadd.f32 %v2061, %v2269
  %2271 = vmatprep.mubr.f32.mxu0 %v2127
  %2272 = vmatmul.mubr.f32.gmra.mrb[0].mxu0 %v1742
  %v2273 = vpop.f32.mrb[0].mxu0
  %v2274 = vadd.f32 %v2065, %v2273
  %v2275 = vpop.f32.mrb[0].mxu0
  %v2276 = vadd.f32 %v2067, %v2275
  %2277 = vmatprep.mubr.f32.mxu0 %v2130
  %2278 = vmatmul.mubr.f32.gmra.mrb[0].mxu0 %v1748
  %v2279 = vpop.f32.mrb[0].mxu0
  %v2280 = vadd.f32 %v2071, %v2279
  %v2281 = vpop.f32.mrb[0].mxu0
  %v2282 = vadd.f32 %v2073, %v2281
  %2283 = vmatprep.mubr.f32.mxu0 %v2133
  %2284 = vmatmul.mubr.f32.gmra.mrb[0].mxu0 %v1754
  %v2285 = vpop.f32.mrb[0].mxu0
  %v2286 = vadd.f32 %v2077, %v2285
  %v2287 = vpop.f32.mrb[0].mxu0
  %v2288 = vadd.f32 %v2079, %v2287
  %2289 = vmatprep.mubr.f32.mxu0 %v2136
  %2290 = vmatmul.mubr.f32.gmra.mrb[0].mxu0 %v1760
  %v2291 = vpop.f32.mrb[0].mxu0
  %v2292 = vadd.f32 %v2083, %v2291
  %v2293 = vpop.f32.mrb[0].mxu0
  %v2294 = vadd.f32 %v2085, %v2293
  %2295 = vmatprep.mubr.f32.mxu0 %v2139
  %2296 = vmatmul.mubr.f32.gmra.mrb[0].mxu0 %v1766
  %v2297 = vpop.f32.mrb[0].mxu0
  %v2298 = vadd.f32 %v2089, %v2297
  %v2299 = vpop.f32.mrb[0].mxu0
  %v2300 = vadd.f32 %v2091, %v2299
  %2301 = vdwg.mxu0
  %s2302 = scalar_lea.vmem %s3, 896
  %v2303 = vld [vmem:[%s2302] sm:$0xff]
  %v2304 = vld [vmem:[%s2302 + $0x8] sm:$0xff]
  %v2305 = vld [vmem:[%s2302 + $0x10] sm:$0xff]
  %v2306 = vld [vmem:[%s2302 + $0x18] sm:$0xff]
  %v2307 = vld [vmem:[%s2302 + $0x20] sm:$0xff]
  %v2308 = vld [vmem:[%s2302 + $0x28] sm:$0xff]
  %v2309 = vld [vmem:[%s2302 + $0x30] sm:$0xff]
  %v2310 = vld [vmem:[%s2302 + $0x38] sm:$0xff]
  %v2311 = vld [vmem:[%s2302 + $0x40] sm:$0xff]
  %v2312 = vld [vmem:[%s2302 + $0x48] sm:$0xff]
  %v2313 = vld [vmem:[%s2302 + $0x50] sm:$0xff]
  %v2314 = vld [vmem:[%s2302 + $0x58] sm:$0xff]
  %v2315 = vld [vmem:[%s2302 + $0x60] sm:$0xff]
  %v2316 = vld [vmem:[%s2302 + $0x68] sm:$0xff]
  %v2317 = vld [vmem:[%s2302 + $0x70] sm:$0xff]
  %v2318 = vld [vmem:[%s2302 + $0x78] sm:$0xff]
  %v2319 = vld [vmem:[%s2302 + $0x80] sm:$0xff]
  %v2320 = vld [vmem:[%s2302 + $0x88] sm:$0xff]
  %v2321 = vld [vmem:[%s2302 + $0x90] sm:$0xff]
  %v2322 = vld [vmem:[%s2302 + $0x98] sm:$0xff]
  %v2323 = vld [vmem:[%s2302 + $0xa0] sm:$0xff]
  %v2324 = vld [vmem:[%s2302 + $0xa8] sm:$0xff]
  %v2325 = vld [vmem:[%s2302 + $0xb0] sm:$0xff]
  %v2326 = vld [vmem:[%s2302 + $0xb8] sm:$0xff]
  %v2327 = vld [vmem:[%s2302 + $0xc0] sm:$0xff]
  %v2328 = vld [vmem:[%s2302 + $0xc8] sm:$0xff]
  %v2329 = vld [vmem:[%s2302 + $0xd0] sm:$0xff]
  %v2330 = vld [vmem:[%s2302 + $0xd8] sm:$0xff]
  %v2331 = vld [vmem:[%s2302 + $0xe0] sm:$0xff]
  %v2332 = vld [vmem:[%s2302 + $0xe8] sm:$0xff]
  %v2333 = vld [vmem:[%s2302 + $0xf0] sm:$0xff]
  %v2334 = vld [vmem:[%s2302 + $0xf8] sm:$0xff]
  %v2335 = vld [vmem:[%s2302 + $0x100] sm:$0xff]
  %v2336 = vld [vmem:[%s2302 + $0x108] sm:$0xff]
  %v2337 = vld [vmem:[%s2302 + $0x110] sm:$0xff]
  %v2338 = vld [vmem:[%s2302 + $0x118] sm:$0xff]
  %v2339 = vld [vmem:[%s2302 + $0x120] sm:$0xff]
  %v2340 = vld [vmem:[%s2302 + $0x128] sm:$0xff]
  %v2341 = vld [vmem:[%s2302 + $0x130] sm:$0xff]
  %v2342 = vld [vmem:[%s2302 + $0x138] sm:$0xff]
  %v2343 = vld [vmem:[%s2302 + $0x140] sm:$0xff]
  %v2344 = vld [vmem:[%s2302 + $0x148] sm:$0xff]
  %v2345 = vld [vmem:[%s2302 + $0x150] sm:$0xff]
  %v2346 = vld [vmem:[%s2302 + $0x158] sm:$0xff]
  %v2347 = vld [vmem:[%s2302 + $0x160] sm:$0xff]
  %v2348 = vld [vmem:[%s2302 + $0x168] sm:$0xff]
  %v2349 = vld [vmem:[%s2302 + $0x170] sm:$0xff]
  %v2350 = vld [vmem:[%s2302 + $0x178] sm:$0xff]
  %v2351 = vld [vmem:[%s2302 + $0x180] sm:$0xff]
  %v2352 = vld [vmem:[%s2302 + $0x188] sm:$0xff]
  %v2353 = vld [vmem:[%s2302 + $0x190] sm:$0xff]
  %v2354 = vld [vmem:[%s2302 + $0x198] sm:$0xff]
  %v2355 = vld [vmem:[%s2302 + $0x1a0] sm:$0xff]
  %v2356 = vld [vmem:[%s2302 + $0x1a8] sm:$0xff]
  %v2357 = vld [vmem:[%s2302 + $0x1b0] sm:$0xff]
  %v2358 = vld [vmem:[%s2302 + $0x1b8] sm:$0xff]
  %v2360 = vsel %vm1883, %v1562, 0
  %v2363 = vsel %vm1883, %v1564, 0
  %v2366 = vsel %vm1883, %v1566, 0
  %v2369 = vsel %vm1883, %v1568, 0
  %v2372 = vsel %vm1883, %v1570, 0
  %v2375 = vsel %vm1883, %v1572, 0
  %v2378 = vsel %vm1883, %v1574, 0
  %v2381 = vsel %vm1883, %v1576, 0
  %v2384 = vsel %vm1883, %v1578, 0
  %v2387 = vsel %vm1883, %v1580, 0
  %v2390 = vsel %vm1883, %v1582, 0
  %v2393 = vsel %vm1883, %v1584, 0
  %v2396 = vsel %vm1883, %v1586, 0
  %v2399 = vsel %vm1883, %v1588, 0
  %v2402 = vsel %vm1883, %v1590, 0
  %v2405 = vsel %vm1883, %v1592, 0
  %2407 = vmatprep.subr.mxu0 %v2304
  %2408 = vmatpush1.msra.mxu0 %v2303
  %2409 = vmatprep.subr.mxu0 %v2306
  %2410 = vmatpush1.msra.mxu0 %v2305
  %2411 = vmatprep.subr.mxu0 %v2308
  %2412 = vmatpush1.msra.mxu0 %v2307
  %2413 = vmatprep.subr.mxu0 %v2310
  %2414 = vmatpush1.msra.mxu0 %v2309
  %2415 = vmatprep.subr.mxu0 %v2312
  %2416 = vmatpush1.msra.mxu0 %v2311
  %2417 = vmatprep.subr.mxu0 %v2314
  %2418 = vmatpush1.msra.mxu0 %v2313
  %2419 = vmatprep.subr.mxu0 %v2316
  %2420 = vmatpush1.msra.mxu0 %v2315
  %2421 = vmatprep.subr.mxu0 %v2318
  %2422 = vmatpush1.msra.mxu0 %v2317
  %2423 = vmatprep.subr.mxu0 %v2320
  %2424 = vmatpush1.msra.mxu0 %v2319
  %2425 = vmatprep.subr.mxu0 %v2322
  %2426 = vmatpush1.msra.mxu0 %v2321
  %2427 = vmatprep.subr.mxu0 %v2324
  %2428 = vmatpush1.msra.mxu0 %v2323
  %2429 = vmatprep.subr.mxu0 %v2326
  %2430 = vmatpush1.msra.mxu0 %v2325
  %2431 = vmatprep.subr.mxu0 %v2328
  %2432 = vmatpush1.msra.mxu0 %v2327
  %2433 = vmatprep.subr.mxu0 %v2330
  %2434 = vmatpush1.msra.mxu0 %v2329
  %2435 = vmatprep.subr.mxu0 %v2332
  %2436 = vmatpush1.msra.mxu0 %v2331
  %2437 = vmatprep.subr.mxu0 %v2334
  %2438 = vmatpush1.msra.mxu0 %v2333
  %2439 = vmatprep.subr.mxu0 %v2336
  %2440 = vmatpush1.msra.mxu0 %v2335
  %2441 = vmatprep.subr.mxu0 %v2338
  %2442 = vmatpush1.msra.mxu0 %v2337
  %2443 = vmatprep.subr.mxu0 %v2340
  %2444 = vmatpush1.msra.mxu0 %v2339
  %2445 = vmatprep.subr.mxu0 %v2342
  %2446 = vmatpush1.msra.mxu0 %v2341
  %2447 = vmatprep.subr.mxu0 %v2344
  %2448 = vmatpush1.msra.mxu0 %v2343
  %2449 = vmatprep.subr.mxu0 %v2346
  %2450 = vmatpush1.msra.mxu0 %v2345
  %2451 = vmatprep.subr.mxu0 %v2348
  %2452 = vmatpush1.msra.mxu0 %v2347
  %2453 = vmatprep.subr.mxu0 %v2350
  %2454 = vmatpush1.msra.mxu0 %v2349
  %2455 = vmatprep.subr.mxu0 %v2352
  %2456 = vmatpush1.msra.mxu0 %v2351
  %2457 = vmatprep.subr.mxu0 %v2354
  %2458 = vmatpush1.msra.mxu0 %v2353
  %2459 = vmatprep.subr.mxu0 %v2356
  %2460 = vmatpush1.msra.mxu0 %v2355
  %2461 = vmatprep.subr.mxu0 %v2358
  %2462 = vmatpush1.msra.mxu0 %v2357
  %2463 = vmatprep.subr.mxu0 0.0
  %2464 = vmatpush1.msra.mxu0 0.0
  %2465 = vmatprep.subr.mxu0 0.0
  %2466 = vmatpush1.msra.mxu0 0.0
  %2467 = vmatprep.subr.mxu0 0.0
  %2468 = vmatpush1.msra.mxu0 0.0
  %2469 = vmatprep.subr.mxu0 0.0
  %2470 = vmatpush1.msra.mxu0 0.0
  %2471 = vmatprep.mubr.f32.mxu0 %v2360
  %2472 = vmatmul.mubr.f32.gmra.mrb[0].mxu0 %v1561
  %v2473 = vpop.f32.mrb[0].mxu0
  %v2474 = vadd.f32 0.0, %v2473
  %v2475 = vpop.f32.mrb[0].mxu0
  %v2476 = vadd.f32 0.0, %v2475
  %2477 = vmatprep.mubr.f32.mxu0 %v2363
  %2478 = vmatmul.mubr.f32.gmra.mrb[0].mxu0 %v1563
  %v2479 = vpop.f32.mrb[0].mxu0
  %v2480 = vadd.f32 0.0, %v2479
  %v2481 = vpop.f32.mrb[0].mxu0
  %v2482 = vadd.f32 0.0, %v2481
  %2483 = vmatprep.mubr.f32.mxu0 %v2366
  %2484 = vmatmul.mubr.f32.gmra.mrb[0].mxu0 %v1565
  %v2485 = vpop.f32.mrb[0].mxu0
  %v2486 = vadd.f32 0.0, %v2485
  %v2487 = vpop.f32.mrb[0].mxu0
  %v2488 = vadd.f32 0.0, %v2487
  %2489 = vmatprep.mubr.f32.mxu0 %v2369
  %2490 = vmatmul.mubr.f32.gmra.mrb[0].mxu0 %v1567
  %v2491 = vpop.f32.mrb[0].mxu0
  %v2492 = vadd.f32 0.0, %v2491
  %v2493 = vpop.f32.mrb[0].mxu0
  %v2494 = vadd.f32 0.0, %v2493
  %2495 = vmatprep.mubr.f32.mxu0 %v2372
  %2496 = vmatmul.mubr.f32.gmra.mrb[0].mxu0 %v1569
  %v2497 = vpop.f32.mrb[0].mxu0
  %v2498 = vadd.f32 0.0, %v2497
  %v2499 = vpop.f32.mrb[0].mxu0
  %v2500 = vadd.f32 0.0, %v2499
  %2501 = vmatprep.mubr.f32.mxu0 %v2375
  %2502 = vmatmul.mubr.f32.gmra.mrb[0].mxu0 %v1571
  %v2503 = vpop.f32.mrb[0].mxu0
  %v2504 = vadd.f32 0.0, %v2503
  %v2505 = vpop.f32.mrb[0].mxu0
  %v2506 = vadd.f32 0.0, %v2505
  %2507 = vmatprep.mubr.f32.mxu0 %v2378
  %2508 = vmatmul.mubr.f32.gmra.mrb[0].mxu0 %v1573
  %v2509 = vpop.f32.mrb[0].mxu0
  %v2510 = vadd.f32 0.0, %v2509
  %v2511 = vpop.f32.mrb[0].mxu0
  %v2512 = vadd.f32 0.0, %v2511
  %2513 = vmatprep.mubr.f32.mxu0 %v2381
  %2514 = vmatmul.mubr.f32.gmra.mrb[0].mxu0 %v1575
  %v2515 = vpop.f32.mrb[0].mxu0
  %v2516 = vadd.f32 0.0, %v2515
  %v2517 = vpop.f32.mrb[0].mxu0
  %v2518 = vadd.f32 0.0, %v2517
  %2519 = vmatprep.mubr.f32.mxu0 %v2384
  %2520 = vmatmul.mubr.f32.gmra.mrb[0].mxu0 %v1577
  %v2521 = vpop.f32.mrb[0].mxu0
  %v2522 = vadd.f32 0.0, %v2521
  %v2523 = vpop.f32.mrb[0].mxu0
  %v2524 = vadd.f32 0.0, %v2523
  %2525 = vmatprep.mubr.f32.mxu0 %v2387
  %2526 = vmatmul.mubr.f32.gmra.mrb[0].mxu0 %v1579
  %v2527 = vpop.f32.mrb[0].mxu0
  %v2528 = vadd.f32 0.0, %v2527
  %v2529 = vpop.f32.mrb[0].mxu0
  %v2530 = vadd.f32 0.0, %v2529
  %2531 = vmatprep.mubr.f32.mxu0 %v2390
  %2532 = vmatmul.mubr.f32.gmra.mrb[0].mxu0 %v1581
  %v2533 = vpop.f32.mrb[0].mxu0
  %v2534 = vadd.f32 0.0, %v2533
  %v2535 = vpop.f32.mrb[0].mxu0
  %v2536 = vadd.f32 0.0, %v2535
  %2537 = vmatprep.mubr.f32.mxu0 %v2393
  %2538 = vmatmul.mubr.f32.gmra.mrb[0].mxu0 %v1583
  %v2539 = vpop.f32.mrb[0].mxu0
  %v2540 = vadd.f32 0.0, %v2539
  %v2541 = vpop.f32.mrb[0].mxu0
  %v2542 = vadd.f32 0.0, %v2541
  %2543 = vmatprep.mubr.f32.mxu0 %v2396
  %2544 = vmatmul.mubr.f32.gmra.mrb[0].mxu0 %v1585
  %v2545 = vpop.f32.mrb[0].mxu0
  %v2546 = vadd.f32 0.0, %v2545
  %v2547 = vpop.f32.mrb[0].mxu0
  %v2548 = vadd.f32 0.0, %v2547
  %2549 = vmatprep.mubr.f32.mxu0 %v2399
  %2550 = vmatmul.mubr.f32.gmra.mrb[0].mxu0 %v1587
  %v2551 = vpop.f32.mrb[0].mxu0
  %v2552 = vadd.f32 0.0, %v2551
  %v2553 = vpop.f32.mrb[0].mxu0
  %v2554 = vadd.f32 0.0, %v2553
  %2555 = vmatprep.mubr.f32.mxu0 %v2402
  %2556 = vmatmul.mubr.f32.gmra.mrb[0].mxu0 %v1589
  %v2557 = vpop.f32.mrb[0].mxu0
  %v2558 = vadd.f32 0.0, %v2557
  %v2559 = vpop.f32.mrb[0].mxu0
  %v2560 = vadd.f32 0.0, %v2559
  %2561 = vmatprep.mubr.f32.mxu0 %v2405
  %2562 = vmatmul.mubr.f32.gmra.mrb[0].mxu0 %v1591
  %v2563 = vpop.f32.mrb[0].mxu0
  %v2564 = vadd.f32 0.0, %v2563
  %v2565 = vpop.f32.mrb[0].mxu0
  %v2566 = vadd.f32 0.0, %v2565
  %2567 = vdwg.mxu0
  %v2568 = vadd.f32 %v2208, %v2474
  %v2569 = vadd.f32 %v2210, %v2476
  %v2570 = vadd.f32 %v2214, %v2480
  %v2571 = vadd.f32 %v2216, %v2482
  %v2572 = vadd.f32 %v2220, %v2486
  %v2573 = vadd.f32 %v2222, %v2488
  %v2574 = vadd.f32 %v2226, %v2492
  %v2575 = vadd.f32 %v2228, %v2494
  %v2576 = vadd.f32 %v2232, %v2498
  %v2577 = vadd.f32 %v2234, %v2500
  %v2578 = vadd.f32 %v2238, %v2504
  %v2579 = vadd.f32 %v2240, %v2506
  %v2580 = vadd.f32 %v2244, %v2510
  %v2581 = vadd.f32 %v2246, %v2512
  %v2582 = vadd.f32 %v2250, %v2516
  %v2583 = vadd.f32 %v2252, %v2518
  %v2584 = vadd.f32 %v2256, %v2522
  %v2585 = vadd.f32 %v2258, %v2524
  %v2586 = vadd.f32 %v2262, %v2528
  %v2587 = vadd.f32 %v2264, %v2530
  %v2588 = vadd.f32 %v2268, %v2534
  %v2589 = vadd.f32 %v2270, %v2536
  %v2590 = vadd.f32 %v2274, %v2540
  %v2591 = vadd.f32 %v2276, %v2542
  %v2592 = vadd.f32 %v2280, %v2546
  %v2593 = vadd.f32 %v2282, %v2548
  %v2594 = vadd.f32 %v2286, %v2552
  %v2595 = vadd.f32 %v2288, %v2554
  %v2596 = vadd.f32 %v2292, %v2558
  %v2597 = vadd.f32 %v2294, %v2560
  %v2598 = vadd.f32 %v2298, %v2564
  %v2599 = vadd.f32 %v2300, %v2566
  %v2600 = vld [vmem:[%s4] sm:$0x3]
  %v2602 = vlaneseq
  %v2603 = vshrl.u32 %v2602, 7
  %v2604 = vsub.s32 0, %v2603
  %v2605 = vrot.slane %v2600, %v2604
  %v2606 = vlaneseq
  %v2607 = vshrl.u32 %v2606, 7
  %v2608 = vsub.s32 1, %v2607
  %v2609 = vrot.slane %v2600, %v2608
  %v2612 = vadd.f32 %v2568, %v2605
  %v2613 = vadd.f32 %v2569, %v2609
  %v2614 = vadd.f32 %v2570, %v2605
  %v2615 = vadd.f32 %v2571, %v2609
  %v2616 = vadd.f32 %v2572, %v2605
  %v2617 = vadd.f32 %v2573, %v2609
  %v2618 = vadd.f32 %v2574, %v2605
  %v2619 = vadd.f32 %v2575, %v2609
  %v2620 = vadd.f32 %v2576, %v2605
  %v2621 = vadd.f32 %v2577, %v2609
  %v2622 = vadd.f32 %v2578, %v2605
  %v2623 = vadd.f32 %v2579, %v2609
  %v2624 = vadd.f32 %v2580, %v2605
  %v2625 = vadd.f32 %v2581, %v2609
  %v2626 = vadd.f32 %v2582, %v2605
  %v2627 = vadd.f32 %v2583, %v2609
  %v2628 = vadd.f32 %v2584, %v2605
  %v2629 = vadd.f32 %v2585, %v2609
  %v2630 = vadd.f32 %v2586, %v2605
  %v2631 = vadd.f32 %v2587, %v2609
  %v2632 = vadd.f32 %v2588, %v2605
  %v2633 = vadd.f32 %v2589, %v2609
  %v2634 = vadd.f32 %v2590, %v2605
  %v2635 = vadd.f32 %v2591, %v2609
  %v2636 = vadd.f32 %v2592, %v2605
  %v2637 = vadd.f32 %v2593, %v2609
  %v2638 = vadd.f32 %v2594, %v2605
  %v2639 = vadd.f32 %v2595, %v2609
  %v2640 = vadd.f32 %v2596, %v2605
  %v2641 = vadd.f32 %v2597, %v2609
  %v2642 = vadd.f32 %v2598, %v2605
  %v2643 = vadd.f32 %v2599, %v2609
  %v2644 = vmax.f32 %v2612, 0.0
  %v2645 = vmax.f32 %v2613, 0.0
  %v2646 = vmax.f32 %v2614, 0.0
  %v2647 = vmax.f32 %v2615, 0.0
  %v2648 = vmax.f32 %v2616, 0.0
  %v2649 = vmax.f32 %v2617, 0.0
  %v2650 = vmax.f32 %v2618, 0.0
  %v2651 = vmax.f32 %v2619, 0.0
  %v2652 = vmax.f32 %v2620, 0.0
  %v2653 = vmax.f32 %v2621, 0.0
  %v2654 = vmax.f32 %v2622, 0.0
  %v2655 = vmax.f32 %v2623, 0.0
  %v2656 = vmax.f32 %v2624, 0.0
  %v2657 = vmax.f32 %v2625, 0.0
  %v2658 = vmax.f32 %v2626, 0.0
  %v2659 = vmax.f32 %v2627, 0.0
  %v2660 = vmax.f32 %v2628, 0.0
  %v2661 = vmax.f32 %v2629, 0.0
  %v2662 = vmax.f32 %v2630, 0.0
  %v2663 = vmax.f32 %v2631, 0.0
  %v2664 = vmax.f32 %v2632, 0.0
  %v2665 = vmax.f32 %v2633, 0.0
  %v2666 = vmax.f32 %v2634, 0.0
  %v2667 = vmax.f32 %v2635, 0.0
  %v2668 = vmax.f32 %v2636, 0.0
  %v2669 = vmax.f32 %v2637, 0.0
  %v2670 = vmax.f32 %v2638, 0.0
  %v2671 = vmax.f32 %v2639, 0.0
  %v2672 = vmax.f32 %v2640, 0.0
  %v2673 = vmax.f32 %v2641, 0.0
  %v2674 = vmax.f32 %v2642, 0.0
  %v2675 = vmax.f32 %v2643, 0.0
  %v2676 = vld [vmem:[%s6] sm:$0xff]
  %v2677 = vld [vmem:[%s6 + $0x8] sm:$0xff]
  %v2678 = vld [vmem:[%s6 + $0x10] sm:$0xff]
  %v2679 = vld [vmem:[%s6 + $0x18] sm:$0xff]
  %v2680 = vld [vmem:[%s6 + $0x20] sm:$0xff]
  %v2681 = vld [vmem:[%s6 + $0x28] sm:$0xff]
  %v2682 = vld [vmem:[%s6 + $0x30] sm:$0xff]
  %v2683 = vld [vmem:[%s6 + $0x38] sm:$0xff]
  %v2684 = vld [vmem:[%s6 + $0x40] sm:$0xff]
  %v2685 = vld [vmem:[%s6 + $0x48] sm:$0xff]
  %v2686 = vld [vmem:[%s6 + $0x50] sm:$0xff]
  %v2687 = vld [vmem:[%s6 + $0x58] sm:$0xff]
  %v2688 = vld [vmem:[%s6 + $0x60] sm:$0xff]
  %v2689 = vld [vmem:[%s6 + $0x68] sm:$0xff]
  %2690 = vmatprep.subr.mxu0 %v2645
  %2691 = vmatpush1.msra.mxu0 %v2644
  %2692 = vmatprep.subr.mxu0 %v2647
  %2693 = vmatpush1.msra.mxu0 %v2646
  %2694 = vmatprep.subr.mxu0 %v2649
  %2695 = vmatpush1.msra.mxu0 %v2648
  %2696 = vmatprep.subr.mxu0 %v2651
  %2697 = vmatpush1.msra.mxu0 %v2650
  %2698 = vmatprep.subr.mxu0 %v2653
  %2699 = vmatpush1.msra.mxu0 %v2652
  %2700 = vmatprep.subr.mxu0 %v2655
  %2701 = vmatpush1.msra.mxu0 %v2654
  %2702 = vmatprep.subr.mxu0 %v2657
  %2703 = vmatpush1.msra.mxu0 %v2656
  %2704 = vmatprep.subr.mxu0 %v2659
  %2705 = vmatpush1.msra.mxu0 %v2658
  %2706 = vmatprep.subr.mxu0 %v2661
  %2707 = vmatpush1.msra.mxu0 %v2660
  %2708 = vmatprep.subr.mxu0 %v2663
  %2709 = vmatpush1.msra.mxu0 %v2662
  %2710 = vmatprep.subr.mxu0 %v2665
  %2711 = vmatpush1.msra.mxu0 %v2664
  %2712 = vmatprep.subr.mxu0 %v2667
  %2713 = vmatpush1.msra.mxu0 %v2666
  %2714 = vmatprep.subr.mxu0 %v2669
  %2715 = vmatpush1.msra.mxu0 %v2668
  %2716 = vmatprep.subr.mxu0 %v2671
  %2717 = vmatpush1.msra.mxu0 %v2670
  %2718 = vmatprep.subr.mxu0 %v2673
  %2719 = vmatpush1.msra.mxu0 %v2672
  %2720 = vmatprep.subr.mxu0 %v2675
  %2721 = vmatpush1.msra.mxu0 %v2674
  %2722 = vmatprep.subr.mxu0 0.0
  %2723 = vmatpush1.msra.mxu0 0.0
  %2724 = vmatprep.subr.mxu0 0.0
  %2725 = vmatpush1.msra.mxu0 0.0
  %2726 = vmatprep.subr.mxu0 0.0
  %2727 = vmatpush1.msra.mxu0 0.0
  %2728 = vmatprep.subr.mxu0 0.0
  %2729 = vmatpush1.msra.mxu0 0.0
  %2730 = vmatprep.subr.mxu0 0.0
  %2731 = vmatpush1.msra.mxu0 0.0
  %2732 = vmatprep.subr.mxu0 0.0
  %2733 = vmatpush1.msra.mxu0 0.0
  %2734 = vmatprep.subr.mxu0 0.0
  %2735 = vmatpush1.msra.mxu0 0.0
  %2736 = vmatprep.subr.mxu0 0.0
  %2737 = vmatpush1.msra.mxu0 0.0
  %2738 = vmatprep.subr.mxu0 0.0
  %2739 = vmatpush1.msra.mxu0 0.0
  %2740 = vmatprep.subr.mxu0 0.0
  %2741 = vmatpush1.msra.mxu0 0.0
  %2742 = vmatprep.subr.mxu0 0.0
  %2743 = vmatpush1.msra.mxu0 0.0
  %2744 = vmatprep.subr.mxu0 0.0
  %2745 = vmatpush1.msra.mxu0 0.0
  %2746 = vmatprep.subr.mxu0 0.0
  %2747 = vmatpush1.msra.mxu0 0.0
  %2748 = vmatprep.subr.mxu0 0.0
  %2749 = vmatpush1.msra.mxu0 0.0
  %2750 = vmatprep.subr.mxu0 0.0
  %2751 = vmatpush1.msra.mxu0 0.0
  %2752 = vmatprep.subr.mxu0 0.0
  %2753 = vmatpush1.msra.mxu0 0.0
  %2754 = vmatprep.mubr.f32.mxu0 0.0
  %2755 = vmatmul.mubr.f32.gmra.mrb[0].mxu0 %v2676
  %v2756 = vpop.f32.mrb[0].mxu0
  %v2757 = vadd.f32 0.0, %v2756
  %v2758 = vpop.f32.mrb[0].mxu0
  %v2759 = vadd.f32 0.0, %v2758
  %2760 = vmatprep.mubr.f32.mxu0 0.0
  %2761 = vmatmul.mubr.f32.gmra.mrb[0].mxu0 %v2677
  %v2762 = vpop.f32.mrb[0].mxu0
  %v2763 = vadd.f32 0.0, %v2762
  %v2764 = vpop.f32.mrb[0].mxu0
  %v2765 = vadd.f32 0.0, %v2764
  %2766 = vmatprep.mubr.f32.mxu0 0.0
  %2767 = vmatmul.mubr.f32.gmra.mrb[0].mxu0 %v2678
  %v2768 = vpop.f32.mrb[0].mxu0
  %v2769 = vadd.f32 0.0, %v2768
  %v2770 = vpop.f32.mrb[0].mxu0
  %v2771 = vadd.f32 0.0, %v2770
  %2772 = vmatprep.mubr.f32.mxu0 0.0
  %2773 = vmatmul.mubr.f32.gmra.mrb[0].mxu0 %v2679
  %v2774 = vpop.f32.mrb[0].mxu0
  %v2775 = vadd.f32 0.0, %v2774
  %v2776 = vpop.f32.mrb[0].mxu0
  %v2777 = vadd.f32 0.0, %v2776
  %2778 = vmatprep.mubr.f32.mxu0 0.0
  %2779 = vmatmul.mubr.f32.gmra.mrb[0].mxu0 %v2680
  %v2780 = vpop.f32.mrb[0].mxu0
  %v2781 = vadd.f32 0.0, %v2780
  %v2782 = vpop.f32.mrb[0].mxu0
  %v2783 = vadd.f32 0.0, %v2782
  %2784 = vmatprep.mubr.f32.mxu0 0.0
  %2785 = vmatmul.mubr.f32.gmra.mrb[0].mxu0 %v2681
  %v2786 = vpop.f32.mrb[0].mxu0
  %v2787 = vadd.f32 0.0, %v2786
  %v2788 = vpop.f32.mrb[0].mxu0
  %v2789 = vadd.f32 0.0, %v2788
  %2790 = vmatprep.mubr.f32.mxu0 0.0
  %2791 = vmatmul.mubr.f32.gmra.mrb[0].mxu0 %v2682
  %v2792 = vpop.f32.mrb[0].mxu0
  %v2793 = vadd.f32 0.0, %v2792
  %v2794 = vpop.f32.mrb[0].mxu0
  %v2795 = vadd.f32 0.0, %v2794
  %2796 = vmatprep.mubr.f32.mxu0 0.0
  %2797 = vmatmul.mubr.f32.gmra.mrb[0].mxu0 %v2683
  %v2798 = vpop.f32.mrb[0].mxu0
  %v2799 = vadd.f32 0.0, %v2798
  %v2800 = vpop.f32.mrb[0].mxu0
  %v2801 = vadd.f32 0.0, %v2800
  %2802 = vmatprep.mubr.f32.mxu0 0.0
  %2803 = vmatmul.mubr.f32.gmra.mrb[0].mxu0 %v2684
  %v2804 = vpop.f32.mrb[0].mxu0
  %v2805 = vadd.f32 0.0, %v2804
  %v2806 = vpop.f32.mrb[0].mxu0
  %v2807 = vadd.f32 0.0, %v2806
  %2808 = vmatprep.mubr.f32.mxu0 0.0
  %2809 = vmatmul.mubr.f32.gmra.mrb[0].mxu0 %v2685
  %v2810 = vpop.f32.mrb[0].mxu0
  %v2811 = vadd.f32 0.0, %v2810
  %v2812 = vpop.f32.mrb[0].mxu0
  %v2813 = vadd.f32 0.0, %v2812
  %2814 = vmatprep.mubr.f32.mxu0 0.0
  %2815 = vmatmul.mubr.f32.gmra.mrb[0].mxu0 %v2686
  %v2816 = vpop.f32.mrb[0].mxu0
  %v2817 = vadd.f32 0.0, %v2816
  %v2818 = vpop.f32.mrb[0].mxu0
  %v2819 = vadd.f32 0.0, %v2818
  %2820 = vmatprep.mubr.f32.mxu0 0.0
  %2821 = vmatmul.mubr.f32.gmra.mrb[0].mxu0 %v2687
  %v2822 = vpop.f32.mrb[0].mxu0
  %v2823 = vadd.f32 0.0, %v2822
  %v2824 = vpop.f32.mrb[0].mxu0
  %v2825 = vadd.f32 0.0, %v2824
  %2826 = vmatprep.mubr.f32.mxu0 0.0
  %2827 = vmatmul.mubr.f32.gmra.mrb[0].mxu0 %v2688
  %v2828 = vpop.f32.mrb[0].mxu0
  %v2829 = vadd.f32 0.0, %v2828
  %v2830 = vpop.f32.mrb[0].mxu0
  %v2831 = vadd.f32 0.0, %v2830
  %2832 = vmatprep.mubr.f32.mxu0 0.0
  %2833 = vmatmul.mubr.f32.gmra.mrb[0].mxu0 %v2689
  %v2834 = vpop.f32.mrb[0].mxu0
  %v2835 = vadd.f32 0.0, %v2834
  %v2836 = vpop.f32.mrb[0].mxu0
  %v2837 = vadd.f32 0.0, %v2836
  %2838 = vdwg.mxu0
  %v2839 = vld [vmem:[%s8] sm:$0x1]
  %v2840 = vld [vmem:[%s7] sm:$0xff]
  %v2841 = vld [vmem:[%s7 + $0x8] sm:$0xff]
  %v2842 = vld [vmem:[%s7 + $0x10] sm:$0xff]
  %v2843 = vld [vmem:[%s7 + $0x18] sm:$0xff]
  %v2844 = vld [vmem:[%s7 + $0x20] sm:$0xff]
  %v2845 = vld [vmem:[%s7 + $0x28] sm:$0xff]
  %v2846 = vld [vmem:[%s7 + $0x30] sm:$0xff]
  %v2847 = vld [vmem:[%s7 + $0x38] sm:$0xff]
  %v2848 = vld [vmem:[%s7 + $0x40] sm:$0xff]
  %v2849 = vld [vmem:[%s7 + $0x48] sm:$0xff]
  %v2850 = vld [vmem:[%s7 + $0x50] sm:$0xff]
  %v2851 = vld [vmem:[%s7 + $0x58] sm:$0xff]
  %v2852 = vld [vmem:[%s7 + $0x60] sm:$0xff]
  %v2853 = vld [vmem:[%s7 + $0x68] sm:$0xff]
  %v2854 = vld [vmem:[%s7 + $0x70] sm:$0xff]
  %v2855 = vld [vmem:[%s7 + $0x78] sm:$0xff]
  %v2856 = vld [vmem:[%s7 + $0x80] sm:$0xff]
  %v2857 = vld [vmem:[%s7 + $0x88] sm:$0xff]
  %v2858 = vld [vmem:[%s7 + $0x90] sm:$0xff]
  %v2859 = vld [vmem:[%s7 + $0x98] sm:$0xff]
  %v2860 = vld [vmem:[%s7 + $0xa0] sm:$0xff]
  %v2861 = vld [vmem:[%s7 + $0xa8] sm:$0xff]
  %v2862 = vld [vmem:[%s7 + $0xb0] sm:$0xff]
  %v2863 = vld [vmem:[%s7 + $0xb8] sm:$0xff]
  %v2864 = vld [vmem:[%s7 + $0xc0] sm:$0xff]
  %v2865 = vld [vmem:[%s7 + $0xc8] sm:$0xff]
  %v2866 = vld [vmem:[%s7 + $0xd0] sm:$0xff]
  %v2867 = vld [vmem:[%s7 + $0xd8] sm:$0xff]
  %v2869 = vsel %vm1883, %v2759, 0
  %v2872 = vsel %vm1883, %v2765, 0
  %2874 = vmatprep.subr.mxu0 0.0
  %2875 = vmatpush1.msra.mxu0 %v2840
  %2876 = vmatprep.subr.mxu0 0.0
  %2877 = vmatpush1.msra.mxu0 %v2841
  %2878 = vmatprep.subr.mxu0 0.0
  %2879 = vmatpush1.msra.mxu0 %v2842
  %2880 = vmatprep.subr.mxu0 0.0
  %2881 = vmatpush1.msra.mxu0 %v2843
  %2882 = vmatprep.subr.mxu0 0.0
  %2883 = vmatpush1.msra.mxu0 %v2844
  %2884 = vmatprep.subr.mxu0 0.0
  %2885 = vmatpush1.msra.mxu0 %v2845
  %2886 = vmatprep.subr.mxu0 0.0
  %2887 = vmatpush1.msra.mxu0 %v2846
  %2888 = vmatprep.subr.mxu0 0.0
  %2889 = vmatpush1.msra.mxu0 %v2847
  %2890 = vmatprep.subr.mxu0 0.0
  %2891 = vmatpush1.msra.mxu0 %v2848
  %2892 = vmatprep.subr.mxu0 0.0
  %2893 = vmatpush1.msra.mxu0 %v2849
  %2894 = vmatprep.subr.mxu0 0.0
  %2895 = vmatpush1.msra.mxu0 %v2850
  %2896 = vmatprep.subr.mxu0 0.0
  %2897 = vmatpush1.msra.mxu0 %v2851
  %2898 = vmatprep.subr.mxu0 0.0
  %2899 = vmatpush1.msra.mxu0 %v2852
  %2900 = vmatprep.subr.mxu0 0.0
  %2901 = vmatpush1.msra.mxu0 %v2853
  %2902 = vmatprep.subr.mxu0 0.0
  %2903 = vmatpush1.msra.mxu0 %v2854
  %2904 = vmatprep.subr.mxu0 0.0
  %2905 = vmatpush1.msra.mxu0 %v2855
  %2906 = vmatprep.subr.mxu0 0.0
  %2907 = vmatpush1.msra.mxu0 %v2856
  %2908 = vmatprep.subr.mxu0 0.0
  %2909 = vmatpush1.msra.mxu0 %v2857
  %2910 = vmatprep.subr.mxu0 0.0
  %2911 = vmatpush1.msra.mxu0 %v2858
  %2912 = vmatprep.subr.mxu0 0.0
  %2913 = vmatpush1.msra.mxu0 %v2859
  %2914 = vmatprep.subr.mxu0 0.0
  %2915 = vmatpush1.msra.mxu0 %v2860
  %2916 = vmatprep.subr.mxu0 0.0
  %2917 = vmatpush1.msra.mxu0 %v2861
  %2918 = vmatprep.subr.mxu0 0.0
  %2919 = vmatpush1.msra.mxu0 %v2862
  %2920 = vmatprep.subr.mxu0 0.0
  %2921 = vmatpush1.msra.mxu0 %v2863
  %2922 = vmatprep.subr.mxu0 0.0
  %2923 = vmatpush1.msra.mxu0 %v2864
  %2924 = vmatprep.subr.mxu0 0.0
  %2925 = vmatpush1.msra.mxu0 %v2865
  %2926 = vmatprep.subr.mxu0 0.0
  %2927 = vmatpush1.msra.mxu0 %v2866
  %2928 = vmatprep.subr.mxu0 0.0
  %2929 = vmatpush1.msra.mxu0 %v2867
  %2930 = vmatprep.subr.mxu0 0.0
  %2931 = vmatpush1.msra.mxu0 0.0
  %2932 = vmatprep.subr.mxu0 0.0
  %2933 = vmatpush1.msra.mxu0 0.0
  %2934 = vmatprep.subr.mxu0 0.0
  %2935 = vmatpush1.msra.mxu0 0.0
  %2936 = vmatprep.subr.mxu0 0.0
  %2937 = vmatpush1.msra.mxu0 0.0
  %2938 = vmatprep.mubr.f32.mxu0 %v2869
  %2939 = vmatmul.mubr.f32.gmra.mrb[0].mxu0 %v2757
  %v2940 = vpop.f32.mrb[0].mxu0
  %v2941 = vadd.f32 0.0, %v2940
  %v2942 = vpop.f32.mrb[0].mxu0
  %2943 = vmatprep.mubr.f32.mxu0 %v2872
  %2944 = vmatmul.mubr.f32.gmra.mrb[0].mxu0 %v2763
  %v2945 = vpop.f32.mrb[0].mxu0
  %v2946 = vadd.f32 0.0, %v2945
  %v2947 = vpop.f32.mrb[0].mxu0
  %2948 = vdwg.mxu0
  %v2950 = vlaneseq
  %v2951 = vshrl.u32 %v2950, 7
  %v2952 = vsub.s32 0, %v2951
  %v2953 = vrot.slane %v2839, %v2952
  %v2955 = vadd.f32 %v2953, %v2941
  %v2956 = vadd.f32 %v2953, %v2946
  %s2957 = scalar_lea.vmem %s7, 224
  %v2958 = vld [vmem:[%s2957] sm:$0xff]
  %v2959 = vld [vmem:[%s2957 + $0x8] sm:$0xff]
  %v2960 = vld [vmem:[%s2957 + $0x10] sm:$0xff]
  %v2961 = vld [vmem:[%s2957 + $0x18] sm:$0xff]
  %v2962 = vld [vmem:[%s2957 + $0x20] sm:$0xff]
  %v2963 = vld [vmem:[%s2957 + $0x28] sm:$0xff]
  %v2964 = vld [vmem:[%s2957 + $0x30] sm:$0xff]
  %v2965 = vld [vmem:[%s2957 + $0x38] sm:$0xff]
  %v2966 = vld [vmem:[%s2957 + $0x40] sm:$0xff]
  %v2967 = vld [vmem:[%s2957 + $0x48] sm:$0xff]
  %v2968 = vld [vmem:[%s2957 + $0x50] sm:$0xff]
  %v2969 = vld [vmem:[%s2957 + $0x58] sm:$0xff]
  %v2970 = vld [vmem:[%s2957 + $0x60] sm:$0xff]
  %v2971 = vld [vmem:[%s2957 + $0x68] sm:$0xff]
  %v2972 = vld [vmem:[%s2957 + $0x70] sm:$0xff]
  %v2973 = vld [vmem:[%s2957 + $0x78] sm:$0xff]
  %v2974 = vld [vmem:[%s2957 + $0x80] sm:$0xff]
  %v2975 = vld [vmem:[%s2957 + $0x88] sm:$0xff]
  %v2976 = vld [vmem:[%s2957 + $0x90] sm:$0xff]
  %v2977 = vld [vmem:[%s2957 + $0x98] sm:$0xff]
  %v2978 = vld [vmem:[%s2957 + $0xa0] sm:$0xff]
  %v2979 = vld [vmem:[%s2957 + $0xa8] sm:$0xff]
  %v2980 = vld [vmem:[%s2957 + $0xb0] sm:$0xff]
  %v2981 = vld [vmem:[%s2957 + $0xb8] sm:$0xff]
  %v2982 = vld [vmem:[%s2957 + $0xc0] sm:$0xff]
  %v2983 = vld [vmem:[%s2957 + $0xc8] sm:$0xff]
  %v2984 = vld [vmem:[%s2957 + $0xd0] sm:$0xff]
  %v2985 = vld [vmem:[%s2957 + $0xd8] sm:$0xff]
  %v2987 = vsel %vm1883, %v2771, 0
  %v2990 = vsel %vm1883, %v2777, 0
  %2992 = vmatprep.subr.mxu0 0.0
  %2993 = vmatpush1.msra.mxu0 %v2958
  %2994 = vmatprep.subr.mxu0 0.0
  %2995 = vmatpush1.msra.mxu0 %v2959
  %2996 = vmatprep.subr.mxu0 0.0
  %2997 = vmatpush1.msra.mxu0 %v2960
  %2998 = vmatprep.subr.mxu0 0.0
  %2999 = vmatpush1.msra.mxu0 %v2961
  %3000 = vmatprep.subr.mxu0 0.0
  %3001 = vmatpush1.msra.mxu0 %v2962
  %3002 = vmatprep.subr.mxu0 0.0
  %3003 = vmatpush1.msra.mxu0 %v2963
  %3004 = vmatprep.subr.mxu0 0.0
  %3005 = vmatpush1.msra.mxu0 %v2964
  %3006 = vmatprep.subr.mxu0 0.0
  %3007 = vmatpush1.msra.mxu0 %v2965
  %3008 = vmatprep.subr.mxu0 0.0
  %3009 = vmatpush1.msra.mxu0 %v2966
  %3010 = vmatprep.subr.mxu0 0.0
  %3011 = vmatpush1.msra.mxu0 %v2967
  %3012 = vmatprep.subr.mxu0 0.0
  %3013 = vmatpush1.msra.mxu0 %v2968
  %3014 = vmatprep.subr.mxu0 0.0
  %3015 = vmatpush1.msra.mxu0 %v2969
  %3016 = vmatprep.subr.mxu0 0.0
  %3017 = vmatpush1.msra.mxu0 %v2970
  %3018 = vmatprep.subr.mxu0 0.0
  %3019 = vmatpush1.msra.mxu0 %v2971
  %3020 = vmatprep.subr.mxu0 0.0
  %3021 = vmatpush1.msra.mxu0 %v2972
  %3022 = vmatprep.subr.mxu0 0.0
  %3023 = vmatpush1.msra.mxu0 %v2973
  %3024 = vmatprep.subr.mxu0 0.0
  %3025 = vmatpush1.msra.mxu0 %v2974
  %3026 = vmatprep.subr.mxu0 0.0
  %3027 = vmatpush1.msra.mxu0 %v2975
  %3028 = vmatprep.subr.mxu0 0.0
  %3029 = vmatpush1.msra.mxu0 %v2976
  %3030 = vmatprep.subr.mxu0 0.0
  %3031 = vmatpush1.msra.mxu0 %v2977
  %3032 = vmatprep.subr.mxu0 0.0
  %3033 = vmatpush1.msra.mxu0 %v2978
  %3034 = vmatprep.subr.mxu0 0.0
  %3035 = vmatpush1.msra.mxu0 %v2979
  %3036 = vmatprep.subr.mxu0 0.0
  %3037 = vmatpush1.msra.mxu0 %v2980
  %3038 = vmatprep.subr.mxu0 0.0
  %3039 = vmatpush1.msra.mxu0 %v2981
  %3040 = vmatprep.subr.mxu0 0.0
  %3041 = vmatpush1.msra.mxu0 %v2982
  %3042 = vmatprep.subr.mxu0 0.0
  %3043 = vmatpush1.msra.mxu0 %v2983
  %3044 = vmatprep.subr.mxu0 0.0
  %3045 = vmatpush1.msra.mxu0 %v2984
  %3046 = vmatprep.subr.mxu0 0.0
  %3047 = vmatpush1.msra.mxu0 %v2985
  %3048 = vmatprep.subr.mxu0 0.0
  %3049 = vmatpush1.msra.mxu0 0.0
  %3050 = vmatprep.subr.mxu0 0.0
  %3051 = vmatpush1.msra.mxu0 0.0
  %3052 = vmatprep.subr.mxu0 0.0
  %3053 = vmatpush1.msra.mxu0 0.0
  %3054 = vmatprep.subr.mxu0 0.0
  %3055 = vmatpush1.msra.mxu0 0.0
  %3056 = vmatprep.mubr.f32.mxu0 %v2987
  %3057 = vmatmul.mubr.f32.gmra.mrb[0].mxu0 %v2769
  %v3058 = vpop.f32.mrb[0].mxu0
  %v3059 = vadd.f32 0.0, %v3058
  %v3060 = vpop.f32.mrb[0].mxu0
  %3061 = vmatprep.mubr.f32.mxu0 %v2990
  %3062 = vmatmul.mubr.f32.gmra.mrb[0].mxu0 %v2775
  %v3063 = vpop.f32.mrb[0].mxu0
  %v3064 = vadd.f32 0.0, %v3063
  %v3065 = vpop.f32.mrb[0].mxu0
  %3066 = vdwg.mxu0
  %v3067 = vadd.f32 %v2955, %v3059
  %v3068 = vadd.f32 %v2956, %v3064
  %s3069 = scalar_lea.vmem %s7, 448
  %v3070 = vld [vmem:[%s3069] sm:$0xff]
  %v3071 = vld [vmem:[%s3069 + $0x8] sm:$0xff]
  %v3072 = vld [vmem:[%s3069 + $0x10] sm:$0xff]
  %v3073 = vld [vmem:[%s3069 + $0x18] sm:$0xff]
  %v3074 = vld [vmem:[%s3069 + $0x20] sm:$0xff]
  %v3075 = vld [vmem:[%s3069 + $0x28] sm:$0xff]
  %v3076 = vld [vmem:[%s3069 + $0x30] sm:$0xff]
  %v3077 = vld [vmem:[%s3069 + $0x38] sm:$0xff]
  %v3078 = vld [vmem:[%s3069 + $0x40] sm:$0xff]
  %v3079 = vld [vmem:[%s3069 + $0x48] sm:$0xff]
  %v3080 = vld [vmem:[%s3069 + $0x50] sm:$0xff]
  %v3081 = vld [vmem:[%s3069 + $0x58] sm:$0xff]
  %v3082 = vld [vmem:[%s3069 + $0x60] sm:$0xff]
  %v3083 = vld [vmem:[%s3069 + $0x68] sm:$0xff]
  %v3084 = vld [vmem:[%s3069 + $0x70] sm:$0xff]
  %v3085 = vld [vmem:[%s3069 + $0x78] sm:$0xff]
  %v3086 = vld [vmem:[%s3069 + $0x80] sm:$0xff]
  %v3087 = vld [vmem:[%s3069 + $0x88] sm:$0xff]
  %v3088 = vld [vmem:[%s3069 + $0x90] sm:$0xff]
  %v3089 = vld [vmem:[%s3069 + $0x98] sm:$0xff]
  %v3090 = vld [vmem:[%s3069 + $0xa0] sm:$0xff]
  %v3091 = vld [vmem:[%s3069 + $0xa8] sm:$0xff]
  %v3092 = vld [vmem:[%s3069 + $0xb0] sm:$0xff]
  %v3093 = vld [vmem:[%s3069 + $0xb8] sm:$0xff]
  %v3094 = vld [vmem:[%s3069 + $0xc0] sm:$0xff]
  %v3095 = vld [vmem:[%s3069 + $0xc8] sm:$0xff]
  %v3096 = vld [vmem:[%s3069 + $0xd0] sm:$0xff]
  %v3097 = vld [vmem:[%s3069 + $0xd8] sm:$0xff]
  %v3099 = vsel %vm1883, %v2783, 0
  %v3102 = vsel %vm1883, %v2789, 0
  %3104 = vmatprep.subr.mxu0 0.0
  %3105 = vmatpush1.msra.mxu0 %v3070
  %3106 = vmatprep.subr.mxu0 0.0
  %3107 = vmatpush1.msra.mxu0 %v3071
  %3108 = vmatprep.subr.mxu0 0.0
  %3109 = vmatpush1.msra.mxu0 %v3072
  %3110 = vmatprep.subr.mxu0 0.0
  %3111 = vmatpush1.msra.mxu0 %v3073
  %3112 = vmatprep.subr.mxu0 0.0
  %3113 = vmatpush1.msra.mxu0 %v3074
  %3114 = vmatprep.subr.mxu0 0.0
  %3115 = vmatpush1.msra.mxu0 %v3075
  %3116 = vmatprep.subr.mxu0 0.0
  %3117 = vmatpush1.msra.mxu0 %v3076
  %3118 = vmatprep.subr.mxu0 0.0
  %3119 = vmatpush1.msra.mxu0 %v3077
  %3120 = vmatprep.subr.mxu0 0.0
  %3121 = vmatpush1.msra.mxu0 %v3078
  %3122 = vmatprep.subr.mxu0 0.0
  %3123 = vmatpush1.msra.mxu0 %v3079
  %3124 = vmatprep.subr.mxu0 0.0
  %3125 = vmatpush1.msra.mxu0 %v3080
  %3126 = vmatprep.subr.mxu0 0.0
  %3127 = vmatpush1.msra.mxu0 %v3081
  %3128 = vmatprep.subr.mxu0 0.0
  %3129 = vmatpush1.msra.mxu0 %v3082
  %3130 = vmatprep.subr.mxu0 0.0
  %3131 = vmatpush1.msra.mxu0 %v3083
  %3132 = vmatprep.subr.mxu0 0.0
  %3133 = vmatpush1.msra.mxu0 %v3084
  %3134 = vmatprep.subr.mxu0 0.0
  %3135 = vmatpush1.msra.mxu0 %v3085
  %3136 = vmatprep.subr.mxu0 0.0
  %3137 = vmatpush1.msra.mxu0 %v3086
  %3138 = vmatprep.subr.mxu0 0.0
  %3139 = vmatpush1.msra.mxu0 %v3087
  %3140 = vmatprep.subr.mxu0 0.0
  %3141 = vmatpush1.msra.mxu0 %v3088
  %3142 = vmatprep.subr.mxu0 0.0
  %3143 = vmatpush1.msra.mxu0 %v3089
  %3144 = vmatprep.subr.mxu0 0.0
  %3145 = vmatpush1.msra.mxu0 %v3090
  %3146 = vmatprep.subr.mxu0 0.0
  %3147 = vmatpush1.msra.mxu0 %v3091
  %3148 = vmatprep.subr.mxu0 0.0
  %3149 = vmatpush1.msra.mxu0 %v3092
  %3150 = vmatprep.subr.mxu0 0.0
  %3151 = vmatpush1.msra.mxu0 %v3093
  %3152 = vmatprep.subr.mxu0 0.0
  %3153 = vmatpush1.msra.mxu0 %v3094
  %3154 = vmatprep.subr.mxu0 0.0
  %3155 = vmatpush1.msra.mxu0 %v3095
  %3156 = vmatprep.subr.mxu0 0.0
  %3157 = vmatpush1.msra.mxu0 %v3096
  %3158 = vmatprep.subr.mxu0 0.0
  %3159 = vmatpush1.msra.mxu0 %v3097
  %3160 = vmatprep.subr.mxu0 0.0
  %3161 = vmatpush1.msra.mxu0 0.0
  %3162 = vmatprep.subr.mxu0 0.0
  %3163 = vmatpush1.msra.mxu0 0.0
  %3164 = vmatprep.subr.mxu0 0.0
  %3165 = vmatpush1.msra.mxu0 0.0
  %3166 = vmatprep.subr.mxu0 0.0
  %3167 = vmatpush1.msra.mxu0 0.0
  %3168 = vmatprep.mubr.f32.mxu0 %v3099
  %3169 = vmatmul.mubr.f32.gmra.mrb[0].mxu0 %v2781
  %v3170 = vpop.f32.mrb[0].mxu0
  %v3171 = vadd.f32 0.0, %v3170
  %v3172 = vpop.f32.mrb[0].mxu0
  %3173 = vmatprep.mubr.f32.mxu0 %v3102
  %3174 = vmatmul.mubr.f32.gmra.mrb[0].mxu0 %v2787
  %v3175 = vpop.f32.mrb[0].mxu0
  %v3176 = vadd.f32 0.0, %v3175
  %v3177 = vpop.f32.mrb[0].mxu0
  %3178 = vdwg.mxu0
  %v3179 = vadd.f32 %v3067, %v3171
  %v3180 = vadd.f32 %v3068, %v3176
  %s3181 = scalar_lea.vmem %s7, 672
  %v3182 = vld [vmem:[%s3181] sm:$0xff]
  %v3183 = vld [vmem:[%s3181 + $0x8] sm:$0xff]
  %v3184 = vld [vmem:[%s3181 + $0x10] sm:$0xff]
  %v3185 = vld [vmem:[%s3181 + $0x18] sm:$0xff]
  %v3186 = vld [vmem:[%s3181 + $0x20] sm:$0xff]
  %v3187 = vld [vmem:[%s3181 + $0x28] sm:$0xff]
  %v3188 = vld [vmem:[%s3181 + $0x30] sm:$0xff]
  %v3189 = vld [vmem:[%s3181 + $0x38] sm:$0xff]
  %v3190 = vld [vmem:[%s3181 + $0x40] sm:$0xff]
  %v3191 = vld [vmem:[%s3181 + $0x48] sm:$0xff]
  %v3192 = vld [vmem:[%s3181 + $0x50] sm:$0xff]
  %v3193 = vld [vmem:[%s3181 + $0x58] sm:$0xff]
  %v3194 = vld [vmem:[%s3181 + $0x60] sm:$0xff]
  %v3195 = vld [vmem:[%s3181 + $0x68] sm:$0xff]
  %v3196 = vld [vmem:[%s3181 + $0x70] sm:$0xff]
  %v3197 = vld [vmem:[%s3181 + $0x78] sm:$0xff]
  %v3198 = vld [vmem:[%s3181 + $0x80] sm:$0xff]
  %v3199 = vld [vmem:[%s3181 + $0x88] sm:$0xff]
  %v3200 = vld [vmem:[%s3181 + $0x90] sm:$0xff]
  %v3201 = vld [vmem:[%s3181 + $0x98] sm:$0xff]
  %v3202 = vld [vmem:[%s3181 + $0xa0] sm:$0xff]
  %v3203 = vld [vmem:[%s3181 + $0xa8] sm:$0xff]
  %v3204 = vld [vmem:[%s3181 + $0xb0] sm:$0xff]
  %v3205 = vld [vmem:[%s3181 + $0xb8] sm:$0xff]
  %v3206 = vld [vmem:[%s3181 + $0xc0] sm:$0xff]
  %v3207 = vld [vmem:[%s3181 + $0xc8] sm:$0xff]
  %v3208 = vld [vmem:[%s3181 + $0xd0] sm:$0xff]
  %v3209 = vld [vmem:[%s3181 + $0xd8] sm:$0xff]
  %v3211 = vsel %vm1883, %v2795, 0
  %v3214 = vsel %vm1883, %v2801, 0
  %3216 = vmatprep.subr.mxu0 0.0
  %3217 = vmatpush1.msra.mxu0 %v3182
  %3218 = vmatprep.subr.mxu0 0.0
  %3219 = vmatpush1.msra.mxu0 %v3183
  %3220 = vmatprep.subr.mxu0 0.0
  %3221 = vmatpush1.msra.mxu0 %v3184
  %3222 = vmatprep.subr.mxu0 0.0
  %3223 = vmatpush1.msra.mxu0 %v3185
  %3224 = vmatprep.subr.mxu0 0.0
  %3225 = vmatpush1.msra.mxu0 %v3186
  %3226 = vmatprep.subr.mxu0 0.0
  %3227 = vmatpush1.msra.mxu0 %v3187
  %3228 = vmatprep.subr.mxu0 0.0
  %3229 = vmatpush1.msra.mxu0 %v3188
  %3230 = vmatprep.subr.mxu0 0.0
  %3231 = vmatpush1.msra.mxu0 %v3189
  %3232 = vmatprep.subr.mxu0 0.0
  %3233 = vmatpush1.msra.mxu0 %v3190
  %3234 = vmatprep.subr.mxu0 0.0
  %3235 = vmatpush1.msra.mxu0 %v3191
  %3236 = vmatprep.subr.mxu0 0.0
  %3237 = vmatpush1.msra.mxu0 %v3192
  %3238 = vmatprep.subr.mxu0 0.0
  %3239 = vmatpush1.msra.mxu0 %v3193
  %3240 = vmatprep.subr.mxu0 0.0
  %3241 = vmatpush1.msra.mxu0 %v3194
  %3242 = vmatprep.subr.mxu0 0.0
  %3243 = vmatpush1.msra.mxu0 %v3195
  %3244 = vmatprep.subr.mxu0 0.0
  %3245 = vmatpush1.msra.mxu0 %v3196
  %3246 = vmatprep.subr.mxu0 0.0
  %3247 = vmatpush1.msra.mxu0 %v3197
  %3248 = vmatprep.subr.mxu0 0.0
  %3249 = vmatpush1.msra.mxu0 %v3198
  %3250 = vmatprep.subr.mxu0 0.0
  %3251 = vmatpush1.msra.mxu0 %v3199
  %3252 = vmatprep.subr.mxu0 0.0
  %3253 = vmatpush1.msra.mxu0 %v3200
  %3254 = vmatprep.subr.mxu0 0.0
  %3255 = vmatpush1.msra.mxu0 %v3201
  %3256 = vmatprep.subr.mxu0 0.0
  %3257 = vmatpush1.msra.mxu0 %v3202
  %3258 = vmatprep.subr.mxu0 0.0
  %3259 = vmatpush1.msra.mxu0 %v3203
  %3260 = vmatprep.subr.mxu0 0.0
  %3261 = vmatpush1.msra.mxu0 %v3204
  %3262 = vmatprep.subr.mxu0 0.0
  %3263 = vmatpush1.msra.mxu0 %v3205
  %3264 = vmatprep.subr.mxu0 0.0
  %3265 = vmatpush1.msra.mxu0 %v3206
  %3266 = vmatprep.subr.mxu0 0.0
  %3267 = vmatpush1.msra.mxu0 %v3207
  %3268 = vmatprep.subr.mxu0 0.0
  %3269 = vmatpush1.msra.mxu0 %v3208
  %3270 = vmatprep.subr.mxu0 0.0
  %3271 = vmatpush1.msra.mxu0 %v3209
  %3272 = vmatprep.subr.mxu0 0.0
  %3273 = vmatpush1.msra.mxu0 0.0
  %3274 = vmatprep.subr.mxu0 0.0
  %3275 = vmatpush1.msra.mxu0 0.0
  %3276 = vmatprep.subr.mxu0 0.0
  %3277 = vmatpush1.msra.mxu0 0.0
  %3278 = vmatprep.subr.mxu0 0.0
  %3279 = vmatpush1.msra.mxu0 0.0
  %3280 = vmatprep.mubr.f32.mxu0 %v3211
  %3281 = vmatmul.mubr.f32.gmra.mrb[0].mxu0 %v2793
  %v3282 = vpop.f32.mrb[0].mxu0
  %v3283 = vadd.f32 0.0, %v3282
  %v3284 = vpop.f32.mrb[0].mxu0
  %3285 = vmatprep.mubr.f32.mxu0 %v3214
  %3286 = vmatmul.mubr.f32.gmra.mrb[0].mxu0 %v2799
  %v3287 = vpop.f32.mrb[0].mxu0
  %v3288 = vadd.f32 0.0, %v3287
  %v3289 = vpop.f32.mrb[0].mxu0
  %3290 = vdwg.mxu0
  %v3291 = vadd.f32 %v3179, %v3283
  %v3292 = vadd.f32 %v3180, %v3288
  %s3293 = scalar_lea.vmem %s7, 896
  %v3294 = vld [vmem:[%s3293] sm:$0xff]
  %v3295 = vld [vmem:[%s3293 + $0x8] sm:$0xff]
  %v3296 = vld [vmem:[%s3293 + $0x10] sm:$0xff]
  %v3297 = vld [vmem:[%s3293 + $0x18] sm:$0xff]
  %v3298 = vld [vmem:[%s3293 + $0x20] sm:$0xff]
  %v3299 = vld [vmem:[%s3293 + $0x28] sm:$0xff]
  %v3300 = vld [vmem:[%s3293 + $0x30] sm:$0xff]
  %v3301 = vld [vmem:[%s3293 + $0x38] sm:$0xff]
  %v3302 = vld [vmem:[%s3293 + $0x40] sm:$0xff]
  %v3303 = vld [vmem:[%s3293 + $0x48] sm:$0xff]
  %v3304 = vld [vmem:[%s3293 + $0x50] sm:$0xff]
  %v3305 = vld [vmem:[%s3293 + $0x58] sm:$0xff]
  %v3306 = vld [vmem:[%s3293 + $0x60] sm:$0xff]
  %v3307 = vld [vmem:[%s3293 + $0x68] sm:$0xff]
  %v3308 = vld [vmem:[%s3293 + $0x70] sm:$0xff]
  %v3309 = vld [vmem:[%s3293 + $0x78] sm:$0xff]
  %v3310 = vld [vmem:[%s3293 + $0x80] sm:$0xff]
  %v3311 = vld [vmem:[%s3293 + $0x88] sm:$0xff]
  %v3312 = vld [vmem:[%s3293 + $0x90] sm:$0xff]
  %v3313 = vld [vmem:[%s3293 + $0x98] sm:$0xff]
  %v3314 = vld [vmem:[%s3293 + $0xa0] sm:$0xff]
  %v3315 = vld [vmem:[%s3293 + $0xa8] sm:$0xff]
  %v3316 = vld [vmem:[%s3293 + $0xb0] sm:$0xff]
  %v3317 = vld [vmem:[%s3293 + $0xb8] sm:$0xff]
  %v3318 = vld [vmem:[%s3293 + $0xc0] sm:$0xff]
  %v3319 = vld [vmem:[%s3293 + $0xc8] sm:$0xff]
  %v3320 = vld [vmem:[%s3293 + $0xd0] sm:$0xff]
  %v3321 = vld [vmem:[%s3293 + $0xd8] sm:$0xff]
  %v3323 = vsel %vm1883, %v2807, 0
  %v3326 = vsel %vm1883, %v2813, 0
  %3328 = vmatprep.subr.mxu0 0.0
  %3329 = vmatpush1.msra.mxu0 %v3294
  %3330 = vmatprep.subr.mxu0 0.0
  %3331 = vmatpush1.msra.mxu0 %v3295
  %3332 = vmatprep.subr.mxu0 0.0
  %3333 = vmatpush1.msra.mxu0 %v3296
  %3334 = vmatprep.subr.mxu0 0.0
  %3335 = vmatpush1.msra.mxu0 %v3297
  %3336 = vmatprep.subr.mxu0 0.0
  %3337 = vmatpush1.msra.mxu0 %v3298
  %3338 = vmatprep.subr.mxu0 0.0
  %3339 = vmatpush1.msra.mxu0 %v3299
  %3340 = vmatprep.subr.mxu0 0.0
  %3341 = vmatpush1.msra.mxu0 %v3300
  %3342 = vmatprep.subr.mxu0 0.0
  %3343 = vmatpush1.msra.mxu0 %v3301
  %3344 = vmatprep.subr.mxu0 0.0
  %3345 = vmatpush1.msra.mxu0 %v3302
  %3346 = vmatprep.subr.mxu0 0.0
  %3347 = vmatpush1.msra.mxu0 %v3303
  %3348 = vmatprep.subr.mxu0 0.0
  %3349 = vmatpush1.msra.mxu0 %v3304
  %3350 = vmatprep.subr.mxu0 0.0
  %3351 = vmatpush1.msra.mxu0 %v3305
  %3352 = vmatprep.subr.mxu0 0.0
  %3353 = vmatpush1.msra.mxu0 %v3306
  %3354 = vmatprep.subr.mxu0 0.0
  %3355 = vmatpush1.msra.mxu0 %v3307
  %3356 = vmatprep.subr.mxu0 0.0
  %3357 = vmatpush1.msra.mxu0 %v3308
  %3358 = vmatprep.subr.mxu0 0.0
  %3359 = vmatpush1.msra.mxu0 %v3309
  %3360 = vmatprep.subr.mxu0 0.0
  %3361 = vmatpush1.msra.mxu0 %v3310
  %3362 = vmatprep.subr.mxu0 0.0
  %3363 = vmatpush1.msra.mxu0 %v3311
  %3364 = vmatprep.subr.mxu0 0.0
  %3365 = vmatpush1.msra.mxu0 %v3312
  %3366 = vmatprep.subr.mxu0 0.0
  %3367 = vmatpush1.msra.mxu0 %v3313
  %3368 = vmatprep.subr.mxu0 0.0
  %3369 = vmatpush1.msra.mxu0 %v3314
  %3370 = vmatprep.subr.mxu0 0.0
  %3371 = vmatpush1.msra.mxu0 %v3315
  %3372 = vmatprep.subr.mxu0 0.0
  %3373 = vmatpush1.msra.mxu0 %v3316
  %3374 = vmatprep.subr.mxu0 0.0
  %3375 = vmatpush1.msra.mxu0 %v3317
  %3376 = vmatprep.subr.mxu0 0.0
  %3377 = vmatpush1.msra.mxu0 %v3318
  %3378 = vmatprep.subr.mxu0 0.0
  %3379 = vmatpush1.msra.mxu0 %v3319
  %3380 = vmatprep.subr.mxu0 0.0
  %3381 = vmatpush1.msra.mxu0 %v3320
  %3382 = vmatprep.subr.mxu0 0.0
  %3383 = vmatpush1.msra.mxu0 %v3321
  %3384 = vmatprep.subr.mxu0 0.0
  %3385 = vmatpush1.msra.mxu0 0.0
  %3386 = vmatprep.subr.mxu0 0.0
  %3387 = vmatpush1.msra.mxu0 0.0
  %3388 = vmatprep.subr.mxu0 0.0
  %3389 = vmatpush1.msra.mxu0 0.0
  %3390 = vmatprep.subr.mxu0 0.0
  %3391 = vmatpush1.msra.mxu0 0.0
  %3392 = vmatprep.mubr.f32.mxu0 %v3323
  %3393 = vmatmul.mubr.f32.gmra.mrb[0].mxu0 %v2805
  %v3394 = vpop.f32.mrb[0].mxu0
  %v3395 = vadd.f32 0.0, %v3394
  %v3396 = vpop.f32.mrb[0].mxu0
  %3397 = vmatprep.mubr.f32.mxu0 %v3326
  %3398 = vmatmul.mubr.f32.gmra.mrb[0].mxu0 %v2811
  %v3399 = vpop.f32.mrb[0].mxu0
  %v3400 = vadd.f32 0.0, %v3399
  %v3401 = vpop.f32.mrb[0].mxu0
  %3402 = vdwg.mxu0
  %v3403 = vadd.f32 %v3291, %v3395
  %v3404 = vadd.f32 %v3292, %v3400
  %s3405 = scalar_lea.vmem %s7, 1120
  %v3406 = vld [vmem:[%s3405] sm:$0xff]
  %v3407 = vld [vmem:[%s3405 + $0x8] sm:$0xff]
  %v3408 = vld [vmem:[%s3405 + $0x10] sm:$0xff]
  %v3409 = vld [vmem:[%s3405 + $0x18] sm:$0xff]
  %v3410 = vld [vmem:[%s3405 + $0x20] sm:$0xff]
  %v3411 = vld [vmem:[%s3405 + $0x28] sm:$0xff]
  %v3412 = vld [vmem:[%s3405 + $0x30] sm:$0xff]
  %v3413 = vld [vmem:[%s3405 + $0x38] sm:$0xff]
  %v3414 = vld [vmem:[%s3405 + $0x40] sm:$0xff]
  %v3415 = vld [vmem:[%s3405 + $0x48] sm:$0xff]
  %v3416 = vld [vmem:[%s3405 + $0x50] sm:$0xff]
  %v3417 = vld [vmem:[%s3405 + $0x58] sm:$0xff]
  %v3418 = vld [vmem:[%s3405 + $0x60] sm:$0xff]
  %v3419 = vld [vmem:[%s3405 + $0x68] sm:$0xff]
  %v3420 = vld [vmem:[%s3405 + $0x70] sm:$0xff]
  %v3421 = vld [vmem:[%s3405 + $0x78] sm:$0xff]
  %v3422 = vld [vmem:[%s3405 + $0x80] sm:$0xff]
  %v3423 = vld [vmem:[%s3405 + $0x88] sm:$0xff]
  %v3424 = vld [vmem:[%s3405 + $0x90] sm:$0xff]
  %v3425 = vld [vmem:[%s3405 + $0x98] sm:$0xff]
  %v3426 = vld [vmem:[%s3405 + $0xa0] sm:$0xff]
  %v3427 = vld [vmem:[%s3405 + $0xa8] sm:$0xff]
  %v3428 = vld [vmem:[%s3405 + $0xb0] sm:$0xff]
  %v3429 = vld [vmem:[%s3405 + $0xb8] sm:$0xff]
  %v3430 = vld [vmem:[%s3405 + $0xc0] sm:$0xff]
  %v3431 = vld [vmem:[%s3405 + $0xc8] sm:$0xff]
  %v3432 = vld [vmem:[%s3405 + $0xd0] sm:$0xff]
  %v3433 = vld [vmem:[%s3405 + $0xd8] sm:$0xff]
  %v3435 = vsel %vm1883, %v2819, 0
  %v3438 = vsel %vm1883, %v2825, 0
  %3440 = vmatprep.subr.mxu0 0.0
  %3441 = vmatpush1.msra.mxu0 %v3406
  %3442 = vmatprep.subr.mxu0 0.0
  %3443 = vmatpush1.msra.mxu0 %v3407
  %3444 = vmatprep.subr.mxu0 0.0
  %3445 = vmatpush1.msra.mxu0 %v3408
  %3446 = vmatprep.subr.mxu0 0.0
  %3447 = vmatpush1.msra.mxu0 %v3409
  %3448 = vmatprep.subr.mxu0 0.0
  %3449 = vmatpush1.msra.mxu0 %v3410
  %3450 = vmatprep.subr.mxu0 0.0
  %3451 = vmatpush1.msra.mxu0 %v3411
  %3452 = vmatprep.subr.mxu0 0.0
  %3453 = vmatpush1.msra.mxu0 %v3412
  %3454 = vmatprep.subr.mxu0 0.0
  %3455 = vmatpush1.msra.mxu0 %v3413
  %3456 = vmatprep.subr.mxu0 0.0
  %3457 = vmatpush1.msra.mxu0 %v3414
  %3458 = vmatprep.subr.mxu0 0.0
  %3459 = vmatpush1.msra.mxu0 %v3415
  %3460 = vmatprep.subr.mxu0 0.0
  %3461 = vmatpush1.msra.mxu0 %v3416
  %3462 = vmatprep.subr.mxu0 0.0
  %3463 = vmatpush1.msra.mxu0 %v3417
  %3464 = vmatprep.subr.mxu0 0.0
  %3465 = vmatpush1.msra.mxu0 %v3418
  %3466 = vmatprep.subr.mxu0 0.0
  %3467 = vmatpush1.msra.mxu0 %v3419
  %3468 = vmatprep.subr.mxu0 0.0
  %3469 = vmatpush1.msra.mxu0 %v3420
  %3470 = vmatprep.subr.mxu0 0.0
  %3471 = vmatpush1.msra.mxu0 %v3421
  %3472 = vmatprep.subr.mxu0 0.0
  %3473 = vmatpush1.msra.mxu0 %v3422
  %3474 = vmatprep.subr.mxu0 0.0
  %3475 = vmatpush1.msra.mxu0 %v3423
  %3476 = vmatprep.subr.mxu0 0.0
  %3477 = vmatpush1.msra.mxu0 %v3424
  %3478 = vmatprep.subr.mxu0 0.0
  %3479 = vmatpush1.msra.mxu0 %v3425
  %3480 = vmatprep.subr.mxu0 0.0
  %3481 = vmatpush1.msra.mxu0 %v3426
  %3482 = vmatprep.subr.mxu0 0.0
  %3483 = vmatpush1.msra.mxu0 %v3427
  %3484 = vmatprep.subr.mxu0 0.0
  %3485 = vmatpush1.msra.mxu0 %v3428
  %3486 = vmatprep.subr.mxu0 0.0
  %3487 = vmatpush1.msra.mxu0 %v3429
  %3488 = vmatprep.subr.mxu0 0.0
  %3489 = vmatpush1.msra.mxu0 %v3430
  %3490 = vmatprep.subr.mxu0 0.0
  %3491 = vmatpush1.msra.mxu0 %v3431
  %3492 = vmatprep.subr.mxu0 0.0
  %3493 = vmatpush1.msra.mxu0 %v3432
  %3494 = vmatprep.subr.mxu0 0.0
  %3495 = vmatpush1.msra.mxu0 %v3433
  %3496 = vmatprep.subr.mxu0 0.0
  %3497 = vmatpush1.msra.mxu0 0.0
  %3498 = vmatprep.subr.mxu0 0.0
  %3499 = vmatpush1.msra.mxu0 0.0
  %3500 = vmatprep.subr.mxu0 0.0
  %3501 = vmatpush1.msra.mxu0 0.0
  %3502 = vmatprep.subr.mxu0 0.0
  %3503 = vmatpush1.msra.mxu0 0.0
  %3504 = vmatprep.mubr.f32.mxu0 %v3435
  %3505 = vmatmul.mubr.f32.gmra.mrb[0].mxu0 %v2817
  %v3506 = vpop.f32.mrb[0].mxu0
  %v3507 = vadd.f32 0.0, %v3506
  %v3508 = vpop.f32.mrb[0].mxu0
  %3509 = vmatprep.mubr.f32.mxu0 %v3438
  %3510 = vmatmul.mubr.f32.gmra.mrb[0].mxu0 %v2823
  %v3511 = vpop.f32.mrb[0].mxu0
  %v3512 = vadd.f32 0.0, %v3511
  %v3513 = vpop.f32.mrb[0].mxu0
  %3514 = vdwg.mxu0
  %v3515 = vadd.f32 %v3403, %v3507
  %v3516 = vadd.f32 %v3404, %v3512
  %s3517 = scalar_lea.vmem %s7, 1344
  %v3518 = vld [vmem:[%s3517] sm:$0xff]
  %v3519 = vld [vmem:[%s3517 + $0x8] sm:$0xff]
  %v3520 = vld [vmem:[%s3517 + $0x10] sm:$0xff]
  %v3521 = vld [vmem:[%s3517 + $0x18] sm:$0xff]
  %v3522 = vld [vmem:[%s3517 + $0x20] sm:$0xff]
  %v3523 = vld [vmem:[%s3517 + $0x28] sm:$0xff]
  %v3524 = vld [vmem:[%s3517 + $0x30] sm:$0xff]
  %v3525 = vld [vmem:[%s3517 + $0x38] sm:$0xff]
  %v3526 = vld [vmem:[%s3517 + $0x40] sm:$0xff]
  %v3527 = vld [vmem:[%s3517 + $0x48] sm:$0xff]
  %v3528 = vld [vmem:[%s3517 + $0x50] sm:$0xff]
  %v3529 = vld [vmem:[%s3517 + $0x58] sm:$0xff]
  %v3530 = vld [vmem:[%s3517 + $0x60] sm:$0xff]
  %v3531 = vld [vmem:[%s3517 + $0x68] sm:$0xff]
  %v3532 = vld [vmem:[%s3517 + $0x70] sm:$0xff]
  %v3533 = vld [vmem:[%s3517 + $0x78] sm:$0xff]
  %v3534 = vld [vmem:[%s3517 + $0x80] sm:$0xff]
  %v3535 = vld [vmem:[%s3517 + $0x88] sm:$0xff]
  %v3536 = vld [vmem:[%s3517 + $0x90] sm:$0xff]
  %v3537 = vld [vmem:[%s3517 + $0x98] sm:$0xff]
  %v3538 = vld [vmem:[%s3517 + $0xa0] sm:$0xff]
  %v3539 = vld [vmem:[%s3517 + $0xa8] sm:$0xff]
  %v3540 = vld [vmem:[%s3517 + $0xb0] sm:$0xff]
  %v3541 = vld [vmem:[%s3517 + $0xb8] sm:$0xff]
  %v3542 = vld [vmem:[%s3517 + $0xc0] sm:$0xff]
  %v3543 = vld [vmem:[%s3517 + $0xc8] sm:$0xff]
  %v3544 = vld [vmem:[%s3517 + $0xd0] sm:$0xff]
  %v3545 = vld [vmem:[%s3517 + $0xd8] sm:$0xff]
  %v3547 = vsel %vm1883, %v2831, 0
  %v3550 = vsel %vm1883, %v2837, 0
  %3552 = vmatprep.subr.mxu0 0.0
  %3553 = vmatpush1.msra.mxu0 %v3518
  %3554 = vmatprep.subr.mxu0 0.0
  %3555 = vmatpush1.msra.mxu0 %v3519
  %3556 = vmatprep.subr.mxu0 0.0
  %3557 = vmatpush1.msra.mxu0 %v3520
  %3558 = vmatprep.subr.mxu0 0.0
  %3559 = vmatpush1.msra.mxu0 %v3521
  %3560 = vmatprep.subr.mxu0 0.0
  %3561 = vmatpush1.msra.mxu0 %v3522
  %3562 = vmatprep.subr.mxu0 0.0
  %3563 = vmatpush1.msra.mxu0 %v3523
  %3564 = vmatprep.subr.mxu0 0.0
  %3565 = vmatpush1.msra.mxu0 %v3524
  %3566 = vmatprep.subr.mxu0 0.0
  %3567 = vmatpush1.msra.mxu0 %v3525
  %3568 = vmatprep.subr.mxu0 0.0
  %3569 = vmatpush1.msra.mxu0 %v3526
  %3570 = vmatprep.subr.mxu0 0.0
  %3571 = vmatpush1.msra.mxu0 %v3527
  %3572 = vmatprep.subr.mxu0 0.0
  %3573 = vmatpush1.msra.mxu0 %v3528
  %3574 = vmatprep.subr.mxu0 0.0
  %3575 = vmatpush1.msra.mxu0 %v3529
  %3576 = vmatprep.subr.mxu0 0.0
  %3577 = vmatpush1.msra.mxu0 %v3530
  %3578 = vmatprep.subr.mxu0 0.0
  %3579 = vmatpush1.msra.mxu0 %v3531
  %3580 = vmatprep.subr.mxu0 0.0
  %3581 = vmatpush1.msra.mxu0 %v3532
  %3582 = vmatprep.subr.mxu0 0.0
  %3583 = vmatpush1.msra.mxu0 %v3533
  %3584 = vmatprep.subr.mxu0 0.0
  %3585 = vmatpush1.msra.mxu0 %v3534
  %3586 = vmatprep.subr.mxu0 0.0
  %3587 = vmatpush1.msra.mxu0 %v3535
  %3588 = vmatprep.subr.mxu0 0.0
  %3589 = vmatpush1.msra.mxu0 %v3536
  %3590 = vmatprep.subr.mxu0 0.0
  %3591 = vmatpush1.msra.mxu0 %v3537
  %3592 = vmatprep.subr.mxu0 0.0
  %3593 = vmatpush1.msra.mxu0 %v3538
  %3594 = vmatprep.subr.mxu0 0.0
  %3595 = vmatpush1.msra.mxu0 %v3539
  %3596 = vmatprep.subr.mxu0 0.0
  %3597 = vmatpush1.msra.mxu0 %v3540
  %3598 = vmatprep.subr.mxu0 0.0
  %3599 = vmatpush1.msra.mxu0 %v3541
  %3600 = vmatprep.subr.mxu0 0.0
  %3601 = vmatpush1.msra.mxu0 %v3542
  %3602 = vmatprep.subr.mxu0 0.0
  %3603 = vmatpush1.msra.mxu0 %v3543
  %3604 = vmatprep.subr.mxu0 0.0
  %3605 = vmatpush1.msra.mxu0 %v3544
  %3606 = vmatprep.subr.mxu0 0.0
  %3607 = vmatpush1.msra.mxu0 %v3545
  %3608 = vmatprep.subr.mxu0 0.0
  %3609 = vmatpush1.msra.mxu0 0.0
  %3610 = vmatprep.subr.mxu0 0.0
  %3611 = vmatpush1.msra.mxu0 0.0
  %3612 = vmatprep.subr.mxu0 0.0
  %3613 = vmatpush1.msra.mxu0 0.0
  %3614 = vmatprep.subr.mxu0 0.0
  %3615 = vmatpush1.msra.mxu0 0.0
  %3616 = vmatprep.mubr.f32.mxu0 %v3547
  %3617 = vmatmul.mubr.f32.gmra.mrb[0].mxu0 %v2829
  %v3618 = vpop.f32.mrb[0].mxu0
  %v3619 = vadd.f32 0.0, %v3618
  %v3620 = vpop.f32.mrb[0].mxu0
  %3621 = vmatprep.mubr.f32.mxu0 %v3550
  %3622 = vmatmul.mubr.f32.gmra.mrb[0].mxu0 %v2835
  %v3623 = vpop.f32.mrb[0].mxu0
  %v3624 = vadd.f32 0.0, %v3623
  %v3625 = vpop.f32.mrb[0].mxu0
  %3626 = vdwg.mxu0
  %v3627 = vadd.f32 %v3515, %v3619
  %v3628 = vadd.f32 %v3516, %v3624
  %v3629 = vld [vmem:[%s9] sm:$0xff]
  %v3630 = vld [vmem:[%s9 + $0x8] sm:$0xff]
  %v3631 = vld [vmem:[%s9 + $0x10] sm:$0xff]
  %v3632 = vld [vmem:[%s9 + $0x18] sm:$0xff]
  %v3633 = vld [vmem:[%s9 + $0x20] sm:$0xff]
  %v3634 = vld [vmem:[%s9 + $0x28] sm:$0xff]
  %v3635 = vld [vmem:[%s9 + $0x30] sm:$0xff]
  %v3636 = vld [vmem:[%s9 + $0x38] sm:$0xff]
  %v3637 = vld [vmem:[%s9 + $0x40] sm:$0xff]
  %v3638 = vld [vmem:[%s9 + $0x48] sm:$0xff]
  %v3639 = vld [vmem:[%s9 + $0x50] sm:$0xff]
  %v3640 = vld [vmem:[%s9 + $0x58] sm:$0xff]
  %v3641 = vld [vmem:[%s9 + $0x60] sm:$0xff]
  %v3642 = vld [vmem:[%s9 + $0x68] sm:$0xff]
  %v3643 = vld [vmem:[%s9 + $0x70] sm:$0xff]
  %v3644 = vld [vmem:[%s9 + $0x78] sm:$0xff]
  %v3645 = vld [vmem:[%s9 + $0x80] sm:$0xff]
  %v3646 = vld [vmem:[%s9 + $0x88] sm:$0xff]
  %v3647 = vld [vmem:[%s9 + $0x90] sm:$0xff]
  %v3648 = vld [vmem:[%s9 + $0x98] sm:$0xff]
  %v3649 = vld [vmem:[%s9 + $0xa0] sm:$0xff]
  %v3650 = vld [vmem:[%s9 + $0xa8] sm:$0xff]
  %v3651 = vld [vmem:[%s9 + $0xb0] sm:$0xff]
  %v3652 = vld [vmem:[%s9 + $0xb8] sm:$0xff]
  %v3653 = vld [vmem:[%s9 + $0xc0] sm:$0xff]
  %v3654 = vld [vmem:[%s9 + $0xc8] sm:$0xff]
  %v3655 = vld [vmem:[%s9 + $0xd0] sm:$0xff]
  %v3656 = vld [vmem:[%s9 + $0xd8] sm:$0xff]
  %v3657 = vld [vmem:[%s9 + $0xe0] sm:$0xff]
  %v3658 = vld [vmem:[%s9 + $0xe8] sm:$0xff]
  %v3659 = vld [vmem:[%s9 + $0xf0] sm:$0xff]
  %v3660 = vld [vmem:[%s9 + $0xf8] sm:$0xff]
  %v3661 = vld [vmem:[%s9 + $0x100] sm:$0xff]
  %v3662 = vld [vmem:[%s9 + $0x108] sm:$0xff]
  %v3663 = vld [vmem:[%s9 + $0x110] sm:$0xff]
  %v3664 = vld [vmem:[%s9 + $0x118] sm:$0xff]
  %v3665 = vld [vmem:[%s9 + $0x120] sm:$0xff]
  %v3666 = vld [vmem:[%s9 + $0x128] sm:$0xff]
  %v3667 = vld [vmem:[%s9 + $0x130] sm:$0xff]
  %v3668 = vld [vmem:[%s9 + $0x138] sm:$0xff]
  %v3669 = vld [vmem:[%s9 + $0x140] sm:$0xff]
  %v3670 = vld [vmem:[%s9 + $0x148] sm:$0xff]
  %v3671 = vld [vmem:[%s9 + $0x150] sm:$0xff]
  %v3672 = vld [vmem:[%s9 + $0x158] sm:$0xff]
  %v3673 = vld [vmem:[%s9 + $0x160] sm:$0xff]
  %v3674 = vld [vmem:[%s9 + $0x168] sm:$0xff]
  %v3675 = vld [vmem:[%s9 + $0x170] sm:$0xff]
  %v3676 = vld [vmem:[%s9 + $0x178] sm:$0xff]
  %v3677 = vld [vmem:[%s9 + $0x180] sm:$0xff]
  %v3678 = vld [vmem:[%s9 + $0x188] sm:$0xff]
  %v3679 = vld [vmem:[%s9 + $0x190] sm:$0xff]
  %v3680 = vld [vmem:[%s9 + $0x198] sm:$0xff]
  %v3681 = vld [vmem:[%s9 + $0x1a0] sm:$0xff]
  %v3682 = vld [vmem:[%s9 + $0x1a8] sm:$0xff]
  %v3683 = vld [vmem:[%s9 + $0x1b0] sm:$0xff]
  %v3684 = vld [vmem:[%s9 + $0x1b8] sm:$0xff]
  %v3685 = vld [vmem:[%s9 + $0x1c0] sm:$0xff]
  %v3686 = vld [vmem:[%s9 + $0x1c8] sm:$0xff]
  %v3687 = vld [vmem:[%s9 + $0x1d0] sm:$0xff]
  %v3688 = vld [vmem:[%s9 + $0x1d8] sm:$0xff]
  %v3689 = vld [vmem:[%s9 + $0x1e0] sm:$0xff]
  %v3690 = vld [vmem:[%s9 + $0x1e8] sm:$0xff]
  %v3691 = vld [vmem:[%s9 + $0x1f0] sm:$0xff]
  %v3692 = vld [vmem:[%s9 + $0x1f8] sm:$0xff]
  %v3693 = vld [vmem:[%s9 + $0x200] sm:$0xff]
  %v3694 = vld [vmem:[%s9 + $0x208] sm:$0xff]
  %v3695 = vld [vmem:[%s9 + $0x210] sm:$0xff]
  %v3696 = vld [vmem:[%s9 + $0x218] sm:$0xff]
  %v3697 = vld [vmem:[%s9 + $0x220] sm:$0xff]
  %v3698 = vld [vmem:[%s9 + $0x228] sm:$0xff]
  %v3699 = vld [vmem:[%s9 + $0x230] sm:$0xff]
  %v3700 = vld [vmem:[%s9 + $0x238] sm:$0xff]
  %v3701 = vld [vmem:[%s9 + $0x240] sm:$0xff]
  %v3702 = vld [vmem:[%s9 + $0x248] sm:$0xff]
  %v3703 = vld [vmem:[%s9 + $0x250] sm:$0xff]
  %v3704 = vld [vmem:[%s9 + $0x258] sm:$0xff]
  %v3705 = vld [vmem:[%s9 + $0x260] sm:$0xff]
  %v3706 = vld [vmem:[%s9 + $0x268] sm:$0xff]
  %v3707 = vld [vmem:[%s9 + $0x270] sm:$0xff]
  %v3708 = vld [vmem:[%s9 + $0x278] sm:$0xff]
  %v3709 = vld [vmem:[%s9 + $0x280] sm:$0xff]
  %v3710 = vld [vmem:[%s9 + $0x288] sm:$0xff]
  %v3711 = vld [vmem:[%s9 + $0x290] sm:$0xff]
  %v3712 = vld [vmem:[%s9 + $0x298] sm:$0xff]
  %v3713 = vld [vmem:[%s9 + $0x2a0] sm:$0xff]
  %v3714 = vld [vmem:[%s9 + $0x2a8] sm:$0xff]
  %v3715 = vld [vmem:[%s9 + $0x2b0] sm:$0xff]
  %v3716 = vld [vmem:[%s9 + $0x2b8] sm:$0xff]
  %v3717 = vld [vmem:[%s9 + $0x2c0] sm:$0xff]
  %v3718 = vld [vmem:[%s9 + $0x2c8] sm:$0xff]
  %v3719 = vld [vmem:[%s9 + $0x2d0] sm:$0xff]
  %v3720 = vld [vmem:[%s9 + $0x2d8] sm:$0xff]
  %v3721 = vld [vmem:[%s9 + $0x2e0] sm:$0xff]
  %v3722 = vld [vmem:[%s9 + $0x2e8] sm:$0xff]
  %v3723 = vld [vmem:[%s9 + $0x2f0] sm:$0xff]
  %v3724 = vld [vmem:[%s9 + $0x2f8] sm:$0xff]
  %v3725 = vld [vmem:[%s9 + $0x300] sm:$0xff]
  %v3726 = vld [vmem:[%s9 + $0x308] sm:$0xff]
  %v3727 = vld [vmem:[%s9 + $0x310] sm:$0xff]
  %v3728 = vld [vmem:[%s9 + $0x318] sm:$0xff]
  %v3729 = vld [vmem:[%s9 + $0x320] sm:$0xff]
  %v3730 = vld [vmem:[%s9 + $0x328] sm:$0xff]
  %v3731 = vld [vmem:[%s9 + $0x330] sm:$0xff]
  %v3732 = vld [vmem:[%s9 + $0x338] sm:$0xff]
  %v3733 = vld [vmem:[%s9 + $0x340] sm:$0xff]
  %v3734 = vld [vmem:[%s9 + $0x348] sm:$0xff]
  %v3735 = vld [vmem:[%s9 + $0x350] sm:$0xff]
  %v3736 = vld [vmem:[%s9 + $0x358] sm:$0xff]
  %v3737 = vld [vmem:[%s9 + $0x360] sm:$0xff]
  %v3738 = vld [vmem:[%s9 + $0x368] sm:$0xff]
  %v3739 = vld [vmem:[%s9 + $0x370] sm:$0xff]
  %v3740 = vld [vmem:[%s9 + $0x378] sm:$0xff]
  %v3741 = vld [vmem:[%s10] sm:$0xff]
  %v3742 = vld [vmem:[%s10 + $0x8] sm:$0x3f]
  %v3745 = vlaneseq
  %v3746 = vshrl.u32 %v3745, 7
  %v3747 = vsub.s32 0, %v3746
  %v3748 = vrot.slane %v3741, %v3747
  %v3749 = vlaneseq
  %v3750 = vshrl.u32 %v3749, 7
  %v3751 = vsub.s32 1, %v3750
  %v3752 = vrot.slane %v3741, %v3751
  %v3753 = vlaneseq
  %v3754 = vshrl.u32 %v3753, 7
  %v3755 = vsub.s32 2, %v3754
  %v3756 = vrot.slane %v3741, %v3755
  %v3757 = vlaneseq
  %v3758 = vshrl.u32 %v3757, 7
  %v3759 = vsub.s32 3, %v3758
  %v3760 = vrot.slane %v3741, %v3759
  %v3761 = vlaneseq
  %v3762 = vshrl.u32 %v3761, 7
  %v3763 = vsub.s32 4, %v3762
  %v3764 = vrot.slane %v3741, %v3763
  %v3765 = vlaneseq
  %v3766 = vshrl.u32 %v3765, 7
  %v3767 = vsub.s32 5, %v3766
  %v3768 = vrot.slane %v3741, %v3767
  %v3769 = vlaneseq
  %v3770 = vshrl.u32 %v3769, 7
  %v3771 = vsub.s32 6, %v3770
  %v3772 = vrot.slane %v3741, %v3771
  %v3773 = vlaneseq
  %v3774 = vshrl.u32 %v3773, 7
  %v3775 = vsub.s32 7, %v3774
  %v3776 = vrot.slane %v3741, %v3775
  %v3777 = vlaneseq
  %v3778 = vshrl.u32 %v3777, 7
  %v3779 = vsub.s32 0, %v3778
  %v3780 = vrot.slane %v3742, %v3779
  %v3781 = vlaneseq
  %v3782 = vshrl.u32 %v3781, 7
  %v3783 = vsub.s32 1, %v3782
  %v3784 = vrot.slane %v3742, %v3783
  %v3785 = vlaneseq
  %v3786 = vshrl.u32 %v3785, 7
  %v3787 = vsub.s32 2, %v3786
  %v3788 = vrot.slane %v3742, %v3787
  %v3789 = vlaneseq
  %v3790 = vshrl.u32 %v3789, 7
  %v3791 = vsub.s32 3, %v3790
  %v3792 = vrot.slane %v3742, %v3791
  %v3793 = vlaneseq
  %v3794 = vshrl.u32 %v3793, 7
  %v3795 = vsub.s32 4, %v3794
  %v3796 = vrot.slane %v3742, %v3795
  %v3797 = vlaneseq
  %v3798 = vshrl.u32 %v3797, 7
  %v3799 = vsub.s32 5, %v3798
  %v3800 = vrot.slane %v3742, %v3799
  %vm3815 = vcmask 523264
  %v3817 = vsel %vm3815, %v3627, 0
  %v3820 = vsel %vm3815, %v3628, 0
  %3822 = vmatprep.subr.mxu0 %v3630
  %3823 = vmatpush1.msra.mxu0 %v3629
  %3824 = vmatprep.subr.mxu0 %v3644
  %3825 = vmatpush1.msra.mxu0 %v3643
  %3826 = vmatprep.subr.mxu0 %v3658
  %3827 = vmatpush1.msra.mxu0 %v3657
  %3828 = vmatprep.subr.mxu0 %v3672
  %3829 = vmatpush1.msra.mxu0 %v3671
  %3830 = vmatprep.subr.mxu0 %v3686
  %3831 = vmatpush1.msra.mxu0 %v3685
  %3832 = vmatprep.subr.mxu0 %v3700
  %3833 = vmatpush1.msra.mxu0 %v3699
  %3834 = vmatprep.subr.mxu0 %v3714
  %3835 = vmatpush1.msra.mxu0 %v3713
  %3836 = vmatprep.subr.mxu0 %v3728
  %3837 = vmatpush1.msra.mxu0 %v3727
  %3838 = vmatprep.subr.mxu0 0.0
  %3839 = vmatpush1.msra.mxu0 0.0
  %3840 = vmatprep.subr.mxu0 0.0
  %3841 = vmatpush1.msra.mxu0 0.0
  %3842 = vmatprep.subr.mxu0 0.0
  %3843 = vmatpush1.msra.mxu0 0.0
  %3844 = vmatprep.subr.mxu0 0.0
  %3845 = vmatpush1.msra.mxu0 0.0
  %3846 = vmatprep.subr.mxu0 0.0
  %3847 = vmatpush1.msra.mxu0 0.0
  %3848 = vmatprep.subr.mxu0 0.0
  %3849 = vmatpush1.msra.mxu0 0.0
  %3850 = vmatprep.subr.mxu0 0.0
  %3851 = vmatpush1.msra.mxu0 0.0
  %3852 = vmatprep.subr.mxu0 0.0
  %3853 = vmatpush1.msra.mxu0 0.0
  %3854 = vmatprep.subr.mxu0 0.0
  %3855 = vmatpush1.msra.mxu0 0.0
  %3856 = vmatprep.subr.mxu0 0.0
  %3857 = vmatpush1.msra.mxu0 0.0
  %3858 = vmatprep.subr.mxu0 0.0
  %3859 = vmatpush1.msra.mxu0 0.0
  %3860 = vmatprep.subr.mxu0 0.0
  %3861 = vmatpush1.msra.mxu0 0.0
  %3862 = vmatprep.subr.mxu0 0.0
  %3863 = vmatpush1.msra.mxu0 0.0
  %3864 = vmatprep.subr.mxu0 0.0
  %3865 = vmatpush1.msra.mxu0 0.0
  %3866 = vmatprep.subr.mxu0 0.0
  %3867 = vmatpush1.msra.mxu0 0.0
  %3868 = vmatprep.subr.mxu0 0.0
  %3869 = vmatpush1.msra.mxu0 0.0
  %3870 = vmatprep.subr.mxu0 0.0
  %3871 = vmatpush1.msra.mxu0 0.0
  %3872 = vmatprep.subr.mxu0 0.0
  %3873 = vmatpush1.msra.mxu0 0.0
  %3874 = vmatprep.subr.mxu0 0.0
  %3875 = vmatpush1.msra.mxu0 0.0
  %3876 = vmatprep.subr.mxu0 0.0
  %3877 = vmatpush1.msra.mxu0 0.0
  %3878 = vmatprep.subr.mxu0 0.0
  %3879 = vmatpush1.msra.mxu0 0.0
  %3880 = vmatprep.subr.mxu0 0.0
  %3881 = vmatpush1.msra.mxu0 0.0
  %3882 = vmatprep.subr.mxu0 0.0
  %3883 = vmatpush1.msra.mxu0 0.0
  %3884 = vmatprep.subr.mxu0 0.0
  %3885 = vmatpush1.msra.mxu0 0.0
  %3886 = vmatprep.mubr.f32.mxu0 0.0
  %3887 = vmatmul.mubr.f32.gmra.mrb[0].mxu0 %v3817
  %v3888 = vpop.f32.mrb[0].mxu0
  %v3889 = vadd.f32 %v3748, %v3888
  %v3890 = vpop.f32.mrb[0].mxu0
  %v3891 = vadd.f32 %v3752, %v3890
  %3892 = vmatprep.mubr.f32.mxu0 0.0
  %3893 = vmatmul.mubr.f32.gmra.mrb[0].mxu0 %v3820
  %v3894 = vpop.f32.mrb[0].mxu0
  %v3895 = vadd.f32 %v3748, %v3894
  %v3896 = vpop.f32.mrb[0].mxu0
  %v3897 = vadd.f32 %v3752, %v3896
  %3898 = vdwg.mxu0
  %3899 = vmatprep.subr.mxu0 %v3632
  %3900 = vmatpush1.msra.mxu0 %v3631
  %3901 = vmatprep.subr.mxu0 %v3646
  %3902 = vmatpush1.msra.mxu0 %v3645
  %3903 = vmatprep.subr.mxu0 %v3660
  %3904 = vmatpush1.msra.mxu0 %v3659
  %3905 = vmatprep.subr.mxu0 %v3674
  %3906 = vmatpush1.msra.mxu0 %v3673
  %3907 = vmatprep.subr.mxu0 %v3688
  %3908 = vmatpush1.msra.mxu0 %v3687
  %3909 = vmatprep.subr.mxu0 %v3702
  %3910 = vmatpush1.msra.mxu0 %v3701
  %3911 = vmatprep.subr.mxu0 %v3716
  %3912 = vmatpush1.msra.mxu0 %v3715
  %3913 = vmatprep.subr.mxu0 %v3730
  %3914 = vmatpush1.msra.mxu0 %v3729
  %3915 = vmatprep.subr.mxu0 0.0
  %3916 = vmatpush1.msra.mxu0 0.0
  %3917 = vmatprep.subr.mxu0 0.0
  %3918 = vmatpush1.msra.mxu0 0.0
  %3919 = vmatprep.subr.mxu0 0.0
  %3920 = vmatpush1.msra.mxu0 0.0
  %3921 = vmatprep.subr.mxu0 0.0
  %3922 = vmatpush1.msra.mxu0 0.0
  %3923 = vmatprep.subr.mxu0 0.0
  %3924 = vmatpush1.msra.mxu0 0.0
  %3925 = vmatprep.subr.mxu0 0.0
  %3926 = vmatpush1.msra.mxu0 0.0
  %3927 = vmatprep.subr.mxu0 0.0
  %3928 = vmatpush1.msra.mxu0 0.0
  %3929 = vmatprep.subr.mxu0 0.0
  %3930 = vmatpush1.msra.mxu0 0.0
  %3931 = vmatprep.subr.mxu0 0.0
  %3932 = vmatpush1.msra.mxu0 0.0
  %3933 = vmatprep.subr.mxu0 0.0
  %3934 = vmatpush1.msra.mxu0 0.0
  %3935 = vmatprep.subr.mxu0 0.0
  %3936 = vmatpush1.msra.mxu0 0.0
  %3937 = vmatprep.subr.mxu0 0.0
  %3938 = vmatpush1.msra.mxu0 0.0
  %3939 = vmatprep.subr.mxu0 0.0
  %3940 = vmatpush1.msra.mxu0 0.0
  %3941 = vmatprep.subr.mxu0 0.0
  %3942 = vmatpush1.msra.mxu0 0.0
  %3943 = vmatprep.subr.mxu0 0.0
  %3944 = vmatpush1.msra.mxu0 0.0
  %3945 = vmatprep.subr.mxu0 0.0
  %3946 = vmatpush1.msra.mxu0 0.0
  %3947 = vmatprep.subr.mxu0 0.0
  %3948 = vmatpush1.msra.mxu0 0.0
  %3949 = vmatprep.subr.mxu0 0.0
  %3950 = vmatpush1.msra.mxu0 0.0
  %3951 = vmatprep.subr.mxu0 0.0
  %3952 = vmatpush1.msra.mxu0 0.0
  %3953 = vmatprep.subr.mxu0 0.0
  %3954 = vmatpush1.msra.mxu0 0.0
  %3955 = vmatprep.subr.mxu0 0.0
  %3956 = vmatpush1.msra.mxu0 0.0
  %3957 = vmatprep.subr.mxu0 0.0
  %3958 = vmatpush1.msra.mxu0 0.0
  %3959 = vmatprep.subr.mxu0 0.0
  %3960 = vmatpush1.msra.mxu0 0.0
  %3961 = vmatprep.subr.mxu0 0.0
  %3962 = vmatpush1.msra.mxu0 0.0
  %3963 = vmatprep.mubr.f32.mxu0 0.0
  %3964 = vmatmul.mubr.f32.gmra.mrb[0].mxu0 %v3817
  %v3965 = vpop.f32.mrb[0].mxu0
  %v3966 = vadd.f32 %v3756, %v3965
  %v3967 = vpop.f32.mrb[0].mxu0
  %v3968 = vadd.f32 %v3760, %v3967
  %3969 = vmatprep.mubr.f32.mxu0 0.0
  %3970 = vmatmul.mubr.f32.gmra.mrb[0].mxu0 %v3820
  %v3971 = vpop.f32.mrb[0].mxu0
  %v3972 = vadd.f32 %v3756, %v3971
  %v3973 = vpop.f32.mrb[0].mxu0
  %v3974 = vadd.f32 %v3760, %v3973
  %3975 = vdwg.mxu0
  %3976 = vmatprep.subr.mxu0 %v3634
  %3977 = vmatpush1.msra.mxu0 %v3633
  %3978 = vmatprep.subr.mxu0 %v3648
  %3979 = vmatpush1.msra.mxu0 %v3647
  %3980 = vmatprep.subr.mxu0 %v3662
  %3981 = vmatpush1.msra.mxu0 %v3661
  %3982 = vmatprep.subr.mxu0 %v3676
  %3983 = vmatpush1.msra.mxu0 %v3675
  %3984 = vmatprep.subr.mxu0 %v3690
  %3985 = vmatpush1.msra.mxu0 %v3689
  %3986 = vmatprep.subr.mxu0 %v3704
  %3987 = vmatpush1.msra.mxu0 %v3703
  %3988 = vmatprep.subr.mxu0 %v3718
  %3989 = vmatpush1.msra.mxu0 %v3717
  %3990 = vmatprep.subr.mxu0 %v3732
  %3991 = vmatpush1.msra.mxu0 %v3731
  %3992 = vmatprep.subr.mxu0 0.0
  %3993 = vmatpush1.msra.mxu0 0.0
  %3994 = vmatprep.subr.mxu0 0.0
  %3995 = vmatpush1.msra.mxu0 0.0
  %3996 = vmatprep.subr.mxu0 0.0
  %3997 = vmatpush1.msra.mxu0 0.0
  %3998 = vmatprep.subr.mxu0 0.0
  %3999 = vmatpush1.msra.mxu0 0.0
  %4000 = vmatprep.subr.mxu0 0.0
  %4001 = vmatpush1.msra.mxu0 0.0
  %4002 = vmatprep.subr.mxu0 0.0
  %4003 = vmatpush1.msra.mxu0 0.0
  %4004 = vmatprep.subr.mxu0 0.0
  %4005 = vmatpush1.msra.mxu0 0.0
  %4006 = vmatprep.subr.mxu0 0.0
  %4007 = vmatpush1.msra.mxu0 0.0
  %4008 = vmatprep.subr.mxu0 0.0
  %4009 = vmatpush1.msra.mxu0 0.0
  %4010 = vmatprep.subr.mxu0 0.0
  %4011 = vmatpush1.msra.mxu0 0.0
  %4012 = vmatprep.subr.mxu0 0.0
  %4013 = vmatpush1.msra.mxu0 0.0
  %4014 = vmatprep.subr.mxu0 0.0
  %4015 = vmatpush1.msra.mxu0 0.0
  %4016 = vmatprep.subr.mxu0 0.0
  %4017 = vmatpush1.msra.mxu0 0.0
  %4018 = vmatprep.subr.mxu0 0.0
  %4019 = vmatpush1.msra.mxu0 0.0
  %4020 = vmatprep.subr.mxu0 0.0
  %4021 = vmatpush1.msra.mxu0 0.0
  %4022 = vmatprep.subr.mxu0 0.0
  %4023 = vmatpush1.msra.mxu0 0.0
  %4024 = vmatprep.subr.mxu0 0.0
  %4025 = vmatpush1.msra.mxu0 0.0
  %4026 = vmatprep.subr.mxu0 0.0
  %4027 = vmatpush1.msra.mxu0 0.0
  %4028 = vmatprep.subr.mxu0 0.0
  %4029 = vmatpush1.msra.mxu0 0.0
  %4030 = vmatprep.subr.mxu0 0.0
  %4031 = vmatpush1.msra.mxu0 0.0
  %4032 = vmatprep.subr.mxu0 0.0
  %4033 = vmatpush1.msra.mxu0 0.0
  %4034 = vmatprep.subr.mxu0 0.0
  %4035 = vmatpush1.msra.mxu0 0.0
  %4036 = vmatprep.subr.mxu0 0.0
  %4037 = vmatpush1.msra.mxu0 0.0
  %4038 = vmatprep.subr.mxu0 0.0
  %4039 = vmatpush1.msra.mxu0 0.0
  %4040 = vmatprep.mubr.f32.mxu0 0.0
  %4041 = vmatmul.mubr.f32.gmra.mrb[0].mxu0 %v3817
  %v4042 = vpop.f32.mrb[0].mxu0
  %v4043 = vadd.f32 %v3764, %v4042
  %v4044 = vpop.f32.mrb[0].mxu0
  %v4045 = vadd.f32 %v3768, %v4044
  %4046 = vmatprep.mubr.f32.mxu0 0.0
  %4047 = vmatmul.mubr.f32.gmra.mrb[0].mxu0 %v3820
  %v4048 = vpop.f32.mrb[0].mxu0
  %v4049 = vadd.f32 %v3764, %v4048
  %v4050 = vpop.f32.mrb[0].mxu0
  %v4051 = vadd.f32 %v3768, %v4050
  %4052 = vdwg.mxu0
  %4053 = vmatprep.subr.mxu0 %v3636
  %4054 = vmatpush1.msra.mxu0 %v3635
  %4055 = vmatprep.subr.mxu0 %v3650
  %4056 = vmatpush1.msra.mxu0 %v3649
  %4057 = vmatprep.subr.mxu0 %v3664
  %4058 = vmatpush1.msra.mxu0 %v3663
  %4059 = vmatprep.subr.mxu0 %v3678
  %4060 = vmatpush1.msra.mxu0 %v3677
  %4061 = vmatprep.subr.mxu0 %v3692
  %4062 = vmatpush1.msra.mxu0 %v3691
  %4063 = vmatprep.subr.mxu0 %v3706
  %4064 = vmatpush1.msra.mxu0 %v3705
  %4065 = vmatprep.subr.mxu0 %v3720
  %4066 = vmatpush1.msra.mxu0 %v3719
  %4067 = vmatprep.subr.mxu0 %v3734
  %4068 = vmatpush1.msra.mxu0 %v3733
  %4069 = vmatprep.subr.mxu0 0.0
  %4070 = vmatpush1.msra.mxu0 0.0
  %4071 = vmatprep.subr.mxu0 0.0
  %4072 = vmatpush1.msra.mxu0 0.0
  %4073 = vmatprep.subr.mxu0 0.0
  %4074 = vmatpush1.msra.mxu0 0.0
  %4075 = vmatprep.subr.mxu0 0.0
  %4076 = vmatpush1.msra.mxu0 0.0
  %4077 = vmatprep.subr.mxu0 0.0
  %4078 = vmatpush1.msra.mxu0 0.0
  %4079 = vmatprep.subr.mxu0 0.0
  %4080 = vmatpush1.msra.mxu0 0.0
  %4081 = vmatprep.subr.mxu0 0.0
  %4082 = vmatpush1.msra.mxu0 0.0
  %4083 = vmatprep.subr.mxu0 0.0
  %4084 = vmatpush1.msra.mxu0 0.0
  %4085 = vmatprep.subr.mxu0 0.0
  %4086 = vmatpush1.msra.mxu0 0.0
  %4087 = vmatprep.subr.mxu0 0.0
  %4088 = vmatpush1.msra.mxu0 0.0
  %4089 = vmatprep.subr.mxu0 0.0
  %4090 = vmatpush1.msra.mxu0 0.0
  %4091 = vmatprep.subr.mxu0 0.0
  %4092 = vmatpush1.msra.mxu0 0.0
  %4093 = vmatprep.subr.mxu0 0.0
  %4094 = vmatpush1.msra.mxu0 0.0
  %4095 = vmatprep.subr.mxu0 0.0
  %4096 = vmatpush1.msra.mxu0 0.0
  %4097 = vmatprep.subr.mxu0 0.0
  %4098 = vmatpush1.msra.mxu0 0.0
  %4099 = vmatprep.subr.mxu0 0.0
  %4100 = vmatpush1.msra.mxu0 0.0
  %4101 = vmatprep.subr.mxu0 0.0
  %4102 = vmatpush1.msra.mxu0 0.0
  %4103 = vmatprep.subr.mxu0 0.0
  %4104 = vmatpush1.msra.mxu0 0.0
  %4105 = vmatprep.subr.mxu0 0.0
  %4106 = vmatpush1.msra.mxu0 0.0
  %4107 = vmatprep.subr.mxu0 0.0
  %4108 = vmatpush1.msra.mxu0 0.0
  %4109 = vmatprep.subr.mxu0 0.0
  %4110 = vmatpush1.msra.mxu0 0.0
  %4111 = vmatprep.subr.mxu0 0.0
  %4112 = vmatpush1.msra.mxu0 0.0
  %4113 = vmatprep.subr.mxu0 0.0
  %4114 = vmatpush1.msra.mxu0 0.0
  %4115 = vmatprep.subr.mxu0 0.0
  %4116 = vmatpush1.msra.mxu0 0.0
  %4117 = vmatprep.mubr.f32.mxu0 0.0
  %4118 = vmatmul.mubr.f32.gmra.mrb[0].mxu0 %v3817
  %v4119 = vpop.f32.mrb[0].mxu0
  %v4120 = vadd.f32 %v3772, %v4119
  %v4121 = vpop.f32.mrb[0].mxu0
  %v4122 = vadd.f32 %v3776, %v4121
  %4123 = vmatprep.mubr.f32.mxu0 0.0
  %4124 = vmatmul.mubr.f32.gmra.mrb[0].mxu0 %v3820
  %v4125 = vpop.f32.mrb[0].mxu0
  %v4126 = vadd.f32 %v3772, %v4125
  %v4127 = vpop.f32.mrb[0].mxu0
  %v4128 = vadd.f32 %v3776, %v4127
  %4129 = vdwg.mxu0
  %4130 = vmatprep.subr.mxu0 %v3638
  %4131 = vmatpush1.msra.mxu0 %v3637
  %4132 = vmatprep.subr.mxu0 %v3652
  %4133 = vmatpush1.msra.mxu0 %v3651
  %4134 = vmatprep.subr.mxu0 %v3666
  %4135 = vmatpush1.msra.mxu0 %v3665
  %4136 = vmatprep.subr.mxu0 %v3680
  %4137 = vmatpush1.msra.mxu0 %v3679
  %4138 = vmatprep.subr.mxu0 %v3694
  %4139 = vmatpush1.msra.mxu0 %v3693
  %4140 = vmatprep.subr.mxu0 %v3708
  %4141 = vmatpush1.msra.mxu0 %v3707
  %4142 = vmatprep.subr.mxu0 %v3722
  %4143 = vmatpush1.msra.mxu0 %v3721
  %4144 = vmatprep.subr.mxu0 %v3736
  %4145 = vmatpush1.msra.mxu0 %v3735
  %4146 = vmatprep.subr.mxu0 0.0
  %4147 = vmatpush1.msra.mxu0 0.0
  %4148 = vmatprep.subr.mxu0 0.0
  %4149 = vmatpush1.msra.mxu0 0.0
  %4150 = vmatprep.subr.mxu0 0.0
  %4151 = vmatpush1.msra.mxu0 0.0
  %4152 = vmatprep.subr.mxu0 0.0
  %4153 = vmatpush1.msra.mxu0 0.0
  %4154 = vmatprep.subr.mxu0 0.0
  %4155 = vmatpush1.msra.mxu0 0.0
  %4156 = vmatprep.subr.mxu0 0.0
  %4157 = vmatpush1.msra.mxu0 0.0
  %4158 = vmatprep.subr.mxu0 0.0
  %4159 = vmatpush1.msra.mxu0 0.0
  %4160 = vmatprep.subr.mxu0 0.0
  %4161 = vmatpush1.msra.mxu0 0.0
  %4162 = vmatprep.subr.mxu0 0.0
  %4163 = vmatpush1.msra.mxu0 0.0
  %4164 = vmatprep.subr.mxu0 0.0
  %4165 = vmatpush1.msra.mxu0 0.0
  %4166 = vmatprep.subr.mxu0 0.0
  %4167 = vmatpush1.msra.mxu0 0.0
  %4168 = vmatprep.subr.mxu0 0.0
  %4169 = vmatpush1.msra.mxu0 0.0
  %4170 = vmatprep.subr.mxu0 0.0
  %4171 = vmatpush1.msra.mxu0 0.0
  %4172 = vmatprep.subr.mxu0 0.0
  %4173 = vmatpush1.msra.mxu0 0.0
  %4174 = vmatprep.subr.mxu0 0.0
  %4175 = vmatpush1.msra.mxu0 0.0
  %4176 = vmatprep.subr.mxu0 0.0
  %4177 = vmatpush1.msra.mxu0 0.0
  %4178 = vmatprep.subr.mxu0 0.0
  %4179 = vmatpush1.msra.mxu0 0.0
  %4180 = vmatprep.subr.mxu0 0.0
  %4181 = vmatpush1.msra.mxu0 0.0
  %4182 = vmatprep.subr.mxu0 0.0
  %4183 = vmatpush1.msra.mxu0 0.0
  %4184 = vmatprep.subr.mxu0 0.0
  %4185 = vmatpush1.msra.mxu0 0.0
  %4186 = vmatprep.subr.mxu0 0.0
  %4187 = vmatpush1.msra.mxu0 0.0
  %4188 = vmatprep.subr.mxu0 0.0
  %4189 = vmatpush1.msra.mxu0 0.0
  %4190 = vmatprep.subr.mxu0 0.0
  %4191 = vmatpush1.msra.mxu0 0.0
  %4192 = vmatprep.subr.mxu0 0.0
  %4193 = vmatpush1.msra.mxu0 0.0
  %4194 = vmatprep.mubr.f32.mxu0 0.0
  %4195 = vmatmul.mubr.f32.gmra.mrb[0].mxu0 %v3817
  %v4196 = vpop.f32.mrb[0].mxu0
  %v4197 = vadd.f32 %v3780, %v4196
  %v4198 = vpop.f32.mrb[0].mxu0
  %v4199 = vadd.f32 %v3784, %v4198
  %4200 = vmatprep.mubr.f32.mxu0 0.0
  %4201 = vmatmul.mubr.f32.gmra.mrb[0].mxu0 %v3820
  %v4202 = vpop.f32.mrb[0].mxu0
  %v4203 = vadd.f32 %v3780, %v4202
  %v4204 = vpop.f32.mrb[0].mxu0
  %v4205 = vadd.f32 %v3784, %v4204
  %4206 = vdwg.mxu0
  %4207 = vmatprep.subr.mxu0 %v3640
  %4208 = vmatpush1.msra.mxu0 %v3639
  %4209 = vmatprep.subr.mxu0 %v3654
  %4210 = vmatpush1.msra.mxu0 %v3653
  %4211 = vmatprep.subr.mxu0 %v3668
  %4212 = vmatpush1.msra.mxu0 %v3667
  %4213 = vmatprep.subr.mxu0 %v3682
  %4214 = vmatpush1.msra.mxu0 %v3681
  %4215 = vmatprep.subr.mxu0 %v3696
  %4216 = vmatpush1.msra.mxu0 %v3695
  %4217 = vmatprep.subr.mxu0 %v3710
  %4218 = vmatpush1.msra.mxu0 %v3709
  %4219 = vmatprep.subr.mxu0 %v3724
  %4220 = vmatpush1.msra.mxu0 %v3723
  %4221 = vmatprep.subr.mxu0 %v3738
  %4222 = vmatpush1.msra.mxu0 %v3737
  %4223 = vmatprep.subr.mxu0 0.0
  %4224 = vmatpush1.msra.mxu0 0.0
  %4225 = vmatprep.subr.mxu0 0.0
  %4226 = vmatpush1.msra.mxu0 0.0
  %4227 = vmatprep.subr.mxu0 0.0
  %4228 = vmatpush1.msra.mxu0 0.0
  %4229 = vmatprep.subr.mxu0 0.0
  %4230 = vmatpush1.msra.mxu0 0.0
  %4231 = vmatprep.subr.mxu0 0.0
  %4232 = vmatpush1.msra.mxu0 0.0
  %4233 = vmatprep.subr.mxu0 0.0
  %4234 = vmatpush1.msra.mxu0 0.0
  %4235 = vmatprep.subr.mxu0 0.0
  %4236 = vmatpush1.msra.mxu0 0.0
  %4237 = vmatprep.subr.mxu0 0.0
  %4238 = vmatpush1.msra.mxu0 0.0
  %4239 = vmatprep.subr.mxu0 0.0
  %4240 = vmatpush1.msra.mxu0 0.0
  %4241 = vmatprep.subr.mxu0 0.0
  %4242 = vmatpush1.msra.mxu0 0.0
  %4243 = vmatprep.subr.mxu0 0.0
  %4244 = vmatpush1.msra.mxu0 0.0
  %4245 = vmatprep.subr.mxu0 0.0
  %4246 = vmatpush1.msra.mxu0 0.0
  %4247 = vmatprep.subr.mxu0 0.0
  %4248 = vmatpush1.msra.mxu0 0.0
  %4249 = vmatprep.subr.mxu0 0.0
  %4250 = vmatpush1.msra.mxu0 0.0
  %4251 = vmatprep.subr.mxu0 0.0
  %4252 = vmatpush1.msra.mxu0 0.0
  %4253 = vmatprep.subr.mxu0 0.0
  %4254 = vmatpush1.msra.mxu0 0.0
  %4255 = vmatprep.subr.mxu0 0.0
  %4256 = vmatpush1.msra.mxu0 0.0
  %4257 = vmatprep.subr.mxu0 0.0
  %4258 = vmatpush1.msra.mxu0 0.0
  %4259 = vmatprep.subr.mxu0 0.0
  %4260 = vmatpush1.msra.mxu0 0.0
  %4261 = vmatprep.subr.mxu0 0.0
  %4262 = vmatpush1.msra.mxu0 0.0
  %4263 = vmatprep.subr.mxu0 0.0
  %4264 = vmatpush1.msra.mxu0 0.0
  %4265 = vmatprep.subr.mxu0 0.0
  %4266 = vmatpush1.msra.mxu0 0.0
  %4267 = vmatprep.subr.mxu0 0.0
  %4268 = vmatpush1.msra.mxu0 0.0
  %4269 = vmatprep.subr.mxu0 0.0
  %4270 = vmatpush1.msra.mxu0 0.0
  %4271 = vmatprep.mubr.f32.mxu0 0.0
  %4272 = vmatmul.mubr.f32.gmra.mrb[0].mxu0 %v3817
  %v4273 = vpop.f32.mrb[0].mxu0
  %v4274 = vadd.f32 %v3788, %v4273
  %v4275 = vpop.f32.mrb[0].mxu0
  %v4276 = vadd.f32 %v3792, %v4275
  %4277 = vmatprep.mubr.f32.mxu0 0.0
  %4278 = vmatmul.mubr.f32.gmra.mrb[0].mxu0 %v3820
  %v4279 = vpop.f32.mrb[0].mxu0
  %v4280 = vadd.f32 %v3788, %v4279
  %v4281 = vpop.f32.mrb[0].mxu0
  %v4282 = vadd.f32 %v3792, %v4281
  %4283 = vdwg.mxu0
  %4284 = vmatprep.subr.mxu0 %v3642
  %4285 = vmatpush1.msra.mxu0 %v3641
  %4286 = vmatprep.subr.mxu0 %v3656
  %4287 = vmatpush1.msra.mxu0 %v3655
  %4288 = vmatprep.subr.mxu0 %v3670
  %4289 = vmatpush1.msra.mxu0 %v3669
  %4290 = vmatprep.subr.mxu0 %v3684
  %4291 = vmatpush1.msra.mxu0 %v3683
  %4292 = vmatprep.subr.mxu0 %v3698
  %4293 = vmatpush1.msra.mxu0 %v3697
  %4294 = vmatprep.subr.mxu0 %v3712
  %4295 = vmatpush1.msra.mxu0 %v3711
  %4296 = vmatprep.subr.mxu0 %v3726
  %4297 = vmatpush1.msra.mxu0 %v3725
  %4298 = vmatprep.subr.mxu0 %v3740
  %4299 = vmatpush1.msra.mxu0 %v3739
  %4300 = vmatprep.subr.mxu0 0.0
  %4301 = vmatpush1.msra.mxu0 0.0
  %4302 = vmatprep.subr.mxu0 0.0
  %4303 = vmatpush1.msra.mxu0 0.0
  %4304 = vmatprep.subr.mxu0 0.0
  %4305 = vmatpush1.msra.mxu0 0.0
  %4306 = vmatprep.subr.mxu0 0.0
  %4307 = vmatpush1.msra.mxu0 0.0
  %4308 = vmatprep.subr.mxu0 0.0
  %4309 = vmatpush1.msra.mxu0 0.0
  %4310 = vmatprep.subr.mxu0 0.0
  %4311 = vmatpush1.msra.mxu0 0.0
  %4312 = vmatprep.subr.mxu0 0.0
  %4313 = vmatpush1.msra.mxu0 0.0
  %4314 = vmatprep.subr.mxu0 0.0
  %4315 = vmatpush1.msra.mxu0 0.0
  %4316 = vmatprep.subr.mxu0 0.0
  %4317 = vmatpush1.msra.mxu0 0.0
  %4318 = vmatprep.subr.mxu0 0.0
  %4319 = vmatpush1.msra.mxu0 0.0
  %4320 = vmatprep.subr.mxu0 0.0
  %4321 = vmatpush1.msra.mxu0 0.0
  %4322 = vmatprep.subr.mxu0 0.0
  %4323 = vmatpush1.msra.mxu0 0.0
  %4324 = vmatprep.subr.mxu0 0.0
  %4325 = vmatpush1.msra.mxu0 0.0
  %4326 = vmatprep.subr.mxu0 0.0
  %4327 = vmatpush1.msra.mxu0 0.0
  %4328 = vmatprep.subr.mxu0 0.0
  %4329 = vmatpush1.msra.mxu0 0.0
  %4330 = vmatprep.subr.mxu0 0.0
  %4331 = vmatpush1.msra.mxu0 0.0
  %4332 = vmatprep.subr.mxu0 0.0
  %4333 = vmatpush1.msra.mxu0 0.0
  %4334 = vmatprep.subr.mxu0 0.0
  %4335 = vmatpush1.msra.mxu0 0.0
  %4336 = vmatprep.subr.mxu0 0.0
  %4337 = vmatpush1.msra.mxu0 0.0
  %4338 = vmatprep.subr.mxu0 0.0
  %4339 = vmatpush1.msra.mxu0 0.0
  %4340 = vmatprep.subr.mxu0 0.0
  %4341 = vmatpush1.msra.mxu0 0.0
  %4342 = vmatprep.subr.mxu0 0.0
  %4343 = vmatpush1.msra.mxu0 0.0
  %4344 = vmatprep.subr.mxu0 0.0
  %4345 = vmatpush1.msra.mxu0 0.0
  %4346 = vmatprep.subr.mxu0 0.0
  %4347 = vmatpush1.msra.mxu0 0.0
  %4348 = vmatprep.mubr.f32.mxu0 0.0
  %4349 = vmatmul.mubr.f32.gmra.mrb[0].mxu0 %v3817
  %v4350 = vpop.f32.mrb[0].mxu0
  %v4351 = vadd.f32 %v3796, %v4350
  %v4352 = vpop.f32.mrb[0].mxu0
  %v4353 = vadd.f32 %v3800, %v4352
  %4354 = vmatprep.mubr.f32.mxu0 0.0
  %4355 = vmatmul.mubr.f32.gmra.mrb[0].mxu0 %v3820
  %v4356 = vpop.f32.mrb[0].mxu0
  %v4357 = vadd.f32 %v3796, %v4356
  %v4358 = vpop.f32.mrb[0].mxu0
  %v4359 = vadd.f32 %v3800, %v4358
  %4360 = vdwg.mxu0
  %v4361 = vmax.f32 %v3889, 0.0
  %v4362 = vmax.f32 %v3891, 0.0
  %v4363 = vmax.f32 %v3966, 0.0
  %v4364 = vmax.f32 %v3968, 0.0
  %v4365 = vmax.f32 %v4043, 0.0
  %v4366 = vmax.f32 %v4045, 0.0
  %v4367 = vmax.f32 %v4120, 0.0
  %v4368 = vmax.f32 %v4122, 0.0
  %v4369 = vmax.f32 %v4197, 0.0
  %v4370 = vmax.f32 %v4199, 0.0
  %v4371 = vmax.f32 %v4274, 0.0
  %v4372 = vmax.f32 %v4276, 0.0
  %v4373 = vmax.f32 %v4351, 0.0
  %v4374 = vmax.f32 %v4353, 0.0
  %v4375 = vmax.f32 %v3895, 0.0
  %v4376 = vmax.f32 %v3897, 0.0
  %v4377 = vmax.f32 %v3972, 0.0
  %v4378 = vmax.f32 %v3974, 0.0
  %v4379 = vmax.f32 %v4049, 0.0
  %v4380 = vmax.f32 %v4051, 0.0
  %v4381 = vmax.f32 %v4126, 0.0
  %v4382 = vmax.f32 %v4128, 0.0
  %v4383 = vmax.f32 %v4203, 0.0
  %v4384 = vmax.f32 %v4205, 0.0
  %v4385 = vmax.f32 %v4280, 0.0
  %v4386 = vmax.f32 %v4282, 0.0
  %v4387 = vmax.f32 %v4357, 0.0
  %v4388 = vmax.f32 %v4359, 0.0
  %v4389 = vld [vmem:[%s11] sm:$0xff]
  %v4390 = vld [vmem:[%s11 + $0x8] sm:$0xff]
  %v4391 = vld [vmem:[%s11 + $0x10] sm:$0xff]
  %v4392 = vld [vmem:[%s11 + $0x18] sm:$0xff]
  %v4393 = vld [vmem:[%s11 + $0x20] sm:$0xff]
  %v4394 = vld [vmem:[%s11 + $0x28] sm:$0xff]
  %v4395 = vld [vmem:[%s11 + $0x30] sm:$0xff]
  %v4396 = vld [vmem:[%s11 + $0x38] sm:$0xff]
  %v4397 = vld [vmem:[%s11 + $0x40] sm:$0xff]
  %v4398 = vld [vmem:[%s11 + $0x48] sm:$0xff]
  %v4399 = vld [vmem:[%s11 + $0x50] sm:$0xff]
  %v4400 = vld [vmem:[%s11 + $0x58] sm:$0xff]
  %v4401 = vld [vmem:[%s11 + $0x60] sm:$0xff]
  %v4402 = vld [vmem:[%s11 + $0x68] sm:$0xff]
  %v4403 = vld [vmem:[%s11 + $0x70] sm:$0xff]
  %v4404 = vld [vmem:[%s11 + $0x78] sm:$0xff]
  %vm4405 = vcmask 916480
  %v4407 = vsel %vm4405, %v4389, 0
  %v4410 = vsel %vm4405, %v4390, 0
  %v4413 = vsel %vm4405, %v4391, 0
  %v4416 = vsel %vm4405, %v4392, 0
  %v4419 = vsel %vm4405, %v4393, 0
  %v4422 = vsel %vm4405, %v4394, 0
  %v4425 = vsel %vm4405, %v4395, 0
  %v4428 = vsel %vm4405, %v4396, 0
  %v4431 = vsel %vm4405, %v4397, 0
  %v4434 = vsel %vm4405, %v4398, 0
  %v4437 = vsel %vm4405, %v4399, 0
  %v4440 = vsel %vm4405, %v4400, 0
  %v4443 = vsel %vm4405, %v4401, 0
  %v4446 = vsel %vm4405, %v4402, 0
  %v4449 = vsel %vm4405, %v4403, 0
  %v4452 = vsel %vm4405, %v4404, 0
  %4454 = vmatprep.subr.mxu0 %v4362
  %4455 = vmatpush1.msra.mxu0 %v4361
  %4456 = vmatprep.subr.mxu0 %v4376
  %4457 = vmatpush1.msra.mxu0 %v4375
  %4458 = vmatprep.subr.mxu0 %v4364
  %4459 = vmatpush1.msra.mxu0 %v4363
  %4460 = vmatprep.subr.mxu0 %v4378
  %4461 = vmatpush1.msra.mxu0 %v4377
  %4462 = vmatprep.subr.mxu0 %v4366
  %4463 = vmatpush1.msra.mxu0 %v4365
  %4464 = vmatprep.subr.mxu0 %v4380
  %4465 = vmatpush1.msra.mxu0 %v4379
  %4466 = vmatprep.subr.mxu0 %v4368
  %4467 = vmatpush1.msra.mxu0 %v4367
  %4468 = vmatprep.subr.mxu0 %v4382
  %4469 = vmatpush1.msra.mxu0 %v4381
  %4470 = vmatprep.subr.mxu0 %v4370
  %4471 = vmatpush1.msra.mxu0 %v4369
  %4472 = vmatprep.subr.mxu0 %v4384
  %4473 = vmatpush1.msra.mxu0 %v4383
  %4474 = vmatprep.subr.mxu0 %v4372
  %4475 = vmatpush1.msra.mxu0 %v4371
  %4476 = vmatprep.subr.mxu0 %v4386
  %4477 = vmatpush1.msra.mxu0 %v4385
  %4478 = vmatprep.subr.mxu0 %v4374
  %4479 = vmatpush1.msra.mxu0 %v4373
  %4480 = vmatprep.subr.mxu0 %v4388
  %4481 = vmatpush1.msra.mxu0 %v4387
  %4482 = vmatprep.subr.mxu0 0.0
  %4483 = vmatpush1.msra.mxu0 0.0
  %4484 = vmatprep.subr.mxu0 0.0
  %4485 = vmatpush1.msra.mxu0 0.0
  %4486 = vmatprep.subr.mxu0 0.0
  %4487 = vmatpush1.msra.mxu0 0.0
  %4488 = vmatprep.subr.mxu0 0.0
  %4489 = vmatpush1.msra.mxu0 0.0
  %4490 = vmatprep.subr.mxu0 0.0
  %4491 = vmatpush1.msra.mxu0 0.0
  %4492 = vmatprep.subr.mxu0 0.0
  %4493 = vmatpush1.msra.mxu0 0.0
  %4494 = vmatprep.subr.mxu0 0.0
  %4495 = vmatpush1.msra.mxu0 0.0
  %4496 = vmatprep.subr.mxu0 0.0
  %4497 = vmatpush1.msra.mxu0 0.0
  %4498 = vmatprep.subr.mxu0 0.0
  %4499 = vmatpush1.msra.mxu0 0.0
  %4500 = vmatprep.subr.mxu0 0.0
  %4501 = vmatpush1.msra.mxu0 0.0
  %4502 = vmatprep.subr.mxu0 0.0
  %4503 = vmatpush1.msra.mxu0 0.0
  %4504 = vmatprep.subr.mxu0 0.0
  %4505 = vmatpush1.msra.mxu0 0.0
  %4506 = vmatprep.subr.mxu0 0.0
  %4507 = vmatpush1.msra.mxu0 0.0
  %4508 = vmatprep.subr.mxu0 0.0
  %4509 = vmatpush1.msra.mxu0 0.0
  %4510 = vmatprep.subr.mxu0 0.0
  %4511 = vmatpush1.msra.mxu0 0.0
  %4512 = vmatprep.subr.mxu0 0.0
  %4513 = vmatpush1.msra.mxu0 0.0
  %4514 = vmatprep.subr.mxu0 0.0
  %4515 = vmatpush1.msra.mxu0 0.0
  %4516 = vmatprep.subr.mxu0 0.0
  %4517 = vmatpush1.msra.mxu0 0.0
  %4518 = vmatprep.mubr.f32.mxu0 0.0
  %4519 = vmatmul.mubr.f32.gmra.mrb[0].mxu0 %v4407
  %v4520 = vpop.f32.mrb[0].mxu0
  %v4521 = vadd.f32 0.0, %v4520
  %v4522 = vpop.f32.mrb[0].mxu0
  %v4523 = vadd.f32 0.0, %v4522
  %4524 = vmatprep.mubr.f32.mxu0 0.0
  %4525 = vmatmul.mubr.f32.gmra.mrb[0].mxu0 %v4410
  %v4526 = vpop.f32.mrb[0].mxu0
  %v4527 = vadd.f32 0.0, %v4526
  %v4528 = vpop.f32.mrb[0].mxu0
  %v4529 = vadd.f32 0.0, %v4528
  %4530 = vmatprep.mubr.f32.mxu0 0.0
  %4531 = vmatmul.mubr.f32.gmra.mrb[0].mxu0 %v4413
  %v4532 = vpop.f32.mrb[0].mxu0
  %v4533 = vadd.f32 0.0, %v4532
  %v4534 = vpop.f32.mrb[0].mxu0
  %v4535 = vadd.f32 0.0, %v4534
  %4536 = vmatprep.mubr.f32.mxu0 0.0
  %4537 = vmatmul.mubr.f32.gmra.mrb[0].mxu0 %v4416
  %v4538 = vpop.f32.mrb[0].mxu0
  %v4539 = vadd.f32 0.0, %v4538
  %v4540 = vpop.f32.mrb[0].mxu0
  %v4541 = vadd.f32 0.0, %v4540
  %4542 = vmatprep.mubr.f32.mxu0 0.0
  %4543 = vmatmul.mubr.f32.gmra.mrb[0].mxu0 %v4419
  %v4544 = vpop.f32.mrb[0].mxu0
  %v4545 = vadd.f32 0.0, %v4544
  %v4546 = vpop.f32.mrb[0].mxu0
  %v4547 = vadd.f32 0.0, %v4546
  %4548 = vmatprep.mubr.f32.mxu0 0.0
  %4549 = vmatmul.mubr.f32.gmra.mrb[0].mxu0 %v4422
  %v4550 = vpop.f32.mrb[0].mxu0
  %v4551 = vadd.f32 0.0, %v4550
  %v4552 = vpop.f32.mrb[0].mxu0
  %v4553 = vadd.f32 0.0, %v4552
  %4554 = vmatprep.mubr.f32.mxu0 0.0
  %4555 = vmatmul.mubr.f32.gmra.mrb[0].mxu0 %v4425
  %v4556 = vpop.f32.mrb[0].mxu0
  %v4557 = vadd.f32 0.0, %v4556
  %v4558 = vpop.f32.mrb[0].mxu0
  %v4559 = vadd.f32 0.0, %v4558
  %4560 = vmatprep.mubr.f32.mxu0 0.0
  %4561 = vmatmul.mubr.f32.gmra.mrb[0].mxu0 %v4428
  %v4562 = vpop.f32.mrb[0].mxu0
  %v4563 = vadd.f32 0.0, %v4562
  %v4564 = vpop.f32.mrb[0].mxu0
  %v4565 = vadd.f32 0.0, %v4564
  %4566 = vmatprep.mubr.f32.mxu0 0.0
  %4567 = vmatmul.mubr.f32.gmra.mrb[0].mxu0 %v4431
  %v4568 = vpop.f32.mrb[0].mxu0
  %v4569 = vadd.f32 0.0, %v4568
  %v4570 = vpop.f32.mrb[0].mxu0
  %v4571 = vadd.f32 0.0, %v4570
  %4572 = vmatprep.mubr.f32.mxu0 0.0
  %4573 = vmatmul.mubr.f32.gmra.mrb[0].mxu0 %v4434
  %v4574 = vpop.f32.mrb[0].mxu0
  %v4575 = vadd.f32 0.0, %v4574
  %v4576 = vpop.f32.mrb[0].mxu0
  %v4577 = vadd.f32 0.0, %v4576
  %4578 = vmatprep.mubr.f32.mxu0 0.0
  %4579 = vmatmul.mubr.f32.gmra.mrb[0].mxu0 %v4437
  %v4580 = vpop.f32.mrb[0].mxu0
  %v4581 = vadd.f32 0.0, %v4580
  %v4582 = vpop.f32.mrb[0].mxu0
  %v4583 = vadd.f32 0.0, %v4582
  %4584 = vmatprep.mubr.f32.mxu0 0.0
  %4585 = vmatmul.mubr.f32.gmra.mrb[0].mxu0 %v4440
  %v4586 = vpop.f32.mrb[0].mxu0
  %v4587 = vadd.f32 0.0, %v4586
  %v4588 = vpop.f32.mrb[0].mxu0
  %v4589 = vadd.f32 0.0, %v4588
  %4590 = vmatprep.mubr.f32.mxu0 0.0
  %4591 = vmatmul.mubr.f32.gmra.mrb[0].mxu0 %v4443
  %v4592 = vpop.f32.mrb[0].mxu0
  %v4593 = vadd.f32 0.0, %v4592
  %v4594 = vpop.f32.mrb[0].mxu0
  %v4595 = vadd.f32 0.0, %v4594
  %4596 = vmatprep.mubr.f32.mxu0 0.0
  %4597 = vmatmul.mubr.f32.gmra.mrb[0].mxu0 %v4446
  %v4598 = vpop.f32.mrb[0].mxu0
  %v4599 = vadd.f32 0.0, %v4598
  %v4600 = vpop.f32.mrb[0].mxu0
  %v4601 = vadd.f32 0.0, %v4600
  %4602 = vmatprep.mubr.f32.mxu0 0.0
  %4603 = vmatmul.mubr.f32.gmra.mrb[0].mxu0 %v4449
  %v4604 = vpop.f32.mrb[0].mxu0
  %v4605 = vadd.f32 0.0, %v4604
  %v4606 = vpop.f32.mrb[0].mxu0
  %v4607 = vadd.f32 0.0, %v4606
  %4608 = vmatprep.mubr.f32.mxu0 0.0
  %4609 = vmatmul.mubr.f32.gmra.mrb[0].mxu0 %v4452
  %v4610 = vpop.f32.mrb[0].mxu0
  %v4611 = vadd.f32 0.0, %v4610
  %v4612 = vpop.f32.mrb[0].mxu0
  %v4613 = vadd.f32 0.0, %v4612
  %4614 = vdwg.mxu0
  %s4615 = scalar_lea.vmem %s11, 128
  %v4616 = vld [vmem:[%s4615] sm:$0xff]
  %v4617 = vld [vmem:[%s4615 + $0x8] sm:$0xff]
  %v4618 = vld [vmem:[%s4615 + $0x10] sm:$0xff]
  %v4619 = vld [vmem:[%s4615 + $0x18] sm:$0xff]
  %v4620 = vld [vmem:[%s4615 + $0x20] sm:$0xff]
  %v4621 = vld [vmem:[%s4615 + $0x28] sm:$0xff]
  %v4622 = vld [vmem:[%s4615 + $0x30] sm:$0xff]
  %v4623 = vld [vmem:[%s4615 + $0x38] sm:$0xff]
  %v4624 = vld [vmem:[%s4615 + $0x40] sm:$0xff]
  %v4625 = vld [vmem:[%s4615 + $0x48] sm:$0xff]
  %v4626 = vld [vmem:[%s4615 + $0x50] sm:$0xff]
  %v4627 = vld [vmem:[%s4615 + $0x58] sm:$0xff]
  %v4628 = vld [vmem:[%s4615 + $0x60] sm:$0xff]
  %v4629 = vld [vmem:[%s4615 + $0x68] sm:$0xff]
  %v4630 = vld [vmem:[%s4615 + $0x70] sm:$0xff]
  %v4631 = vld [vmem:[%s4615 + $0x78] sm:$0xff]
  %v4633 = vsel %vm4405, %v4616, 0
  %v4636 = vsel %vm4405, %v4617, 0
  %v4639 = vsel %vm4405, %v4618, 0
  %v4642 = vsel %vm4405, %v4619, 0
  %v4645 = vsel %vm4405, %v4620, 0
  %v4648 = vsel %vm4405, %v4621, 0
  %v4651 = vsel %vm4405, %v4622, 0
  %v4654 = vsel %vm4405, %v4623, 0
  %v4657 = vsel %vm4405, %v4624, 0
  %v4660 = vsel %vm4405, %v4625, 0
  %v4663 = vsel %vm4405, %v4626, 0
  %v4666 = vsel %vm4405, %v4627, 0
  %v4669 = vsel %vm4405, %v4628, 0
  %v4672 = vsel %vm4405, %v4629, 0
  %v4675 = vsel %vm4405, %v4630, 0
  %v4678 = vsel %vm4405, %v4631, 0
  %4680 = vmatprep.subr.mxu0 %v4362
  %4681 = vmatpush1.msra.mxu0 %v4361
  %4682 = vmatprep.subr.mxu0 %v4376
  %4683 = vmatpush1.msra.mxu0 %v4375
  %4684 = vmatprep.subr.mxu0 %v4364
  %4685 = vmatpush1.msra.mxu0 %v4363
  %4686 = vmatprep.subr.mxu0 %v4378
  %4687 = vmatpush1.msra.mxu0 %v4377
  %4688 = vmatprep.subr.mxu0 %v4366
  %4689 = vmatpush1.msra.mxu0 %v4365
  %4690 = vmatprep.subr.mxu0 %v4380
  %4691 = vmatpush1.msra.mxu0 %v4379
  %4692 = vmatprep.subr.mxu0 %v4368
  %4693 = vmatpush1.msra.mxu0 %v4367
  %4694 = vmatprep.subr.mxu0 %v4382
  %4695 = vmatpush1.msra.mxu0 %v4381
  %4696 = vmatprep.subr.mxu0 %v4370
  %4697 = vmatpush1.msra.mxu0 %v4369
  %4698 = vmatprep.subr.mxu0 %v4384
  %4699 = vmatpush1.msra.mxu0 %v4383
  %4700 = vmatprep.subr.mxu0 %v4372
  %4701 = vmatpush1.msra.mxu0 %v4371
  %4702 = vmatprep.subr.mxu0 %v4386
  %4703 = vmatpush1.msra.mxu0 %v4385
  %4704 = vmatprep.subr.mxu0 %v4374
  %4705 = vmatpush1.msra.mxu0 %v4373
  %4706 = vmatprep.subr.mxu0 %v4388
  %4707 = vmatpush1.msra.mxu0 %v4387
  %4708 = vmatprep.subr.mxu0 0.0
  %4709 = vmatpush1.msra.mxu0 0.0
  %4710 = vmatprep.subr.mxu0 0.0
  %4711 = vmatpush1.msra.mxu0 0.0
  %4712 = vmatprep.subr.mxu0 0.0
  %4713 = vmatpush1.msra.mxu0 0.0
  %4714 = vmatprep.subr.mxu0 0.0
  %4715 = vmatpush1.msra.mxu0 0.0
  %4716 = vmatprep.subr.mxu0 0.0
  %4717 = vmatpush1.msra.mxu0 0.0
  %4718 = vmatprep.subr.mxu0 0.0
  %4719 = vmatpush1.msra.mxu0 0.0
  %4720 = vmatprep.subr.mxu0 0.0
  %4721 = vmatpush1.msra.mxu0 0.0
  %4722 = vmatprep.subr.mxu0 0.0
  %4723 = vmatpush1.msra.mxu0 0.0
  %4724 = vmatprep.subr.mxu0 0.0
  %4725 = vmatpush1.msra.mxu0 0.0
  %4726 = vmatprep.subr.mxu0 0.0
  %4727 = vmatpush1.msra.mxu0 0.0
  %4728 = vmatprep.subr.mxu0 0.0
  %4729 = vmatpush1.msra.mxu0 0.0
  %4730 = vmatprep.subr.mxu0 0.0
  %4731 = vmatpush1.msra.mxu0 0.0
  %4732 = vmatprep.subr.mxu0 0.0
  %4733 = vmatpush1.msra.mxu0 0.0
  %4734 = vmatprep.subr.mxu0 0.0
  %4735 = vmatpush1.msra.mxu0 0.0
  %4736 = vmatprep.subr.mxu0 0.0
  %4737 = vmatpush1.msra.mxu0 0.0
  %4738 = vmatprep.subr.mxu0 0.0
  %4739 = vmatpush1.msra.mxu0 0.0
  %4740 = vmatprep.subr.mxu0 0.0
  %4741 = vmatpush1.msra.mxu0 0.0
  %4742 = vmatprep.subr.mxu0 0.0
  %4743 = vmatpush1.msra.mxu0 0.0
  %4744 = vmatprep.mubr.f32.mxu0 0.0
  %4745 = vmatmul.mubr.f32.gmra.mrb[0].mxu0 %v4633
  %v4746 = vpop.f32.mrb[0].mxu0
  %v4747 = vadd.f32 0.0, %v4746
  %v4748 = vpop.f32.mrb[0].mxu0
  %v4749 = vadd.f32 0.0, %v4748
  %4750 = vmatprep.mubr.f32.mxu0 0.0
  %4751 = vmatmul.mubr.f32.gmra.mrb[0].mxu0 %v4636
  %v4752 = vpop.f32.mrb[0].mxu0
  %v4753 = vadd.f32 0.0, %v4752
  %v4754 = vpop.f32.mrb[0].mxu0
  %v4755 = vadd.f32 0.0, %v4754
  %4756 = vmatprep.mubr.f32.mxu0 0.0
  %4757 = vmatmul.mubr.f32.gmra.mrb[0].mxu0 %v4639
  %v4758 = vpop.f32.mrb[0].mxu0
  %v4759 = vadd.f32 0.0, %v4758
  %v4760 = vpop.f32.mrb[0].mxu0
  %v4761 = vadd.f32 0.0, %v4760
  %4762 = vmatprep.mubr.f32.mxu0 0.0
  %4763 = vmatmul.mubr.f32.gmra.mrb[0].mxu0 %v4642
  %v4764 = vpop.f32.mrb[0].mxu0
  %v4765 = vadd.f32 0.0, %v4764
  %v4766 = vpop.f32.mrb[0].mxu0
  %v4767 = vadd.f32 0.0, %v4766
  %4768 = vmatprep.mubr.f32.mxu0 0.0
  %4769 = vmatmul.mubr.f32.gmra.mrb[0].mxu0 %v4645
  %v4770 = vpop.f32.mrb[0].mxu0
  %v4771 = vadd.f32 0.0, %v4770
  %v4772 = vpop.f32.mrb[0].mxu0
  %v4773 = vadd.f32 0.0, %v4772
  %4774 = vmatprep.mubr.f32.mxu0 0.0
  %4775 = vmatmul.mubr.f32.gmra.mrb[0].mxu0 %v4648
  %v4776 = vpop.f32.mrb[0].mxu0
  %v4777 = vadd.f32 0.0, %v4776
  %v4778 = vpop.f32.mrb[0].mxu0
  %v4779 = vadd.f32 0.0, %v4778
  %4780 = vmatprep.mubr.f32.mxu0 0.0
  %4781 = vmatmul.mubr.f32.gmra.mrb[0].mxu0 %v4651
  %v4782 = vpop.f32.mrb[0].mxu0
  %v4783 = vadd.f32 0.0, %v4782
  %v4784 = vpop.f32.mrb[0].mxu0
  %v4785 = vadd.f32 0.0, %v4784
  %4786 = vmatprep.mubr.f32.mxu0 0.0
  %4787 = vmatmul.mubr.f32.gmra.mrb[0].mxu0 %v4654
  %v4788 = vpop.f32.mrb[0].mxu0
  %v4789 = vadd.f32 0.0, %v4788
  %v4790 = vpop.f32.mrb[0].mxu0
  %v4791 = vadd.f32 0.0, %v4790
  %4792 = vmatprep.mubr.f32.mxu0 0.0
  %4793 = vmatmul.mubr.f32.gmra.mrb[0].mxu0 %v4657
  %v4794 = vpop.f32.mrb[0].mxu0
  %v4795 = vadd.f32 0.0, %v4794
  %v4796 = vpop.f32.mrb[0].mxu0
  %v4797 = vadd.f32 0.0, %v4796
  %4798 = vmatprep.mubr.f32.mxu0 0.0
  %4799 = vmatmul.mubr.f32.gmra.mrb[0].mxu0 %v4660
  %v4800 = vpop.f32.mrb[0].mxu0
  %v4801 = vadd.f32 0.0, %v4800
  %v4802 = vpop.f32.mrb[0].mxu0
  %v4803 = vadd.f32 0.0, %v4802
  %4804 = vmatprep.mubr.f32.mxu0 0.0
  %4805 = vmatmul.mubr.f32.gmra.mrb[0].mxu0 %v4663
  %v4806 = vpop.f32.mrb[0].mxu0
  %v4807 = vadd.f32 0.0, %v4806
  %v4808 = vpop.f32.mrb[0].mxu0
  %v4809 = vadd.f32 0.0, %v4808
  %4810 = vmatprep.mubr.f32.mxu0 0.0
  %4811 = vmatmul.mubr.f32.gmra.mrb[0].mxu0 %v4666
  %v4812 = vpop.f32.mrb[0].mxu0
  %v4813 = vadd.f32 0.0, %v4812
  %v4814 = vpop.f32.mrb[0].mxu0
  %v4815 = vadd.f32 0.0, %v4814
  %4816 = vmatprep.mubr.f32.mxu0 0.0
  %4817 = vmatmul.mubr.f32.gmra.mrb[0].mxu0 %v4669
  %v4818 = vpop.f32.mrb[0].mxu0
  %v4819 = vadd.f32 0.0, %v4818
  %v4820 = vpop.f32.mrb[0].mxu0
  %v4821 = vadd.f32 0.0, %v4820
  %4822 = vmatprep.mubr.f32.mxu0 0.0
  %4823 = vmatmul.mubr.f32.gmra.mrb[0].mxu0 %v4672
  %v4824 = vpop.f32.mrb[0].mxu0
  %v4825 = vadd.f32 0.0, %v4824
  %v4826 = vpop.f32.mrb[0].mxu0
  %v4827 = vadd.f32 0.0, %v4826
  %4828 = vmatprep.mubr.f32.mxu0 0.0
  %4829 = vmatmul.mubr.f32.gmra.mrb[0].mxu0 %v4675
  %v4830 = vpop.f32.mrb[0].mxu0
  %v4831 = vadd.f32 0.0, %v4830
  %v4832 = vpop.f32.mrb[0].mxu0
  %v4833 = vadd.f32 0.0, %v4832
  %4834 = vmatprep.mubr.f32.mxu0 0.0
  %4835 = vmatmul.mubr.f32.gmra.mrb[0].mxu0 %v4678
  %v4836 = vpop.f32.mrb[0].mxu0
  %v4837 = vadd.f32 0.0, %v4836
  %v4838 = vpop.f32.mrb[0].mxu0
  %v4839 = vadd.f32 0.0, %v4838
  %4840 = vdwg.mxu0
  %v4841 = vld [vmem:[%s13] sm:$0x3]
  %s4842 = scalar_lea.vmem %s12, 512
  %v4843 = vld [vmem:[%s4842] sm:$0xff]
  %v4844 = vld [vmem:[%s4842 + $0x8] sm:$0xff]
  %v4845 = vld [vmem:[%s4842 + $0x10] sm:$0xff]
  %v4846 = vld [vmem:[%s4842 + $0x18] sm:$0xff]
  %v4847 = vld [vmem:[%s4842 + $0x20] sm:$0xff]
  %v4848 = vld [vmem:[%s4842 + $0x28] sm:$0xff]
  %v4849 = vld [vmem:[%s4842 + $0x30] sm:$0xff]
  %v4850 = vld [vmem:[%s4842 + $0x38] sm:$0xff]
  %v4851 = vld [vmem:[%s4842 + $0x40] sm:$0xff]
  %v4852 = vld [vmem:[%s4842 + $0x48] sm:$0xff]
  %v4853 = vld [vmem:[%s4842 + $0x50] sm:$0xff]
  %v4854 = vld [vmem:[%s4842 + $0x58] sm:$0xff]
  %v4855 = vld [vmem:[%s4842 + $0x60] sm:$0xff]
  %v4856 = vld [vmem:[%s4842 + $0x68] sm:$0xff]
  %v4857 = vld [vmem:[%s4842 + $0x70] sm:$0xff]
  %v4858 = vld [vmem:[%s4842 + $0x78] sm:$0xff]
  %v4859 = vld [vmem:[%s4842 + $0x80] sm:$0xff]
  %v4860 = vld [vmem:[%s4842 + $0x88] sm:$0xff]
  %v4861 = vld [vmem:[%s4842 + $0x90] sm:$0xff]
  %v4862 = vld [vmem:[%s4842 + $0x98] sm:$0xff]
  %v4863 = vld [vmem:[%s4842 + $0xa0] sm:$0xff]
  %v4864 = vld [vmem:[%s4842 + $0xa8] sm:$0xff]
  %v4865 = vld [vmem:[%s4842 + $0xb0] sm:$0xff]
  %v4866 = vld [vmem:[%s4842 + $0xb8] sm:$0xff]
  %v4867 = vld [vmem:[%s4842 + $0xc0] sm:$0xff]
  %v4868 = vld [vmem:[%s4842 + $0xc8] sm:$0xff]
  %v4869 = vld [vmem:[%s4842 + $0xd0] sm:$0xff]
  %v4870 = vld [vmem:[%s4842 + $0xd8] sm:$0xff]
  %v4871 = vld [vmem:[%s4842 + $0xe0] sm:$0xff]
  %v4872 = vld [vmem:[%s4842 + $0xe8] sm:$0xff]
  %v4873 = vld [vmem:[%s4842 + $0xf0] sm:$0xff]
  %v4874 = vld [vmem:[%s4842 + $0xf8] sm:$0xff]
  %v4875 = vld [vmem:[%s4842 + $0x100] sm:$0xff]
  %v4876 = vld [vmem:[%s4842 + $0x108] sm:$0xff]
  %v4877 = vld [vmem:[%s4842 + $0x110] sm:$0xff]
  %v4878 = vld [vmem:[%s4842 + $0x118] sm:$0xff]
  %v4879 = vld [vmem:[%s4842 + $0x120] sm:$0xff]
  %v4880 = vld [vmem:[%s4842 + $0x128] sm:$0xff]
  %v4881 = vld [vmem:[%s4842 + $0x130] sm:$0xff]
  %v4882 = vld [vmem:[%s4842 + $0x138] sm:$0xff]
  %v4883 = vld [vmem:[%s4842 + $0x140] sm:$0xff]
  %v4884 = vld [vmem:[%s4842 + $0x148] sm:$0xff]
  %v4885 = vld [vmem:[%s4842 + $0x150] sm:$0xff]
  %v4886 = vld [vmem:[%s4842 + $0x158] sm:$0xff]
  %v4887 = vld [vmem:[%s4842 + $0x160] sm:$0xff]
  %v4888 = vld [vmem:[%s4842 + $0x168] sm:$0xff]
  %v4889 = vld [vmem:[%s4842 + $0x170] sm:$0xff]
  %v4890 = vld [vmem:[%s4842 + $0x178] sm:$0xff]
  %v4891 = vld [vmem:[%s4842 + $0x180] sm:$0xff]
  %v4892 = vld [vmem:[%s4842 + $0x188] sm:$0xff]
  %v4893 = vld [vmem:[%s4842 + $0x190] sm:$0xff]
  %v4894 = vld [vmem:[%s4842 + $0x198] sm:$0xff]
  %v4895 = vld [vmem:[%s4842 + $0x1a0] sm:$0xff]
  %v4896 = vld [vmem:[%s4842 + $0x1a8] sm:$0xff]
  %v4897 = vld [vmem:[%s4842 + $0x1b0] sm:$0xff]
  %v4898 = vld [vmem:[%s4842 + $0x1b8] sm:$0xff]
  %v4899 = vld [vmem:[%s4842 + $0x1c0] sm:$0xff]
  %v4900 = vld [vmem:[%s4842 + $0x1c8] sm:$0xff]
  %v4901 = vld [vmem:[%s4842 + $0x1d0] sm:$0xff]
  %v4902 = vld [vmem:[%s4842 + $0x1d8] sm:$0xff]
  %v4903 = vld [vmem:[%s4842 + $0x1e0] sm:$0xff]
  %v4904 = vld [vmem:[%s4842 + $0x1e8] sm:$0xff]
  %v4905 = vld [vmem:[%s4842 + $0x1f0] sm:$0xff]
  %v4906 = vld [vmem:[%s4842 + $0x1f8] sm:$0xff]
  %v4908 = vlaneseq
  %v4909 = vshrl.u32 %v4908, 7
  %v4910 = vsub.s32 0, %v4909
  %v4911 = vrot.slane %v4841, %v4910
  %v4912 = vlaneseq
  %v4913 = vshrl.u32 %v4912, 7
  %v4914 = vsub.s32 1, %v4913
  %v4915 = vrot.slane %v4841, %v4914
  %4918 = vmatprep.subr.mxu0 %v4844
  %4919 = vmatpush1.msra.mxu0 %v4843
  %4920 = vmatprep.subr.mxu0 %v4846
  %4921 = vmatpush1.msra.mxu0 %v4845
  %4922 = vmatprep.subr.mxu0 %v4848
  %4923 = vmatpush1.msra.mxu0 %v4847
  %4924 = vmatprep.subr.mxu0 %v4850
  %4925 = vmatpush1.msra.mxu0 %v4849
  %4926 = vmatprep.subr.mxu0 %v4852
  %4927 = vmatpush1.msra.mxu0 %v4851
  %4928 = vmatprep.subr.mxu0 %v4854
  %4929 = vmatpush1.msra.mxu0 %v4853
  %4930 = vmatprep.subr.mxu0 %v4856
  %4931 = vmatpush1.msra.mxu0 %v4855
  %4932 = vmatprep.subr.mxu0 %v4858
  %4933 = vmatpush1.msra.mxu0 %v4857
  %4934 = vmatprep.subr.mxu0 %v4860
  %4935 = vmatpush1.msra.mxu0 %v4859
  %4936 = vmatprep.subr.mxu0 %v4862
  %4937 = vmatpush1.msra.mxu0 %v4861
  %4938 = vmatprep.subr.mxu0 %v4864
  %4939 = vmatpush1.msra.mxu0 %v4863
  %4940 = vmatprep.subr.mxu0 %v4866
  %4941 = vmatpush1.msra.mxu0 %v4865
  %4942 = vmatprep.subr.mxu0 %v4868
  %4943 = vmatpush1.msra.mxu0 %v4867
  %4944 = vmatprep.subr.mxu0 %v4870
  %4945 = vmatpush1.msra.mxu0 %v4869
  %4946 = vmatprep.subr.mxu0 %v4872
  %4947 = vmatpush1.msra.mxu0 %v4871
  %4948 = vmatprep.subr.mxu0 %v4874
  %4949 = vmatpush1.msra.mxu0 %v4873
  %4950 = vmatprep.subr.mxu0 %v4876
  %4951 = vmatpush1.msra.mxu0 %v4875
  %4952 = vmatprep.subr.mxu0 %v4878
  %4953 = vmatpush1.msra.mxu0 %v4877
  %4954 = vmatprep.subr.mxu0 %v4880
  %4955 = vmatpush1.msra.mxu0 %v4879
  %4956 = vmatprep.subr.mxu0 %v4882
  %4957 = vmatpush1.msra.mxu0 %v4881
  %4958 = vmatprep.subr.mxu0 %v4884
  %4959 = vmatpush1.msra.mxu0 %v4883
  %4960 = vmatprep.subr.mxu0 %v4886
  %4961 = vmatpush1.msra.mxu0 %v4885
  %4962 = vmatprep.subr.mxu0 %v4888
  %4963 = vmatpush1.msra.mxu0 %v4887
  %4964 = vmatprep.subr.mxu0 %v4890
  %4965 = vmatpush1.msra.mxu0 %v4889
  %4966 = vmatprep.subr.mxu0 %v4892
  %4967 = vmatpush1.msra.mxu0 %v4891
  %4968 = vmatprep.subr.mxu0 %v4894
  %4969 = vmatpush1.msra.mxu0 %v4893
  %4970 = vmatprep.subr.mxu0 %v4896
  %4971 = vmatpush1.msra.mxu0 %v4895
  %4972 = vmatprep.subr.mxu0 %v4898
  %4973 = vmatpush1.msra.mxu0 %v4897
  %4974 = vmatprep.subr.mxu0 %v4900
  %4975 = vmatpush1.msra.mxu0 %v4899
  %4976 = vmatprep.subr.mxu0 %v4902
  %4977 = vmatpush1.msra.mxu0 %v4901
  %4978 = vmatprep.subr.mxu0 %v4904
  %4979 = vmatpush1.msra.mxu0 %v4903
  %4980 = vmatprep.subr.mxu0 %v4906
  %4981 = vmatpush1.msra.mxu0 %v4905
  %4982 = vmatprep.mubr.f32.mxu0 %v4523
  %4983 = vmatmul.mubr.f32.gmra.mrb[0].mxu0 %v4521
  %v4984 = vpop.f32.mrb[0].mxu0
  %v4985 = vadd.f32 %v4911, %v4984
  %v4986 = vpop.f32.mrb[0].mxu0
  %v4987 = vadd.f32 %v4915, %v4986
  %4988 = vmatprep.mubr.f32.mxu0 %v4529
  %4989 = vmatmul.mubr.f32.gmra.mrb[0].mxu0 %v4527
  %v4990 = vpop.f32.mrb[0].mxu0
  %v4991 = vadd.f32 %v4911, %v4990
  %v4992 = vpop.f32.mrb[0].mxu0
  %v4993 = vadd.f32 %v4915, %v4992
  %4994 = vmatprep.mubr.f32.mxu0 %v4535
  %4995 = vmatmul.mubr.f32.gmra.mrb[0].mxu0 %v4533
  %v4996 = vpop.f32.mrb[0].mxu0
  %v4997 = vadd.f32 %v4911, %v4996
  %v4998 = vpop.f32.mrb[0].mxu0
  %v4999 = vadd.f32 %v4915, %v4998
  %5000 = vmatprep.mubr.f32.mxu0 %v4541
  %5001 = vmatmul.mubr.f32.gmra.mrb[0].mxu0 %v4539
  %v5002 = vpop.f32.mrb[0].mxu0
  %v5003 = vadd.f32 %v4911, %v5002
  %v5004 = vpop.f32.mrb[0].mxu0
  %v5005 = vadd.f32 %v4915, %v5004
  %5006 = vmatprep.mubr.f32.mxu0 %v4547
  %5007 = vmatmul.mubr.f32.gmra.mrb[0].mxu0 %v4545
  %v5008 = vpop.f32.mrb[0].mxu0
  %v5009 = vadd.f32 %v4911, %v5008
  %v5010 = vpop.f32.mrb[0].mxu0
  %v5011 = vadd.f32 %v4915, %v5010
  %5012 = vmatprep.mubr.f32.mxu0 %v4553
  %5013 = vmatmul.mubr.f32.gmra.mrb[0].mxu0 %v4551
  %v5014 = vpop.f32.mrb[0].mxu0
  %v5015 = vadd.f32 %v4911, %v5014
  %v5016 = vpop.f32.mrb[0].mxu0
  %v5017 = vadd.f32 %v4915, %v5016
  %5018 = vmatprep.mubr.f32.mxu0 %v4559
  %5019 = vmatmul.mubr.f32.gmra.mrb[0].mxu0 %v4557
  %v5020 = vpop.f32.mrb[0].mxu0
  %v5021 = vadd.f32 %v4911, %v5020
  %v5022 = vpop.f32.mrb[0].mxu0
  %v5023 = vadd.f32 %v4915, %v5022
  %5024 = vmatprep.mubr.f32.mxu0 %v4565
  %5025 = vmatmul.mubr.f32.gmra.mrb[0].mxu0 %v4563
  %v5026 = vpop.f32.mrb[0].mxu0
  %v5027 = vadd.f32 %v4911, %v5026
  %v5028 = vpop.f32.mrb[0].mxu0
  %v5029 = vadd.f32 %v4915, %v5028
  %5030 = vmatprep.mubr.f32.mxu0 %v4571
  %5031 = vmatmul.mubr.f32.gmra.mrb[0].mxu0 %v4569
  %v5032 = vpop.f32.mrb[0].mxu0
  %v5033 = vadd.f32 %v4911, %v5032
  %v5034 = vpop.f32.mrb[0].mxu0
  %v5035 = vadd.f32 %v4915, %v5034
  %5036 = vmatprep.mubr.f32.mxu0 %v4577
  %5037 = vmatmul.mubr.f32.gmra.mrb[0].mxu0 %v4575
  %v5038 = vpop.f32.mrb[0].mxu0
  %v5039 = vadd.f32 %v4911, %v5038
  %v5040 = vpop.f32.mrb[0].mxu0
  %v5041 = vadd.f32 %v4915, %v5040
  %5042 = vmatprep.mubr.f32.mxu0 %v4583
  %5043 = vmatmul.mubr.f32.gmra.mrb[0].mxu0 %v4581
  %v5044 = vpop.f32.mrb[0].mxu0
  %v5045 = vadd.f32 %v4911, %v5044
  %v5046 = vpop.f32.mrb[0].mxu0
  %v5047 = vadd.f32 %v4915, %v5046
  %5048 = vmatprep.mubr.f32.mxu0 %v4589
  %5049 = vmatmul.mubr.f32.gmra.mrb[0].mxu0 %v4587
  %v5050 = vpop.f32.mrb[0].mxu0
  %v5051 = vadd.f32 %v4911, %v5050
  %v5052 = vpop.f32.mrb[0].mxu0
  %v5053 = vadd.f32 %v4915, %v5052
  %5054 = vmatprep.mubr.f32.mxu0 %v4595
  %5055 = vmatmul.mubr.f32.gmra.mrb[0].mxu0 %v4593
  %v5056 = vpop.f32.mrb[0].mxu0
  %v5057 = vadd.f32 %v4911, %v5056
  %v5058 = vpop.f32.mrb[0].mxu0
  %v5059 = vadd.f32 %v4915, %v5058
  %5060 = vmatprep.mubr.f32.mxu0 %v4601
  %5061 = vmatmul.mubr.f32.gmra.mrb[0].mxu0 %v4599
  %v5062 = vpop.f32.mrb[0].mxu0
  %v5063 = vadd.f32 %v4911, %v5062
  %v5064 = vpop.f32.mrb[0].mxu0
  %v5065 = vadd.f32 %v4915, %v5064
  %5066 = vmatprep.mubr.f32.mxu0 %v4607
  %5067 = vmatmul.mubr.f32.gmra.mrb[0].mxu0 %v4605
  %v5068 = vpop.f32.mrb[0].mxu0
  %v5069 = vadd.f32 %v4911, %v5068
  %v5070 = vpop.f32.mrb[0].mxu0
  %v5071 = vadd.f32 %v4915, %v5070
  %5072 = vmatprep.mubr.f32.mxu0 %v4613
  %5073 = vmatmul.mubr.f32.gmra.mrb[0].mxu0 %v4611
  %v5074 = vpop.f32.mrb[0].mxu0
  %v5075 = vadd.f32 %v4911, %v5074
  %v5076 = vpop.f32.mrb[0].mxu0
  %v5077 = vadd.f32 %v4915, %v5076
  %5078 = vdwg.mxu0
  %v5079 = vmax.f32 %v4985, 0.0
  %v5080 = vmax.f32 %v4987, 0.0
  %v5081 = vmax.f32 %v4991, 0.0
  %v5082 = vmax.f32 %v4993, 0.0
  %v5083 = vmax.f32 %v4997, 0.0
  %v5084 = vmax.f32 %v4999, 0.0
  %v5085 = vmax.f32 %v5003, 0.0
  %v5086 = vmax.f32 %v5005, 0.0
  %v5087 = vmax.f32 %v5009, 0.0
  %v5088 = vmax.f32 %v5011, 0.0
  %v5089 = vmax.f32 %v5015, 0.0
  %v5090 = vmax.f32 %v5017, 0.0
  %v5091 = vmax.f32 %v5021, 0.0
  %v5092 = vmax.f32 %v5023, 0.0
  %v5093 = vmax.f32 %v5027, 0.0
  %v5094 = vmax.f32 %v5029, 0.0
  %v5095 = vmax.f32 %v5033, 0.0
  %v5096 = vmax.f32 %v5035, 0.0
  %v5097 = vmax.f32 %v5039, 0.0
  %v5098 = vmax.f32 %v5041, 0.0
  %v5099 = vmax.f32 %v5045, 0.0
  %v5100 = vmax.f32 %v5047, 0.0
  %v5101 = vmax.f32 %v5051, 0.0
  %v5102 = vmax.f32 %v5053, 0.0
  %v5103 = vmax.f32 %v5057, 0.0
  %v5104 = vmax.f32 %v5059, 0.0
  %v5105 = vmax.f32 %v5063, 0.0
  %v5106 = vmax.f32 %v5065, 0.0
  %v5107 = vmax.f32 %v5069, 0.0
  %v5108 = vmax.f32 %v5071, 0.0
  %v5109 = vmax.f32 %v5075, 0.0
  %v5110 = vmax.f32 %v5077, 0.0
  %s5111 = scalar_lea.vmem %s12, 1024
  %v5112 = vld [vmem:[%s5111] sm:$0xff]
  %v5113 = vld [vmem:[%s5111 + $0x8] sm:$0xff]
  %v5114 = vld [vmem:[%s5111 + $0x10] sm:$0xff]
  %v5115 = vld [vmem:[%s5111 + $0x18] sm:$0xff]
  %v5116 = vld [vmem:[%s5111 + $0x20] sm:$0xff]
  %v5117 = vld [vmem:[%s5111 + $0x28] sm:$0xff]
  %v5118 = vld [vmem:[%s5111 + $0x30] sm:$0xff]
  %v5119 = vld [vmem:[%s5111 + $0x38] sm:$0xff]
  %v5120 = vld [vmem:[%s5111 + $0x40] sm:$0xff]
  %v5121 = vld [vmem:[%s5111 + $0x48] sm:$0xff]
  %v5122 = vld [vmem:[%s5111 + $0x50] sm:$0xff]
  %v5123 = vld [vmem:[%s5111 + $0x58] sm:$0xff]
  %v5124 = vld [vmem:[%s5111 + $0x60] sm:$0xff]
  %v5125 = vld [vmem:[%s5111 + $0x68] sm:$0xff]
  %v5126 = vld [vmem:[%s5111 + $0x70] sm:$0xff]
  %v5127 = vld [vmem:[%s5111 + $0x78] sm:$0xff]
  %v5128 = vld [vmem:[%s5111 + $0x80] sm:$0xff]
  %v5129 = vld [vmem:[%s5111 + $0x88] sm:$0xff]
  %v5130 = vld [vmem:[%s5111 + $0x90] sm:$0xff]
  %v5131 = vld [vmem:[%s5111 + $0x98] sm:$0xff]
  %v5132 = vld [vmem:[%s5111 + $0xa0] sm:$0xff]
  %v5133 = vld [vmem:[%s5111 + $0xa8] sm:$0xff]
  %v5134 = vld [vmem:[%s5111 + $0xb0] sm:$0xff]
  %v5135 = vld [vmem:[%s5111 + $0xb8] sm:$0xff]
  %v5136 = vld [vmem:[%s5111 + $0xc0] sm:$0xff]
  %v5137 = vld [vmem:[%s5111 + $0xc8] sm:$0xff]
  %v5138 = vld [vmem:[%s5111 + $0xd0] sm:$0xff]
  %v5139 = vld [vmem:[%s5111 + $0xd8] sm:$0xff]
  %v5140 = vld [vmem:[%s5111 + $0xe0] sm:$0xff]
  %v5141 = vld [vmem:[%s5111 + $0xe8] sm:$0xff]
  %v5142 = vld [vmem:[%s5111 + $0xf0] sm:$0xff]
  %v5143 = vld [vmem:[%s5111 + $0xf8] sm:$0xff]
  %v5144 = vld [vmem:[%s5111 + $0x100] sm:$0xff]
  %v5145 = vld [vmem:[%s5111 + $0x108] sm:$0xff]
  %v5146 = vld [vmem:[%s5111 + $0x110] sm:$0xff]
  %v5147 = vld [vmem:[%s5111 + $0x118] sm:$0xff]
  %v5148 = vld [vmem:[%s5111 + $0x120] sm:$0xff]
  %v5149 = vld [vmem:[%s5111 + $0x128] sm:$0xff]
  %v5150 = vld [vmem:[%s5111 + $0x130] sm:$0xff]
  %v5151 = vld [vmem:[%s5111 + $0x138] sm:$0xff]
  %v5152 = vld [vmem:[%s5111 + $0x140] sm:$0xff]
  %v5153 = vld [vmem:[%s5111 + $0x148] sm:$0xff]
  %v5154 = vld [vmem:[%s5111 + $0x150] sm:$0xff]
  %v5155 = vld [vmem:[%s5111 + $0x158] sm:$0xff]
  %v5156 = vld [vmem:[%s5111 + $0x160] sm:$0xff]
  %v5157 = vld [vmem:[%s5111 + $0x168] sm:$0xff]
  %v5158 = vld [vmem:[%s5111 + $0x170] sm:$0xff]
  %v5159 = vld [vmem:[%s5111 + $0x178] sm:$0xff]
  %v5160 = vld [vmem:[%s5111 + $0x180] sm:$0xff]
  %v5161 = vld [vmem:[%s5111 + $0x188] sm:$0xff]
  %v5162 = vld [vmem:[%s5111 + $0x190] sm:$0xff]
  %v5163 = vld [vmem:[%s5111 + $0x198] sm:$0xff]
  %v5164 = vld [vmem:[%s5111 + $0x1a0] sm:$0xff]
  %v5165 = vld [vmem:[%s5111 + $0x1a8] sm:$0xff]
  %v5166 = vld [vmem:[%s5111 + $0x1b0] sm:$0xff]
  %v5167 = vld [vmem:[%s5111 + $0x1b8] sm:$0xff]
  %v5168 = vld [vmem:[%s5111 + $0x1c0] sm:$0xff]
  %v5169 = vld [vmem:[%s5111 + $0x1c8] sm:$0xff]
  %v5170 = vld [vmem:[%s5111 + $0x1d0] sm:$0xff]
  %v5171 = vld [vmem:[%s5111 + $0x1d8] sm:$0xff]
  %v5172 = vld [vmem:[%s5111 + $0x1e0] sm:$0xff]
  %v5173 = vld [vmem:[%s5111 + $0x1e8] sm:$0xff]
  %v5174 = vld [vmem:[%s5111 + $0x1f0] sm:$0xff]
  %v5175 = vld [vmem:[%s5111 + $0x1f8] sm:$0xff]
  %v5176 = vld [vmem:[%s12] sm:$0xff]
  %v5177 = vld [vmem:[%s12 + $0x8] sm:$0xff]
  %v5178 = vld [vmem:[%s12 + $0x10] sm:$0xff]
  %v5179 = vld [vmem:[%s12 + $0x18] sm:$0xff]
  %v5180 = vld [vmem:[%s12 + $0x20] sm:$0xff]
  %v5181 = vld [vmem:[%s12 + $0x28] sm:$0xff]
  %v5182 = vld [vmem:[%s12 + $0x30] sm:$0xff]
  %v5183 = vld [vmem:[%s12 + $0x38] sm:$0xff]
  %v5184 = vld [vmem:[%s12 + $0x40] sm:$0xff]
  %v5185 = vld [vmem:[%s12 + $0x48] sm:$0xff]
  %v5186 = vld [vmem:[%s12 + $0x50] sm:$0xff]
  %v5187 = vld [vmem:[%s12 + $0x58] sm:$0xff]
  %v5188 = vld [vmem:[%s12 + $0x60] sm:$0xff]
  %v5189 = vld [vmem:[%s12 + $0x68] sm:$0xff]
  %v5190 = vld [vmem:[%s12 + $0x70] sm:$0xff]
  %v5191 = vld [vmem:[%s12 + $0x78] sm:$0xff]
  %v5192 = vld [vmem:[%s12 + $0x80] sm:$0xff]
  %v5193 = vld [vmem:[%s12 + $0x88] sm:$0xff]
  %v5194 = vld [vmem:[%s12 + $0x90] sm:$0xff]
  %v5195 = vld [vmem:[%s12 + $0x98] sm:$0xff]
  %v5196 = vld [vmem:[%s12 + $0xa0] sm:$0xff]
  %v5197 = vld [vmem:[%s12 + $0xa8] sm:$0xff]
  %v5198 = vld [vmem:[%s12 + $0xb0] sm:$0xff]
  %v5199 = vld [vmem:[%s12 + $0xb8] sm:$0xff]
  %v5200 = vld [vmem:[%s12 + $0xc0] sm:$0xff]
  %v5201 = vld [vmem:[%s12 + $0xc8] sm:$0xff]
  %v5202 = vld [vmem:[%s12 + $0xd0] sm:$0xff]
  %v5203 = vld [vmem:[%s12 + $0xd8] sm:$0xff]
  %v5204 = vld [vmem:[%s12 + $0xe0] sm:$0xff]
  %v5205 = vld [vmem:[%s12 + $0xe8] sm:$0xff]
  %v5206 = vld [vmem:[%s12 + $0xf0] sm:$0xff]
  %v5207 = vld [vmem:[%s12 + $0xf8] sm:$0xff]
  %v5208 = vld [vmem:[%s12 + $0x100] sm:$0xff]
  %v5209 = vld [vmem:[%s12 + $0x108] sm:$0xff]
  %v5210 = vld [vmem:[%s12 + $0x110] sm:$0xff]
  %v5211 = vld [vmem:[%s12 + $0x118] sm:$0xff]
  %v5212 = vld [vmem:[%s12 + $0x120] sm:$0xff]
  %v5213 = vld [vmem:[%s12 + $0x128] sm:$0xff]
  %v5214 = vld [vmem:[%s12 + $0x130] sm:$0xff]
  %v5215 = vld [vmem:[%s12 + $0x138] sm:$0xff]
  %v5216 = vld [vmem:[%s12 + $0x140] sm:$0xff]
  %v5217 = vld [vmem:[%s12 + $0x148] sm:$0xff]
  %v5218 = vld [vmem:[%s12 + $0x150] sm:$0xff]
  %v5219 = vld [vmem:[%s12 + $0x158] sm:$0xff]
  %v5220 = vld [vmem:[%s12 + $0x160] sm:$0xff]
  %v5221 = vld [vmem:[%s12 + $0x168] sm:$0xff]
  %v5222 = vld [vmem:[%s12 + $0x170] sm:$0xff]
  %v5223 = vld [vmem:[%s12 + $0x178] sm:$0xff]
  %v5224 = vld [vmem:[%s12 + $0x180] sm:$0xff]
  %v5225 = vld [vmem:[%s12 + $0x188] sm:$0xff]
  %v5226 = vld [vmem:[%s12 + $0x190] sm:$0xff]
  %v5227 = vld [vmem:[%s12 + $0x198] sm:$0xff]
  %v5228 = vld [vmem:[%s12 + $0x1a0] sm:$0xff]
  %v5229 = vld [vmem:[%s12 + $0x1a8] sm:$0xff]
  %v5230 = vld [vmem:[%s12 + $0x1b0] sm:$0xff]
  %v5231 = vld [vmem:[%s12 + $0x1b8] sm:$0xff]
  %v5232 = vld [vmem:[%s12 + $0x1c0] sm:$0xff]
  %v5233 = vld [vmem:[%s12 + $0x1c8] sm:$0xff]
  %v5234 = vld [vmem:[%s12 + $0x1d0] sm:$0xff]
  %v5235 = vld [vmem:[%s12 + $0x1d8] sm:$0xff]
  %v5236 = vld [vmem:[%s12 + $0x1e0] sm:$0xff]
  %v5237 = vld [vmem:[%s12 + $0x1e8] sm:$0xff]
  %v5238 = vld [vmem:[%s12 + $0x1f0] sm:$0xff]
  %v5239 = vld [vmem:[%s12 + $0x1f8] sm:$0xff]
  %5240 = vmatprep.subr.mxu0 %v5177
  %5241 = vmatpush1.msra.mxu0 %v5176
  %5242 = vmatprep.subr.mxu0 %v5179
  %5243 = vmatpush1.msra.mxu0 %v5178
  %5244 = vmatprep.subr.mxu0 %v5181
  %5245 = vmatpush1.msra.mxu0 %v5180
  %5246 = vmatprep.subr.mxu0 %v5183
  %5247 = vmatpush1.msra.mxu0 %v5182
  %5248 = vmatprep.subr.mxu0 %v5185
  %5249 = vmatpush1.msra.mxu0 %v5184
  %5250 = vmatprep.subr.mxu0 %v5187
  %5251 = vmatpush1.msra.mxu0 %v5186
  %5252 = vmatprep.subr.mxu0 %v5189
  %5253 = vmatpush1.msra.mxu0 %v5188
  %5254 = vmatprep.subr.mxu0 %v5191
  %5255 = vmatpush1.msra.mxu0 %v5190
  %5256 = vmatprep.subr.mxu0 %v5193
  %5257 = vmatpush1.msra.mxu0 %v5192
  %5258 = vmatprep.subr.mxu0 %v5195
  %5259 = vmatpush1.msra.mxu0 %v5194
  %5260 = vmatprep.subr.mxu0 %v5197
  %5261 = vmatpush1.msra.mxu0 %v5196
  %5262 = vmatprep.subr.mxu0 %v5199
  %5263 = vmatpush1.msra.mxu0 %v5198
  %5264 = vmatprep.subr.mxu0 %v5201
  %5265 = vmatpush1.msra.mxu0 %v5200
  %5266 = vmatprep.subr.mxu0 %v5203
  %5267 = vmatpush1.msra.mxu0 %v5202
  %5268 = vmatprep.subr.mxu0 %v5205
  %5269 = vmatpush1.msra.mxu0 %v5204
  %5270 = vmatprep.subr.mxu0 %v5207
  %5271 = vmatpush1.msra.mxu0 %v5206
  %5272 = vmatprep.subr.mxu0 %v5209
  %5273 = vmatpush1.msra.mxu0 %v5208
  %5274 = vmatprep.subr.mxu0 %v5211
  %5275 = vmatpush1.msra.mxu0 %v5210
  %5276 = vmatprep.subr.mxu0 %v5213
  %5277 = vmatpush1.msra.mxu0 %v5212
  %5278 = vmatprep.subr.mxu0 %v5215
  %5279 = vmatpush1.msra.mxu0 %v5214
  %5280 = vmatprep.subr.mxu0 %v5217
  %5281 = vmatpush1.msra.mxu0 %v5216
  %5282 = vmatprep.subr.mxu0 %v5219
  %5283 = vmatpush1.msra.mxu0 %v5218
  %5284 = vmatprep.subr.mxu0 %v5221
  %5285 = vmatpush1.msra.mxu0 %v5220
  %5286 = vmatprep.subr.mxu0 %v5223
  %5287 = vmatpush1.msra.mxu0 %v5222
  %5288 = vmatprep.subr.mxu0 %v5225
  %5289 = vmatpush1.msra.mxu0 %v5224
  %5290 = vmatprep.subr.mxu0 %v5227
  %5291 = vmatpush1.msra.mxu0 %v5226
  %5292 = vmatprep.subr.mxu0 %v5229
  %5293 = vmatpush1.msra.mxu0 %v5228
  %5294 = vmatprep.subr.mxu0 %v5231
  %5295 = vmatpush1.msra.mxu0 %v5230
  %5296 = vmatprep.subr.mxu0 %v5233
  %5297 = vmatpush1.msra.mxu0 %v5232
  %5298 = vmatprep.subr.mxu0 %v5235
  %5299 = vmatpush1.msra.mxu0 %v5234
  %5300 = vmatprep.subr.mxu0 %v5237
  %5301 = vmatpush1.msra.mxu0 %v5236
  %5302 = vmatprep.subr.mxu0 %v5239
  %5303 = vmatpush1.msra.mxu0 %v5238
  %5304 = vmatprep.mubr.f32.mxu0 %v4749
  %5305 = vmatmul.mubr.f32.gmra.mrb[0].mxu0 %v4747
  %v5306 = vpop.f32.mrb[0].mxu0
  %v5307 = vadd.f32 0.0, %v5306
  %v5308 = vpop.f32.mrb[0].mxu0
  %v5309 = vadd.f32 0.0, %v5308
  %5310 = vmatprep.mubr.f32.mxu0 %v4755
  %5311 = vmatmul.mubr.f32.gmra.mrb[0].mxu0 %v4753
  %v5312 = vpop.f32.mrb[0].mxu0
  %v5313 = vadd.f32 0.0, %v5312
  %v5314 = vpop.f32.mrb[0].mxu0
  %v5315 = vadd.f32 0.0, %v5314
  %5316 = vmatprep.mubr.f32.mxu0 %v4761
  %5317 = vmatmul.mubr.f32.gmra.mrb[0].mxu0 %v4759
  %v5318 = vpop.f32.mrb[0].mxu0
  %v5319 = vadd.f32 0.0, %v5318
  %v5320 = vpop.f32.mrb[0].mxu0
  %v5321 = vadd.f32 0.0, %v5320
  %5322 = vmatprep.mubr.f32.mxu0 %v4767
  %5323 = vmatmul.mubr.f32.gmra.mrb[0].mxu0 %v4765
  %v5324 = vpop.f32.mrb[0].mxu0
  %v5325 = vadd.f32 0.0, %v5324
  %v5326 = vpop.f32.mrb[0].mxu0
  %v5327 = vadd.f32 0.0, %v5326
  %5328 = vmatprep.mubr.f32.mxu0 %v4773
  %5329 = vmatmul.mubr.f32.gmra.mrb[0].mxu0 %v4771
  %v5330 = vpop.f32.mrb[0].mxu0
  %v5331 = vadd.f32 0.0, %v5330
  %v5332 = vpop.f32.mrb[0].mxu0
  %v5333 = vadd.f32 0.0, %v5332
  %5334 = vmatprep.mubr.f32.mxu0 %v4779
  %5335 = vmatmul.mubr.f32.gmra.mrb[0].mxu0 %v4777
  %v5336 = vpop.f32.mrb[0].mxu0
  %v5337 = vadd.f32 0.0, %v5336
  %v5338 = vpop.f32.mrb[0].mxu0
  %v5339 = vadd.f32 0.0, %v5338
  %5340 = vmatprep.mubr.f32.mxu0 %v4785
  %5341 = vmatmul.mubr.f32.gmra.mrb[0].mxu0 %v4783
  %v5342 = vpop.f32.mrb[0].mxu0
  %v5343 = vadd.f32 0.0, %v5342
  %v5344 = vpop.f32.mrb[0].mxu0
  %v5345 = vadd.f32 0.0, %v5344
  %5346 = vmatprep.mubr.f32.mxu0 %v4791
  %5347 = vmatmul.mubr.f32.gmra.mrb[0].mxu0 %v4789
  %v5348 = vpop.f32.mrb[0].mxu0
  %v5349 = vadd.f32 0.0, %v5348
  %v5350 = vpop.f32.mrb[0].mxu0
  %v5351 = vadd.f32 0.0, %v5350
  %5352 = vmatprep.mubr.f32.mxu0 %v4797
  %5353 = vmatmul.mubr.f32.gmra.mrb[0].mxu0 %v4795
  %v5354 = vpop.f32.mrb[0].mxu0
  %v5355 = vadd.f32 0.0, %v5354
  %v5356 = vpop.f32.mrb[0].mxu0
  %v5357 = vadd.f32 0.0, %v5356
  %5358 = vmatprep.mubr.f32.mxu0 %v4803
  %5359 = vmatmul.mubr.f32.gmra.mrb[0].mxu0 %v4801
  %v5360 = vpop.f32.mrb[0].mxu0
  %v5361 = vadd.f32 0.0, %v5360
  %v5362 = vpop.f32.mrb[0].mxu0
  %v5363 = vadd.f32 0.0, %v5362
  %5364 = vmatprep.mubr.f32.mxu0 %v4809
  %5365 = vmatmul.mubr.f32.gmra.mrb[0].mxu0 %v4807
  %v5366 = vpop.f32.mrb[0].mxu0
  %v5367 = vadd.f32 0.0, %v5366
  %v5368 = vpop.f32.mrb[0].mxu0
  %v5369 = vadd.f32 0.0, %v5368
  %5370 = vmatprep.mubr.f32.mxu0 %v4815
  %5371 = vmatmul.mubr.f32.gmra.mrb[0].mxu0 %v4813
  %v5372 = vpop.f32.mrb[0].mxu0
  %v5373 = vadd.f32 0.0, %v5372
  %v5374 = vpop.f32.mrb[0].mxu0
  %v5375 = vadd.f32 0.0, %v5374
  %5376 = vmatprep.mubr.f32.mxu0 %v4821
  %5377 = vmatmul.mubr.f32.gmra.mrb[0].mxu0 %v4819
  %v5378 = vpop.f32.mrb[0].mxu0
  %v5379 = vadd.f32 0.0, %v5378
  %v5380 = vpop.f32.mrb[0].mxu0
  %v5381 = vadd.f32 0.0, %v5380
  %5382 = vmatprep.mubr.f32.mxu0 %v4827
  %5383 = vmatmul.mubr.f32.gmra.mrb[0].mxu0 %v4825
  %v5384 = vpop.f32.mrb[0].mxu0
  %v5385 = vadd.f32 0.0, %v5384
  %v5386 = vpop.f32.mrb[0].mxu0
  %v5387 = vadd.f32 0.0, %v5386
  %5388 = vmatprep.mubr.f32.mxu0 %v4833
  %5389 = vmatmul.mubr.f32.gmra.mrb[0].mxu0 %v4831
  %v5390 = vpop.f32.mrb[0].mxu0
  %v5391 = vadd.f32 0.0, %v5390
  %v5392 = vpop.f32.mrb[0].mxu0
  %v5393 = vadd.f32 0.0, %v5392
  %5394 = vmatprep.mubr.f32.mxu0 %v4839
  %5395 = vmatmul.mubr.f32.gmra.mrb[0].mxu0 %v4837
  %v5396 = vpop.f32.mrb[0].mxu0
  %v5397 = vadd.f32 0.0, %v5396
  %v5398 = vpop.f32.mrb[0].mxu0
  %v5399 = vadd.f32 0.0, %v5398
  %5400 = vdwg.mxu0
  %5401 = vmatprep.subr.mxu0 %v5113
  %5402 = vmatpush1.msra.mxu0 %v5112
  %5403 = vmatprep.subr.mxu0 %v5115
  %5404 = vmatpush1.msra.mxu0 %v5114
  %5405 = vmatprep.subr.mxu0 %v5117
  %5406 = vmatpush1.msra.mxu0 %v5116
  %5407 = vmatprep.subr.mxu0 %v5119
  %5408 = vmatpush1.msra.mxu0 %v5118
  %5409 = vmatprep.subr.mxu0 %v5121
  %5410 = vmatpush1.msra.mxu0 %v5120
  %5411 = vmatprep.subr.mxu0 %v5123
  %5412 = vmatpush1.msra.mxu0 %v5122
  %5413 = vmatprep.subr.mxu0 %v5125
  %5414 = vmatpush1.msra.mxu0 %v5124
  %5415 = vmatprep.subr.mxu0 %v5127
  %5416 = vmatpush1.msra.mxu0 %v5126
  %5417 = vmatprep.subr.mxu0 %v5129
  %5418 = vmatpush1.msra.mxu0 %v5128
  %5419 = vmatprep.subr.mxu0 %v5131
  %5420 = vmatpush1.msra.mxu0 %v5130
  %5421 = vmatprep.subr.mxu0 %v5133
  %5422 = vmatpush1.msra.mxu0 %v5132
  %5423 = vmatprep.subr.mxu0 %v5135
  %5424 = vmatpush1.msra.mxu0 %v5134
  %5425 = vmatprep.subr.mxu0 %v5137
  %5426 = vmatpush1.msra.mxu0 %v5136
  %5427 = vmatprep.subr.mxu0 %v5139
  %5428 = vmatpush1.msra.mxu0 %v5138
  %5429 = vmatprep.subr.mxu0 %v5141
  %5430 = vmatpush1.msra.mxu0 %v5140
  %5431 = vmatprep.subr.mxu0 %v5143
  %5432 = vmatpush1.msra.mxu0 %v5142
  %5433 = vmatprep.subr.mxu0 %v5145
  %5434 = vmatpush1.msra.mxu0 %v5144
  %5435 = vmatprep.subr.mxu0 %v5147
  %5436 = vmatpush1.msra.mxu0 %v5146
  %5437 = vmatprep.subr.mxu0 %v5149
  %5438 = vmatpush1.msra.mxu0 %v5148
  %5439 = vmatprep.subr.mxu0 %v5151
  %5440 = vmatpush1.msra.mxu0 %v5150
  %5441 = vmatprep.subr.mxu0 %v5153
  %5442 = vmatpush1.msra.mxu0 %v5152
  %5443 = vmatprep.subr.mxu0 %v5155
  %5444 = vmatpush1.msra.mxu0 %v5154
  %5445 = vmatprep.subr.mxu0 %v5157
  %5446 = vmatpush1.msra.mxu0 %v5156
  %5447 = vmatprep.subr.mxu0 %v5159
  %5448 = vmatpush1.msra.mxu0 %v5158
  %5449 = vmatprep.subr.mxu0 %v5161
  %5450 = vmatpush1.msra.mxu0 %v5160
  %5451 = vmatprep.subr.mxu0 %v5163
  %5452 = vmatpush1.msra.mxu0 %v5162
  %5453 = vmatprep.subr.mxu0 %v5165
  %5454 = vmatpush1.msra.mxu0 %v5164
  %5455 = vmatprep.subr.mxu0 %v5167
  %5456 = vmatpush1.msra.mxu0 %v5166
  %5457 = vmatprep.subr.mxu0 %v5169
  %5458 = vmatpush1.msra.mxu0 %v5168
  %5459 = vmatprep.subr.mxu0 %v5171
  %5460 = vmatpush1.msra.mxu0 %v5170
  %5461 = vmatprep.subr.mxu0 %v5173
  %5462 = vmatpush1.msra.mxu0 %v5172
  %5463 = vmatprep.subr.mxu0 %v5175
  %5464 = vmatpush1.msra.mxu0 %v5174
  %5465 = vmatprep.mubr.f32.mxu0 %v4523
  %5466 = vmatmul.mubr.f32.gmra.mrb[0].mxu0 %v4521
  %v5467 = vpop.f32.mrb[0].mxu0
  %v5468 = vadd.f32 %v5307, %v5467
  %v5469 = vpop.f32.mrb[0].mxu0
  %v5470 = vadd.f32 %v5309, %v5469
  %5471 = vmatprep.mubr.f32.mxu0 %v4529
  %5472 = vmatmul.mubr.f32.gmra.mrb[0].mxu0 %v4527
  %v5473 = vpop.f32.mrb[0].mxu0
  %v5474 = vadd.f32 %v5313, %v5473
  %v5475 = vpop.f32.mrb[0].mxu0
  %v5476 = vadd.f32 %v5315, %v5475
  %5477 = vmatprep.mubr.f32.mxu0 %v4535
  %5478 = vmatmul.mubr.f32.gmra.mrb[0].mxu0 %v4533
  %v5479 = vpop.f32.mrb[0].mxu0
  %v5480 = vadd.f32 %v5319, %v5479
  %v5481 = vpop.f32.mrb[0].mxu0
  %v5482 = vadd.f32 %v5321, %v5481
  %5483 = vmatprep.mubr.f32.mxu0 %v4541
  %5484 = vmatmul.mubr.f32.gmra.mrb[0].mxu0 %v4539
  %v5485 = vpop.f32.mrb[0].mxu0
  %v5486 = vadd.f32 %v5325, %v5485
  %v5487 = vpop.f32.mrb[0].mxu0
  %v5488 = vadd.f32 %v5327, %v5487
  %5489 = vmatprep.mubr.f32.mxu0 %v4547
  %5490 = vmatmul.mubr.f32.gmra.mrb[0].mxu0 %v4545
  %v5491 = vpop.f32.mrb[0].mxu0
  %v5492 = vadd.f32 %v5331, %v5491
  %v5493 = vpop.f32.mrb[0].mxu0
  %v5494 = vadd.f32 %v5333, %v5493
  %5495 = vmatprep.mubr.f32.mxu0 %v4553
  %5496 = vmatmul.mubr.f32.gmra.mrb[0].mxu0 %v4551
  %v5497 = vpop.f32.mrb[0].mxu0
  %v5498 = vadd.f32 %v5337, %v5497
  %v5499 = vpop.f32.mrb[0].mxu0
  %v5500 = vadd.f32 %v5339, %v5499
  %5501 = vmatprep.mubr.f32.mxu0 %v4559
  %5502 = vmatmul.mubr.f32.gmra.mrb[0].mxu0 %v4557
  %v5503 = vpop.f32.mrb[0].mxu0
  %v5504 = vadd.f32 %v5343, %v5503
  %v5505 = vpop.f32.mrb[0].mxu0
  %v5506 = vadd.f32 %v5345, %v5505
  %5507 = vmatprep.mubr.f32.mxu0 %v4565
  %5508 = vmatmul.mubr.f32.gmra.mrb[0].mxu0 %v4563
  %v5509 = vpop.f32.mrb[0].mxu0
  %v5510 = vadd.f32 %v5349, %v5509
  %v5511 = vpop.f32.mrb[0].mxu0
  %v5512 = vadd.f32 %v5351, %v5511
  %5513 = vmatprep.mubr.f32.mxu0 %v4571
  %5514 = vmatmul.mubr.f32.gmra.mrb[0].mxu0 %v4569
  %v5515 = vpop.f32.mrb[0].mxu0
  %v5516 = vadd.f32 %v5355, %v5515
  %v5517 = vpop.f32.mrb[0].mxu0
  %v5518 = vadd.f32 %v5357, %v5517
  %5519 = vmatprep.mubr.f32.mxu0 %v4577
  %5520 = vmatmul.mubr.f32.gmra.mrb[0].mxu0 %v4575
  %v5521 = vpop.f32.mrb[0].mxu0
  %v5522 = vadd.f32 %v5361, %v5521
  %v5523 = vpop.f32.mrb[0].mxu0
  %v5524 = vadd.f32 %v5363, %v5523
  %5525 = vmatprep.mubr.f32.mxu0 %v4583
  %5526 = vmatmul.mubr.f32.gmra.mrb[0].mxu0 %v4581
  %v5527 = vpop.f32.mrb[0].mxu0
  %v5528 = vadd.f32 %v5367, %v5527
  %v5529 = vpop.f32.mrb[0].mxu0
  %v5530 = vadd.f32 %v5369, %v5529
  %5531 = vmatprep.mubr.f32.mxu0 %v4589
  %5532 = vmatmul.mubr.f32.gmra.mrb[0].mxu0 %v4587
  %v5533 = vpop.f32.mrb[0].mxu0
  %v5534 = vadd.f32 %v5373, %v5533
  %v5535 = vpop.f32.mrb[0].mxu0
  %v5536 = vadd.f32 %v5375, %v5535
  %5537 = vmatprep.mubr.f32.mxu0 %v4595
  %5538 = vmatmul.mubr.f32.gmra.mrb[0].mxu0 %v4593
  %v5539 = vpop.f32.mrb[0].mxu0
  %v5540 = vadd.f32 %v5379, %v5539
  %v5541 = vpop.f32.mrb[0].mxu0
  %v5542 = vadd.f32 %v5381, %v5541
  %5543 = vmatprep.mubr.f32.mxu0 %v4601
  %5544 = vmatmul.mubr.f32.gmra.mrb[0].mxu0 %v4599
  %v5545 = vpop.f32.mrb[0].mxu0
  %v5546 = vadd.f32 %v5385, %v5545
  %v5547 = vpop.f32.mrb[0].mxu0
  %v5548 = vadd.f32 %v5387, %v5547
  %5549 = vmatprep.mubr.f32.mxu0 %v4607
  %5550 = vmatmul.mubr.f32.gmra.mrb[0].mxu0 %v4605
  %v5551 = vpop.f32.mrb[0].mxu0
  %v5552 = vadd.f32 %v5391, %v5551
  %v5553 = vpop.f32.mrb[0].mxu0
  %v5554 = vadd.f32 %v5393, %v5553
  %5555 = vmatprep.mubr.f32.mxu0 %v4613
  %5556 = vmatmul.mubr.f32.gmra.mrb[0].mxu0 %v4611
  %v5557 = vpop.f32.mrb[0].mxu0
  %v5558 = vadd.f32 %v5397, %v5557
  %v5559 = vpop.f32.mrb[0].mxu0
  %v5560 = vadd.f32 %v5399, %v5559
  %5561 = vdwg.mxu0
  %v5562 = vadd.f32 %v5468, %v4911
  %v5563 = vadd.f32 %v5470, %v4915
  %v5564 = vadd.f32 %v5474, %v4911
  %v5565 = vadd.f32 %v5476, %v4915
  %v5566 = vadd.f32 %v5480, %v4911
  %v5567 = vadd.f32 %v5482, %v4915
  %v5568 = vadd.f32 %v5486, %v4911
  %v5569 = vadd.f32 %v5488, %v4915
  %v5570 = vadd.f32 %v5492, %v4911
  %v5571 = vadd.f32 %v5494, %v4915
  %v5572 = vadd.f32 %v5498, %v4911
  %v5573 = vadd.f32 %v5500, %v4915
  %v5574 = vadd.f32 %v5504, %v4911
  %v5575 = vadd.f32 %v5506, %v4915
  %v5576 = vadd.f32 %v5510, %v4911
  %v5577 = vadd.f32 %v5512, %v4915
  %v5578 = vadd.f32 %v5516, %v4911
  %v5579 = vadd.f32 %v5518, %v4915
  %v5580 = vadd.f32 %v5522, %v4911
  %v5581 = vadd.f32 %v5524, %v4915
  %v5582 = vadd.f32 %v5528, %v4911
  %v5583 = vadd.f32 %v5530, %v4915
  %v5584 = vadd.f32 %v5534, %v4911
  %v5585 = vadd.f32 %v5536, %v4915
  %v5586 = vadd.f32 %v5540, %v4911
  %v5587 = vadd.f32 %v5542, %v4915
  %v5588 = vadd.f32 %v5546, %v4911
  %v5589 = vadd.f32 %v5548, %v4915
  %v5590 = vadd.f32 %v5552, %v4911
  %v5591 = vadd.f32 %v5554, %v4915
  %v5592 = vadd.f32 %v5558, %v4911
  %v5593 = vadd.f32 %v5560, %v4915
  %v5594 = vmax.f32 %v5562, 0.0
  %v5595 = vmax.f32 %v5563, 0.0
  %v5596 = vmax.f32 %v5564, 0.0
  %v5597 = vmax.f32 %v5565, 0.0
  %v5598 = vmax.f32 %v5566, 0.0
  %v5599 = vmax.f32 %v5567, 0.0
  %v5600 = vmax.f32 %v5568, 0.0
  %v5601 = vmax.f32 %v5569, 0.0
  %v5602 = vmax.f32 %v5570, 0.0
  %v5603 = vmax.f32 %v5571, 0.0
  %v5604 = vmax.f32 %v5572, 0.0
  %v5605 = vmax.f32 %v5573, 0.0
  %v5606 = vmax.f32 %v5574, 0.0
  %v5607 = vmax.f32 %v5575, 0.0
  %v5608 = vmax.f32 %v5576, 0.0
  %v5609 = vmax.f32 %v5577, 0.0
  %v5610 = vmax.f32 %v5578, 0.0
  %v5611 = vmax.f32 %v5579, 0.0
  %v5612 = vmax.f32 %v5580, 0.0
  %v5613 = vmax.f32 %v5581, 0.0
  %v5614 = vmax.f32 %v5582, 0.0
  %v5615 = vmax.f32 %v5583, 0.0
  %v5616 = vmax.f32 %v5584, 0.0
  %v5617 = vmax.f32 %v5585, 0.0
  %v5618 = vmax.f32 %v5586, 0.0
  %v5619 = vmax.f32 %v5587, 0.0
  %v5620 = vmax.f32 %v5588, 0.0
  %v5621 = vmax.f32 %v5589, 0.0
  %v5622 = vmax.f32 %v5590, 0.0
  %v5623 = vmax.f32 %v5591, 0.0
  %v5624 = vmax.f32 %v5592, 0.0
  %v5625 = vmax.f32 %v5593, 0.0
  %s5626 = scalar_lea.vmem %s5, 128
  %v5627 = vld [vmem:[%s5626] sm:$0xff]
  %v5628 = vld [vmem:[%s5626 + $0x8] sm:$0xff]
  %v5629 = vld [vmem:[%s5626 + $0x10] sm:$0xff]
  %v5630 = vld [vmem:[%s5626 + $0x18] sm:$0xff]
  %v5631 = vld [vmem:[%s5626 + $0x20] sm:$0xff]
  %v5632 = vld [vmem:[%s5626 + $0x28] sm:$0xff]
  %v5633 = vld [vmem:[%s5626 + $0x30] sm:$0xff]
  %v5634 = vld [vmem:[%s5626 + $0x38] sm:$0xff]
  %v5635 = vld [vmem:[%s5626 + $0x40] sm:$0xff]
  %v5636 = vld [vmem:[%s5626 + $0x48] sm:$0xff]
  %v5637 = vld [vmem:[%s5626 + $0x50] sm:$0xff]
  %v5638 = vld [vmem:[%s5626 + $0x58] sm:$0xff]
  %v5639 = vld [vmem:[%s5626 + $0x60] sm:$0xff]
  %v5640 = vld [vmem:[%s5626 + $0x68] sm:$0xff]
  %v5641 = vld [vmem:[%s5626 + $0x70] sm:$0xff]
  %v5642 = vld [vmem:[%s5626 + $0x78] sm:$0xff]
  %5643 = vmatprep.subr.mxu0 %v5080
  %5644 = vmatpush1.msra.mxu0 %v5079
  %5645 = vmatprep.subr.mxu0 %v5082
  %5646 = vmatpush1.msra.mxu0 %v5081
  %5647 = vmatprep.subr.mxu0 %v5084
  %5648 = vmatpush1.msra.mxu0 %v5083
  %5649 = vmatprep.subr.mxu0 %v5086
  %5650 = vmatpush1.msra.mxu0 %v5085
  %5651 = vmatprep.subr.mxu0 %v5088
  %5652 = vmatpush1.msra.mxu0 %v5087
  %5653 = vmatprep.subr.mxu0 %v5090
  %5654 = vmatpush1.msra.mxu0 %v5089
  %5655 = vmatprep.subr.mxu0 %v5092
  %5656 = vmatpush1.msra.mxu0 %v5091
  %5657 = vmatprep.subr.mxu0 %v5094
  %5658 = vmatpush1.msra.mxu0 %v5093
  %5659 = vmatprep.subr.mxu0 %v5096
  %5660 = vmatpush1.msra.mxu0 %v5095
  %5661 = vmatprep.subr.mxu0 %v5098
  %5662 = vmatpush1.msra.mxu0 %v5097
  %5663 = vmatprep.subr.mxu0 %v5100
  %5664 = vmatpush1.msra.mxu0 %v5099
  %5665 = vmatprep.subr.mxu0 %v5102
  %5666 = vmatpush1.msra.mxu0 %v5101
  %5667 = vmatprep.subr.mxu0 %v5104
  %5668 = vmatpush1.msra.mxu0 %v5103
  %5669 = vmatprep.subr.mxu0 %v5106
  %5670 = vmatpush1.msra.mxu0 %v5105
  %5671 = vmatprep.subr.mxu0 %v5108
  %5672 = vmatpush1.msra.mxu0 %v5107
  %5673 = vmatprep.subr.mxu0 %v5110
  %5674 = vmatpush1.msra.mxu0 %v5109
  %5675 = vmatprep.subr.mxu0 0.0
  %5676 = vmatpush1.msra.mxu0 0.0
  %5677 = vmatprep.subr.mxu0 0.0
  %5678 = vmatpush1.msra.mxu0 0.0
  %5679 = vmatprep.subr.mxu0 0.0
  %5680 = vmatpush1.msra.mxu0 0.0
  %5681 = vmatprep.subr.mxu0 0.0
  %5682 = vmatpush1.msra.mxu0 0.0
  %5683 = vmatprep.subr.mxu0 0.0
  %5684 = vmatpush1.msra.mxu0 0.0
  %5685 = vmatprep.subr.mxu0 0.0
  %5686 = vmatpush1.msra.mxu0 0.0
  %5687 = vmatprep.subr.mxu0 0.0
  %5688 = vmatpush1.msra.mxu0 0.0
  %5689 = vmatprep.subr.mxu0 0.0
  %5690 = vmatpush1.msra.mxu0 0.0
  %5691 = vmatprep.subr.mxu0 0.0
  %5692 = vmatpush1.msra.mxu0 0.0
  %5693 = vmatprep.subr.mxu0 0.0
  %5694 = vmatpush1.msra.mxu0 0.0
  %5695 = vmatprep.subr.mxu0 0.0
  %5696 = vmatpush1.msra.mxu0 0.0
  %5697 = vmatprep.subr.mxu0 0.0
  %5698 = vmatpush1.msra.mxu0 0.0
  %5699 = vmatprep.subr.mxu0 0.0
  %5700 = vmatpush1.msra.mxu0 0.0
  %5701 = vmatprep.subr.mxu0 0.0
  %5702 = vmatpush1.msra.mxu0 0.0
  %5703 = vmatprep.subr.mxu0 0.0
  %5704 = vmatpush1.msra.mxu0 0.0
  %5705 = vmatprep.subr.mxu0 0.0
  %5706 = vmatpush1.msra.mxu0 0.0
  %5707 = vmatprep.mubr.f32.mxu0 0.0
  %5708 = vmatmul.mubr.f32.gmra.mrb[0].mxu0 %v5627
  %v5709 = vpop.f32.mrb[0].mxu0
  %v5710 = vadd.f32 0.0, %v5709
  %v5711 = vpop.f32.mrb[0].mxu0
  %v5712 = vadd.f32 0.0, %v5711
  %5713 = vmatprep.mubr.f32.mxu0 0.0
  %5714 = vmatmul.mubr.f32.gmra.mrb[0].mxu0 %v5628
  %v5715 = vpop.f32.mrb[0].mxu0
  %v5716 = vadd.f32 0.0, %v5715
  %v5717 = vpop.f32.mrb[0].mxu0
  %v5718 = vadd.f32 0.0, %v5717
  %5719 = vmatprep.mubr.f32.mxu0 0.0
  %5720 = vmatmul.mubr.f32.gmra.mrb[0].mxu0 %v5629
  %v5721 = vpop.f32.mrb[0].mxu0
  %v5722 = vadd.f32 0.0, %v5721
  %v5723 = vpop.f32.mrb[0].mxu0
  %v5724 = vadd.f32 0.0, %v5723
  %5725 = vmatprep.mubr.f32.mxu0 0.0
  %5726 = vmatmul.mubr.f32.gmra.mrb[0].mxu0 %v5630
  %v5727 = vpop.f32.mrb[0].mxu0
  %v5728 = vadd.f32 0.0, %v5727
  %v5729 = vpop.f32.mrb[0].mxu0
  %v5730 = vadd.f32 0.0, %v5729
  %5731 = vmatprep.mubr.f32.mxu0 0.0
  %5732 = vmatmul.mubr.f32.gmra.mrb[0].mxu0 %v5631
  %v5733 = vpop.f32.mrb[0].mxu0
  %v5734 = vadd.f32 0.0, %v5733
  %v5735 = vpop.f32.mrb[0].mxu0
  %v5736 = vadd.f32 0.0, %v5735
  %5737 = vmatprep.mubr.f32.mxu0 0.0
  %5738 = vmatmul.mubr.f32.gmra.mrb[0].mxu0 %v5632
  %v5739 = vpop.f32.mrb[0].mxu0
  %v5740 = vadd.f32 0.0, %v5739
  %v5741 = vpop.f32.mrb[0].mxu0
  %v5742 = vadd.f32 0.0, %v5741
  %5743 = vmatprep.mubr.f32.mxu0 0.0
  %5744 = vmatmul.mubr.f32.gmra.mrb[0].mxu0 %v5633
  %v5745 = vpop.f32.mrb[0].mxu0
  %v5746 = vadd.f32 0.0, %v5745
  %v5747 = vpop.f32.mrb[0].mxu0
  %v5748 = vadd.f32 0.0, %v5747
  %5749 = vmatprep.mubr.f32.mxu0 0.0
  %5750 = vmatmul.mubr.f32.gmra.mrb[0].mxu0 %v5634
  %v5751 = vpop.f32.mrb[0].mxu0
  %v5752 = vadd.f32 0.0, %v5751
  %v5753 = vpop.f32.mrb[0].mxu0
  %v5754 = vadd.f32 0.0, %v5753
  %5755 = vmatprep.mubr.f32.mxu0 0.0
  %5756 = vmatmul.mubr.f32.gmra.mrb[0].mxu0 %v5635
  %v5757 = vpop.f32.mrb[0].mxu0
  %v5758 = vadd.f32 0.0, %v5757
  %v5759 = vpop.f32.mrb[0].mxu0
  %v5760 = vadd.f32 0.0, %v5759
  %5761 = vmatprep.mubr.f32.mxu0 0.0
  %5762 = vmatmul.mubr.f32.gmra.mrb[0].mxu0 %v5636
  %v5763 = vpop.f32.mrb[0].mxu0
  %v5764 = vadd.f32 0.0, %v5763
  %v5765 = vpop.f32.mrb[0].mxu0
  %v5766 = vadd.f32 0.0, %v5765
  %5767 = vmatprep.mubr.f32.mxu0 0.0
  %5768 = vmatmul.mubr.f32.gmra.mrb[0].mxu0 %v5637
  %v5769 = vpop.f32.mrb[0].mxu0
  %v5770 = vadd.f32 0.0, %v5769
  %v5771 = vpop.f32.mrb[0].mxu0
  %v5772 = vadd.f32 0.0, %v5771
  %5773 = vmatprep.mubr.f32.mxu0 0.0
  %5774 = vmatmul.mubr.f32.gmra.mrb[0].mxu0 %v5638
  %v5775 = vpop.f32.mrb[0].mxu0
  %v5776 = vadd.f32 0.0, %v5775
  %v5777 = vpop.f32.mrb[0].mxu0
  %v5778 = vadd.f32 0.0, %v5777
  %5779 = vmatprep.mubr.f32.mxu0 0.0
  %5780 = vmatmul.mubr.f32.gmra.mrb[0].mxu0 %v5639
  %v5781 = vpop.f32.mrb[0].mxu0
  %v5782 = vadd.f32 0.0, %v5781
  %v5783 = vpop.f32.mrb[0].mxu0
  %v5784 = vadd.f32 0.0, %v5783
  %5785 = vmatprep.mubr.f32.mxu0 0.0
  %5786 = vmatmul.mubr.f32.gmra.mrb[0].mxu0 %v5640
  %v5787 = vpop.f32.mrb[0].mxu0
  %v5788 = vadd.f32 0.0, %v5787
  %v5789 = vpop.f32.mrb[0].mxu0
  %v5790 = vadd.f32 0.0, %v5789
  %5791 = vmatprep.mubr.f32.mxu0 0.0
  %5792 = vmatmul.mubr.f32.gmra.mrb[0].mxu0 %v5641
  %v5793 = vpop.f32.mrb[0].mxu0
  %v5794 = vadd.f32 0.0, %v5793
  %v5795 = vpop.f32.mrb[0].mxu0
  %v5796 = vadd.f32 0.0, %v5795
  %5797 = vmatprep.mubr.f32.mxu0 0.0
  %5798 = vmatmul.mubr.f32.gmra.mrb[0].mxu0 %v5642
  %v5799 = vpop.f32.mrb[0].mxu0
  %v5800 = vadd.f32 0.0, %v5799
  %v5801 = vpop.f32.mrb[0].mxu0
  %v5802 = vadd.f32 0.0, %v5801
  %5803 = vdwg.mxu0
  %v5804 = vld [vmem:[%s14] sm:$0xff]
  %v5805 = vld [vmem:[%s14 + $0x8] sm:$0xff]
  %v5806 = vld [vmem:[%s14 + $0x10] sm:$0xff]
  %v5807 = vld [vmem:[%s14 + $0x18] sm:$0xff]
  %v5808 = vld [vmem:[%s14 + $0x20] sm:$0xff]
  %v5809 = vld [vmem:[%s14 + $0x28] sm:$0xff]
  %v5810 = vld [vmem:[%s14 + $0x30] sm:$0xff]
  %v5811 = vld [vmem:[%s14 + $0x38] sm:$0xff]
  %v5812 = vld [vmem:[%s14 + $0x40] sm:$0xff]
  %v5813 = vld [vmem:[%s14 + $0x48] sm:$0xff]
  %v5814 = vld [vmem:[%s14 + $0x50] sm:$0xff]
  %v5815 = vld [vmem:[%s14 + $0x58] sm:$0xff]
  %v5816 = vld [vmem:[%s14 + $0x60] sm:$0xff]
  %v5817 = vld [vmem:[%s14 + $0x68] sm:$0xff]
  %v5818 = vld [vmem:[%s14 + $0x70] sm:$0xff]
  %v5819 = vld [vmem:[%s14 + $0x78] sm:$0xff]
  %v5820 = vld [vmem:[%s14 + $0x80] sm:$0xff]
  %v5821 = vld [vmem:[%s14 + $0x88] sm:$0xff]
  %v5822 = vld [vmem:[%s14 + $0x90] sm:$0xff]
  %v5823 = vld [vmem:[%s14 + $0x98] sm:$0xff]
  %v5824 = vld [vmem:[%s14 + $0xa0] sm:$0xff]
  %v5825 = vld [vmem:[%s14 + $0xa8] sm:$0xff]
  %v5826 = vld [vmem:[%s14 + $0xb0] sm:$0xff]
  %v5827 = vld [vmem:[%s14 + $0xb8] sm:$0xff]
  %v5828 = vld [vmem:[%s14 + $0xc0] sm:$0xff]
  %v5829 = vld [vmem:[%s14 + $0xc8] sm:$0xff]
  %v5830 = vld [vmem:[%s14 + $0xd0] sm:$0xff]
  %v5831 = vld [vmem:[%s14 + $0xd8] sm:$0xff]
  %s5832 = scalar_lea.vmem %s14, 224
  %v5833 = vld [vmem:[%s5832] sm:$0xff]
  %v5834 = vld [vmem:[%s5832 + $0x8] sm:$0xff]
  %v5835 = vld [vmem:[%s5832 + $0x10] sm:$0xff]
  %v5836 = vld [vmem:[%s5832 + $0x18] sm:$0xff]
  %v5837 = vld [vmem:[%s5832 + $0x20] sm:$0xff]
  %v5838 = vld [vmem:[%s5832 + $0x28] sm:$0xff]
  %v5839 = vld [vmem:[%s5832 + $0x30] sm:$0xff]
  %v5840 = vld [vmem:[%s5832 + $0x38] sm:$0xff]
  %v5841 = vld [vmem:[%s5832 + $0x40] sm:$0xff]
  %v5842 = vld [vmem:[%s5832 + $0x48] sm:$0xff]
  %v5843 = vld [vmem:[%s5832 + $0x50] sm:$0xff]
  %v5844 = vld [vmem:[%s5832 + $0x58] sm:$0xff]
  %v5845 = vld [vmem:[%s5832 + $0x60] sm:$0xff]
  %v5846 = vld [vmem:[%s5832 + $0x68] sm:$0xff]
  %v5847 = vld [vmem:[%s5832 + $0x70] sm:$0xff]
  %v5848 = vld [vmem:[%s5832 + $0x78] sm:$0xff]
  %v5849 = vld [vmem:[%s5832 + $0x80] sm:$0xff]
  %v5850 = vld [vmem:[%s5832 + $0x88] sm:$0xff]
  %v5851 = vld [vmem:[%s5832 + $0x90] sm:$0xff]
  %v5852 = vld [vmem:[%s5832 + $0x98] sm:$0xff]
  %v5853 = vld [vmem:[%s5832 + $0xa0] sm:$0xff]
  %v5854 = vld [vmem:[%s5832 + $0xa8] sm:$0xff]
  %v5855 = vld [vmem:[%s5832 + $0xb0] sm:$0xff]
  %v5856 = vld [vmem:[%s5832 + $0xb8] sm:$0xff]
  %v5857 = vld [vmem:[%s5832 + $0xc0] sm:$0xff]
  %v5858 = vld [vmem:[%s5832 + $0xc8] sm:$0xff]
  %v5859 = vld [vmem:[%s5832 + $0xd0] sm:$0xff]
  %v5860 = vld [vmem:[%s5832 + $0xd8] sm:$0xff]
  %v5862 = vsel %vm1883, %v5595, 0
  %v5865 = vsel %vm1883, %v5597, 0
  %v5868 = vsel %vm1883, %v5599, 0
  %v5871 = vsel %vm1883, %v5601, 0
  %v5874 = vsel %vm1883, %v5603, 0
  %v5877 = vsel %vm1883, %v5605, 0
  %v5880 = vsel %vm1883, %v5607, 0
  %v5883 = vsel %vm1883, %v5609, 0
  %v5886 = vsel %vm1883, %v5611, 0
  %v5889 = vsel %vm1883, %v5613, 0
  %v5892 = vsel %vm1883, %v5615, 0
  %v5895 = vsel %vm1883, %v5617, 0
  %v5898 = vsel %vm1883, %v5619, 0
  %v5901 = vsel %vm1883, %v5621, 0
  %v5904 = vsel %vm1883, %v5623, 0
  %v5907 = vsel %vm1883, %v5625, 0
  %5909 = vmatprep.subr.mxu0 0.0
  %5910 = vmatpush1.msra.mxu0 %v5833
  %5911 = vmatprep.subr.mxu0 0.0
  %5912 = vmatpush1.msra.mxu0 %v5834
  %5913 = vmatprep.subr.mxu0 0.0
  %5914 = vmatpush1.msra.mxu0 %v5835
  %5915 = vmatprep.subr.mxu0 0.0
  %5916 = vmatpush1.msra.mxu0 %v5836
  %5917 = vmatprep.subr.mxu0 0.0
  %5918 = vmatpush1.msra.mxu0 %v5837
  %5919 = vmatprep.subr.mxu0 0.0
  %5920 = vmatpush1.msra.mxu0 %v5838
  %5921 = vmatprep.subr.mxu0 0.0
  %5922 = vmatpush1.msra.mxu0 %v5839
  %5923 = vmatprep.subr.mxu0 0.0
  %5924 = vmatpush1.msra.mxu0 %v5840
  %5925 = vmatprep.subr.mxu0 0.0
  %5926 = vmatpush1.msra.mxu0 %v5841
  %5927 = vmatprep.subr.mxu0 0.0
  %5928 = vmatpush1.msra.mxu0 %v5842
  %5929 = vmatprep.subr.mxu0 0.0
  %5930 = vmatpush1.msra.mxu0 %v5843
  %5931 = vmatprep.subr.mxu0 0.0
  %5932 = vmatpush1.msra.mxu0 %v5844
  %5933 = vmatprep.subr.mxu0 0.0
  %5934 = vmatpush1.msra.mxu0 %v5845
  %5935 = vmatprep.subr.mxu0 0.0
  %5936 = vmatpush1.msra.mxu0 %v5846
  %5937 = vmatprep.subr.mxu0 0.0
  %5938 = vmatpush1.msra.mxu0 %v5847
  %5939 = vmatprep.subr.mxu0 0.0
  %5940 = vmatpush1.msra.mxu0 %v5848
  %5941 = vmatprep.subr.mxu0 0.0
  %5942 = vmatpush1.msra.mxu0 %v5849
  %5943 = vmatprep.subr.mxu0 0.0
  %5944 = vmatpush1.msra.mxu0 %v5850
  %5945 = vmatprep.subr.mxu0 0.0
  %5946 = vmatpush1.msra.mxu0 %v5851
  %5947 = vmatprep.subr.mxu0 0.0
  %5948 = vmatpush1.msra.mxu0 %v5852
  %5949 = vmatprep.subr.mxu0 0.0
  %5950 = vmatpush1.msra.mxu0 %v5853
  %5951 = vmatprep.subr.mxu0 0.0
  %5952 = vmatpush1.msra.mxu0 %v5854
  %5953 = vmatprep.subr.mxu0 0.0
  %5954 = vmatpush1.msra.mxu0 %v5855
  %5955 = vmatprep.subr.mxu0 0.0
  %5956 = vmatpush1.msra.mxu0 %v5856
  %5957 = vmatprep.subr.mxu0 0.0
  %5958 = vmatpush1.msra.mxu0 %v5857
  %5959 = vmatprep.subr.mxu0 0.0
  %5960 = vmatpush1.msra.mxu0 %v5858
  %5961 = vmatprep.subr.mxu0 0.0
  %5962 = vmatpush1.msra.mxu0 %v5859
  %5963 = vmatprep.subr.mxu0 0.0
  %5964 = vmatpush1.msra.mxu0 %v5860
  %5965 = vmatprep.subr.mxu0 0.0
  %5966 = vmatpush1.msra.mxu0 0.0
  %5967 = vmatprep.subr.mxu0 0.0
  %5968 = vmatpush1.msra.mxu0 0.0
  %5969 = vmatprep.subr.mxu0 0.0
  %5970 = vmatpush1.msra.mxu0 0.0
  %5971 = vmatprep.subr.mxu0 0.0
  %5972 = vmatpush1.msra.mxu0 0.0
  %5973 = vmatprep.mubr.f32.mxu0 %v5862
  %5974 = vmatmul.mubr.f32.gmra.mrb[0].mxu0 %v5594
  %v5975 = vpop.f32.mrb[0].mxu0
  %v5976 = vadd.f32 0.0, %v5975
  %v5977 = vpop.f32.mrb[0].mxu0
  %5978 = vmatprep.mubr.f32.mxu0 %v5865
  %5979 = vmatmul.mubr.f32.gmra.mrb[0].mxu0 %v5596
  %v5980 = vpop.f32.mrb[0].mxu0
  %v5981 = vadd.f32 0.0, %v5980
  %v5982 = vpop.f32.mrb[0].mxu0
  %5983 = vmatprep.mubr.f32.mxu0 %v5868
  %5984 = vmatmul.mubr.f32.gmra.mrb[0].mxu0 %v5598
  %v5985 = vpop.f32.mrb[0].mxu0
  %v5986 = vadd.f32 0.0, %v5985
  %v5987 = vpop.f32.mrb[0].mxu0
  %5988 = vmatprep.mubr.f32.mxu0 %v5871
  %5989 = vmatmul.mubr.f32.gmra.mrb[0].mxu0 %v5600
  %v5990 = vpop.f32.mrb[0].mxu0
  %v5991 = vadd.f32 0.0, %v5990
  %v5992 = vpop.f32.mrb[0].mxu0
  %5993 = vmatprep.mubr.f32.mxu0 %v5874
  %5994 = vmatmul.mubr.f32.gmra.mrb[0].mxu0 %v5602
  %v5995 = vpop.f32.mrb[0].mxu0
  %v5996 = vadd.f32 0.0, %v5995
  %v5997 = vpop.f32.mrb[0].mxu0
  %5998 = vmatprep.mubr.f32.mxu0 %v5877
  %5999 = vmatmul.mubr.f32.gmra.mrb[0].mxu0 %v5604
  %v6000 = vpop.f32.mrb[0].mxu0
  %v6001 = vadd.f32 0.0, %v6000
  %v6002 = vpop.f32.mrb[0].mxu0
  %6003 = vmatprep.mubr.f32.mxu0 %v5880
  %6004 = vmatmul.mubr.f32.gmra.mrb[0].mxu0 %v5606
  %v6005 = vpop.f32.mrb[0].mxu0
  %v6006 = vadd.f32 0.0, %v6005
  %v6007 = vpop.f32.mrb[0].mxu0
  %6008 = vmatprep.mubr.f32.mxu0 %v5883
  %6009 = vmatmul.mubr.f32.gmra.mrb[0].mxu0 %v5608
  %v6010 = vpop.f32.mrb[0].mxu0
  %v6011 = vadd.f32 0.0, %v6010
  %v6012 = vpop.f32.mrb[0].mxu0
  %6013 = vmatprep.mubr.f32.mxu0 %v5886
  %6014 = vmatmul.mubr.f32.gmra.mrb[0].mxu0 %v5610
  %v6015 = vpop.f32.mrb[0].mxu0
  %v6016 = vadd.f32 0.0, %v6015
  %v6017 = vpop.f32.mrb[0].mxu0
  %6018 = vmatprep.mubr.f32.mxu0 %v5889
  %6019 = vmatmul.mubr.f32.gmra.mrb[0].mxu0 %v5612
  %v6020 = vpop.f32.mrb[0].mxu0
  %v6021 = vadd.f32 0.0, %v6020
  %v6022 = vpop.f32.mrb[0].mxu0
  %6023 = vmatprep.mubr.f32.mxu0 %v5892
  %6024 = vmatmul.mubr.f32.gmra.mrb[0].mxu0 %v5614
  %v6025 = vpop.f32.mrb[0].mxu0
  %v6026 = vadd.f32 0.0, %v6025
  %v6027 = vpop.f32.mrb[0].mxu0
  %6028 = vmatprep.mubr.f32.mxu0 %v5895
  %6029 = vmatmul.mubr.f32.gmra.mrb[0].mxu0 %v5616
  %v6030 = vpop.f32.mrb[0].mxu0
  %v6031 = vadd.f32 0.0, %v6030
  %v6032 = vpop.f32.mrb[0].mxu0
  %6033 = vmatprep.mubr.f32.mxu0 %v5898
  %6034 = vmatmul.mubr.f32.gmra.mrb[0].mxu0 %v5618
  %v6035 = vpop.f32.mrb[0].mxu0
  %v6036 = vadd.f32 0.0, %v6035
  %v6037 = vpop.f32.mrb[0].mxu0
  %6038 = vmatprep.mubr.f32.mxu0 %v5901
  %6039 = vmatmul.mubr.f32.gmra.mrb[0].mxu0 %v5620
  %v6040 = vpop.f32.mrb[0].mxu0
  %v6041 = vadd.f32 0.0, %v6040
  %v6042 = vpop.f32.mrb[0].mxu0
  %6043 = vmatprep.mubr.f32.mxu0 %v5904
  %6044 = vmatmul.mubr.f32.gmra.mrb[0].mxu0 %v5622
  %v6045 = vpop.f32.mrb[0].mxu0
  %v6046 = vadd.f32 0.0, %v6045
  %v6047 = vpop.f32.mrb[0].mxu0
  %6048 = vmatprep.mubr.f32.mxu0 %v5907
  %6049 = vmatmul.mubr.f32.gmra.mrb[0].mxu0 %v5624
  %v6050 = vpop.f32.mrb[0].mxu0
  %v6051 = vadd.f32 0.0, %v6050
  %v6052 = vpop.f32.mrb[0].mxu0
  %6053 = vdwg.mxu0
  %v6055 = vsel %vm1883, %v5080, 0
  %v6058 = vsel %vm1883, %v5082, 0
  %v6061 = vsel %vm1883, %v5084, 0
  %v6064 = vsel %vm1883, %v5086, 0
  %v6067 = vsel %vm1883, %v5088, 0
  %v6070 = vsel %vm1883, %v5090, 0
  %v6073 = vsel %vm1883, %v5092, 0
  %v6076 = vsel %vm1883, %v5094, 0
  %v6079 = vsel %vm1883, %v5096, 0
  %v6082 = vsel %vm1883, %v5098, 0
  %v6085 = vsel %vm1883, %v5100, 0
  %v6088 = vsel %vm1883, %v5102, 0
  %v6091 = vsel %vm1883, %v5104, 0
  %v6094 = vsel %vm1883, %v5106, 0
  %v6097 = vsel %vm1883, %v5108, 0
  %v6100 = vsel %vm1883, %v5110, 0
  %6102 = vmatprep.subr.mxu0 0.0
  %6103 = vmatpush1.msra.mxu0 %v5804
  %6104 = vmatprep.subr.mxu0 0.0
  %6105 = vmatpush1.msra.mxu0 %v5805
  %6106 = vmatprep.subr.mxu0 0.0
  %6107 = vmatpush1.msra.mxu0 %v5806
  %6108 = vmatprep.subr.mxu0 0.0
  %6109 = vmatpush1.msra.mxu0 %v5807
  %6110 = vmatprep.subr.mxu0 0.0
  %6111 = vmatpush1.msra.mxu0 %v5808
  %6112 = vmatprep.subr.mxu0 0.0
  %6113 = vmatpush1.msra.mxu0 %v5809
  %6114 = vmatprep.subr.mxu0 0.0
  %6115 = vmatpush1.msra.mxu0 %v5810
  %6116 = vmatprep.subr.mxu0 0.0
  %6117 = vmatpush1.msra.mxu0 %v5811
  %6118 = vmatprep.subr.mxu0 0.0
  %6119 = vmatpush1.msra.mxu0 %v5812
  %6120 = vmatprep.subr.mxu0 0.0
  %6121 = vmatpush1.msra.mxu0 %v5813
  %6122 = vmatprep.subr.mxu0 0.0
  %6123 = vmatpush1.msra.mxu0 %v5814
  %6124 = vmatprep.subr.mxu0 0.0
  %6125 = vmatpush1.msra.mxu0 %v5815
  %6126 = vmatprep.subr.mxu0 0.0
  %6127 = vmatpush1.msra.mxu0 %v5816
  %6128 = vmatprep.subr.mxu0 0.0
  %6129 = vmatpush1.msra.mxu0 %v5817
  %6130 = vmatprep.subr.mxu0 0.0
  %6131 = vmatpush1.msra.mxu0 %v5818
  %6132 = vmatprep.subr.mxu0 0.0
  %6133 = vmatpush1.msra.mxu0 %v5819
  %6134 = vmatprep.subr.mxu0 0.0
  %6135 = vmatpush1.msra.mxu0 %v5820
  %6136 = vmatprep.subr.mxu0 0.0
  %6137 = vmatpush1.msra.mxu0 %v5821
  %6138 = vmatprep.subr.mxu0 0.0
  %6139 = vmatpush1.msra.mxu0 %v5822
  %6140 = vmatprep.subr.mxu0 0.0
  %6141 = vmatpush1.msra.mxu0 %v5823
  %6142 = vmatprep.subr.mxu0 0.0
  %6143 = vmatpush1.msra.mxu0 %v5824
  %6144 = vmatprep.subr.mxu0 0.0
  %6145 = vmatpush1.msra.mxu0 %v5825
  %6146 = vmatprep.subr.mxu0 0.0
  %6147 = vmatpush1.msra.mxu0 %v5826
  %6148 = vmatprep.subr.mxu0 0.0
  %6149 = vmatpush1.msra.mxu0 %v5827
  %6150 = vmatprep.subr.mxu0 0.0
  %6151 = vmatpush1.msra.mxu0 %v5828
  %6152 = vmatprep.subr.mxu0 0.0
  %6153 = vmatpush1.msra.mxu0 %v5829
  %6154 = vmatprep.subr.mxu0 0.0
  %6155 = vmatpush1.msra.mxu0 %v5830
  %6156 = vmatprep.subr.mxu0 0.0
  %6157 = vmatpush1.msra.mxu0 %v5831
  %6158 = vmatprep.subr.mxu0 0.0
  %6159 = vmatpush1.msra.mxu0 0.0
  %6160 = vmatprep.subr.mxu0 0.0
  %6161 = vmatpush1.msra.mxu0 0.0
  %6162 = vmatprep.subr.mxu0 0.0
  %6163 = vmatpush1.msra.mxu0 0.0
  %6164 = vmatprep.subr.mxu0 0.0
  %6165 = vmatpush1.msra.mxu0 0.0
  %6166 = vmatprep.mubr.f32.mxu0 %v6055
  %6167 = vmatmul.mubr.f32.gmra.mrb[0].mxu0 %v5079
  %v6168 = vpop.f32.mrb[0].mxu0
  %v6169 = vadd.f32 %v5976, %v6168
  %v6170 = vpop.f32.mrb[0].mxu0
  %6171 = vmatprep.mubr.f32.mxu0 %v6058
  %6172 = vmatmul.mubr.f32.gmra.mrb[0].mxu0 %v5081
  %v6173 = vpop.f32.mrb[0].mxu0
  %v6174 = vadd.f32 %v5981, %v6173
  %v6175 = vpop.f32.mrb[0].mxu0
  %6176 = vmatprep.mubr.f32.mxu0 %v6061
  %6177 = vmatmul.mubr.f32.gmra.mrb[0].mxu0 %v5083
  %v6178 = vpop.f32.mrb[0].mxu0
  %v6179 = vadd.f32 %v5986, %v6178
  %v6180 = vpop.f32.mrb[0].mxu0
  %6181 = vmatprep.mubr.f32.mxu0 %v6064
  %6182 = vmatmul.mubr.f32.gmra.mrb[0].mxu0 %v5085
  %v6183 = vpop.f32.mrb[0].mxu0
  %v6184 = vadd.f32 %v5991, %v6183
  %v6185 = vpop.f32.mrb[0].mxu0
  %6186 = vmatprep.mubr.f32.mxu0 %v6067
  %6187 = vmatmul.mubr.f32.gmra.mrb[0].mxu0 %v5087
  %v6188 = vpop.f32.mrb[0].mxu0
  %v6189 = vadd.f32 %v5996, %v6188
  %v6190 = vpop.f32.mrb[0].mxu0
  %6191 = vmatprep.mubr.f32.mxu0 %v6070
  %6192 = vmatmul.mubr.f32.gmra.mrb[0].mxu0 %v5089
  %v6193 = vpop.f32.mrb[0].mxu0
  %v6194 = vadd.f32 %v6001, %v6193
  %v6195 = vpop.f32.mrb[0].mxu0
  %6196 = vmatprep.mubr.f32.mxu0 %v6073
  %6197 = vmatmul.mubr.f32.gmra.mrb[0].mxu0 %v5091
  %v6198 = vpop.f32.mrb[0].mxu0
  %v6199 = vadd.f32 %v6006, %v6198
  %v6200 = vpop.f32.mrb[0].mxu0
  %6201 = vmatprep.mubr.f32.mxu0 %v6076
  %6202 = vmatmul.mubr.f32.gmra.mrb[0].mxu0 %v5093
  %v6203 = vpop.f32.mrb[0].mxu0
  %v6204 = vadd.f32 %v6011, %v6203
  %v6205 = vpop.f32.mrb[0].mxu0
  %6206 = vmatprep.mubr.f32.mxu0 %v6079
  %6207 = vmatmul.mubr.f32.gmra.mrb[0].mxu0 %v5095
  %v6208 = vpop.f32.mrb[0].mxu0
  %v6209 = vadd.f32 %v6016, %v6208
  %v6210 = vpop.f32.mrb[0].mxu0
  %6211 = vmatprep.mubr.f32.mxu0 %v6082
  %6212 = vmatmul.mubr.f32.gmra.mrb[0].mxu0 %v5097
  %v6213 = vpop.f32.mrb[0].mxu0
  %v6214 = vadd.f32 %v6021, %v6213
  %v6215 = vpop.f32.mrb[0].mxu0
  %6216 = vmatprep.mubr.f32.mxu0 %v6085
  %6217 = vmatmul.mubr.f32.gmra.mrb[0].mxu0 %v5099
  %v6218 = vpop.f32.mrb[0].mxu0
  %v6219 = vadd.f32 %v6026, %v6218
  %v6220 = vpop.f32.mrb[0].mxu0
  %6221 = vmatprep.mubr.f32.mxu0 %v6088
  %6222 = vmatmul.mubr.f32.gmra.mrb[0].mxu0 %v5101
  %v6223 = vpop.f32.mrb[0].mxu0
  %v6224 = vadd.f32 %v6031, %v6223
  %v6225 = vpop.f32.mrb[0].mxu0
  %6226 = vmatprep.mubr.f32.mxu0 %v6091
  %6227 = vmatmul.mubr.f32.gmra.mrb[0].mxu0 %v5103
  %v6228 = vpop.f32.mrb[0].mxu0
  %v6229 = vadd.f32 %v6036, %v6228
  %v6230 = vpop.f32.mrb[0].mxu0
  %6231 = vmatprep.mubr.f32.mxu0 %v6094
  %6232 = vmatmul.mubr.f32.gmra.mrb[0].mxu0 %v5105
  %v6233 = vpop.f32.mrb[0].mxu0
  %v6234 = vadd.f32 %v6041, %v6233
  %v6235 = vpop.f32.mrb[0].mxu0
  %6236 = vmatprep.mubr.f32.mxu0 %v6097
  %6237 = vmatmul.mubr.f32.gmra.mrb[0].mxu0 %v5107
  %v6238 = vpop.f32.mrb[0].mxu0
  %v6239 = vadd.f32 %v6046, %v6238
  %v6240 = vpop.f32.mrb[0].mxu0
  %6241 = vmatprep.mubr.f32.mxu0 %v6100
  %6242 = vmatmul.mubr.f32.gmra.mrb[0].mxu0 %v5109
  %v6243 = vpop.f32.mrb[0].mxu0
  %v6244 = vadd.f32 %v6051, %v6243
  %v6245 = vpop.f32.mrb[0].mxu0
  %6246 = vdwg.mxu0
  %s6247 = scalar_lea.vmem %s14, 448
  %v6248 = vld [vmem:[%s6247] sm:$0xff]
  %v6249 = vld [vmem:[%s6247 + $0x8] sm:$0xff]
  %v6250 = vld [vmem:[%s6247 + $0x10] sm:$0xff]
  %v6251 = vld [vmem:[%s6247 + $0x18] sm:$0xff]
  %v6252 = vld [vmem:[%s6247 + $0x20] sm:$0xff]
  %v6253 = vld [vmem:[%s6247 + $0x28] sm:$0xff]
  %v6254 = vld [vmem:[%s6247 + $0x30] sm:$0xff]
  %v6255 = vld [vmem:[%s6247 + $0x38] sm:$0xff]
  %v6256 = vld [vmem:[%s6247 + $0x40] sm:$0xff]
  %v6257 = vld [vmem:[%s6247 + $0x48] sm:$0xff]
  %v6258 = vld [vmem:[%s6247 + $0x50] sm:$0xff]
  %v6259 = vld [vmem:[%s6247 + $0x58] sm:$0xff]
  %v6260 = vld [vmem:[%s6247 + $0x60] sm:$0xff]
  %v6261 = vld [vmem:[%s6247 + $0x68] sm:$0xff]
  %v6262 = vld [vmem:[%s6247 + $0x70] sm:$0xff]
  %v6263 = vld [vmem:[%s6247 + $0x78] sm:$0xff]
  %v6264 = vld [vmem:[%s6247 + $0x80] sm:$0xff]
  %v6265 = vld [vmem:[%s6247 + $0x88] sm:$0xff]
  %v6266 = vld [vmem:[%s6247 + $0x90] sm:$0xff]
  %v6267 = vld [vmem:[%s6247 + $0x98] sm:$0xff]
  %v6268 = vld [vmem:[%s6247 + $0xa0] sm:$0xff]
  %v6269 = vld [vmem:[%s6247 + $0xa8] sm:$0xff]
  %v6270 = vld [vmem:[%s6247 + $0xb0] sm:$0xff]
  %v6271 = vld [vmem:[%s6247 + $0xb8] sm:$0xff]
  %v6272 = vld [vmem:[%s6247 + $0xc0] sm:$0xff]
  %v6273 = vld [vmem:[%s6247 + $0xc8] sm:$0xff]
  %v6274 = vld [vmem:[%s6247 + $0xd0] sm:$0xff]
  %v6275 = vld [vmem:[%s6247 + $0xd8] sm:$0xff]
  %v6277 = vsel %vm1883, %v5712, 0
  %v6280 = vsel %vm1883, %v5718, 0
  %v6283 = vsel %vm1883, %v5724, 0
  %v6286 = vsel %vm1883, %v5730, 0
  %v6289 = vsel %vm1883, %v5736, 0
  %v6292 = vsel %vm1883, %v5742, 0
  %v6295 = vsel %vm1883, %v5748, 0
  %v6298 = vsel %vm1883, %v5754, 0
  %v6301 = vsel %vm1883, %v5760, 0
  %v6304 = vsel %vm1883, %v5766, 0
  %v6307 = vsel %vm1883, %v5772, 0
  %v6310 = vsel %vm1883, %v5778, 0
  %v6313 = vsel %vm1883, %v5784, 0
  %v6316 = vsel %vm1883, %v5790, 0
  %v6319 = vsel %vm1883, %v5796, 0
  %v6322 = vsel %vm1883, %v5802, 0
  %6324 = vmatprep.subr.mxu0 0.0
  %6325 = vmatpush1.msra.mxu0 %v6248
  %6326 = vmatprep.subr.mxu0 0.0
  %6327 = vmatpush1.msra.mxu0 %v6249
  %6328 = vmatprep.subr.mxu0 0.0
  %6329 = vmatpush1.msra.mxu0 %v6250
  %6330 = vmatprep.subr.mxu0 0.0
  %6331 = vmatpush1.msra.mxu0 %v6251
  %6332 = vmatprep.subr.mxu0 0.0
  %6333 = vmatpush1.msra.mxu0 %v6252
  %6334 = vmatprep.subr.mxu0 0.0
  %6335 = vmatpush1.msra.mxu0 %v6253
  %6336 = vmatprep.subr.mxu0 0.0
  %6337 = vmatpush1.msra.mxu0 %v6254
  %6338 = vmatprep.subr.mxu0 0.0
  %6339 = vmatpush1.msra.mxu0 %v6255
  %6340 = vmatprep.subr.mxu0 0.0
  %6341 = vmatpush1.msra.mxu0 %v6256
  %6342 = vmatprep.subr.mxu0 0.0
  %6343 = vmatpush1.msra.mxu0 %v6257
  %6344 = vmatprep.subr.mxu0 0.0
  %6345 = vmatpush1.msra.mxu0 %v6258
  %6346 = vmatprep.subr.mxu0 0.0
  %6347 = vmatpush1.msra.mxu0 %v6259
  %6348 = vmatprep.subr.mxu0 0.0
  %6349 = vmatpush1.msra.mxu0 %v6260
  %6350 = vmatprep.subr.mxu0 0.0
  %6351 = vmatpush1.msra.mxu0 %v6261
  %6352 = vmatprep.subr.mxu0 0.0
  %6353 = vmatpush1.msra.mxu0 %v6262
  %6354 = vmatprep.subr.mxu0 0.0
  %6355 = vmatpush1.msra.mxu0 %v6263
  %6356 = vmatprep.subr.mxu0 0.0
  %6357 = vmatpush1.msra.mxu0 %v6264
  %6358 = vmatprep.subr.mxu0 0.0
  %6359 = vmatpush1.msra.mxu0 %v6265
  %6360 = vmatprep.subr.mxu0 0.0
  %6361 = vmatpush1.msra.mxu0 %v6266
  %6362 = vmatprep.subr.mxu0 0.0
  %6363 = vmatpush1.msra.mxu0 %v6267
  %6364 = vmatprep.subr.mxu0 0.0
  %6365 = vmatpush1.msra.mxu0 %v6268
  %6366 = vmatprep.subr.mxu0 0.0
  %6367 = vmatpush1.msra.mxu0 %v6269
  %6368 = vmatprep.subr.mxu0 0.0
  %6369 = vmatpush1.msra.mxu0 %v6270
  %6370 = vmatprep.subr.mxu0 0.0
  %6371 = vmatpush1.msra.mxu0 %v6271
  %6372 = vmatprep.subr.mxu0 0.0
  %6373 = vmatpush1.msra.mxu0 %v6272
  %6374 = vmatprep.subr.mxu0 0.0
  %6375 = vmatpush1.msra.mxu0 %v6273
  %6376 = vmatprep.subr.mxu0 0.0
  %6377 = vmatpush1.msra.mxu0 %v6274
  %6378 = vmatprep.subr.mxu0 0.0
  %6379 = vmatpush1.msra.mxu0 %v6275
  %6380 = vmatprep.subr.mxu0 0.0
  %6381 = vmatpush1.msra.mxu0 0.0
  %6382 = vmatprep.subr.mxu0 0.0
  %6383 = vmatpush1.msra.mxu0 0.0
  %6384 = vmatprep.subr.mxu0 0.0
  %6385 = vmatpush1.msra.mxu0 0.0
  %6386 = vmatprep.subr.mxu0 0.0
  %6387 = vmatpush1.msra.mxu0 0.0
  %6388 = vmatprep.mubr.f32.mxu0 %v6277
  %6389 = vmatmul.mubr.f32.gmra.mrb[0].mxu0 %v5710
  %v6390 = vpop.f32.mrb[0].mxu0
  %v6391 = vadd.f32 0.0, %v6390
  %v6392 = vpop.f32.mrb[0].mxu0
  %6393 = vmatprep.mubr.f32.mxu0 %v6280
  %6394 = vmatmul.mubr.f32.gmra.mrb[0].mxu0 %v5716
  %v6395 = vpop.f32.mrb[0].mxu0
  %v6396 = vadd.f32 0.0, %v6395
  %v6397 = vpop.f32.mrb[0].mxu0
  %6398 = vmatprep.mubr.f32.mxu0 %v6283
  %6399 = vmatmul.mubr.f32.gmra.mrb[0].mxu0 %v5722
  %v6400 = vpop.f32.mrb[0].mxu0
  %v6401 = vadd.f32 0.0, %v6400
  %v6402 = vpop.f32.mrb[0].mxu0
  %6403 = vmatprep.mubr.f32.mxu0 %v6286
  %6404 = vmatmul.mubr.f32.gmra.mrb[0].mxu0 %v5728
  %v6405 = vpop.f32.mrb[0].mxu0
  %v6406 = vadd.f32 0.0, %v6405
  %v6407 = vpop.f32.mrb[0].mxu0
  %6408 = vmatprep.mubr.f32.mxu0 %v6289
  %6409 = vmatmul.mubr.f32.gmra.mrb[0].mxu0 %v5734
  %v6410 = vpop.f32.mrb[0].mxu0
  %v6411 = vadd.f32 0.0, %v6410
  %v6412 = vpop.f32.mrb[0].mxu0
  %6413 = vmatprep.mubr.f32.mxu0 %v6292
  %6414 = vmatmul.mubr.f32.gmra.mrb[0].mxu0 %v5740
  %v6415 = vpop.f32.mrb[0].mxu0
  %v6416 = vadd.f32 0.0, %v6415
  %v6417 = vpop.f32.mrb[0].mxu0
  %6418 = vmatprep.mubr.f32.mxu0 %v6295
  %6419 = vmatmul.mubr.f32.gmra.mrb[0].mxu0 %v5746
  %v6420 = vpop.f32.mrb[0].mxu0
  %v6421 = vadd.f32 0.0, %v6420
  %v6422 = vpop.f32.mrb[0].mxu0
  %6423 = vmatprep.mubr.f32.mxu0 %v6298
  %6424 = vmatmul.mubr.f32.gmra.mrb[0].mxu0 %v5752
  %v6425 = vpop.f32.mrb[0].mxu0
  %v6426 = vadd.f32 0.0, %v6425
  %v6427 = vpop.f32.mrb[0].mxu0
  %6428 = vmatprep.mubr.f32.mxu0 %v6301
  %6429 = vmatmul.mubr.f32.gmra.mrb[0].mxu0 %v5758
  %v6430 = vpop.f32.mrb[0].mxu0
  %v6431 = vadd.f32 0.0, %v6430
  %v6432 = vpop.f32.mrb[0].mxu0
  %6433 = vmatprep.mubr.f32.mxu0 %v6304
  %6434 = vmatmul.mubr.f32.gmra.mrb[0].mxu0 %v5764
  %v6435 = vpop.f32.mrb[0].mxu0
  %v6436 = vadd.f32 0.0, %v6435
  %v6437 = vpop.f32.mrb[0].mxu0
  %6438 = vmatprep.mubr.f32.mxu0 %v6307
  %6439 = vmatmul.mubr.f32.gmra.mrb[0].mxu0 %v5770
  %v6440 = vpop.f32.mrb[0].mxu0
  %v6441 = vadd.f32 0.0, %v6440
  %v6442 = vpop.f32.mrb[0].mxu0
  %6443 = vmatprep.mubr.f32.mxu0 %v6310
  %6444 = vmatmul.mubr.f32.gmra.mrb[0].mxu0 %v5776
  %v6445 = vpop.f32.mrb[0].mxu0
  %v6446 = vadd.f32 0.0, %v6445
  %v6447 = vpop.f32.mrb[0].mxu0
  %6448 = vmatprep.mubr.f32.mxu0 %v6313
  %6449 = vmatmul.mubr.f32.gmra.mrb[0].mxu0 %v5782
  %v6450 = vpop.f32.mrb[0].mxu0
  %v6451 = vadd.f32 0.0, %v6450
  %v6452 = vpop.f32.mrb[0].mxu0
  %6453 = vmatprep.mubr.f32.mxu0 %v6316
  %6454 = vmatmul.mubr.f32.gmra.mrb[0].mxu0 %v5788
  %v6455 = vpop.f32.mrb[0].mxu0
  %v6456 = vadd.f32 0.0, %v6455
  %v6457 = vpop.f32.mrb[0].mxu0
  %6458 = vmatprep.mubr.f32.mxu0 %v6319
  %6459 = vmatmul.mubr.f32.gmra.mrb[0].mxu0 %v5794
  %v6460 = vpop.f32.mrb[0].mxu0
  %v6461 = vadd.f32 0.0, %v6460
  %v6462 = vpop.f32.mrb[0].mxu0
  %6463 = vmatprep.mubr.f32.mxu0 %v6322
  %6464 = vmatmul.mubr.f32.gmra.mrb[0].mxu0 %v5800
  %v6465 = vpop.f32.mrb[0].mxu0
  %v6466 = vadd.f32 0.0, %v6465
  %v6467 = vpop.f32.mrb[0].mxu0
  %6468 = vdwg.mxu0
  %v6469 = vadd.f32 %v6169, %v6391
  %v6470 = vadd.f32 %v6174, %v6396
  %v6471 = vadd.f32 %v6179, %v6401
  %v6472 = vadd.f32 %v6184, %v6406
  %v6473 = vadd.f32 %v6189, %v6411
  %v6474 = vadd.f32 %v6194, %v6416
  %v6475 = vadd.f32 %v6199, %v6421
  %v6476 = vadd.f32 %v6204, %v6426
  %v6477 = vadd.f32 %v6209, %v6431
  %v6478 = vadd.f32 %v6214, %v6436
  %v6479 = vadd.f32 %v6219, %v6441
  %v6480 = vadd.f32 %v6224, %v6446
  %v6481 = vadd.f32 %v6229, %v6451
  %v6482 = vadd.f32 %v6234, %v6456
  %v6483 = vadd.f32 %v6239, %v6461
  %v6484 = vadd.f32 %v6244, %v6466
  %v6485 = vld [vmem:[%s15] sm:$0x1]
  %v6487 = vlaneseq
  %v6488 = vshrl.u32 %v6487, 7
  %v6489 = vsub.s32 0, %v6488
  %v6490 = vrot.slane %v6485, %v6489
  %v6492 = vadd.f32 %v6469, %v6490
  %v6493 = vadd.f32 %v6470, %v6490
  %v6494 = vadd.f32 %v6471, %v6490
  %v6495 = vadd.f32 %v6472, %v6490
  %v6496 = vadd.f32 %v6473, %v6490
  %v6497 = vadd.f32 %v6474, %v6490
  %v6498 = vadd.f32 %v6475, %v6490
  %v6499 = vadd.f32 %v6476, %v6490
  %v6500 = vadd.f32 %v6477, %v6490
  %v6501 = vadd.f32 %v6478, %v6490
  %v6502 = vadd.f32 %v6479, %v6490
  %v6503 = vadd.f32 %v6480, %v6490
  %v6504 = vadd.f32 %v6481, %v6490
  %v6505 = vadd.f32 %v6482, %v6490
  %v6506 = vadd.f32 %v6483, %v6490
  %v6507 = vadd.f32 %v6484, %v6490
  %v6508 = vsub.f32 0.0, %v6492
  %v6509 = vsub.f32 0.0, %v6493
  %v6510 = vsub.f32 0.0, %v6494
  %v6511 = vsub.f32 0.0, %v6495
  %v6512 = vsub.f32 0.0, %v6496
  %v6513 = vsub.f32 0.0, %v6497
  %v6514 = vsub.f32 0.0, %v6498
  %v6515 = vsub.f32 0.0, %v6499
  %v6516 = vsub.f32 0.0, %v6500
  %v6517 = vsub.f32 0.0, %v6501
  %v6518 = vsub.f32 0.0, %v6502
  %v6519 = vsub.f32 0.0, %v6503
  %v6520 = vsub.f32 0.0, %v6504
  %v6521 = vsub.f32 0.0, %v6505
  %v6522 = vsub.f32 0.0, %v6506
  %v6523 = vsub.f32 0.0, %v6507
  %v6524 = vmul.f32 %v6508, 1.442695
  %v6525 = vpow.pop %v6524
  %v6526 = vmul.f32 %v6509, 1.442695
  %v6527 = vpow.pop %v6526
  %v6528 = vmul.f32 %v6510, 1.442695
  %v6529 = vpow.pop %v6528
  %v6530 = vmul.f32 %v6511, 1.442695
  %v6531 = vpow.pop %v6530
  %v6532 = vmul.f32 %v6512, 1.442695
  %v6533 = vpow.pop %v6532
  %v6534 = vmul.f32 %v6513, 1.442695
  %v6535 = vpow.pop %v6534
  %v6536 = vmul.f32 %v6514, 1.442695
  %v6537 = vpow.pop %v6536
  %v6538 = vmul.f32 %v6515, 1.442695
  %v6539 = vpow.pop %v6538
  %v6540 = vmul.f32 %v6516, 1.442695
  %v6541 = vpow.pop %v6540
  %v6542 = vmul.f32 %v6517, 1.442695
  %v6543 = vpow.pop %v6542
  %v6544 = vmul.f32 %v6518, 1.442695
  %v6545 = vpow.pop %v6544
  %v6546 = vmul.f32 %v6519, 1.442695
  %v6547 = vpow.pop %v6546
  %v6548 = vmul.f32 %v6520, 1.442695
  %v6549 = vpow.pop %v6548
  %v6550 = vmul.f32 %v6521, 1.442695
  %v6551 = vpow.pop %v6550
  %v6552 = vmul.f32 %v6522, 1.442695
  %v6553 = vpow.pop %v6552
  %v6554 = vmul.f32 %v6523, 1.442695
  %v6555 = vpow.pop %v6554
  %v6556 = vadd.f32 %v6525, 1.0
  %v6557 = vadd.f32 %v6527, 1.0
  %v6558 = vadd.f32 %v6529, 1.0
  %v6559 = vadd.f32 %v6531, 1.0
  %v6560 = vadd.f32 %v6533, 1.0
  %v6561 = vadd.f32 %v6535, 1.0
  %v6562 = vadd.f32 %v6537, 1.0
  %v6563 = vadd.f32 %v6539, 1.0
  %v6564 = vadd.f32 %v6541, 1.0
  %v6565 = vadd.f32 %v6543, 1.0
  %v6566 = vadd.f32 %v6545, 1.0
  %v6567 = vadd.f32 %v6547, 1.0
  %v6568 = vadd.f32 %v6549, 1.0
  %v6569 = vadd.f32 %v6551, 1.0
  %v6570 = vadd.f32 %v6553, 1.0
  %v6571 = vadd.f32 %v6555, 1.0
  %v6572 = vrcp.pop %v6556
  %v6573 = vmul.f32 1.0, %v6572
  %v6574 = vrcp.pop %v6557
  %v6575 = vmul.f32 1.0, %v6574
  %v6576 = vrcp.pop %v6558
  %v6577 = vmul.f32 1.0, %v6576
  %v6578 = vrcp.pop %v6559
  %v6579 = vmul.f32 1.0, %v6578
  %v6580 = vrcp.pop %v6560
  %v6581 = vmul.f32 1.0, %v6580
  %v6582 = vrcp.pop %v6561
  %v6583 = vmul.f32 1.0, %v6582
  %v6584 = vrcp.pop %v6562
  %v6585 = vmul.f32 1.0, %v6584
  %v6586 = vrcp.pop %v6563
  %v6587 = vmul.f32 1.0, %v6586
  %v6588 = vrcp.pop %v6564
  %v6589 = vmul.f32 1.0, %v6588
  %v6590 = vrcp.pop %v6565
  %v6591 = vmul.f32 1.0, %v6590
  %v6592 = vrcp.pop %v6566
  %v6593 = vmul.f32 1.0, %v6592
  %v6594 = vrcp.pop %v6567
  %v6595 = vmul.f32 1.0, %v6594
  %v6596 = vrcp.pop %v6568
  %v6597 = vmul.f32 1.0, %v6596
  %v6598 = vrcp.pop %v6569
  %v6599 = vmul.f32 1.0, %v6598
  %v6600 = vrcp.pop %v6570
  %v6601 = vmul.f32 1.0, %v6600
  %v6602 = vrcp.pop %v6571
  %v6603 = vmul.f32 1.0, %v6602
  %6604 = vst [vmem:[%s16] sm:$0xff] %v6573
  %6605 = vst [vmem:[%s16 + $0x8] sm:$0xff] %v6575
  %6606 = vst [vmem:[%s16 + $0x10] sm:$0xff] %v6577
  %6607 = vst [vmem:[%s16 + $0x18] sm:$0xff] %v6579
  %6608 = vst [vmem:[%s16 + $0x20] sm:$0xff] %v6581
  %6609 = vst [vmem:[%s16 + $0x28] sm:$0xff] %v6583
  %6610 = vst [vmem:[%s16 + $0x30] sm:$0xff] %v6585
  %6611 = vst [vmem:[%s16 + $0x38] sm:$0xff] %v6587
  %6612 = vst [vmem:[%s16 + $0x40] sm:$0xff] %v6589
  %6613 = vst [vmem:[%s16 + $0x48] sm:$0xff] %v6591
  %6614 = vst [vmem:[%s16 + $0x50] sm:$0xff] %v6593
  %6615 = vst [vmem:[%s16 + $0x58] sm:$0xff] %v6595
  %6616 = vst [vmem:[%s16 + $0x60] sm:$0xff] %v6597
  %6617 = vst [vmem:[%s16 + $0x68] sm:$0xff] %v6599
  %6618 = vst [vmem:[%s16 + $0x70] sm:$0xff] %v6601
  %6619 = vst [vmem:[%s16 + $0x78] sm:$0xff] %v6603
  // Predicated region
  $region66: #{autoencoder_forward.1} parent=0 // pred_check
    _
  $region67: #{autoencoder_forward.1} parent=0 // pred_check_branch
    %6621 = sbr.rel (0) target = $region69
  $region68: #{autoencoder_forward.1} parent=0 // pred_region
    _
  $region69: #{autoencoder_forward.1} parent=0 // pred_fallthru
    _
  // Predicated region
  $region70: #{autoencoder_forward.1} parent=0 // pred_check
    _
  $region71: #{autoencoder_forward.1} parent=0 // pred_check_branch
    %6623 = sbr.rel (0) target = $region73
  $region72: #{autoencoder_forward.1} parent=0 // pred_region
    _
  $region73: #{autoencoder_forward.1} parent=0 // pred_fallthru
    _

</llo_original>
